<compile_context>
chip_gen: v6e
topology: v6e:2x2x1
jax: 0.10.0
libtpu: 0.0.40
codegen_flags: <defaults>
</compile_context>

<pallas_src>
import jax
import jax.numpy as jnp
from jax.experimental import pallas as pl
from jax.experimental.pallas import tpu as pltpu

# ---------------- module hyper-parameters (small, matching the module) --------
S = 4             # num_residual_streams
BI = 2            # num_branch_inputs
D = 32            # dim
T = S + BI        # alpha columns  (branch-input cols + residual cols)
P = T + BI        # fused projection width: [alpha cols | beta cols]
B = 2             # batch
N = 8             # sequence length

assert 128 % D == 0, "demo packing assumes dim divides 128"  # TODO(synk): general D
G = 128 // D      # n-positions packed per 128-lane row
L = G * D         # 128 packed lane width
CP = G * P        # compact projection lanes per stream
CF = S * CP       # folded carry lanes (= 128 here -> lane-dense carry)

HI = jax.lax.Precision.HIGHEST   # tiny matmuls; keep them f32-accurate


def _pick_rt(r_total, cap=256):
    """Packed-row tile: multiple of 8 sublanes dividing r_total, else full."""
    if r_total % 8 == 0:
        rt = min(cap, r_total)
        rt -= rt % 8
        while r_total % rt:
            rt -= 8
        return rt
    return r_total                      # == full extent -> always a legal block


# ----------------------------- constant folding --------------------------------
def _fold_params(params):
    f32 = jnp.float32
    eye_g = jnp.eye(G, dtype=f32)
    eye_s = jnp.eye(S, dtype=f32)
    ones_d = jnp.ones((D,), f32)

    gamma = params["gamma"].reshape(D).astype(f32)
    g = jnp.sqrt(f32(D)) * (gamma + 1.0)                       # RMSNorm gain
    w_cat = jnp.concatenate([params["dynamic_alpha_fn"],
                             params["dynamic_beta_fn"]], axis=1)   # (D, P)
    wg = g[:, None] * w_cat                                    # gain folded in

    # packed projection weight: lanes (j, d) -> compact lanes (j, p)
    wp = (eye_g[:, None, :, None] * wg[None, :, None, :]).reshape(L, CP)

    # per-D-lane-group sum matrix (sum of squares, broadcast back across group)
    msum = jnp.kron(eye_g, jnp.ones((D, D), f32))              # (L, L)

    # alpha broadcast: compact (j, p) -> (t, j, d) lanes, alpha_scale folded in
    sel_a = jnp.eye(P, T, dtype=f32)                           # sel_a[p, t] = (p == t)
    ea = (eye_g[:, None, None, :, None]
          * sel_a[None, :, :, None, None]
          * ones_d[None, None, None, None, :]).reshape(CP, T * L)
    ea = ea * params["dynamic_alpha_scale"]
    sab = jnp.repeat(params["static_alpha"].astype(f32), L, axis=1)   # (S, T*L)

    # carry fold: per-stream shift of compact lanes into the (RT, S*CP) slab
    eye_cp = jnp.eye(CP, dtype=f32)
    sh = (eye_s[:, None, :, None] * eye_cp[None, :, None, :]).reshape(S, CP, CF)

    # depth beta broadcast: folded (s, j, p) -> (s, i, j, d), beta_scale folded in
    sel_b = jnp.eye(P, BI, k=-T, dtype=f32)                    # sel_b[T+i, i] = 1
    eb = (eye_s[:, None, None, :, None, None, None]
          * eye_g[None, :, None, None, None, :, None]
          * sel_b[None, None, :, None, :, None, None]
          * ones_d[None, None, None, None, None, None, :]).reshape(CF, S * BI * L)
    eb = eb * params["dynamic_beta_scale"]
    sbb = jnp.repeat(params["static_beta"].astype(f32).reshape(1, S * BI), L, axis=1)

    return (wp, msum, ea, sab, sh), (eb, sbb)


# --------------------------------- kernels --------------------------------------
def _width_kernel(x_ref, wp_ref, msum_ref, ea_ref, sab_ref, sh_ref,
                  branch_ref, resid_ref, coeff_ref):
    x = x_ref[...]                                   # (S, RT, L), lane-dense
    rt = x.shape[1]
    xf = x.reshape(S * rt, L)                        # leading-dim merge only

    # RMSNorm over each D-lane channel group; group sum-of-squares via the idle
    # MXU (result already broadcast across the group's lanes); one rsqrt.
    ss = jnp.dot(xf * xf, msum_ref[...], precision=HI)           # (S*RT, L)
    xn = xf * jax.lax.rsqrt(jnp.maximum(ss, 1e-24))              # gamma folded into wp

    # fused dynamic alpha/beta projection, single tanh stream (compact lanes)
    tp = jnp.tanh(jnp.dot(xn, wp_ref[...], precision=HI))        # (S*RT, CP)

    # width mixing: for each output column, broadcast alpha to channel lanes via
    # a tiny selection matmul (alpha_scale folded into ea, static into sab), then
    # store one full-lane (RT, L) tile straight into the output ref (no stacking).
    for t in range(T):
        a = jnp.dot(tp, ea_ref[:, t * L:(t + 1) * L], precision=HI)   # (S*RT, L)
        a = a.reshape(S, rt, L) + sab_ref[:, t * L:(t + 1) * L][:, None, :]
        mixed = jnp.sum(a * x, axis=0)                                 # (RT, L)
        if t < BI:
            branch_ref[t, 0] = mixed
        else:
            resid_ref[t - BI] = mixed

    # lane-dense carry of the compact projection: (RT, S*CP = 128), single store
    tp3 = tp.reshape(S, rt, CP)
    folded = jnp.dot(tp3[0], sh_ref[0], precision=HI)
    for s in range(1, S):
        folded = folded + jnp.dot(tp3[s], sh_ref[s], precision=HI)
    coeff_ref[0] = folded


def _depth_kernel(bo_ref, resid_ref, coeff_ref, eb_ref, sbb_ref, out_ref):
    c = coeff_ref[0]                                             # (RT, CF)
    # beta broadcast to channel lanes for every (stream, branch-input) pair;
    # beta_scale folded into eb, static_beta folded into sbb.
    bb = jnp.dot(c, eb_ref[...], precision=HI) + sbb_ref[...]    # (RT, S*BI*L)
    for s in range(S):
        acc = resid_ref[s]                                       # (RT, L)
        for i in range(BI):
            off = (s * BI + i) * L
            acc = acc + bb[:, off:off + L] * bo_ref[i, 0]
        out_ref[s] = acc


# ----------------------------- pallas_call wrappers -----------------------------
def width_connection(xp, consts, *, b, rt):
    wp, msum, ea, sab, sh = consts
    r_total = xp.shape[1]
    grid = (b, r_total // rt)
    rows = b * S * r_total
    cost = pl.CostEstimate(
        flops=int(2 * rows * L * (L + CP) + 2 * rows * CP * L * T
                  + 3 * rows * L * T + 2 * rows * CP * CF),
        transcendentals=int(rows * (CP + L)),
        bytes_accessed=int(4 * (xp.size + wp.size + msum.size + ea.size
                                + sab.size + sh.size
                                + BI * b * r_total * L
                                + b * S * r_total * L
                                + b * r_total * CF)))
    return pl.pallas_call(
        _width_kernel,
        out_shape=(
            jax.ShapeDtypeStruct((BI, b, r_total, L), jnp.float32),   # branch input
            jax.ShapeDtypeStruct((b * S, r_total, L), jnp.float32),   # mixed residuals
            jax.ShapeDtypeStruct((b, r_total, CF), jnp.float32),      # folded coeff carry
        ),
        grid=grid,
        in_specs=[
            pl.BlockSpec((S, rt, L), lambda i, j: (i, j, 0)),         # '(b s) n d' packed
            pl.BlockSpec(wp.shape, lambda i, j: (0, 0)),
            pl.BlockSpec(msum.shape, lambda i, j: (0, 0)),
            pl.BlockSpec(ea.shape, lambda i, j: (0, 0)),
            pl.BlockSpec(sab.shape, lambda i, j: (0, 0)),
            pl.BlockSpec(sh.shape, lambda i, j: (0, 0, 0)),
        ],
        out_specs=(
            pl.BlockSpec((BI, 1, rt, L), lambda i, j: (0, i, j, 0)),
            pl.BlockSpec((S, rt, L), lambda i, j: (i, j, 0)),
            pl.BlockSpec((1, rt, CF), lambda i, j: (i, j, 0)),
        ),
        compiler_params=pltpu.CompilerParams(
            dimension_semantics=("parallel", "parallel")),
        cost_estimate=cost,
    )(xp, wp, msum, ea, sab, sh)


def depth_connection(bo_p, resid_p, coeff_p, consts, *, b, rt):
    eb, sbb = consts
    r_total = resid_p.shape[1]
    grid = (b, r_total // rt)
    rows = b * r_total
    cost = pl.CostEstimate(
        flops=int(2 * rows * CF * S * BI * L + 2 * b * S * r_total * L * BI),
        transcendentals=0,
        bytes_accessed=int(4 * (bo_p.size + resid_p.size + coeff_p.size
                                + eb.size + sbb.size + b * S * r_total * L)))
    return pl.pallas_call(
        _depth_kernel,
        out_shape=jax.ShapeDtypeStruct((b * S, r_total, L), jnp.float32),
        grid=grid,
        in_specs=[
            pl.BlockSpec((BI, 1, rt, L), lambda i, j: (0, i, j, 0)),
            pl.BlockSpec((S, rt, L), lambda i, j: (i, j, 0)),
            pl.BlockSpec((1, rt, CF), lambda i, j: (i, j, 0)),
            pl.BlockSpec(eb.shape, lambda i, j: (0, 0)),
            pl.BlockSpec(sbb.shape, lambda i, j: (0, 0)),
        ],
        out_specs=pl.BlockSpec((S, rt, L), lambda i, j: (i, j, 0)),
        compiler_params=pltpu.CompilerParams(
            dimension_semantics=("parallel", "parallel")),
        cost_estimate=cost,
    )(bo_p, resid_p, coeff_p, eb, sbb)


# ----------------------------- module forward (glue) ----------------------------
def hyper_connections_forward(residuals, params):
    """Mirror of HyperConnections.forward with branches=None: returns the branch
    input '(i b) n d' and an `add_residual` closure (depth connection)."""
    bs, n, d = residuals.shape
    assert d == D and bs % S == 0
    assert (n * D) % L == 0, "sequence must pack into 128-lane rows"
    # TODO(synk): ragged n (n*D not a multiple of 128) would need masked tiles.
    b = bs // S
    r_total = (n * D) // L
    rt = _pick_rt(r_total)

    consts_w, consts_d = _fold_params(params)

    xp = residuals.reshape(bs, r_total, L)              # free: (n, d) contiguous

    branch_p, resid_p, coeff_p = width_connection(xp, consts_w, b=b, rt=rt)

    # '(i b) n d' branch input, exactly as the module returns it (free reshapes)
    branch_input = branch_p.reshape(BI * b, n, D)

    def add_residual(branch_output):
        bo_p = branch_output.reshape(BI, b, r_total, L)  # '(i b) n d' -> packed
        out_p = depth_connection(bo_p, resid_p, coeff_p, consts_d, b=b, rt=rt)
        return out_p.reshape(bs, n, D)
        # TODO(synk): nn.Dropout(p=0.0) is identity and omitted.

    return branch_input, add_residual


# ------------------------------- pure-JAX reference -----------------------------
def reference_forward(residuals, params):
    b = residuals.shape[0] // S
    n = residuals.shape[1]
    x = residuals.reshape(b, S, n, D).transpose(0, 2, 1, 3)              # (b, n, S, D)
    norm = jnp.sqrt(jnp.sum(x * x, axis=-1, keepdims=True))
    normed = x / jnp.maximum(norm, 1e-12) * jnp.sqrt(jnp.float32(D)) * (params["gamma"] + 1.0)
    wc = jnp.tanh(jnp.einsum("bnsd,de->bnse", normed, params["dynamic_alpha_fn"],
                             precision=HI))
    alpha = wc * params["dynamic_alpha_scale"] + params["static_alpha"]
    dc = jnp.tanh(jnp.einsum("bnsd,de->bnse", normed, params["dynamic_beta_fn"],
                             precision=HI))
    beta = dc * params["dynamic_beta_scale"] + params["static_beta"]
    mix = jnp.einsum("bnst,bnsd->bntd", alpha, x, precision=HI)
    branch_input = mix[..., :BI, :]
    resid = mix[..., BI:, :]
    branch_flat = branch_input.transpose(2, 0, 1, 3).reshape(BI * b, n, D)
    bo = branch_flat.reshape(BI, b, n, D)                                # identity branch
    res2 = jnp.einsum("ibnd,bnsi->bnsd", bo, beta, precision=HI) + resid
    out = res2.transpose(0, 2, 1, 3).reshape(b * S, n, D)
    return branch_flat, out


# ---------------------------------------- main ----------------------------------
if __name__ == "__main__":
    key = jax.random.PRNGKey(0)
    k1, k2, k3 = jax.random.split(key, 3)

    # deterministic layer index (module uses randrange(num_streams * num_branch_inputs))
    layer_index = 0
    layer_offset = (layer_index % (S * BI)) * BI
    stream_seq = jnp.arange(S)[:, None]
    branch_seq = jnp.arange(BI)[None, :]
    init_alpha0 = (((stream_seq + branch_seq + layer_offset) % S) == 0).astype(jnp.float32)
    static_alpha = jnp.concatenate([init_alpha0, jnp.eye(S, dtype=jnp.float32)], axis=1)

    params = dict(
        gamma=jnp.zeros((1, D), jnp.float32),               # RMSNorm gamma (init 0 -> gain 1)
        static_alpha=static_alpha,                          # (S, BI + S)
        static_beta=jnp.ones((S, BI), jnp.float32),         # (S, BI)
        # __init__ uses zeros for the dynamic projection weights; use small
        # deterministic random values so the dynamic path is actually exercised.
        dynamic_alpha_fn=0.02 * jax.random.normal(k1, (D, T), jnp.float32),
        dynamic_beta_fn=0.02 * jax.random.normal(k2, (D, BI), jnp.float32),
        dynamic_alpha_scale=jnp.float32(0.01),
        dynamic_beta_scale=jnp.float32(0.01),
    )

    residuals = jax.random.normal(k3, (B * S, N, D), jnp.float32)

    branch_input, add_residual = hyper_connections_forward(residuals, params)
    # branches=None in __init__: feed the branch input back through an identity branch.
    output = add_residual(branch_input)

    branch_input = jax.block_until_ready(branch_input)
    output = jax.block_until_ready(output)

    ref_branch, ref_out = reference_forward(residuals, params)
    assert branch_input.shape == (BI * B, N, D)
    assert output.shape == (B * S, N, D)
    assert jnp.allclose(branch_input, ref_branch, atol=1e-5, rtol=1e-5)
    assert jnp.allclose(output, ref_out, atol=1e-5, rtol=1e-5)

    print("KERNEL_OK")
</pallas_src>

<mosaic_0001>
module attributes {stable_mosaic.version = 11 : i64} {
  func.func @_width_kernel(%arg0: i32, %arg1: i32, %arg2: memref<4x2x128xf32, #tpu.memory_space<vmem>>, %arg3: memref<128x32xf32, #tpu.memory_space<vmem>>, %arg4: memref<128x128xf32, #tpu.memory_space<vmem>>, %arg5: memref<32x768xf32, #tpu.memory_space<vmem>>, %arg6: memref<4x768xf32, #tpu.memory_space<vmem>>, %arg7: memref<4x32x128xf32, #tpu.memory_space<vmem>>, %arg8: memref<2x1x2x128xf32, #tpu.memory_space<vmem>>, %arg9: memref<4x2x128xf32, #tpu.memory_space<vmem>>, %arg10: memref<1x2x128xf32, #tpu.memory_space<vmem>>) attributes {dimension_semantics = [#tpu.dimension_semantics<parallel>, #tpu.dimension_semantics<parallel>], iteration_bounds = array<i64: 2, 1>, scalar_prefetch = 0 : i64, scratch_operands = 0 : i64, tpu.core_type = #tpu.core_type<tc>, window_params = [{transform_indices = @transform_0, window_bounds = array<i64: 4, 2, 128>}, {pipeline_mode = #tpu.pipeline_mode<synchronous>, transform_indices = @transform_1, window_bounds = array<i64: 128, 32>}, {pipeline_mode = #tpu.pipeline_mode<synchronous>, transform_indices = @transform_2, window_bounds = array<i64: 128, 128>}, {pipeline_mode = #tpu.pipeline_mode<synchronous>, transform_indices = @transform_3, window_bounds = array<i64: 32, 768>}, {pipeline_mode = #tpu.pipeline_mode<synchronous>, transform_indices = @transform_4, window_bounds = array<i64: 4, 768>}, {pipeline_mode = #tpu.pipeline_mode<synchronous>, transform_indices = @transform_5, window_bounds = array<i64: 4, 32, 128>}, {transform_indices = @transform_6, window_bounds = array<i64: 2, 1, 2, 128>}, {transform_indices = @transform_7, window_bounds = array<i64: 4, 2, 128>}, {transform_indices = @transform_8, window_bounds = array<i64: 1, 2, 128>}]} {
    %c0 = arith.constant 0 : index
    %c0_0 = arith.constant 0 : index
    %c0_1 = arith.constant 0 : index
    %0 = vector.load %arg2[%c0, %c0_0, %c0_1] : memref<4x2x128xf32, #tpu.memory_space<vmem>>, vector<4x2x128xf32>
    %1 = vector.shape_cast %0 : vector<4x2x128xf32> to vector<8x128xf32>
    %2 = arith.mulf %1, %1 : vector<8x128xf32>
    %c0_2 = arith.constant 0 : index
    %c0_3 = arith.constant 0 : index
    %3 = vector.load %arg4[%c0_2, %c0_3] : memref<128x128xf32, #tpu.memory_space<vmem>>, vector<128x128xf32>
    %cst = arith.constant dense<0.000000e+00> : vector<8x128xf32>
    %4 = tpu.matmul %2, %3, %cst {dimension_numbers = #tpu.dot_dimension_numbers<[1], [0], [0], [1], [0, 0, 1, 1], [], []>, precision = #tpu.contract_precision<fp32>} : vector<8x128xf32>, vector<128x128xf32>, vector<8x128xf32> -> vector<8x128xf32>
    %cst_4 = arith.constant 1.000000e-24 : f32
    %5 = vector.broadcast %cst_4 : f32 to vector<8x128xf32>
    %6 = arith.maximumf %4, %5 : vector<8x128xf32>
    %7 = math.rsqrt %6 : vector<8x128xf32>
    %8 = arith.mulf %1, %7 : vector<8x128xf32>
    %c0_5 = arith.constant 0 : index
    %c0_6 = arith.constant 0 : index
    %9 = vector.load %arg3[%c0_5, %c0_6] : memref<128x32xf32, #tpu.memory_space<vmem>>, vector<128x32xf32>
    %cst_7 = arith.constant dense<0.000000e+00> : vector<8x32xf32>
    %10 = tpu.matmul %8, %9, %cst_7 {dimension_numbers = #tpu.dot_dimension_numbers<[1], [0], [0], [1], [0, 0, 1, 1], [], []>, precision = #tpu.contract_precision<fp32>} : vector<8x128xf32>, vector<128x32xf32>, vector<8x32xf32> -> vector<8x32xf32>
    %11 = math.tanh %10 : vector<8x32xf32>
    %c0_8 = arith.constant 0 : index
    %c0_9 = arith.constant 0 : index
    %12 = vector.load %arg5[%c0_8, %c0_9] : memref<32x768xf32, #tpu.memory_space<vmem>>, vector<32x128xf32>
    %cst_10 = arith.constant dense<0.000000e+00> : vector<8x128xf32>
    %13 = tpu.matmul %11, %12, %cst_10 {dimension_numbers = #tpu.dot_dimension_numbers<[1], [0], [0], [1], [0, 0, 1, 1], [], []>, precision = #tpu.contract_precision<fp32>} : vector<8x32xf32>, vector<32x128xf32>, vector<8x128xf32> -> vector<8x128xf32>
    %14 = vector.shape_cast %13 : vector<8x128xf32> to vector<4x2x128xf32>
    %c0_11 = arith.constant 0 : index
    %c0_12 = arith.constant 0 : index
    %15 = vector.load %arg6[%c0_11, %c0_12] : memref<4x768xf32, #tpu.memory_space<vmem>>, vector<4x128xf32>
    %16 = vector.shape_cast %15 : vector<4x128xf32> to vector<4x1x128xf32>
    %17 = vector.broadcast %16 : vector<4x1x128xf32> to vector<4x2x128xf32>
    %18 = arith.addf %14, %17 : vector<4x2x128xf32>
    %19 = arith.mulf %18, %0 : vector<4x2x128xf32>
    %cst_13 = arith.constant dense<0.000000e+00> : vector<2x128xf32>
    %20 = vector.multi_reduction <add>, %19, %cst_13 [0] : vector<4x2x128xf32> to vector<2x128xf32>
    %c0_14 = arith.constant 0 : index
    %c0_15 = arith.constant 0 : index
    %c0_16 = arith.constant 0 : index
    %c0_17 = arith.constant 0 : index
    %21 = vector.load %arg8[%c0_14, %c0_15, %c0_16, %c0_17] : memref<2x1x2x128xf32, #tpu.memory_space<vmem>>, vector<1x1x2x128xf32>
    %22 = vector.shape_cast %21 : vector<1x1x2x128xf32> to vector<2x128xf32>
    %23 = vector.shape_cast %20 : vector<2x128xf32> to vector<1x1x2x128xf32>
    tpu.vector_store %arg8[%c0_14, %c0_15, %c0_16, %c0_17], %23 {strides = array<i32>} : memref<2x1x2x128xf32, #tpu.memory_space<vmem>>, vector<1x1x2x128xf32>,
    %c0_18 = arith.constant 0 : index
    %c128 = arith.constant 128 : index
    %24 = vector.load %arg5[%c0_18, %c128] : memref<32x768xf32, #tpu.memory_space<vmem>>, vector<32x128xf32>
    %cst_19 = arith.constant dense<0.000000e+00> : vector<8x128xf32>
    %25 = tpu.matmul %11, %24, %cst_19 {dimension_numbers = #tpu.dot_dimension_numbers<[1], [0], [0], [1], [0, 0, 1, 1], [], []>, precision = #tpu.contract_precision<fp32>} : vector<8x32xf32>, vector<32x128xf32>, vector<8x128xf32> -> vector<8x128xf32>
    %26 = vector.shape_cast %25 : vector<8x128xf32> to vector<4x2x128xf32>
    %c0_20 = arith.constant 0 : index
    %c128_21 = arith.constant 128 : index
    %27 = vector.load %arg6[%c0_20, %c128_21] : memref<4x768xf32, #tpu.memory_space<vmem>>, vector<4x128xf32>
    %28 = vector.shape_cast %27 : vector<4x128xf32> to vector<4x1x128xf32>
    %29 = vector.broadcast %28 : vector<4x1x128xf32> to vector<4x2x128xf32>
    %30 = arith.addf %26, %29 : vector<4x2x128xf32>
    %31 = arith.mulf %30, %0 : vector<4x2x128xf32>
    %cst_22 = arith.constant dense<0.000000e+00> : vector<2x128xf32>
    %32 = vector.multi_reduction <add>, %31, %cst_22 [0] : vector<4x2x128xf32> to vector<2x128xf32>
    %c1 = arith.constant 1 : index
    %c0_23 = arith.constant 0 : index
    %c0_24 = arith.constant 0 : index
    %c0_25 = arith.constant 0 : index
    %33 = vector.load %arg8[%c1, %c0_23, %c0_24, %c0_25] : memref<2x1x2x128xf32, #tpu.memory_space<vmem>>, vector<1x1x2x128xf32>
    %34 = vector.shape_cast %33 : vector<1x1x2x128xf32> to vector<2x128xf32>
    %35 = vector.shape_cast %32 : vector<2x128xf32> to vector<1x1x2x128xf32>
    tpu.vector_store %arg8[%c1, %c0_23, %c0_24, %c0_25], %35 {strides = array<i32>} : memref<2x1x2x128xf32, #tpu.memory_space<vmem>>, vector<1x1x2x128xf32>,
    %c0_26 = arith.constant 0 : index
    %c256 = arith.constant 256 : index
    %36 = vector.load %arg5[%c0_26, %c256] : memref<32x768xf32, #tpu.memory_space<vmem>>, vector<32x128xf32>
    %cst_27 = arith.constant dense<0.000000e+00> : vector<8x128xf32>
    %37 = tpu.matmul %11, %36, %cst_27 {dimension_numbers = #tpu.dot_dimension_numbers<[1], [0], [0], [1], [0, 0, 1, 1], [], []>, precision = #tpu.contract_precision<fp32>} : vector<8x32xf32>, vector<32x128xf32>, vector<8x128xf32> -> vector<8x128xf32>
    %38 = vector.shape_cast %37 : vector<8x128xf32> to vector<4x2x128xf32>
    %c0_28 = arith.constant 0 : index
    %c256_29 = arith.constant 256 : index
    %39 = vector.load %arg6[%c0_28, %c256_29] : memref<4x768xf32, #tpu.memory_space<vmem>>, vector<4x128xf32>
    %40 = vector.shape_cast %39 : vector<4x128xf32> to vector<4x1x128xf32>
    %41 = vector.broadcast %40 : vector<4x1x128xf32> to vector<4x2x128xf32>
    %42 = arith.addf %38, %41 : vector<4x2x128xf32>
    %43 = arith.mulf %42, %0 : vector<4x2x128xf32>
    %cst_30 = arith.constant dense<0.000000e+00> : vector<2x128xf32>
    %44 = vector.multi_reduction <add>, %43, %cst_30 [0] : vector<4x2x128xf32> to vector<2x128xf32>
    %c0_31 = arith.constant 0 : index
    %c0_32 = arith.constant 0 : index
    %c0_33 = arith.constant 0 : index
    %45 = vector.load %arg9[%c0_31, %c0_32, %c0_33] : memref<4x2x128xf32, #tpu.memory_space<vmem>>, vector<1x2x128xf32>
    %46 = vector.shape_cast %45 : vector<1x2x128xf32> to vector<2x128xf32>
    %47 = vector.shape_cast %44 : vector<2x128xf32> to vector<1x2x128xf32>
    tpu.vector_store %arg9[%c0_31, %c0_32, %c0_33], %47 {strides = array<i32>} : memref<4x2x128xf32, #tpu.memory_space<vmem>>, vector<1x2x128xf32>,
    %c0_34 = arith.constant 0 : index
    %c384 = arith.constant 384 : index
    %48 = vector.load %arg5[%c0_34, %c384] : memref<32x768xf32, #tpu.memory_space<vmem>>, vector<32x128xf32>
    %cst_35 = arith.constant dense<0.000000e+00> : vector<8x128xf32>
    %49 = tpu.matmul %11, %48, %cst_35 {dimension_numbers = #tpu.dot_dimension_numbers<[1], [0], [0], [1], [0, 0, 1, 1], [], []>, precision = #tpu.contract_precision<fp32>} : vector<8x32xf32>, vector<32x128xf32>, vector<8x128xf32> -> vector<8x128xf32>
    %50 = vector.shape_cast %49 : vector<8x128xf32> to vector<4x2x128xf32>
    %c0_36 = arith.constant 0 : index
    %c384_37 = arith.constant 384 : index
    %51 = vector.load %arg6[%c0_36, %c384_37] : memref<4x768xf32, #tpu.memory_space<vmem>>, vector<4x128xf32>
    %52 = vector.shape_cast %51 : vector<4x128xf32> to vector<4x1x128xf32>
    %53 = vector.broadcast %52 : vector<4x1x128xf32> to vector<4x2x128xf32>
    %54 = arith.addf %50, %53 : vector<4x2x128xf32>
    %55 = arith.mulf %54, %0 : vector<4x2x128xf32>
    %cst_38 = arith.constant dense<0.000000e+00> : vector<2x128xf32>
    %56 = vector.multi_reduction <add>, %55, %cst_38 [0] : vector<4x2x128xf32> to vector<2x128xf32>
    %c1_39 = arith.constant 1 : index
    %c0_40 = arith.constant 0 : index
    %c0_41 = arith.constant 0 : index
    %57 = vector.load %arg9[%c1_39, %c0_40, %c0_41] : memref<4x2x128xf32, #tpu.memory_space<vmem>>, vector<1x2x128xf32>
    %58 = vector.shape_cast %57 : vector<1x2x128xf32> to vector<2x128xf32>
    %59 = vector.shape_cast %56 : vector<2x128xf32> to vector<1x2x128xf32>
    tpu.vector_store %arg9[%c1_39, %c0_40, %c0_41], %59 {strides = array<i32>} : memref<4x2x128xf32, #tpu.memory_space<vmem>>, vector<1x2x128xf32>,
    %c0_42 = arith.constant 0 : index
    %c512 = arith.constant 512 : index
    %60 = vector.load %arg5[%c0_42, %c512] : memref<32x768xf32, #tpu.memory_space<vmem>>, vector<32x128xf32>
    %cst_43 = arith.constant dense<0.000000e+00> : vector<8x128xf32>
    %61 = tpu.matmul %11, %60, %cst_43 {dimension_numbers = #tpu.dot_dimension_numbers<[1], [0], [0], [1], [0, 0, 1, 1], [], []>, precision = #tpu.contract_precision<fp32>} : vector<8x32xf32>, vector<32x128xf32>, vector<8x128xf32> -> vector<8x128xf32>
    %62 = vector.shape_cast %61 : vector<8x128xf32> to vector<4x2x128xf32>
    %c0_44 = arith.constant 0 : index
    %c512_45 = arith.constant 512 : index
    %63 = vector.load %arg6[%c0_44, %c512_45] : memref<4x768xf32, #tpu.memory_space<vmem>>, vector<4x128xf32>
    %64 = vector.shape_cast %63 : vector<4x128xf32> to vector<4x1x128xf32>
    %65 = vector.broadcast %64 : vector<4x1x128xf32> to vector<4x2x128xf32>
    %66 = arith.addf %62, %65 : vector<4x2x128xf32>
    %67 = arith.mulf %66, %0 : vector<4x2x128xf32>
    %cst_46 = arith.constant dense<0.000000e+00> : vector<2x128xf32>
    %68 = vector.multi_reduction <add>, %67, %cst_46 [0] : vector<4x2x128xf32> to vector<2x128xf32>
    %c2 = arith.constant 2 : index
    %c0_47 = arith.constant 0 : index
    %c0_48 = arith.constant 0 : index
    %69 = vector.load %arg9[%c2, %c0_47, %c0_48] : memref<4x2x128xf32, #tpu.memory_space<vmem>>, vector<1x2x128xf32>
    %70 = vector.shape_cast %69 : vector<1x2x128xf32> to vector<2x128xf32>
    %71 = vector.shape_cast %68 : vector<2x128xf32> to vector<1x2x128xf32>
    tpu.vector_store %arg9[%c2, %c0_47, %c0_48], %71 {strides = array<i32>} : memref<4x2x128xf32, #tpu.memory_space<vmem>>, vector<1x2x128xf32>,
    %c0_49 = arith.constant 0 : index
    %c640 = arith.constant 640 : index
    %72 = vector.load %arg5[%c0_49, %c640] : memref<32x768xf32, #tpu.memory_space<vmem>>, vector<32x128xf32>
    %cst_50 = arith.constant dense<0.000000e+00> : vector<8x128xf32>
    %73 = tpu.matmul %11, %72, %cst_50 {dimension_numbers = #tpu.dot_dimension_numbers<[1], [0], [0], [1], [0, 0, 1, 1], [], []>, precision = #tpu.contract_precision<fp32>} : vector<8x32xf32>, vector<32x128xf32>, vector<8x128xf32> -> vector<8x128xf32>
    %74 = vector.shape_cast %73 : vector<8x128xf32> to vector<4x2x128xf32>
    %c0_51 = arith.constant 0 : index
    %c640_52 = arith.constant 640 : index
    %75 = vector.load %arg6[%c0_51, %c640_52] : memref<4x768xf32, #tpu.memory_space<vmem>>, vector<4x128xf32>
    %76 = vector.shape_cast %75 : vector<4x128xf32> to vector<4x1x128xf32>
    %77 = vector.broadcast %76 : vector<4x1x128xf32> to vector<4x2x128xf32>
    %78 = arith.addf %74, %77 : vector<4x2x128xf32>
    %79 = arith.mulf %78, %0 : vector<4x2x128xf32>
    %cst_53 = arith.constant dense<0.000000e+00> : vector<2x128xf32>
    %80 = vector.multi_reduction <add>, %79, %cst_53 [0] : vector<4x2x128xf32> to vector<2x128xf32>
    %c3 = arith.constant 3 : index
    %c0_54 = arith.constant 0 : index
    %c0_55 = arith.constant 0 : index
    %81 = vector.load %arg9[%c3, %c0_54, %c0_55] : memref<4x2x128xf32, #tpu.memory_space<vmem>>, vector<1x2x128xf32>
    %82 = vector.shape_cast %81 : vector<1x2x128xf32> to vector<2x128xf32>
    %83 = vector.shape_cast %80 : vector<2x128xf32> to vector<1x2x128xf32>
    tpu.vector_store %arg9[%c3, %c0_54, %c0_55], %83 {strides = array<i32>} : memref<4x2x128xf32, #tpu.memory_space<vmem>>, vector<1x2x128xf32>,
    %84 = vector.shape_cast %11 : vector<8x32xf32> to vector<4x2x32xf32>
    %85 = vector.extract_strided_slice %84 {offsets = [0, 0, 0], sizes = [1, 2, 32], strides = [1, 1, 1]} : vector<4x2x32xf32> to vector<1x2x32xf32>
    %86 = vector.shape_cast %85 : vector<1x2x32xf32> to vector<2x32xf32>
    %c0_56 = arith.constant 0 : index
    %c0_57 = arith.constant 0 : index
    %c0_58 = arith.constant 0 : index
    %87 = vector.load %arg7[%c0_56, %c0_57, %c0_58] : memref<4x32x128xf32, #tpu.memory_space<vmem>>, vector<1x32x128xf32>
    %88 = vector.shape_cast %87 : vector<1x32x128xf32> to vector<32x128xf32>
    %cst_59 = arith.constant dense<0.000000e+00> : vector<2x128xf32>
    %89 = tpu.matmul %86, %88, %cst_59 {dimension_numbers = #tpu.dot_dimension_numbers<[1], [0], [0], [1], [0, 0, 1, 1], [], []>, precision = #tpu.contract_precision<fp32>} : vector<2x32xf32>, vector<32x128xf32>, vector<2x128xf32> -> vector<2x128xf32>
    %90 = vector.extract_strided_slice %84 {offsets = [1, 0, 0], sizes = [1, 2, 32], strides = [1, 1, 1]} : vector<4x2x32xf32> to vector<1x2x32xf32>
    %91 = vector.shape_cast %90 : vector<1x2x32xf32> to vector<2x32xf32>
    %c1_60 = arith.constant 1 : index
    %c0_61 = arith.constant 0 : index
    %c0_62 = arith.constant 0 : index
    %92 = vector.load %arg7[%c1_60, %c0_61, %c0_62] : memref<4x32x128xf32, #tpu.memory_space<vmem>>, vector<1x32x128xf32>
    %93 = vector.shape_cast %92 : vector<1x32x128xf32> to vector<32x128xf32>
    %cst_63 = arith.constant dense<0.000000e+00> : vector<2x128xf32>
    %94 = tpu.matmul %91, %93, %cst_63 {dimension_numbers = #tpu.dot_dimension_numbers<[1], [0], [0], [1], [0, 0, 1, 1], [], []>, precision = #tpu.contract_precision<fp32>} : vector<2x32xf32>, vector<32x128xf32>, vector<2x128xf32> -> vector<2x128xf32>
    %95 = arith.addf %89, %94 : vector<2x128xf32>
    %96 = vector.extract_strided_slice %84 {offsets = [2, 0, 0], sizes = [1, 2, 32], strides = [1, 1, 1]} : vector<4x2x32xf32> to vector<1x2x32xf32>
    %97 = vector.shape_cast %96 : vector<1x2x32xf32> to vector<2x32xf32>
    %c2_64 = arith.constant 2 : index
    %c0_65 = arith.constant 0 : index
    %c0_66 = arith.constant 0 : index
    %98 = vector.load %arg7[%c2_64, %c0_65, %c0_66] : memref<4x32x128xf32, #tpu.memory_space<vmem>>, vector<1x32x128xf32>
    %99 = vector.shape_cast %98 : vector<1x32x128xf32> to vector<32x128xf32>
    %cst_67 = arith.constant dense<0.000000e+00> : vector<2x128xf32>
    %100 = tpu.matmul %97, %99, %cst_67 {dimension_numbers = #tpu.dot_dimension_numbers<[1], [0], [0], [1], [0, 0, 1, 1], [], []>, precision = #tpu.contract_precision<fp32>} : vector<2x32xf32>, vector<32x128xf32>, vector<2x128xf32> -> vector<2x128xf32>
    %101 = arith.addf %95, %100 : vector<2x128xf32>
    %102 = vector.extract_strided_slice %84 {offsets = [3, 0, 0], sizes = [1, 2, 32], strides = [1, 1, 1]} : vector<4x2x32xf32> to vector<1x2x32xf32>
    %103 = vector.shape_cast %102 : vector<1x2x32xf32> to vector<2x32xf32>
    %c3_68 = arith.constant 3 : index
    %c0_69 = arith.constant 0 : index
    %c0_70 = arith.constant 0 : index
    %104 = vector.load %arg7[%c3_68, %c0_69, %c0_70] : memref<4x32x128xf32, #tpu.memory_space<vmem>>, vector<1x32x128xf32>
    %105 = vector.shape_cast %104 : vector<1x32x128xf32> to vector<32x128xf32>
    %cst_71 = arith.constant dense<0.000000e+00> : vector<2x128xf32>
    %106 = tpu.matmul %103, %105, %cst_71 {dimension_numbers = #tpu.dot_dimension_numbers<[1], [0], [0], [1], [0, 0, 1, 1], [], []>, precision = #tpu.contract_precision<fp32>} : vector<2x32xf32>, vector<32x128xf32>, vector<2x128xf32> -> vector<2x128xf32>
    %107 = arith.addf %101, %106 : vector<2x128xf32>
    %c0_72 = arith.constant 0 : index
    %c0_73 = arith.constant 0 : index
    %c0_74 = arith.constant 0 : index
    %108 = vector.load %arg10[%c0_72, %c0_73, %c0_74] : memref<1x2x128xf32, #tpu.memory_space<vmem>>, vector<1x2x128xf32>
    %109 = vector.shape_cast %108 : vector<1x2x128xf32> to vector<2x128xf32>
    %110 = vector.shape_cast %107 : vector<2x128xf32> to vector<1x2x128xf32>
    tpu.vector_store %arg10[%c0_72, %c0_73, %c0_74], %110 {strides = array<i32>} : memref<1x2x128xf32, #tpu.memory_space<vmem>>, vector<1x2x128xf32>,
    return
  }
  func.func @transform_0(%arg0: i32, %arg1: i32) -> (i32, i32, i32) {
    %c0_i32 = arith.constant 0 : i32
    %c0_i32_0 = arith.constant 0 : i32
    return %arg0, %arg1, %c0_i32 : i32, i32, i32
  }
  func.func @transform_1(%arg0: i32, %arg1: i32) -> (i32, i32) {
    %c0_i32 = arith.constant 0 : i32
    %c0_i32_0 = arith.constant 0 : i32
    %c0_i32_1 = arith.constant 0 : i32
    return %c0_i32, %c0_i32_0 : i32, i32
  }
  func.func @transform_2(%arg0: i32, %arg1: i32) -> (i32, i32) {
    %c0_i32 = arith.constant 0 : i32
    %c0_i32_0 = arith.constant 0 : i32
    %c0_i32_1 = arith.constant 0 : i32
    return %c0_i32, %c0_i32_0 : i32, i32
  }
  func.func @transform_3(%arg0: i32, %arg1: i32) -> (i32, i32) {
    %c0_i32 = arith.constant 0 : i32
    %c0_i32_0 = arith.constant 0 : i32
    %c0_i32_1 = arith.constant 0 : i32
    return %c0_i32, %c0_i32_0 : i32, i32
  }
  func.func @transform_4(%arg0: i32, %arg1: i32) -> (i32, i32) {
    %c0_i32 = arith.constant 0 : i32
    %c0_i32_0 = arith.constant 0 : i32
    %c0_i32_1 = arith.constant 0 : i32
    return %c0_i32, %c0_i32_0 : i32, i32
  }
  func.func @transform_5(%arg0: i32, %arg1: i32) -> (i32, i32, i32) {
    %c0_i32 = arith.constant 0 : i32
    %c0_i32_0 = arith.constant 0 : i32
    %c0_i32_1 = arith.constant 0 : i32
    %c0_i32_2 = arith.constant 0 : i32
    return %c0_i32, %c0_i32_0, %c0_i32_1 : i32, i32, i32
  }
  func.func @transform_6(%arg0: i32, %arg1: i32) -> (i32, i32, i32, i32) {
    %c0_i32 = arith.constant 0 : i32
    %c0_i32_0 = arith.constant 0 : i32
    %c0_i32_1 = arith.constant 0 : i32
    return %c0_i32, %arg0, %arg1, %c0_i32_0 : i32, i32, i32, i32
  }
  func.func @transform_7(%arg0: i32, %arg1: i32) -> (i32, i32, i32) {
    %c0_i32 = arith.constant 0 : i32
    %c0_i32_0 = arith.constant 0 : i32
    return %arg0, %arg1, %c0_i32 : i32, i32, i32
  }
  func.func @transform_8(%arg0: i32, %arg1: i32) -> (i32, i32, i32) {
    %c0_i32 = arith.constant 0 : i32
    %c0_i32_0 = arith.constant 0 : i32
    return %arg0, %arg1, %c0_i32 : i32, i32, i32
  }
}

</mosaic_0001>

<llo_original>
// kernel: tpu_custom_call.1
$region0: #{tpu_custom_call.1}
  #allocation0 [shape = 'u32[]', space=smem, size = 0x4, offset = 0x4, fixed_abs, tag = 'smem constant byte address 0x4 - core index']
  #allocation1 [shape = 'u32[144,128]{1,0:T(1,128)}', space=vmem, size = 0x12000, scoped, tag = 'internal scratch']
  %s0 = inlined_call_operand.hbm [shape: f32[8,2,128], index: 0, kind: input, shape index: {}]
  %s1 = inlined_call_operand.vmem [shape: f32[128,32], index: 1, kind: input, shape index: {}]
  %s2 = inlined_call_operand.vmem [shape: f32[128,128], index: 2, kind: input, shape index: {}]
  %s3 = inlined_call_operand.hbm [shape: f32[32,768], index: 3, kind: input, shape index: {}]
  %s4 = inlined_call_operand.vmem [shape: f32[4,768], index: 4, kind: input, shape index: {}]
  %s5 = inlined_call_operand.hbm [shape: f32[4,32,128], index: 5, kind: input, shape index: {}]
  %s6 = inlined_call_operand.hbm [shape: f32[2,2,2,128], index: 6, kind: output, shape index: {0}]
  %s7 = inlined_call_operand.hbm [shape: f32[8,2,128], index: 7, kind: output, shape index: {1}]
  %s8 = inlined_call_operand.hbm [shape: f32[2,2,128], index: 8, kind: output, shape index: {2}]
  %9 = xla_tuple %s6, %s7, %s8
  %s10 = sld [smem:[#allocation0]]
  $region85: #{tpu_custom_call.1} parent=0
    _
  %s12 = ssub.s32 1, %s10
  %s13 = scalar_select 0, %s12, %s10
  $region1: #{tpu_custom_call.1} parent=0
    #allocation2 [shape = 'u8[8192]{0}', space=vmem, size = 0x2000, scoped, tag = 'input window, operand 0']
    #allocation3 [shape = 's32[2]{0}', space=sflag, size = 0x8, scoped, tag = 'scoped memory for tpu_custom_call.1']
    #allocation4 [shape = 's32[2]{0}', space=sflag, size = 0x8, scoped, tag = 'scoped memory for tpu_custom_call.1']
    #allocation5 [shape = 'u8[98304]{0}', space=vmem, size = 0x18000, scoped, tag = 'input window, operand 3, single buffered']
    #allocation6 [shape = 's32[1]{0}', space=sflag, size = 0x4, scoped, tag = 'scoped memory for tpu_custom_call.1']
    #allocation7 [shape = 'u8[65536]{0}', space=vmem, size = 0x10000, scoped, tag = 'input window, operand 5, single buffered']
    #allocation8 [shape = 'u8[4096]{0}', space=vmem, size = 0x1000, scoped, tag = 'output window, operand 0']
    #allocation9 [shape = 'u8[8192]{0}', space=vmem, size = 0x2000, scoped, tag = 'output window, operand 1']
    #allocation10 [shape = 's32[2]{0}', space=sflag, size = 0x8, scoped, tag = 'scoped memory for tpu_custom_call.1']
    #allocation11 [shape = 'u8[2048]{0}', space=vmem, size = 0x800, scoped, tag = 'output window, operand 2']
    %14 = vsyncpa [#allocation3], 0
    %s15 = scalar_lea.sflag [#allocation3], 1
    %16 = vsyncpa %s15, 0
    %17 = vsyncpa [#allocation6], 0
    %18 = vsyncpa [#allocation4], 0
    %s19 = scalar_lea.sflag [#allocation4], 1
    %20 = vsyncpa %s19, 0
    %21 = vsyncpa [#allocation10], 0
    %s22 = scalar_lea.sflag [#allocation10], 1
    %23 = vsyncpa %s22, 0
    loop: start=0, step=1, limit=4
    $region2: #{tpu_custom_call.1} parent=1 // loop_pre_header
      _
    $region3: #{tpu_custom_call.1} parent=1 // loop_header
      %s25 = sphi 0, %s29
      %p26 = scmp.ge.s32.totalorder %s25, 4
      %s32 = sphi 0, %s44
      %s33 = sphi 0, %s40
      %s34 = sphi 0, %s32
      %s35 = sphi 0, %s33
      %s36 = sphi 0, %s34
      %s37 = sphi 0, %s35
      %s49 = sphi 0, %s51
      %s52 = sphi 0, %s49
      %s53 = sphi 0, %s52
      %s69 = sphi 0, %s53
      %s73 = sphi 0, %s73
      %s75 = sphi 0, %s73
      %s76 = sphi 0, %s75
      %s90 = sphi 0, %s76
      %s94 = sphi 0, %s94
      %s96 = sphi 0, %s94
      %s97 = sphi 0, %s96
      %s111 = sphi 0, %s97
      %s115 = sphi 0, %s115
      %s117 = sphi 0, %s115
      %s118 = sphi 0, %s117
      %s132 = sphi 0, %s118
      %s136 = sphi 0, %s136
      %s138 = sphi 0, %s136
      %s139 = sphi 0, %s138
      %s153 = sphi 0, %s139
      %s157 = sphi 0, %s157
      %s159 = sphi 0, %s157
      %s160 = sphi 0, %s159
      %s174 = sphi 0, %s160
      %s182 = sphi 0, %s184
      %s185 = sphi 0, %s182
      %s186 = sphi 0, %s185
      %s202 = sphi 0, %s186
      %s210 = sphi 0, %s212
      %s213 = sphi 0, %s210
      %s214 = sphi 0, %s213
      %s230 = sphi 0, %s214
      %s238 = sphi 0, %s240
      %s241 = sphi 0, %s238
      %s242 = sphi 0, %s241
      %s258 = sphi 0, %s242
    $region4: #{tpu_custom_call.1} parent=1 // loop_header_branch
      %28 = sbr.rel (%p26) target = $region8
    $region5: #{tpu_custom_call.1} parent=1 // loop_body
      %s30 = ssub.s32 %s25, 1
      %s31 = ssub.s32 %s25, 2
      %s38 = sadd.s32 1, %s33
      %p39 = scmp.ge.s32.totalorder %s38, 1
      %s40 = scalar_select %p39, 0, %s38
      %s41 = sadd.s32 1, %s32
      %s42 = scalar_select %p39, %s41, %s32
      %p43 = scmp.ge.s32.totalorder %s42, 2
      %s44 = scalar_select %p43, 0, %s42
      %s45 = ssub.s32 %s32, %s44
      %s46 = ssub.s32 %s33, %s40
      %s47 = sor.u32 %s45, %s46
      %p48 = scmp.eq.s32.totalorder %s47, 0
      %s50 = sadd.s32 %s49, 1
      %s51 = scalar_select %p48, %s49, %s50
      %p54 = pneg %p48
      %p55 = scmp.eq.s32.totalorder %s25, 1
      %p56 = por %p54, %p55
      %p57 = scmp.ne.s32.totalorder %s49, %s52
      %p58 = scmp.eq.s32.totalorder %s25, 0
      %p59 = por %p57, %p58
      %p60 = scmp.ne.s32.totalorder %s49, %s52
      %p61 = scmp.eq.s32.totalorder %s30, 1
      %p62 = por %p60, %p61
      %p63 = scmp.ne.s32.totalorder %s52, %s53
      %p64 = scmp.eq.s32.totalorder %s30, 0
      %p65 = por %p63, %p64
      %p66 = scmp.ne.s32.totalorder %s52, %s53
      %p67 = scmp.eq.s32.totalorder %s31, 1
      %p68 = por %p66, %p67
      %p70 = scmp.ne.s32.totalorder %s53, %s69
      %p71 = scmp.eq.s32.totalorder %s31, 0
      %p72 = por %p70, %p71
      %s74 = sadd.s32 %s73, 1
      %p77 = scmp.eq.s32.totalorder %s25, 1
      %p78 = scmp.ne.s32.totalorder %s73, %s75
      %p79 = scmp.eq.s32.totalorder %s25, 0
      %p80 = por %p78, %p79
      %p81 = scmp.ne.s32.totalorder %s73, %s75
      %p82 = scmp.eq.s32.totalorder %s30, 1
      %p83 = por %p81, %p82
      %p84 = scmp.ne.s32.totalorder %s75, %s76
      %p85 = scmp.eq.s32.totalorder %s30, 0
      %p86 = por %p84, %p85
      %p87 = scmp.ne.s32.totalorder %s75, %s76
      %p88 = scmp.eq.s32.totalorder %s31, 1
      %p89 = por %p87, %p88
      %p91 = scmp.ne.s32.totalorder %s76, %s90
      %p92 = scmp.eq.s32.totalorder %s31, 0
      %p93 = por %p91, %p92
      %s95 = sadd.s32 %s94, 1
      %p98 = scmp.eq.s32.totalorder %s25, 1
      %p99 = scmp.ne.s32.totalorder %s94, %s96
      %p100 = scmp.eq.s32.totalorder %s25, 0
      %p101 = por %p99, %p100
      %p102 = scmp.ne.s32.totalorder %s94, %s96
      %p103 = scmp.eq.s32.totalorder %s30, 1
      %p104 = por %p102, %p103
      %p105 = scmp.ne.s32.totalorder %s96, %s97
      %p106 = scmp.eq.s32.totalorder %s30, 0
      %p107 = por %p105, %p106
      %p108 = scmp.ne.s32.totalorder %s96, %s97
      %p109 = scmp.eq.s32.totalorder %s31, 1
      %p110 = por %p108, %p109
      %p112 = scmp.ne.s32.totalorder %s97, %s111
      %p113 = scmp.eq.s32.totalorder %s31, 0
      %p114 = por %p112, %p113
      %s116 = sadd.s32 %s115, 1
      %p119 = scmp.eq.s32.totalorder %s25, 1
      %p120 = scmp.ne.s32.totalorder %s115, %s117
      %p121 = scmp.eq.s32.totalorder %s25, 0
      %p122 = por %p120, %p121
      %p123 = scmp.ne.s32.totalorder %s115, %s117
      %p124 = scmp.eq.s32.totalorder %s30, 1
      %p125 = por %p123, %p124
      %p126 = scmp.ne.s32.totalorder %s117, %s118
      %p127 = scmp.eq.s32.totalorder %s30, 0
      %p128 = por %p126, %p127
      %p129 = scmp.ne.s32.totalorder %s117, %s118
      %p130 = scmp.eq.s32.totalorder %s31, 1
      %p131 = por %p129, %p130
      %p133 = scmp.ne.s32.totalorder %s118, %s132
      %p134 = scmp.eq.s32.totalorder %s31, 0
      %p135 = por %p133, %p134
      %s137 = sadd.s32 %s136, 1
      %p140 = scmp.eq.s32.totalorder %s25, 1
      %p141 = scmp.ne.s32.totalorder %s136, %s138
      %p142 = scmp.eq.s32.totalorder %s25, 0
      %p143 = por %p141, %p142
      %p144 = scmp.ne.s32.totalorder %s136, %s138
      %p145 = scmp.eq.s32.totalorder %s30, 1
      %p146 = por %p144, %p145
      %p147 = scmp.ne.s32.totalorder %s138, %s139
      %p148 = scmp.eq.s32.totalorder %s30, 0
      %p149 = por %p147, %p148
      %p150 = scmp.ne.s32.totalorder %s138, %s139
      %p151 = scmp.eq.s32.totalorder %s31, 1
      %p152 = por %p150, %p151
      %p154 = scmp.ne.s32.totalorder %s139, %s153
      %p155 = scmp.eq.s32.totalorder %s31, 0
      %p156 = por %p154, %p155
      %s158 = sadd.s32 %s157, 1
      %p161 = scmp.eq.s32.totalorder %s25, 1
      %p162 = scmp.ne.s32.totalorder %s157, %s159
      %p163 = scmp.eq.s32.totalorder %s25, 0
      %p164 = por %p162, %p163
      %p165 = scmp.ne.s32.totalorder %s157, %s159
      %p166 = scmp.eq.s32.totalorder %s30, 1
      %p167 = por %p165, %p166
      %p168 = scmp.ne.s32.totalorder %s159, %s160
      %p169 = scmp.eq.s32.totalorder %s30, 0
      %p170 = por %p168, %p169
      %p171 = scmp.ne.s32.totalorder %s159, %s160
      %p172 = scmp.eq.s32.totalorder %s31, 1
      %p173 = por %p171, %p172
      %p175 = scmp.ne.s32.totalorder %s160, %s174
      %p176 = scmp.eq.s32.totalorder %s31, 0
      %p177 = por %p175, %p176
      %s178 = ssub.s32 %s32, %s44
      %s179 = ssub.s32 %s33, %s40
      %s180 = sor.u32 %s178, %s179
      %p181 = scmp.eq.s32.totalorder %s180, 0
      %s183 = sadd.s32 %s182, 1
      %s184 = scalar_select %p181, %s182, %s183
      %p187 = pneg %p181
      %p188 = scmp.eq.s32.totalorder %s25, 1
      %p189 = por %p187, %p188
      %p190 = scmp.ne.s32.totalorder %s182, %s185
      %p191 = scmp.eq.s32.totalorder %s25, 0
      %p192 = por %p190, %p191
      %p193 = scmp.ne.s32.totalorder %s182, %s185
      %p194 = scmp.eq.s32.totalorder %s30, 1
      %p195 = por %p193, %p194
      %p196 = scmp.ne.s32.totalorder %s185, %s186
      %p197 = scmp.eq.s32.totalorder %s30, 0
      %p198 = por %p196, %p197
      %p199 = scmp.ne.s32.totalorder %s185, %s186
      %p200 = scmp.eq.s32.totalorder %s31, 1
      %p201 = por %p199, %p200
      %p203 = scmp.ne.s32.totalorder %s186, %s202
      %p204 = scmp.eq.s32.totalorder %s31, 0
      %p205 = por %p203, %p204
      %s206 = ssub.s32 %s32, %s44
      %s207 = ssub.s32 %s33, %s40
      %s208 = sor.u32 %s206, %s207
      %p209 = scmp.eq.s32.totalorder %s208, 0
      %s211 = sadd.s32 %s210, 1
      %s212 = scalar_select %p209, %s210, %s211
      %p215 = pneg %p209
      %p216 = scmp.eq.s32.totalorder %s25, 1
      %p217 = por %p215, %p216
      %p218 = scmp.ne.s32.totalorder %s210, %s213
      %p219 = scmp.eq.s32.totalorder %s25, 0
      %p220 = por %p218, %p219
      %p221 = scmp.ne.s32.totalorder %s210, %s213
      %p222 = scmp.eq.s32.totalorder %s30, 1
      %p223 = por %p221, %p222
      %p224 = scmp.ne.s32.totalorder %s213, %s214
      %p225 = scmp.eq.s32.totalorder %s30, 0
      %p226 = por %p224, %p225
      %p227 = scmp.ne.s32.totalorder %s213, %s214
      %p228 = scmp.eq.s32.totalorder %s31, 1
      %p229 = por %p227, %p228
      %p231 = scmp.ne.s32.totalorder %s214, %s230
      %p232 = scmp.eq.s32.totalorder %s31, 0
      %p233 = por %p231, %p232
      %s234 = ssub.s32 %s32, %s44
      %s235 = ssub.s32 %s33, %s40
      %s236 = sor.u32 %s234, %s235
      %p237 = scmp.eq.s32.totalorder %s236, 0
      %s239 = sadd.s32 %s238, 1
      %s240 = scalar_select %p237, %s238, %s239
      %p243 = pneg %p237
      %p244 = scmp.eq.s32.totalorder %s25, 1
      %p245 = por %p243, %p244
      %p246 = scmp.ne.s32.totalorder %s238, %s241
      %p247 = scmp.eq.s32.totalorder %s25, 0
      %p248 = por %p246, %p247
      %p249 = scmp.ne.s32.totalorder %s238, %s241
      %p250 = scmp.eq.s32.totalorder %s30, 1
      %p251 = por %p249, %p250
      %p252 = scmp.ne.s32.totalorder %s241, %s242
      %p253 = scmp.eq.s32.totalorder %s30, 0
      %p254 = por %p252, %p253
      %p255 = scmp.ne.s32.totalorder %s241, %s242
      %p256 = scmp.eq.s32.totalorder %s31, 1
      %p257 = por %p255, %p256
      %p259 = scmp.ne.s32.totalorder %s242, %s258
      %p260 = scmp.eq.s32.totalorder %s31, 0
      %p261 = por %p259, %p260
      %p262 = scmp.le.s32.totalorder 1, %s25
      %p263 = scmp.lt.s32.totalorder %s25, 3
      %p264 = pnand %p262, %p263
      %p265 = pneg %p264
      // Predicated region
      $region9: #{tpu_custom_call.1} parent=5 // pred_check
        _
      $region10: #{tpu_custom_call.1} parent=5 // pred_check_branch
        %267 = sbr.rel (%p264) target = $region12
      $region11: #{tpu_custom_call.1} parent=5 // pred_region
        %s268 = ssub.s32 %s25, 1
        // Predicated region
        $region13: #{tpu_custom_call.1} parent=11 // pred_check
          %p269 = pneg %p86
        $region14: #{tpu_custom_call.1} parent=11 // pred_check_branch
          %271 = sbr.rel (%p269) target = $region16
        $region15: #{tpu_custom_call.1} parent=11 // pred_region
          _
        $region16: #{tpu_custom_call.1} parent=11 // pred_fallthru
          _
        // Predicated region
        $region17: #{tpu_custom_call.1} parent=11 // pred_check
          %p272 = pneg %p107
        $region18: #{tpu_custom_call.1} parent=11 // pred_check_branch
          %274 = sbr.rel (%p272) target = $region20
        $region19: #{tpu_custom_call.1} parent=11 // pred_region
          _
        $region20: #{tpu_custom_call.1} parent=11 // pred_fallthru
          _
        // Predicated region
        $region21: #{tpu_custom_call.1} parent=11 // pred_check
          %p275 = pneg %p128
        $region22: #{tpu_custom_call.1} parent=11 // pred_check_branch
          %277 = sbr.rel (%p275) target = $region24
        $region23: #{tpu_custom_call.1} parent=11 // pred_region
          %s279 = ssub.s32 3072, 3072
          %280 = vsyncadd [#allocation6], %s279
          %s281 = sshll.u32 [#allocation5], 4
          %s282 = int_to_ptr.vmem [resolvable:$true] %s281
          %287 = dma.hbm_to_vmem [thread:$0]  %s3, 3072, %s282, [#allocation6], 768, 768, 48
        $region24: #{tpu_custom_call.1} parent=11 // pred_fallthru
          _
        // Predicated region
        $region25: #{tpu_custom_call.1} parent=11 // pred_check
          %p288 = pneg %p149
        $region26: #{tpu_custom_call.1} parent=11 // pred_check_branch
          %290 = sbr.rel (%p288) target = $region28
        $region27: #{tpu_custom_call.1} parent=11 // pred_region
          _
        $region28: #{tpu_custom_call.1} parent=11 // pred_fallthru
          _
        // Predicated region
        $region29: #{tpu_custom_call.1} parent=11 // pred_check
          %p291 = pneg %p170
        $region30: #{tpu_custom_call.1} parent=11 // pred_check_branch
          %293 = sbr.rel (%p291) target = $region32
        $region31: #{tpu_custom_call.1} parent=11 // pred_region
          %s295 = ssub.s32 2048, 2048
          %296 = vsyncadd [#allocation6], %s295
          %s297 = sshll.u32 [#allocation7], 4
          %s298 = int_to_ptr.vmem [resolvable:$true] %s297
          %303 = dma.hbm_to_vmem [thread:$0]  %s5, 2048, %s298, [#allocation6], 128, 128, 8
        $region32: #{tpu_custom_call.1} parent=11 // pred_fallthru
          _
      $region12: #{tpu_custom_call.1} parent=5 // pred_fallthru
        _
      %p304 = scmp.lt.s32.totalorder %s25, 2
      // Predicated region
      $region33: #{tpu_custom_call.1} parent=5 // pred_check
        %p305 = pneg %p304
      $region34: #{tpu_custom_call.1} parent=5 // pred_check_branch
        %307 = sbr.rel (%p305) target = $region36
      $region35: #{tpu_custom_call.1} parent=5 // pred_region
        // Predicated region
        $region37: #{tpu_custom_call.1} parent=35 // pred_check
          %p308 = pneg %p59
        $region38: #{tpu_custom_call.1} parent=35 // pred_check_branch
          %310 = sbr.rel (%p308) target = $region40
        $region39: #{tpu_custom_call.1} parent=35 // pred_region
          %s311 = sand.u32 %s49, 1
          %s312 = scalar_lea.sflag [#allocation3], %s311
          %s313 = sand.u32 %s49, 1
          %s314 = smul.addr %s313, 8
          %s315 = scalar_lea.vmem [#allocation2], %s314
          %s316 = smul.u32 4, %s32
          %s318 = ssub.s32 128, 128
          %319 = vsyncadd %s312, %s318
          %s320 = sadd.s32 %s33, %s316
          %s321 = smul.addr %s320, 32
          %s322 = scalar_lea.hbm %s0, %s321
          %s323 = sshll.u32 %s315, 4
          %s324 = int_to_ptr.vmem [resolvable:$true] %s323
          %329 = dma.hbm_to_vmem [thread:$0]  %s322, 128, %s324, %s312, 32, 32, 2
        $region40: #{tpu_custom_call.1} parent=35 // pred_fallthru
          _
      $region36: #{tpu_custom_call.1} parent=5 // pred_fallthru
        _
      %p330 = scmp.le.s32.totalorder 1, %s25
      %p331 = scmp.lt.s32.totalorder %s25, 3
      %p332 = pnand %p330, %p331
      %p333 = pneg %p332
      // Predicated region
      $region41: #{tpu_custom_call.1} parent=5 // pred_check
        _
      $region42: #{tpu_custom_call.1} parent=5 // pred_check_branch
        %335 = sbr.rel (%p332) target = $region44
      $region43: #{tpu_custom_call.1} parent=5 // pred_region
        %s336 = ssub.s32 %s25, 1
        %s337 = sand.u32 %s52, 1
        %s338 = scalar_lea.sflag [#allocation3], %s337
        %s339 = sand.u32 %s52, 1
        %s340 = smul.addr %s339, 8
        %s341 = scalar_lea.vmem [#allocation2], %s340
        // Predicated region
        $region45: #{tpu_custom_call.1} parent=43 // pred_check
          %p342 = pneg %p65
        $region46: #{tpu_custom_call.1} parent=43 // pred_check_branch
          %344 = sbr.rel (%p342) target = $region48
        $region47: #{tpu_custom_call.1} parent=43 // pred_region
          %345 = dma.done %s338, 128
        $region48: #{tpu_custom_call.1} parent=43 // pred_fallthru
          _
        // Predicated region
        $region49: #{tpu_custom_call.1} parent=43 // pred_check
          %p346 = pneg %p128
        $region50: #{tpu_custom_call.1} parent=43 // pred_check_branch
          %348 = sbr.rel (%p346) target = $region52
        $region51: #{tpu_custom_call.1} parent=43 // pred_region
          %349 = dma.done [#allocation6], 3072
        $region52: #{tpu_custom_call.1} parent=43 // pred_fallthru
          _
        // Predicated region
        $region53: #{tpu_custom_call.1} parent=43 // pred_check
          %p350 = pneg %p170
        $region54: #{tpu_custom_call.1} parent=43 // pred_check_branch
          %352 = sbr.rel (%p350) target = $region56
        $region55: #{tpu_custom_call.1} parent=43 // pred_region
          %353 = dma.done [#allocation6], 2048
        $region56: #{tpu_custom_call.1} parent=43 // pred_fallthru
          _
        %s354 = sand.u32 %s52, 1
        %s355 = scalar_lea.sflag [#allocation3], %s354
        %s356 = sand.u32 %s52, 1
        %s357 = smul.addr %s356, 8
        %s358 = scalar_lea.vmem [#allocation2], %s357
        %p359 = pneg %p65
        %p360 = pneg %p62
        %p361 = pneg %p86
        %p362 = pneg %p83
        %p363 = pneg %p107
        %p364 = pneg %p104
        %p365 = pneg %p128
        %p366 = pneg %p125
        %p367 = pneg %p149
        %p368 = pneg %p146
        %p369 = pneg %p170
        %p370 = pneg %p167
        %p371 = pneg %p198
        %p372 = pneg %p195
        %s373 = sand.u32 %s185, 1
        %s374 = scalar_lea.sflag [#allocation4], %s373
        %s375 = sand.u32 %s185, 1
        %s376 = smul.addr %s375, 4
        %s377 = scalar_lea.vmem [#allocation8], %s376
        %p378 = pneg %p226
        %p379 = pneg %p223
        %s380 = sand.u32 %s30, 1
        %s381 = scalar_lea.sflag [#allocation10], %s380
        %s382 = sand.u32 %s213, 1
        %s383 = smul.addr %s382, 8
        %s384 = scalar_lea.vmem [#allocation9], %s383
        %p385 = pneg %p254
        %p386 = pneg %p251
        %s387 = sand.u32 %s30, 1
        %s388 = scalar_lea.sflag [#allocation10], %s387
        %s389 = sand.u32 %s241, 1
        %s390 = smul.addr %s389, 2
        %s391 = scalar_lea.vmem [#allocation11], %s390
        %s392 = smul.u32 4, %s34
        %s393 = smul.u32 4, %s34
        %v394 = vld [vmem:[%s341] sm:$0x3]
        %v395 = vld [vmem:[%s341 + $0x2] sm:$0x3]
        %v396 = vld [vmem:[%s341 + $0x4] sm:$0x3]
        %v397 = vld [vmem:[%s341 + $0x6] sm:$0x3]
        %v398 = vmul.f32 %v394, %v394
        %v399 = vmul.f32 %v395, %v395
        %v400 = vmul.f32 %v396, %v396
        %v401 = vmul.f32 %v397, %v397
        %v402 = vld [vmem:[%s2] sm:$0xff]
        %v403 = vld [vmem:[%s2 + $0x8] sm:$0xff]
        %v404 = vld [vmem:[%s2 + $0x10] sm:$0xff]
        %v405 = vld [vmem:[%s2 + $0x18] sm:$0xff]
        %v406 = vld [vmem:[%s2 + $0x20] sm:$0xff]
        %v407 = vld [vmem:[%s2 + $0x28] sm:$0xff]
        %v408 = vld [vmem:[%s2 + $0x30] sm:$0xff]
        %v409 = vld [vmem:[%s2 + $0x38] sm:$0xff]
        %v410 = vld [vmem:[%s2 + $0x40] sm:$0xff]
        %v411 = vld [vmem:[%s2 + $0x48] sm:$0xff]
        %v412 = vld [vmem:[%s2 + $0x50] sm:$0xff]
        %v413 = vld [vmem:[%s2 + $0x58] sm:$0xff]
        %v414 = vld [vmem:[%s2 + $0x60] sm:$0xff]
        %v415 = vld [vmem:[%s2 + $0x68] sm:$0xff]
        %v416 = vld [vmem:[%s2 + $0x70] sm:$0xff]
        %v417 = vld [vmem:[%s2 + $0x78] sm:$0xff]
        %v422 = vcombine.low %v398, %v399
        %v423 = vcombine.low %v400, %v401
        %v425 = vunpack.c.l.s4 1983009808
        %v426 = vunpack.c.0.s8 %v425
        %v427 = vlaneseq
        %v428 = vshrl.u32 %v427, 7
        %v429 = vsub.s32 %v426, %v428
        %v430 = vrot.slane %v422, %v429
        %v432 = vunpack.c.l.s4 1983009808
        %v433 = vunpack.c.0.s8 %v432
        %v434 = vlaneseq
        %v435 = vshrl.u32 %v434, 7
        %v436 = vsub.s32 %v433, %v435
        %v437 = vrot.slane %v423, %v436
        %v438 = vcombine.low %v430, %v437
        %440 = vmatprep.subr.mxu0 0.0
        %v441 = vand.u32 %v417, 4294901760
        %442 = vmatpush1.msra.mxu0 %v441
        %443 = vmatprep.subr.mxu0 0.0
        %v444 = vand.u32 %v416, 4294901760
        %445 = vmatpush1.msra.mxu0 %v444
        %446 = vmatprep.subr.mxu0 0.0
        %v447 = vand.u32 %v415, 4294901760
        %448 = vmatpush1.msra.mxu0 %v447
        %449 = vmatprep.subr.mxu0 0.0
        %v450 = vand.u32 %v414, 4294901760
        %451 = vmatpush1.msra.mxu0 %v450
        %452 = vmatprep.subr.mxu0 0.0
        %v453 = vand.u32 %v413, 4294901760
        %454 = vmatpush1.msra.mxu0 %v453
        %455 = vmatprep.subr.mxu0 0.0
        %v456 = vand.u32 %v412, 4294901760
        %457 = vmatpush1.msra.mxu0 %v456
        %458 = vmatprep.subr.mxu0 0.0
        %v459 = vand.u32 %v411, 4294901760
        %460 = vmatpush1.msra.mxu0 %v459
        %461 = vmatprep.subr.mxu0 0.0
        %v462 = vand.u32 %v410, 4294901760
        %463 = vmatpush1.msra.mxu0 %v462
        %464 = vmatprep.subr.mxu0 0.0
        %v465 = vand.u32 %v409, 4294901760
        %466 = vmatpush1.msra.mxu0 %v465
        %467 = vmatprep.subr.mxu0 0.0
        %v468 = vand.u32 %v408, 4294901760
        %469 = vmatpush1.msra.mxu0 %v468
        %470 = vmatprep.subr.mxu0 0.0
        %v471 = vand.u32 %v407, 4294901760
        %472 = vmatpush1.msra.mxu0 %v471
        %473 = vmatprep.subr.mxu0 0.0
        %v474 = vand.u32 %v406, 4294901760
        %475 = vmatpush1.msra.mxu0 %v474
        %476 = vmatprep.subr.mxu0 0.0
        %v477 = vand.u32 %v405, 4294901760
        %478 = vmatpush1.msra.mxu0 %v477
        %479 = vmatprep.subr.mxu0 0.0
        %v480 = vand.u32 %v404, 4294901760
        %481 = vmatpush1.msra.mxu0 %v480
        %482 = vmatprep.subr.mxu0 0.0
        %v483 = vand.u32 %v403, 4294901760
        %484 = vmatpush1.msra.mxu0 %v483
        %485 = vmatprep.subr.mxu0 0.0
        %v486 = vand.u32 %v402, 4294901760
        %487 = vmatpush1.msra.mxu0 %v486
        %488 = vmatprep.subr.mxu0 0.0
        %489 = vmatpush2.msra.mxu0 0.0
        %490 = vmatprep.subr.mxu0 0.0
        %491 = vmatpush2.msra.mxu0 0.0
        %492 = vmatprep.subr.mxu0 0.0
        %493 = vmatpush2.msra.mxu0 0.0
        %494 = vmatprep.subr.mxu0 0.0
        %495 = vmatpush2.msra.mxu0 0.0
        %496 = vmatprep.subr.mxu0 0.0
        %497 = vmatpush2.msra.mxu0 0.0
        %498 = vmatprep.subr.mxu0 0.0
        %499 = vmatpush2.msra.mxu0 0.0
        %500 = vmatprep.subr.mxu0 0.0
        %501 = vmatpush2.msra.mxu0 0.0
        %502 = vmatprep.subr.mxu0 0.0
        %503 = vmatpush2.msra.mxu0 0.0
        %504 = vmatprep.subr.mxu0 0.0
        %505 = vmatpush2.msra.mxu0 0.0
        %506 = vmatprep.subr.mxu0 0.0
        %507 = vmatpush2.msra.mxu0 0.0
        %508 = vmatprep.subr.mxu0 0.0
        %509 = vmatpush2.msra.mxu0 0.0
        %510 = vmatprep.subr.mxu0 0.0
        %511 = vmatpush2.msra.mxu0 0.0
        %512 = vmatprep.subr.mxu0 0.0
        %513 = vmatpush2.msra.mxu0 0.0
        %514 = vmatprep.subr.mxu0 0.0
        %515 = vmatpush2.msra.mxu0 0.0
        %516 = vmatprep.subr.mxu0 0.0
        %517 = vmatpush2.msra.mxu0 0.0
        %518 = vmatprep.subr.mxu0 0.0
        %519 = vmatpush2.msra.mxu0 0.0
        %520 = vmatprep.mubr.f32.mxu0 0.0
        %v521 = vand.u32 %v438, 4294901760
        %v522 = vsub.f32 %v438, %v521
        %v523 = vand.u32 %v522, 4294901760
        %v524 = vsub.f32 %v522, %v523
        %v525 = vand.u32 %v524, 4294901760
        %526 = vmatmul.mubr.f32.gmra.mxu0 %v525
        %v527 = vpop.f32.mrf.mxu0
        %v528 = vadd.f32 0.0, %v527
        %v529 = vpop.f32.mrf.mxu0
        %530 = vdwg.mxu0
        %531 = vmatprep.subr.mxu0 0.0
        %v532 = vand.u32 %v417, 4294901760
        %v533 = vsub.f32 %v417, %v532
        %v534 = vand.u32 %v533, 4294901760
        %v535 = vsub.f32 %v533, %v534
        %v536 = vand.u32 %v535, 4294901760
        %537 = vmatpush1.msra.mxu0 %v536
        %538 = vmatprep.subr.mxu0 0.0
        %v539 = vand.u32 %v416, 4294901760
        %v540 = vsub.f32 %v416, %v539
        %v541 = vand.u32 %v540, 4294901760
        %v542 = vsub.f32 %v540, %v541
        %v543 = vand.u32 %v542, 4294901760
        %544 = vmatpush1.msra.mxu0 %v543
        %545 = vmatprep.subr.mxu0 0.0
        %v546 = vand.u32 %v415, 4294901760
        %v547 = vsub.f32 %v415, %v546
        %v548 = vand.u32 %v547, 4294901760
        %v549 = vsub.f32 %v547, %v548
        %v550 = vand.u32 %v549, 4294901760
        %551 = vmatpush1.msra.mxu0 %v550
        %552 = vmatprep.subr.mxu0 0.0
        %v553 = vand.u32 %v414, 4294901760
        %v554 = vsub.f32 %v414, %v553
        %v555 = vand.u32 %v554, 4294901760
        %v556 = vsub.f32 %v554, %v555
        %v557 = vand.u32 %v556, 4294901760
        %558 = vmatpush1.msra.mxu0 %v557
        %559 = vmatprep.subr.mxu0 0.0
        %v560 = vand.u32 %v413, 4294901760
        %v561 = vsub.f32 %v413, %v560
        %v562 = vand.u32 %v561, 4294901760
        %v563 = vsub.f32 %v561, %v562
        %v564 = vand.u32 %v563, 4294901760
        %565 = vmatpush1.msra.mxu0 %v564
        %566 = vmatprep.subr.mxu0 0.0
        %v567 = vand.u32 %v412, 4294901760
        %v568 = vsub.f32 %v412, %v567
        %v569 = vand.u32 %v568, 4294901760
        %v570 = vsub.f32 %v568, %v569
        %v571 = vand.u32 %v570, 4294901760
        %572 = vmatpush1.msra.mxu0 %v571
        %573 = vmatprep.subr.mxu0 0.0
        %v574 = vand.u32 %v411, 4294901760
        %v575 = vsub.f32 %v411, %v574
        %v576 = vand.u32 %v575, 4294901760
        %v577 = vsub.f32 %v575, %v576
        %v578 = vand.u32 %v577, 4294901760
        %579 = vmatpush1.msra.mxu0 %v578
        %580 = vmatprep.subr.mxu0 0.0
        %v581 = vand.u32 %v410, 4294901760
        %v582 = vsub.f32 %v410, %v581
        %v583 = vand.u32 %v582, 4294901760
        %v584 = vsub.f32 %v582, %v583
        %v585 = vand.u32 %v584, 4294901760
        %586 = vmatpush1.msra.mxu0 %v585
        %587 = vmatprep.subr.mxu0 0.0
        %v588 = vand.u32 %v409, 4294901760
        %v589 = vsub.f32 %v409, %v588
        %v590 = vand.u32 %v589, 4294901760
        %v591 = vsub.f32 %v589, %v590
        %v592 = vand.u32 %v591, 4294901760
        %593 = vmatpush1.msra.mxu0 %v592
        %594 = vmatprep.subr.mxu0 0.0
        %v595 = vand.u32 %v408, 4294901760
        %v596 = vsub.f32 %v408, %v595
        %v597 = vand.u32 %v596, 4294901760
        %v598 = vsub.f32 %v596, %v597
        %v599 = vand.u32 %v598, 4294901760
        %600 = vmatpush1.msra.mxu0 %v599
        %601 = vmatprep.subr.mxu0 0.0
        %v602 = vand.u32 %v407, 4294901760
        %v603 = vsub.f32 %v407, %v602
        %v604 = vand.u32 %v603, 4294901760
        %v605 = vsub.f32 %v603, %v604
        %v606 = vand.u32 %v605, 4294901760
        %607 = vmatpush1.msra.mxu0 %v606
        %608 = vmatprep.subr.mxu0 0.0
        %v609 = vand.u32 %v406, 4294901760
        %v610 = vsub.f32 %v406, %v609
        %v611 = vand.u32 %v610, 4294901760
        %v612 = vsub.f32 %v610, %v611
        %v613 = vand.u32 %v612, 4294901760
        %614 = vmatpush1.msra.mxu0 %v613
        %615 = vmatprep.subr.mxu0 0.0
        %v616 = vand.u32 %v405, 4294901760
        %v617 = vsub.f32 %v405, %v616
        %v618 = vand.u32 %v617, 4294901760
        %v619 = vsub.f32 %v617, %v618
        %v620 = vand.u32 %v619, 4294901760
        %621 = vmatpush1.msra.mxu0 %v620
        %622 = vmatprep.subr.mxu0 0.0
        %v623 = vand.u32 %v404, 4294901760
        %v624 = vsub.f32 %v404, %v623
        %v625 = vand.u32 %v624, 4294901760
        %v626 = vsub.f32 %v624, %v625
        %v627 = vand.u32 %v626, 4294901760
        %628 = vmatpush1.msra.mxu0 %v627
        %629 = vmatprep.subr.mxu0 0.0
        %v630 = vand.u32 %v403, 4294901760
        %v631 = vsub.f32 %v403, %v630
        %v632 = vand.u32 %v631, 4294901760
        %v633 = vsub.f32 %v631, %v632
        %v634 = vand.u32 %v633, 4294901760
        %635 = vmatpush1.msra.mxu0 %v634
        %636 = vmatprep.subr.mxu0 0.0
        %v637 = vand.u32 %v402, 4294901760
        %v638 = vsub.f32 %v402, %v637
        %v639 = vand.u32 %v638, 4294901760
        %v640 = vsub.f32 %v638, %v639
        %v641 = vand.u32 %v640, 4294901760
        %642 = vmatpush1.msra.mxu0 %v641
        %643 = vmatprep.subr.mxu0 0.0
        %644 = vmatpush2.msra.mxu0 0.0
        %645 = vmatprep.subr.mxu0 0.0
        %646 = vmatpush2.msra.mxu0 0.0
        %647 = vmatprep.subr.mxu0 0.0
        %648 = vmatpush2.msra.mxu0 0.0
        %649 = vmatprep.subr.mxu0 0.0
        %650 = vmatpush2.msra.mxu0 0.0
        %651 = vmatprep.subr.mxu0 0.0
        %652 = vmatpush2.msra.mxu0 0.0
        %653 = vmatprep.subr.mxu0 0.0
        %654 = vmatpush2.msra.mxu0 0.0
        %655 = vmatprep.subr.mxu0 0.0
        %656 = vmatpush2.msra.mxu0 0.0
        %657 = vmatprep.subr.mxu0 0.0
        %658 = vmatpush2.msra.mxu0 0.0
        %659 = vmatprep.subr.mxu0 0.0
        %660 = vmatpush2.msra.mxu0 0.0
        %661 = vmatprep.subr.mxu0 0.0
        %662 = vmatpush2.msra.mxu0 0.0
        %663 = vmatprep.subr.mxu0 0.0
        %664 = vmatpush2.msra.mxu0 0.0
        %665 = vmatprep.subr.mxu0 0.0
        %666 = vmatpush2.msra.mxu0 0.0
        %667 = vmatprep.subr.mxu0 0.0
        %668 = vmatpush2.msra.mxu0 0.0
        %669 = vmatprep.subr.mxu0 0.0
        %670 = vmatpush2.msra.mxu0 0.0
        %671 = vmatprep.subr.mxu0 0.0
        %672 = vmatpush2.msra.mxu0 0.0
        %673 = vmatprep.subr.mxu0 0.0
        %674 = vmatpush2.msra.mxu0 0.0
        %675 = vmatprep.mubr.f32.mxu0 0.0
        %v676 = vand.u32 %v438, 4294901760
        %677 = vmatmul.mubr.f32.gmra.mxu0 %v676
        %v678 = vpop.f32.mrf.mxu0
        %v679 = vadd.f32 %v528, %v678
        %v680 = vpop.f32.mrf.mxu0
        %681 = vdwg.mxu0
        %682 = vmatprep.subr.mxu0 0.0
        %v683 = vand.u32 %v417, 4294901760
        %v684 = vsub.f32 %v417, %v683
        %685 = vmatpush1.msra.mxu0 %v684
        %686 = vmatprep.subr.mxu0 0.0
        %v687 = vand.u32 %v416, 4294901760
        %v688 = vsub.f32 %v416, %v687
        %689 = vmatpush1.msra.mxu0 %v688
        %690 = vmatprep.subr.mxu0 0.0
        %v691 = vand.u32 %v415, 4294901760
        %v692 = vsub.f32 %v415, %v691
        %693 = vmatpush1.msra.mxu0 %v692
        %694 = vmatprep.subr.mxu0 0.0
        %v695 = vand.u32 %v414, 4294901760
        %v696 = vsub.f32 %v414, %v695
        %697 = vmatpush1.msra.mxu0 %v696
        %698 = vmatprep.subr.mxu0 0.0
        %v699 = vand.u32 %v413, 4294901760
        %v700 = vsub.f32 %v413, %v699
        %701 = vmatpush1.msra.mxu0 %v700
        %702 = vmatprep.subr.mxu0 0.0
        %v703 = vand.u32 %v412, 4294901760
        %v704 = vsub.f32 %v412, %v703
        %705 = vmatpush1.msra.mxu0 %v704
        %706 = vmatprep.subr.mxu0 0.0
        %v707 = vand.u32 %v411, 4294901760
        %v708 = vsub.f32 %v411, %v707
        %709 = vmatpush1.msra.mxu0 %v708
        %710 = vmatprep.subr.mxu0 0.0
        %v711 = vand.u32 %v410, 4294901760
        %v712 = vsub.f32 %v410, %v711
        %713 = vmatpush1.msra.mxu0 %v712
        %714 = vmatprep.subr.mxu0 0.0
        %v715 = vand.u32 %v409, 4294901760
        %v716 = vsub.f32 %v409, %v715
        %717 = vmatpush1.msra.mxu0 %v716
        %718 = vmatprep.subr.mxu0 0.0
        %v719 = vand.u32 %v408, 4294901760
        %v720 = vsub.f32 %v408, %v719
        %721 = vmatpush1.msra.mxu0 %v720
        %722 = vmatprep.subr.mxu0 0.0
        %v723 = vand.u32 %v407, 4294901760
        %v724 = vsub.f32 %v407, %v723
        %725 = vmatpush1.msra.mxu0 %v724
        %726 = vmatprep.subr.mxu0 0.0
        %v727 = vand.u32 %v406, 4294901760
        %v728 = vsub.f32 %v406, %v727
        %729 = vmatpush1.msra.mxu0 %v728
        %730 = vmatprep.subr.mxu0 0.0
        %v731 = vand.u32 %v405, 4294901760
        %v732 = vsub.f32 %v405, %v731
        %733 = vmatpush1.msra.mxu0 %v732
        %734 = vmatprep.subr.mxu0 0.0
        %v735 = vand.u32 %v404, 4294901760
        %v736 = vsub.f32 %v404, %v735
        %737 = vmatpush1.msra.mxu0 %v736
        %738 = vmatprep.subr.mxu0 0.0
        %v739 = vand.u32 %v403, 4294901760
        %v740 = vsub.f32 %v403, %v739
        %741 = vmatpush1.msra.mxu0 %v740
        %742 = vmatprep.subr.mxu0 0.0
        %v743 = vand.u32 %v402, 4294901760
        %v744 = vsub.f32 %v402, %v743
        %745 = vmatpush1.msra.mxu0 %v744
        %746 = vmatprep.subr.mxu0 0.0
        %747 = vmatpush2.msra.mxu0 0.0
        %748 = vmatprep.subr.mxu0 0.0
        %749 = vmatpush2.msra.mxu0 0.0
        %750 = vmatprep.subr.mxu0 0.0
        %751 = vmatpush2.msra.mxu0 0.0
        %752 = vmatprep.subr.mxu0 0.0
        %753 = vmatpush2.msra.mxu0 0.0
        %754 = vmatprep.subr.mxu0 0.0
        %755 = vmatpush2.msra.mxu0 0.0
        %756 = vmatprep.subr.mxu0 0.0
        %757 = vmatpush2.msra.mxu0 0.0
        %758 = vmatprep.subr.mxu0 0.0
        %759 = vmatpush2.msra.mxu0 0.0
        %760 = vmatprep.subr.mxu0 0.0
        %761 = vmatpush2.msra.mxu0 0.0
        %762 = vmatprep.subr.mxu0 0.0
        %763 = vmatpush2.msra.mxu0 0.0
        %764 = vmatprep.subr.mxu0 0.0
        %765 = vmatpush2.msra.mxu0 0.0
        %766 = vmatprep.subr.mxu0 0.0
        %767 = vmatpush2.msra.mxu0 0.0
        %768 = vmatprep.subr.mxu0 0.0
        %769 = vmatpush2.msra.mxu0 0.0
        %770 = vmatprep.subr.mxu0 0.0
        %771 = vmatpush2.msra.mxu0 0.0
        %772 = vmatprep.subr.mxu0 0.0
        %773 = vmatpush2.msra.mxu0 0.0
        %774 = vmatprep.subr.mxu0 0.0
        %775 = vmatpush2.msra.mxu0 0.0
        %776 = vmatprep.subr.mxu0 0.0
        %777 = vmatpush2.msra.mxu0 0.0
        %778 = vmatprep.mubr.f32.mxu0 0.0
        %v779 = vand.u32 %v438, 4294901760
        %v780 = vsub.f32 %v438, %v779
        %781 = vmatmul.mubr.f32.gmra.mxu0 %v780
        %v782 = vpop.f32.mrf.mxu0
        %v783 = vadd.f32 %v679, %v782
        %v784 = vpop.f32.mrf.mxu0
        %785 = vdwg.mxu0
        %786 = vmatprep.subr.mxu0 0.0
        %v787 = vand.u32 %v417, 4294901760
        %788 = vmatpush1.msra.mxu0 %v787
        %789 = vmatprep.subr.mxu0 0.0
        %v790 = vand.u32 %v416, 4294901760
        %791 = vmatpush1.msra.mxu0 %v790
        %792 = vmatprep.subr.mxu0 0.0
        %v793 = vand.u32 %v415, 4294901760
        %794 = vmatpush1.msra.mxu0 %v793
        %795 = vmatprep.subr.mxu0 0.0
        %v796 = vand.u32 %v414, 4294901760
        %797 = vmatpush1.msra.mxu0 %v796
        %798 = vmatprep.subr.mxu0 0.0
        %v799 = vand.u32 %v413, 4294901760
        %800 = vmatpush1.msra.mxu0 %v799
        %801 = vmatprep.subr.mxu0 0.0
        %v802 = vand.u32 %v412, 4294901760
        %803 = vmatpush1.msra.mxu0 %v802
        %804 = vmatprep.subr.mxu0 0.0
        %v805 = vand.u32 %v411, 4294901760
        %806 = vmatpush1.msra.mxu0 %v805
        %807 = vmatprep.subr.mxu0 0.0
        %v808 = vand.u32 %v410, 4294901760
        %809 = vmatpush1.msra.mxu0 %v808
        %810 = vmatprep.subr.mxu0 0.0
        %v811 = vand.u32 %v409, 4294901760
        %812 = vmatpush1.msra.mxu0 %v811
        %813 = vmatprep.subr.mxu0 0.0
        %v814 = vand.u32 %v408, 4294901760
        %815 = vmatpush1.msra.mxu0 %v814
        %816 = vmatprep.subr.mxu0 0.0
        %v817 = vand.u32 %v407, 4294901760
        %818 = vmatpush1.msra.mxu0 %v817
        %819 = vmatprep.subr.mxu0 0.0
        %v820 = vand.u32 %v406, 4294901760
        %821 = vmatpush1.msra.mxu0 %v820
        %822 = vmatprep.subr.mxu0 0.0
        %v823 = vand.u32 %v405, 4294901760
        %824 = vmatpush1.msra.mxu0 %v823
        %825 = vmatprep.subr.mxu0 0.0
        %v826 = vand.u32 %v404, 4294901760
        %827 = vmatpush1.msra.mxu0 %v826
        %828 = vmatprep.subr.mxu0 0.0
        %v829 = vand.u32 %v403, 4294901760
        %830 = vmatpush1.msra.mxu0 %v829
        %831 = vmatprep.subr.mxu0 0.0
        %v832 = vand.u32 %v402, 4294901760
        %833 = vmatpush1.msra.mxu0 %v832
        %834 = vmatprep.subr.mxu0 0.0
        %835 = vmatpush2.msra.mxu0 0.0
        %836 = vmatprep.subr.mxu0 0.0
        %837 = vmatpush2.msra.mxu0 0.0
        %838 = vmatprep.subr.mxu0 0.0
        %839 = vmatpush2.msra.mxu0 0.0
        %840 = vmatprep.subr.mxu0 0.0
        %841 = vmatpush2.msra.mxu0 0.0
        %842 = vmatprep.subr.mxu0 0.0
        %843 = vmatpush2.msra.mxu0 0.0
        %844 = vmatprep.subr.mxu0 0.0
        %845 = vmatpush2.msra.mxu0 0.0
        %846 = vmatprep.subr.mxu0 0.0
        %847 = vmatpush2.msra.mxu0 0.0
        %848 = vmatprep.subr.mxu0 0.0
        %849 = vmatpush2.msra.mxu0 0.0
        %850 = vmatprep.subr.mxu0 0.0
        %851 = vmatpush2.msra.mxu0 0.0
        %852 = vmatprep.subr.mxu0 0.0
        %853 = vmatpush2.msra.mxu0 0.0
        %854 = vmatprep.subr.mxu0 0.0
        %855 = vmatpush2.msra.mxu0 0.0
        %856 = vmatprep.subr.mxu0 0.0
        %857 = vmatpush2.msra.mxu0 0.0
        %858 = vmatprep.subr.mxu0 0.0
        %859 = vmatpush2.msra.mxu0 0.0
        %860 = vmatprep.subr.mxu0 0.0
        %861 = vmatpush2.msra.mxu0 0.0
        %862 = vmatprep.subr.mxu0 0.0
        %863 = vmatpush2.msra.mxu0 0.0
        %864 = vmatprep.subr.mxu0 0.0
        %865 = vmatpush2.msra.mxu0 0.0
        %866 = vmatprep.mubr.f32.mxu0 0.0
        %v867 = vand.u32 %v438, 4294901760
        %v868 = vsub.f32 %v438, %v867
        %v869 = vand.u32 %v868, 4294901760
        %870 = vmatmul.mubr.f32.gmra.mxu0 %v869
        %v871 = vpop.f32.mrf.mxu0
        %v872 = vadd.f32 %v783, %v871
        %v873 = vpop.f32.mrf.mxu0
        %874 = vdwg.mxu0
        %875 = vmatprep.subr.mxu0 0.0
        %v876 = vand.u32 %v417, 4294901760
        %v877 = vsub.f32 %v417, %v876
        %v878 = vand.u32 %v877, 4294901760
        %879 = vmatpush1.msra.mxu0 %v878
        %880 = vmatprep.subr.mxu0 0.0
        %v881 = vand.u32 %v416, 4294901760
        %v882 = vsub.f32 %v416, %v881
        %v883 = vand.u32 %v882, 4294901760
        %884 = vmatpush1.msra.mxu0 %v883
        %885 = vmatprep.subr.mxu0 0.0
        %v886 = vand.u32 %v415, 4294901760
        %v887 = vsub.f32 %v415, %v886
        %v888 = vand.u32 %v887, 4294901760
        %889 = vmatpush1.msra.mxu0 %v888
        %890 = vmatprep.subr.mxu0 0.0
        %v891 = vand.u32 %v414, 4294901760
        %v892 = vsub.f32 %v414, %v891
        %v893 = vand.u32 %v892, 4294901760
        %894 = vmatpush1.msra.mxu0 %v893
        %895 = vmatprep.subr.mxu0 0.0
        %v896 = vand.u32 %v413, 4294901760
        %v897 = vsub.f32 %v413, %v896
        %v898 = vand.u32 %v897, 4294901760
        %899 = vmatpush1.msra.mxu0 %v898
        %900 = vmatprep.subr.mxu0 0.0
        %v901 = vand.u32 %v412, 4294901760
        %v902 = vsub.f32 %v412, %v901
        %v903 = vand.u32 %v902, 4294901760
        %904 = vmatpush1.msra.mxu0 %v903
        %905 = vmatprep.subr.mxu0 0.0
        %v906 = vand.u32 %v411, 4294901760
        %v907 = vsub.f32 %v411, %v906
        %v908 = vand.u32 %v907, 4294901760
        %909 = vmatpush1.msra.mxu0 %v908
        %910 = vmatprep.subr.mxu0 0.0
        %v911 = vand.u32 %v410, 4294901760
        %v912 = vsub.f32 %v410, %v911
        %v913 = vand.u32 %v912, 4294901760
        %914 = vmatpush1.msra.mxu0 %v913
        %915 = vmatprep.subr.mxu0 0.0
        %v916 = vand.u32 %v409, 4294901760
        %v917 = vsub.f32 %v409, %v916
        %v918 = vand.u32 %v917, 4294901760
        %919 = vmatpush1.msra.mxu0 %v918
        %920 = vmatprep.subr.mxu0 0.0
        %v921 = vand.u32 %v408, 4294901760
        %v922 = vsub.f32 %v408, %v921
        %v923 = vand.u32 %v922, 4294901760
        %924 = vmatpush1.msra.mxu0 %v923
        %925 = vmatprep.subr.mxu0 0.0
        %v926 = vand.u32 %v407, 4294901760
        %v927 = vsub.f32 %v407, %v926
        %v928 = vand.u32 %v927, 4294901760
        %929 = vmatpush1.msra.mxu0 %v928
        %930 = vmatprep.subr.mxu0 0.0
        %v931 = vand.u32 %v406, 4294901760
        %v932 = vsub.f32 %v406, %v931
        %v933 = vand.u32 %v932, 4294901760
        %934 = vmatpush1.msra.mxu0 %v933
        %935 = vmatprep.subr.mxu0 0.0
        %v936 = vand.u32 %v405, 4294901760
        %v937 = vsub.f32 %v405, %v936
        %v938 = vand.u32 %v937, 4294901760
        %939 = vmatpush1.msra.mxu0 %v938
        %940 = vmatprep.subr.mxu0 0.0
        %v941 = vand.u32 %v404, 4294901760
        %v942 = vsub.f32 %v404, %v941
        %v943 = vand.u32 %v942, 4294901760
        %944 = vmatpush1.msra.mxu0 %v943
        %945 = vmatprep.subr.mxu0 0.0
        %v946 = vand.u32 %v403, 4294901760
        %v947 = vsub.f32 %v403, %v946
        %v948 = vand.u32 %v947, 4294901760
        %949 = vmatpush1.msra.mxu0 %v948
        %950 = vmatprep.subr.mxu0 0.0
        %v951 = vand.u32 %v402, 4294901760
        %v952 = vsub.f32 %v402, %v951
        %v953 = vand.u32 %v952, 4294901760
        %954 = vmatpush1.msra.mxu0 %v953
        %955 = vmatprep.subr.mxu0 0.0
        %956 = vmatpush2.msra.mxu0 0.0
        %957 = vmatprep.subr.mxu0 0.0
        %958 = vmatpush2.msra.mxu0 0.0
        %959 = vmatprep.subr.mxu0 0.0
        %960 = vmatpush2.msra.mxu0 0.0
        %961 = vmatprep.subr.mxu0 0.0
        %962 = vmatpush2.msra.mxu0 0.0
        %963 = vmatprep.subr.mxu0 0.0
        %964 = vmatpush2.msra.mxu0 0.0
        %965 = vmatprep.subr.mxu0 0.0
        %966 = vmatpush2.msra.mxu0 0.0
        %967 = vmatprep.subr.mxu0 0.0
        %968 = vmatpush2.msra.mxu0 0.0
        %969 = vmatprep.subr.mxu0 0.0
        %970 = vmatpush2.msra.mxu0 0.0
        %971 = vmatprep.subr.mxu0 0.0
        %972 = vmatpush2.msra.mxu0 0.0
        %973 = vmatprep.subr.mxu0 0.0
        %974 = vmatpush2.msra.mxu0 0.0
        %975 = vmatprep.subr.mxu0 0.0
        %976 = vmatpush2.msra.mxu0 0.0
        %977 = vmatprep.subr.mxu0 0.0
        %978 = vmatpush2.msra.mxu0 0.0
        %979 = vmatprep.subr.mxu0 0.0
        %980 = vmatpush2.msra.mxu0 0.0
        %981 = vmatprep.subr.mxu0 0.0
        %982 = vmatpush2.msra.mxu0 0.0
        %983 = vmatprep.subr.mxu0 0.0
        %984 = vmatpush2.msra.mxu0 0.0
        %985 = vmatprep.subr.mxu0 0.0
        %986 = vmatpush2.msra.mxu0 0.0
        %987 = vmatprep.mubr.f32.mxu0 0.0
        %v988 = vand.u32 %v438, 4294901760
        %989 = vmatmul.mubr.f32.gmra.mxu0 %v988
        %v990 = vpop.f32.mrf.mxu0
        %v991 = vadd.f32 %v872, %v990
        %v992 = vpop.f32.mrf.mxu0
        %993 = vdwg.mxu0
        %994 = vmatprep.subr.mxu0 0.0
        %v995 = vand.u32 %v417, 4294901760
        %996 = vmatpush1.msra.mxu0 %v995
        %997 = vmatprep.subr.mxu0 0.0
        %v998 = vand.u32 %v416, 4294901760
        %999 = vmatpush1.msra.mxu0 %v998
        %1000 = vmatprep.subr.mxu0 0.0
        %v1001 = vand.u32 %v415, 4294901760
        %1002 = vmatpush1.msra.mxu0 %v1001
        %1003 = vmatprep.subr.mxu0 0.0
        %v1004 = vand.u32 %v414, 4294901760
        %1005 = vmatpush1.msra.mxu0 %v1004
        %1006 = vmatprep.subr.mxu0 0.0
        %v1007 = vand.u32 %v413, 4294901760
        %1008 = vmatpush1.msra.mxu0 %v1007
        %1009 = vmatprep.subr.mxu0 0.0
        %v1010 = vand.u32 %v412, 4294901760
        %1011 = vmatpush1.msra.mxu0 %v1010
        %1012 = vmatprep.subr.mxu0 0.0
        %v1013 = vand.u32 %v411, 4294901760
        %1014 = vmatpush1.msra.mxu0 %v1013
        %1015 = vmatprep.subr.mxu0 0.0
        %v1016 = vand.u32 %v410, 4294901760
        %1017 = vmatpush1.msra.mxu0 %v1016
        %1018 = vmatprep.subr.mxu0 0.0
        %v1019 = vand.u32 %v409, 4294901760
        %1020 = vmatpush1.msra.mxu0 %v1019
        %1021 = vmatprep.subr.mxu0 0.0
        %v1022 = vand.u32 %v408, 4294901760
        %1023 = vmatpush1.msra.mxu0 %v1022
        %1024 = vmatprep.subr.mxu0 0.0
        %v1025 = vand.u32 %v407, 4294901760
        %1026 = vmatpush1.msra.mxu0 %v1025
        %1027 = vmatprep.subr.mxu0 0.0
        %v1028 = vand.u32 %v406, 4294901760
        %1029 = vmatpush1.msra.mxu0 %v1028
        %1030 = vmatprep.subr.mxu0 0.0
        %v1031 = vand.u32 %v405, 4294901760
        %1032 = vmatpush1.msra.mxu0 %v1031
        %1033 = vmatprep.subr.mxu0 0.0
        %v1034 = vand.u32 %v404, 4294901760
        %1035 = vmatpush1.msra.mxu0 %v1034
        %1036 = vmatprep.subr.mxu0 0.0
        %v1037 = vand.u32 %v403, 4294901760
        %1038 = vmatpush1.msra.mxu0 %v1037
        %1039 = vmatprep.subr.mxu0 0.0
        %v1040 = vand.u32 %v402, 4294901760
        %1041 = vmatpush1.msra.mxu0 %v1040
        %1042 = vmatprep.subr.mxu0 0.0
        %1043 = vmatpush2.msra.mxu0 0.0
        %1044 = vmatprep.subr.mxu0 0.0
        %1045 = vmatpush2.msra.mxu0 0.0
        %1046 = vmatprep.subr.mxu0 0.0
        %1047 = vmatpush2.msra.mxu0 0.0
        %1048 = vmatprep.subr.mxu0 0.0
        %1049 = vmatpush2.msra.mxu0 0.0
        %1050 = vmatprep.subr.mxu0 0.0
        %1051 = vmatpush2.msra.mxu0 0.0
        %1052 = vmatprep.subr.mxu0 0.0
        %1053 = vmatpush2.msra.mxu0 0.0
        %1054 = vmatprep.subr.mxu0 0.0
        %1055 = vmatpush2.msra.mxu0 0.0
        %1056 = vmatprep.subr.mxu0 0.0
        %1057 = vmatpush2.msra.mxu0 0.0
        %1058 = vmatprep.subr.mxu0 0.0
        %1059 = vmatpush2.msra.mxu0 0.0
        %1060 = vmatprep.subr.mxu0 0.0
        %1061 = vmatpush2.msra.mxu0 0.0
        %1062 = vmatprep.subr.mxu0 0.0
        %1063 = vmatpush2.msra.mxu0 0.0
        %1064 = vmatprep.subr.mxu0 0.0
        %1065 = vmatpush2.msra.mxu0 0.0
        %1066 = vmatprep.subr.mxu0 0.0
        %1067 = vmatpush2.msra.mxu0 0.0
        %1068 = vmatprep.subr.mxu0 0.0
        %1069 = vmatpush2.msra.mxu0 0.0
        %1070 = vmatprep.subr.mxu0 0.0
        %1071 = vmatpush2.msra.mxu0 0.0
        %1072 = vmatprep.subr.mxu0 0.0
        %1073 = vmatpush2.msra.mxu0 0.0
        %1074 = vmatprep.mubr.f32.mxu0 0.0
        %v1075 = vand.u32 %v438, 4294901760
        %1076 = vmatmul.mubr.f32.gmra.mxu0 %v1075
        %v1077 = vpop.f32.mrf.mxu0
        %v1078 = vadd.f32 %v991, %v1077
        %v1079 = vpop.f32.mrf.mxu0
        %1080 = vdwg.mxu0
        %v1081 = vmax.f32 %v1078, 1e-24
        %v1082 = vrsqrt.pop %v1081
        %v1084 = vcombine.high %v1082, %v1082
        %v1086 = vunpack.c.l.s4 1983009808
        %v1087 = vunpack.c.0.s8 %v1086
        %v1088 = vlaneseq
        %v1089 = vshrl.u32 %v1088, 7
        %v1090 = vsub.s32 %v1087, %v1089
        %v1091 = vrot.slane %v1082, %v1090
        %v1093 = vunpack.c.l.s4 1983009808
        %v1094 = vunpack.c.0.s8 %v1093
        %v1095 = vlaneseq
        %v1096 = vshrl.u32 %v1095, 7
        %v1097 = vsub.s32 %v1094, %v1096
        %v1098 = vrot.slane %v1084, %v1097
        %v1099 = vcombine.high %v1091, %v1091
        %v1100 = vcombine.high %v1098, %v1098
        %v1105 = vmul.f32 %v394, %v1091
        %v1106 = vmul.f32 %v395, %v1099
        %v1107 = vmul.f32 %v396, %v1098
        %v1108 = vmul.f32 %v397, %v1100
        %v1109 = vld [vmem:[%s1] sm:$0xff]
        %v1110 = vld [vmem:[%s1 + $0x8] sm:$0xff]
        %v1111 = vld [vmem:[%s1 + $0x10] sm:$0xff]
        %v1112 = vld [vmem:[%s1 + $0x18] sm:$0xff]
        %v1113 = vld [vmem:[%s1 + $0x20] sm:$0xff]
        %v1114 = vld [vmem:[%s1 + $0x28] sm:$0xff]
        %v1115 = vld [vmem:[%s1 + $0x30] sm:$0xff]
        %v1116 = vld [vmem:[%s1 + $0x38] sm:$0xff]
        %v1117 = vld [vmem:[%s1 + $0x40] sm:$0xff]
        %v1118 = vld [vmem:[%s1 + $0x48] sm:$0xff]
        %v1119 = vld [vmem:[%s1 + $0x50] sm:$0xff]
        %v1120 = vld [vmem:[%s1 + $0x58] sm:$0xff]
        %v1121 = vld [vmem:[%s1 + $0x60] sm:$0xff]
        %v1122 = vld [vmem:[%s1 + $0x68] sm:$0xff]
        %v1123 = vld [vmem:[%s1 + $0x70] sm:$0xff]
        %v1124 = vld [vmem:[%s1 + $0x78] sm:$0xff]
        %v1129 = vcombine.low %v1105, %v1106
        %v1130 = vcombine.low %v1107, %v1108
        %v1132 = vunpack.c.l.s4 1983009808
        %v1133 = vunpack.c.0.s8 %v1132
        %v1134 = vlaneseq
        %v1135 = vshrl.u32 %v1134, 7
        %v1136 = vsub.s32 %v1133, %v1135
        %v1137 = vrot.slane %v1129, %v1136
        %v1139 = vunpack.c.l.s4 1983009808
        %v1140 = vunpack.c.0.s8 %v1139
        %v1141 = vlaneseq
        %v1142 = vshrl.u32 %v1141, 7
        %v1143 = vsub.s32 %v1140, %v1142
        %v1144 = vrot.slane %v1130, %v1143
        %v1145 = vcombine.low %v1137, %v1144
        %1147 = vmatprep.subr.mxu0 0.0
        %v1148 = vand.u32 %v1124, 4294901760
        %1149 = vmatpush1.msra.mxu0 %v1148
        %1150 = vmatprep.subr.mxu0 0.0
        %v1151 = vand.u32 %v1123, 4294901760
        %1152 = vmatpush1.msra.mxu0 %v1151
        %1153 = vmatprep.subr.mxu0 0.0
        %v1154 = vand.u32 %v1122, 4294901760
        %1155 = vmatpush1.msra.mxu0 %v1154
        %1156 = vmatprep.subr.mxu0 0.0
        %v1157 = vand.u32 %v1121, 4294901760
        %1158 = vmatpush1.msra.mxu0 %v1157
        %1159 = vmatprep.subr.mxu0 0.0
        %v1160 = vand.u32 %v1120, 4294901760
        %1161 = vmatpush1.msra.mxu0 %v1160
        %1162 = vmatprep.subr.mxu0 0.0
        %v1163 = vand.u32 %v1119, 4294901760
        %1164 = vmatpush1.msra.mxu0 %v1163
        %1165 = vmatprep.subr.mxu0 0.0
        %v1166 = vand.u32 %v1118, 4294901760
        %1167 = vmatpush1.msra.mxu0 %v1166
        %1168 = vmatprep.subr.mxu0 0.0
        %v1169 = vand.u32 %v1117, 4294901760
        %1170 = vmatpush1.msra.mxu0 %v1169
        %1171 = vmatprep.subr.mxu0 0.0
        %v1172 = vand.u32 %v1116, 4294901760
        %1173 = vmatpush1.msra.mxu0 %v1172
        %1174 = vmatprep.subr.mxu0 0.0
        %v1175 = vand.u32 %v1115, 4294901760
        %1176 = vmatpush1.msra.mxu0 %v1175
        %1177 = vmatprep.subr.mxu0 0.0
        %v1178 = vand.u32 %v1114, 4294901760
        %1179 = vmatpush1.msra.mxu0 %v1178
        %1180 = vmatprep.subr.mxu0 0.0
        %v1181 = vand.u32 %v1113, 4294901760
        %1182 = vmatpush1.msra.mxu0 %v1181
        %1183 = vmatprep.subr.mxu0 0.0
        %v1184 = vand.u32 %v1112, 4294901760
        %1185 = vmatpush1.msra.mxu0 %v1184
        %1186 = vmatprep.subr.mxu0 0.0
        %v1187 = vand.u32 %v1111, 4294901760
        %1188 = vmatpush1.msra.mxu0 %v1187
        %1189 = vmatprep.subr.mxu0 0.0
        %v1190 = vand.u32 %v1110, 4294901760
        %1191 = vmatpush1.msra.mxu0 %v1190
        %1192 = vmatprep.subr.mxu0 0.0
        %v1193 = vand.u32 %v1109, 4294901760
        %1194 = vmatpush1.msra.mxu0 %v1193
        %1195 = vmatprep.subr.mxu0 0.0
        %1196 = vmatpush2.msra.mxu0 0.0
        %1197 = vmatprep.subr.mxu0 0.0
        %1198 = vmatpush2.msra.mxu0 0.0
        %1199 = vmatprep.subr.mxu0 0.0
        %1200 = vmatpush2.msra.mxu0 0.0
        %1201 = vmatprep.subr.mxu0 0.0
        %1202 = vmatpush2.msra.mxu0 0.0
        %1203 = vmatprep.subr.mxu0 0.0
        %1204 = vmatpush2.msra.mxu0 0.0
        %1205 = vmatprep.subr.mxu0 0.0
        %1206 = vmatpush2.msra.mxu0 0.0
        %1207 = vmatprep.subr.mxu0 0.0
        %1208 = vmatpush2.msra.mxu0 0.0
        %1209 = vmatprep.subr.mxu0 0.0
        %1210 = vmatpush2.msra.mxu0 0.0
        %1211 = vmatprep.subr.mxu0 0.0
        %1212 = vmatpush2.msra.mxu0 0.0
        %1213 = vmatprep.subr.mxu0 0.0
        %1214 = vmatpush2.msra.mxu0 0.0
        %1215 = vmatprep.subr.mxu0 0.0
        %1216 = vmatpush2.msra.mxu0 0.0
        %1217 = vmatprep.subr.mxu0 0.0
        %1218 = vmatpush2.msra.mxu0 0.0
        %1219 = vmatprep.subr.mxu0 0.0
        %1220 = vmatpush2.msra.mxu0 0.0
        %1221 = vmatprep.subr.mxu0 0.0
        %1222 = vmatpush2.msra.mxu0 0.0
        %1223 = vmatprep.subr.mxu0 0.0
        %1224 = vmatpush2.msra.mxu0 0.0
        %1225 = vmatprep.subr.mxu0 0.0
        %1226 = vmatpush2.msra.mxu0 0.0
        %1227 = vmatprep.mubr.f32.mxu0 0.0
        %v1228 = vand.u32 %v1145, 4294901760
        %v1229 = vsub.f32 %v1145, %v1228
        %v1230 = vand.u32 %v1229, 4294901760
        %v1231 = vsub.f32 %v1229, %v1230
        %v1232 = vand.u32 %v1231, 4294901760
        %1233 = vmatmul.mubr.f32.gmra.mxu0 %v1232
        %v1234 = vpop.f32.mrf.mxu0
        %v1235 = vadd.f32 0.0, %v1234
        %v1236 = vpop.f32.mrf.mxu0
        %1237 = vdwg.mxu0
        %1238 = vmatprep.subr.mxu0 0.0
        %v1239 = vand.u32 %v1124, 4294901760
        %v1240 = vsub.f32 %v1124, %v1239
        %v1241 = vand.u32 %v1240, 4294901760
        %v1242 = vsub.f32 %v1240, %v1241
        %v1243 = vand.u32 %v1242, 4294901760
        %1244 = vmatpush1.msra.mxu0 %v1243
        %1245 = vmatprep.subr.mxu0 0.0
        %v1246 = vand.u32 %v1123, 4294901760
        %v1247 = vsub.f32 %v1123, %v1246
        %v1248 = vand.u32 %v1247, 4294901760
        %v1249 = vsub.f32 %v1247, %v1248
        %v1250 = vand.u32 %v1249, 4294901760
        %1251 = vmatpush1.msra.mxu0 %v1250
        %1252 = vmatprep.subr.mxu0 0.0
        %v1253 = vand.u32 %v1122, 4294901760
        %v1254 = vsub.f32 %v1122, %v1253
        %v1255 = vand.u32 %v1254, 4294901760
        %v1256 = vsub.f32 %v1254, %v1255
        %v1257 = vand.u32 %v1256, 4294901760
        %1258 = vmatpush1.msra.mxu0 %v1257
        %1259 = vmatprep.subr.mxu0 0.0
        %v1260 = vand.u32 %v1121, 4294901760
        %v1261 = vsub.f32 %v1121, %v1260
        %v1262 = vand.u32 %v1261, 4294901760
        %v1263 = vsub.f32 %v1261, %v1262
        %v1264 = vand.u32 %v1263, 4294901760
        %1265 = vmatpush1.msra.mxu0 %v1264
        %1266 = vmatprep.subr.mxu0 0.0
        %v1267 = vand.u32 %v1120, 4294901760
        %v1268 = vsub.f32 %v1120, %v1267
        %v1269 = vand.u32 %v1268, 4294901760
        %v1270 = vsub.f32 %v1268, %v1269
        %v1271 = vand.u32 %v1270, 4294901760
        %1272 = vmatpush1.msra.mxu0 %v1271
        %1273 = vmatprep.subr.mxu0 0.0
        %v1274 = vand.u32 %v1119, 4294901760
        %v1275 = vsub.f32 %v1119, %v1274
        %v1276 = vand.u32 %v1275, 4294901760
        %v1277 = vsub.f32 %v1275, %v1276
        %v1278 = vand.u32 %v1277, 4294901760
        %1279 = vmatpush1.msra.mxu0 %v1278
        %1280 = vmatprep.subr.mxu0 0.0
        %v1281 = vand.u32 %v1118, 4294901760
        %v1282 = vsub.f32 %v1118, %v1281
        %v1283 = vand.u32 %v1282, 4294901760
        %v1284 = vsub.f32 %v1282, %v1283
        %v1285 = vand.u32 %v1284, 4294901760
        %1286 = vmatpush1.msra.mxu0 %v1285
        %1287 = vmatprep.subr.mxu0 0.0
        %v1288 = vand.u32 %v1117, 4294901760
        %v1289 = vsub.f32 %v1117, %v1288
        %v1290 = vand.u32 %v1289, 4294901760
        %v1291 = vsub.f32 %v1289, %v1290
        %v1292 = vand.u32 %v1291, 4294901760
        %1293 = vmatpush1.msra.mxu0 %v1292
        %1294 = vmatprep.subr.mxu0 0.0
        %v1295 = vand.u32 %v1116, 4294901760
        %v1296 = vsub.f32 %v1116, %v1295
        %v1297 = vand.u32 %v1296, 4294901760
        %v1298 = vsub.f32 %v1296, %v1297
        %v1299 = vand.u32 %v1298, 4294901760
        %1300 = vmatpush1.msra.mxu0 %v1299
        %1301 = vmatprep.subr.mxu0 0.0
        %v1302 = vand.u32 %v1115, 4294901760
        %v1303 = vsub.f32 %v1115, %v1302
        %v1304 = vand.u32 %v1303, 4294901760
        %v1305 = vsub.f32 %v1303, %v1304
        %v1306 = vand.u32 %v1305, 4294901760
        %1307 = vmatpush1.msra.mxu0 %v1306
        %1308 = vmatprep.subr.mxu0 0.0
        %v1309 = vand.u32 %v1114, 4294901760
        %v1310 = vsub.f32 %v1114, %v1309
        %v1311 = vand.u32 %v1310, 4294901760
        %v1312 = vsub.f32 %v1310, %v1311
        %v1313 = vand.u32 %v1312, 4294901760
        %1314 = vmatpush1.msra.mxu0 %v1313
        %1315 = vmatprep.subr.mxu0 0.0
        %v1316 = vand.u32 %v1113, 4294901760
        %v1317 = vsub.f32 %v1113, %v1316
        %v1318 = vand.u32 %v1317, 4294901760
        %v1319 = vsub.f32 %v1317, %v1318
        %v1320 = vand.u32 %v1319, 4294901760
        %1321 = vmatpush1.msra.mxu0 %v1320
        %1322 = vmatprep.subr.mxu0 0.0
        %v1323 = vand.u32 %v1112, 4294901760
        %v1324 = vsub.f32 %v1112, %v1323
        %v1325 = vand.u32 %v1324, 4294901760
        %v1326 = vsub.f32 %v1324, %v1325
        %v1327 = vand.u32 %v1326, 4294901760
        %1328 = vmatpush1.msra.mxu0 %v1327
        %1329 = vmatprep.subr.mxu0 0.0
        %v1330 = vand.u32 %v1111, 4294901760
        %v1331 = vsub.f32 %v1111, %v1330
        %v1332 = vand.u32 %v1331, 4294901760
        %v1333 = vsub.f32 %v1331, %v1332
        %v1334 = vand.u32 %v1333, 4294901760
        %1335 = vmatpush1.msra.mxu0 %v1334
        %1336 = vmatprep.subr.mxu0 0.0
        %v1337 = vand.u32 %v1110, 4294901760
        %v1338 = vsub.f32 %v1110, %v1337
        %v1339 = vand.u32 %v1338, 4294901760
        %v1340 = vsub.f32 %v1338, %v1339
        %v1341 = vand.u32 %v1340, 4294901760
        %1342 = vmatpush1.msra.mxu0 %v1341
        %1343 = vmatprep.subr.mxu0 0.0
        %v1344 = vand.u32 %v1109, 4294901760
        %v1345 = vsub.f32 %v1109, %v1344
        %v1346 = vand.u32 %v1345, 4294901760
        %v1347 = vsub.f32 %v1345, %v1346
        %v1348 = vand.u32 %v1347, 4294901760
        %1349 = vmatpush1.msra.mxu0 %v1348
        %1350 = vmatprep.subr.mxu0 0.0
        %1351 = vmatpush2.msra.mxu0 0.0
        %1352 = vmatprep.subr.mxu0 0.0
        %1353 = vmatpush2.msra.mxu0 0.0
        %1354 = vmatprep.subr.mxu0 0.0
        %1355 = vmatpush2.msra.mxu0 0.0
        %1356 = vmatprep.subr.mxu0 0.0
        %1357 = vmatpush2.msra.mxu0 0.0
        %1358 = vmatprep.subr.mxu0 0.0
        %1359 = vmatpush2.msra.mxu0 0.0
        %1360 = vmatprep.subr.mxu0 0.0
        %1361 = vmatpush2.msra.mxu0 0.0
        %1362 = vmatprep.subr.mxu0 0.0
        %1363 = vmatpush2.msra.mxu0 0.0
        %1364 = vmatprep.subr.mxu0 0.0
        %1365 = vmatpush2.msra.mxu0 0.0
        %1366 = vmatprep.subr.mxu0 0.0
        %1367 = vmatpush2.msra.mxu0 0.0
        %1368 = vmatprep.subr.mxu0 0.0
        %1369 = vmatpush2.msra.mxu0 0.0
        %1370 = vmatprep.subr.mxu0 0.0
        %1371 = vmatpush2.msra.mxu0 0.0
        %1372 = vmatprep.subr.mxu0 0.0
        %1373 = vmatpush2.msra.mxu0 0.0
        %1374 = vmatprep.subr.mxu0 0.0
        %1375 = vmatpush2.msra.mxu0 0.0
        %1376 = vmatprep.subr.mxu0 0.0
        %1377 = vmatpush2.msra.mxu0 0.0
        %1378 = vmatprep.subr.mxu0 0.0
        %1379 = vmatpush2.msra.mxu0 0.0
        %1380 = vmatprep.subr.mxu0 0.0
        %1381 = vmatpush2.msra.mxu0 0.0
        %1382 = vmatprep.mubr.f32.mxu0 0.0
        %v1383 = vand.u32 %v1145, 4294901760
        %1384 = vmatmul.mubr.f32.gmra.mxu0 %v1383
        %v1385 = vpop.f32.mrf.mxu0
        %v1386 = vadd.f32 %v1235, %v1385
        %v1387 = vpop.f32.mrf.mxu0
        %1388 = vdwg.mxu0
        %1389 = vmatprep.subr.mxu0 0.0
        %v1390 = vand.u32 %v1124, 4294901760
        %v1391 = vsub.f32 %v1124, %v1390
        %1392 = vmatpush1.msra.mxu0 %v1391
        %1393 = vmatprep.subr.mxu0 0.0
        %v1394 = vand.u32 %v1123, 4294901760
        %v1395 = vsub.f32 %v1123, %v1394
        %1396 = vmatpush1.msra.mxu0 %v1395
        %1397 = vmatprep.subr.mxu0 0.0
        %v1398 = vand.u32 %v1122, 4294901760
        %v1399 = vsub.f32 %v1122, %v1398
        %1400 = vmatpush1.msra.mxu0 %v1399
        %1401 = vmatprep.subr.mxu0 0.0
        %v1402 = vand.u32 %v1121, 4294901760
        %v1403 = vsub.f32 %v1121, %v1402
        %1404 = vmatpush1.msra.mxu0 %v1403
        %1405 = vmatprep.subr.mxu0 0.0
        %v1406 = vand.u32 %v1120, 4294901760
        %v1407 = vsub.f32 %v1120, %v1406
        %1408 = vmatpush1.msra.mxu0 %v1407
        %1409 = vmatprep.subr.mxu0 0.0
        %v1410 = vand.u32 %v1119, 4294901760
        %v1411 = vsub.f32 %v1119, %v1410
        %1412 = vmatpush1.msra.mxu0 %v1411
        %1413 = vmatprep.subr.mxu0 0.0
        %v1414 = vand.u32 %v1118, 4294901760
        %v1415 = vsub.f32 %v1118, %v1414
        %1416 = vmatpush1.msra.mxu0 %v1415
        %1417 = vmatprep.subr.mxu0 0.0
        %v1418 = vand.u32 %v1117, 4294901760
        %v1419 = vsub.f32 %v1117, %v1418
        %1420 = vmatpush1.msra.mxu0 %v1419
        %1421 = vmatprep.subr.mxu0 0.0
        %v1422 = vand.u32 %v1116, 4294901760
        %v1423 = vsub.f32 %v1116, %v1422
        %1424 = vmatpush1.msra.mxu0 %v1423
        %1425 = vmatprep.subr.mxu0 0.0
        %v1426 = vand.u32 %v1115, 4294901760
        %v1427 = vsub.f32 %v1115, %v1426
        %1428 = vmatpush1.msra.mxu0 %v1427
        %1429 = vmatprep.subr.mxu0 0.0
        %v1430 = vand.u32 %v1114, 4294901760
        %v1431 = vsub.f32 %v1114, %v1430
        %1432 = vmatpush1.msra.mxu0 %v1431
        %1433 = vmatprep.subr.mxu0 0.0
        %v1434 = vand.u32 %v1113, 4294901760
        %v1435 = vsub.f32 %v1113, %v1434
        %1436 = vmatpush1.msra.mxu0 %v1435
        %1437 = vmatprep.subr.mxu0 0.0
        %v1438 = vand.u32 %v1112, 4294901760
        %v1439 = vsub.f32 %v1112, %v1438
        %1440 = vmatpush1.msra.mxu0 %v1439
        %1441 = vmatprep.subr.mxu0 0.0
        %v1442 = vand.u32 %v1111, 4294901760
        %v1443 = vsub.f32 %v1111, %v1442
        %1444 = vmatpush1.msra.mxu0 %v1443
        %1445 = vmatprep.subr.mxu0 0.0
        %v1446 = vand.u32 %v1110, 4294901760
        %v1447 = vsub.f32 %v1110, %v1446
        %1448 = vmatpush1.msra.mxu0 %v1447
        %1449 = vmatprep.subr.mxu0 0.0
        %v1450 = vand.u32 %v1109, 4294901760
        %v1451 = vsub.f32 %v1109, %v1450
        %1452 = vmatpush1.msra.mxu0 %v1451
        %1453 = vmatprep.subr.mxu0 0.0
        %1454 = vmatpush2.msra.mxu0 0.0
        %1455 = vmatprep.subr.mxu0 0.0
        %1456 = vmatpush2.msra.mxu0 0.0
        %1457 = vmatprep.subr.mxu0 0.0
        %1458 = vmatpush2.msra.mxu0 0.0
        %1459 = vmatprep.subr.mxu0 0.0
        %1460 = vmatpush2.msra.mxu0 0.0
        %1461 = vmatprep.subr.mxu0 0.0
        %1462 = vmatpush2.msra.mxu0 0.0
        %1463 = vmatprep.subr.mxu0 0.0
        %1464 = vmatpush2.msra.mxu0 0.0
        %1465 = vmatprep.subr.mxu0 0.0
        %1466 = vmatpush2.msra.mxu0 0.0
        %1467 = vmatprep.subr.mxu0 0.0
        %1468 = vmatpush2.msra.mxu0 0.0
        %1469 = vmatprep.subr.mxu0 0.0
        %1470 = vmatpush2.msra.mxu0 0.0
        %1471 = vmatprep.subr.mxu0 0.0
        %1472 = vmatpush2.msra.mxu0 0.0
        %1473 = vmatprep.subr.mxu0 0.0
        %1474 = vmatpush2.msra.mxu0 0.0
        %1475 = vmatprep.subr.mxu0 0.0
        %1476 = vmatpush2.msra.mxu0 0.0
        %1477 = vmatprep.subr.mxu0 0.0
        %1478 = vmatpush2.msra.mxu0 0.0
        %1479 = vmatprep.subr.mxu0 0.0
        %1480 = vmatpush2.msra.mxu0 0.0
        %1481 = vmatprep.subr.mxu0 0.0
        %1482 = vmatpush2.msra.mxu0 0.0
        %1483 = vmatprep.subr.mxu0 0.0
        %1484 = vmatpush2.msra.mxu0 0.0
        %1485 = vmatprep.mubr.f32.mxu0 0.0
        %v1486 = vand.u32 %v1145, 4294901760
        %v1487 = vsub.f32 %v1145, %v1486
        %1488 = vmatmul.mubr.f32.gmra.mxu0 %v1487
        %v1489 = vpop.f32.mrf.mxu0
        %v1490 = vadd.f32 %v1386, %v1489
        %v1491 = vpop.f32.mrf.mxu0
        %1492 = vdwg.mxu0
        %1493 = vmatprep.subr.mxu0 0.0
        %v1494 = vand.u32 %v1124, 4294901760
        %1495 = vmatpush1.msra.mxu0 %v1494
        %1496 = vmatprep.subr.mxu0 0.0
        %v1497 = vand.u32 %v1123, 4294901760
        %1498 = vmatpush1.msra.mxu0 %v1497
        %1499 = vmatprep.subr.mxu0 0.0
        %v1500 = vand.u32 %v1122, 4294901760
        %1501 = vmatpush1.msra.mxu0 %v1500
        %1502 = vmatprep.subr.mxu0 0.0
        %v1503 = vand.u32 %v1121, 4294901760
        %1504 = vmatpush1.msra.mxu0 %v1503
        %1505 = vmatprep.subr.mxu0 0.0
        %v1506 = vand.u32 %v1120, 4294901760
        %1507 = vmatpush1.msra.mxu0 %v1506
        %1508 = vmatprep.subr.mxu0 0.0
        %v1509 = vand.u32 %v1119, 4294901760
        %1510 = vmatpush1.msra.mxu0 %v1509
        %1511 = vmatprep.subr.mxu0 0.0
        %v1512 = vand.u32 %v1118, 4294901760
        %1513 = vmatpush1.msra.mxu0 %v1512
        %1514 = vmatprep.subr.mxu0 0.0
        %v1515 = vand.u32 %v1117, 4294901760
        %1516 = vmatpush1.msra.mxu0 %v1515
        %1517 = vmatprep.subr.mxu0 0.0
        %v1518 = vand.u32 %v1116, 4294901760
        %1519 = vmatpush1.msra.mxu0 %v1518
        %1520 = vmatprep.subr.mxu0 0.0
        %v1521 = vand.u32 %v1115, 4294901760
        %1522 = vmatpush1.msra.mxu0 %v1521
        %1523 = vmatprep.subr.mxu0 0.0
        %v1524 = vand.u32 %v1114, 4294901760
        %1525 = vmatpush1.msra.mxu0 %v1524
        %1526 = vmatprep.subr.mxu0 0.0
        %v1527 = vand.u32 %v1113, 4294901760
        %1528 = vmatpush1.msra.mxu0 %v1527
        %1529 = vmatprep.subr.mxu0 0.0
        %v1530 = vand.u32 %v1112, 4294901760
        %1531 = vmatpush1.msra.mxu0 %v1530
        %1532 = vmatprep.subr.mxu0 0.0
        %v1533 = vand.u32 %v1111, 4294901760
        %1534 = vmatpush1.msra.mxu0 %v1533
        %1535 = vmatprep.subr.mxu0 0.0
        %v1536 = vand.u32 %v1110, 4294901760
        %1537 = vmatpush1.msra.mxu0 %v1536
        %1538 = vmatprep.subr.mxu0 0.0
        %v1539 = vand.u32 %v1109, 4294901760
        %1540 = vmatpush1.msra.mxu0 %v1539
        %1541 = vmatprep.subr.mxu0 0.0
        %1542 = vmatpush2.msra.mxu0 0.0
        %1543 = vmatprep.subr.mxu0 0.0
        %1544 = vmatpush2.msra.mxu0 0.0
        %1545 = vmatprep.subr.mxu0 0.0
        %1546 = vmatpush2.msra.mxu0 0.0
        %1547 = vmatprep.subr.mxu0 0.0
        %1548 = vmatpush2.msra.mxu0 0.0
        %1549 = vmatprep.subr.mxu0 0.0
        %1550 = vmatpush2.msra.mxu0 0.0
        %1551 = vmatprep.subr.mxu0 0.0
        %1552 = vmatpush2.msra.mxu0 0.0
        %1553 = vmatprep.subr.mxu0 0.0
        %1554 = vmatpush2.msra.mxu0 0.0
        %1555 = vmatprep.subr.mxu0 0.0
        %1556 = vmatpush2.msra.mxu0 0.0
        %1557 = vmatprep.subr.mxu0 0.0
        %1558 = vmatpush2.msra.mxu0 0.0
        %1559 = vmatprep.subr.mxu0 0.0
        %1560 = vmatpush2.msra.mxu0 0.0
        %1561 = vmatprep.subr.mxu0 0.0
        %1562 = vmatpush2.msra.mxu0 0.0
        %1563 = vmatprep.subr.mxu0 0.0
        %1564 = vmatpush2.msra.mxu0 0.0
        %1565 = vmatprep.subr.mxu0 0.0
        %1566 = vmatpush2.msra.mxu0 0.0
        %1567 = vmatprep.subr.mxu0 0.0
        %1568 = vmatpush2.msra.mxu0 0.0
        %1569 = vmatprep.subr.mxu0 0.0
        %1570 = vmatpush2.msra.mxu0 0.0
        %1571 = vmatprep.subr.mxu0 0.0
        %1572 = vmatpush2.msra.mxu0 0.0
        %1573 = vmatprep.mubr.f32.mxu0 0.0
        %v1574 = vand.u32 %v1145, 4294901760
        %v1575 = vsub.f32 %v1145, %v1574
        %v1576 = vand.u32 %v1575, 4294901760
        %1577 = vmatmul.mubr.f32.gmra.mxu0 %v1576
        %v1578 = vpop.f32.mrf.mxu0
        %v1579 = vadd.f32 %v1490, %v1578
        %v1580 = vpop.f32.mrf.mxu0
        %1581 = vdwg.mxu0
        %1582 = vmatprep.subr.mxu0 0.0
        %v1583 = vand.u32 %v1124, 4294901760
        %v1584 = vsub.f32 %v1124, %v1583
        %v1585 = vand.u32 %v1584, 4294901760
        %1586 = vmatpush1.msra.mxu0 %v1585
        %1587 = vmatprep.subr.mxu0 0.0
        %v1588 = vand.u32 %v1123, 4294901760
        %v1589 = vsub.f32 %v1123, %v1588
        %v1590 = vand.u32 %v1589, 4294901760
        %1591 = vmatpush1.msra.mxu0 %v1590
        %1592 = vmatprep.subr.mxu0 0.0
        %v1593 = vand.u32 %v1122, 4294901760
        %v1594 = vsub.f32 %v1122, %v1593
        %v1595 = vand.u32 %v1594, 4294901760
        %1596 = vmatpush1.msra.mxu0 %v1595
        %1597 = vmatprep.subr.mxu0 0.0
        %v1598 = vand.u32 %v1121, 4294901760
        %v1599 = vsub.f32 %v1121, %v1598
        %v1600 = vand.u32 %v1599, 4294901760
        %1601 = vmatpush1.msra.mxu0 %v1600
        %1602 = vmatprep.subr.mxu0 0.0
        %v1603 = vand.u32 %v1120, 4294901760
        %v1604 = vsub.f32 %v1120, %v1603
        %v1605 = vand.u32 %v1604, 4294901760
        %1606 = vmatpush1.msra.mxu0 %v1605
        %1607 = vmatprep.subr.mxu0 0.0
        %v1608 = vand.u32 %v1119, 4294901760
        %v1609 = vsub.f32 %v1119, %v1608
        %v1610 = vand.u32 %v1609, 4294901760
        %1611 = vmatpush1.msra.mxu0 %v1610
        %1612 = vmatprep.subr.mxu0 0.0
        %v1613 = vand.u32 %v1118, 4294901760
        %v1614 = vsub.f32 %v1118, %v1613
        %v1615 = vand.u32 %v1614, 4294901760
        %1616 = vmatpush1.msra.mxu0 %v1615
        %1617 = vmatprep.subr.mxu0 0.0
        %v1618 = vand.u32 %v1117, 4294901760
        %v1619 = vsub.f32 %v1117, %v1618
        %v1620 = vand.u32 %v1619, 4294901760
        %1621 = vmatpush1.msra.mxu0 %v1620
        %1622 = vmatprep.subr.mxu0 0.0
        %v1623 = vand.u32 %v1116, 4294901760
        %v1624 = vsub.f32 %v1116, %v1623
        %v1625 = vand.u32 %v1624, 4294901760
        %1626 = vmatpush1.msra.mxu0 %v1625
        %1627 = vmatprep.subr.mxu0 0.0
        %v1628 = vand.u32 %v1115, 4294901760
        %v1629 = vsub.f32 %v1115, %v1628
        %v1630 = vand.u32 %v1629, 4294901760
        %1631 = vmatpush1.msra.mxu0 %v1630
        %1632 = vmatprep.subr.mxu0 0.0
        %v1633 = vand.u32 %v1114, 4294901760
        %v1634 = vsub.f32 %v1114, %v1633
        %v1635 = vand.u32 %v1634, 4294901760
        %1636 = vmatpush1.msra.mxu0 %v1635
        %1637 = vmatprep.subr.mxu0 0.0
        %v1638 = vand.u32 %v1113, 4294901760
        %v1639 = vsub.f32 %v1113, %v1638
        %v1640 = vand.u32 %v1639, 4294901760
        %1641 = vmatpush1.msra.mxu0 %v1640
        %1642 = vmatprep.subr.mxu0 0.0
        %v1643 = vand.u32 %v1112, 4294901760
        %v1644 = vsub.f32 %v1112, %v1643
        %v1645 = vand.u32 %v1644, 4294901760
        %1646 = vmatpush1.msra.mxu0 %v1645
        %1647 = vmatprep.subr.mxu0 0.0
        %v1648 = vand.u32 %v1111, 4294901760
        %v1649 = vsub.f32 %v1111, %v1648
        %v1650 = vand.u32 %v1649, 4294901760
        %1651 = vmatpush1.msra.mxu0 %v1650
        %1652 = vmatprep.subr.mxu0 0.0
        %v1653 = vand.u32 %v1110, 4294901760
        %v1654 = vsub.f32 %v1110, %v1653
        %v1655 = vand.u32 %v1654, 4294901760
        %1656 = vmatpush1.msra.mxu0 %v1655
        %1657 = vmatprep.subr.mxu0 0.0
        %v1658 = vand.u32 %v1109, 4294901760
        %v1659 = vsub.f32 %v1109, %v1658
        %v1660 = vand.u32 %v1659, 4294901760
        %1661 = vmatpush1.msra.mxu0 %v1660
        %1662 = vmatprep.subr.mxu0 0.0
        %1663 = vmatpush2.msra.mxu0 0.0
        %1664 = vmatprep.subr.mxu0 0.0
        %1665 = vmatpush2.msra.mxu0 0.0
        %1666 = vmatprep.subr.mxu0 0.0
        %1667 = vmatpush2.msra.mxu0 0.0
        %1668 = vmatprep.subr.mxu0 0.0
        %1669 = vmatpush2.msra.mxu0 0.0
        %1670 = vmatprep.subr.mxu0 0.0
        %1671 = vmatpush2.msra.mxu0 0.0
        %1672 = vmatprep.subr.mxu0 0.0
        %1673 = vmatpush2.msra.mxu0 0.0
        %1674 = vmatprep.subr.mxu0 0.0
        %1675 = vmatpush2.msra.mxu0 0.0
        %1676 = vmatprep.subr.mxu0 0.0
        %1677 = vmatpush2.msra.mxu0 0.0
        %1678 = vmatprep.subr.mxu0 0.0
        %1679 = vmatpush2.msra.mxu0 0.0
        %1680 = vmatprep.subr.mxu0 0.0
        %1681 = vmatpush2.msra.mxu0 0.0
        %1682 = vmatprep.subr.mxu0 0.0
        %1683 = vmatpush2.msra.mxu0 0.0
        %1684 = vmatprep.subr.mxu0 0.0
        %1685 = vmatpush2.msra.mxu0 0.0
        %1686 = vmatprep.subr.mxu0 0.0
        %1687 = vmatpush2.msra.mxu0 0.0
        %1688 = vmatprep.subr.mxu0 0.0
        %1689 = vmatpush2.msra.mxu0 0.0
        %1690 = vmatprep.subr.mxu0 0.0
        %1691 = vmatpush2.msra.mxu0 0.0
        %1692 = vmatprep.subr.mxu0 0.0
        %1693 = vmatpush2.msra.mxu0 0.0
        %1694 = vmatprep.mubr.f32.mxu0 0.0
        %v1695 = vand.u32 %v1145, 4294901760
        %1696 = vmatmul.mubr.f32.gmra.mxu0 %v1695
        %v1697 = vpop.f32.mrf.mxu0
        %v1698 = vadd.f32 %v1579, %v1697
        %v1699 = vpop.f32.mrf.mxu0
        %1700 = vdwg.mxu0
        %1701 = vmatprep.subr.mxu0 0.0
        %v1702 = vand.u32 %v1124, 4294901760
        %1703 = vmatpush1.msra.mxu0 %v1702
        %1704 = vmatprep.subr.mxu0 0.0
        %v1705 = vand.u32 %v1123, 4294901760
        %1706 = vmatpush1.msra.mxu0 %v1705
        %1707 = vmatprep.subr.mxu0 0.0
        %v1708 = vand.u32 %v1122, 4294901760
        %1709 = vmatpush1.msra.mxu0 %v1708
        %1710 = vmatprep.subr.mxu0 0.0
        %v1711 = vand.u32 %v1121, 4294901760
        %1712 = vmatpush1.msra.mxu0 %v1711
        %1713 = vmatprep.subr.mxu0 0.0
        %v1714 = vand.u32 %v1120, 4294901760
        %1715 = vmatpush1.msra.mxu0 %v1714
        %1716 = vmatprep.subr.mxu0 0.0
        %v1717 = vand.u32 %v1119, 4294901760
        %1718 = vmatpush1.msra.mxu0 %v1717
        %1719 = vmatprep.subr.mxu0 0.0
        %v1720 = vand.u32 %v1118, 4294901760
        %1721 = vmatpush1.msra.mxu0 %v1720
        %1722 = vmatprep.subr.mxu0 0.0
        %v1723 = vand.u32 %v1117, 4294901760
        %1724 = vmatpush1.msra.mxu0 %v1723
        %1725 = vmatprep.subr.mxu0 0.0
        %v1726 = vand.u32 %v1116, 4294901760
        %1727 = vmatpush1.msra.mxu0 %v1726
        %1728 = vmatprep.subr.mxu0 0.0
        %v1729 = vand.u32 %v1115, 4294901760
        %1730 = vmatpush1.msra.mxu0 %v1729
        %1731 = vmatprep.subr.mxu0 0.0
        %v1732 = vand.u32 %v1114, 4294901760
        %1733 = vmatpush1.msra.mxu0 %v1732
        %1734 = vmatprep.subr.mxu0 0.0
        %v1735 = vand.u32 %v1113, 4294901760
        %1736 = vmatpush1.msra.mxu0 %v1735
        %1737 = vmatprep.subr.mxu0 0.0
        %v1738 = vand.u32 %v1112, 4294901760
        %1739 = vmatpush1.msra.mxu0 %v1738
        %1740 = vmatprep.subr.mxu0 0.0
        %v1741 = vand.u32 %v1111, 4294901760
        %1742 = vmatpush1.msra.mxu0 %v1741
        %1743 = vmatprep.subr.mxu0 0.0
        %v1744 = vand.u32 %v1110, 4294901760
        %1745 = vmatpush1.msra.mxu0 %v1744
        %1746 = vmatprep.subr.mxu0 0.0
        %v1747 = vand.u32 %v1109, 4294901760
        %1748 = vmatpush1.msra.mxu0 %v1747
        %1749 = vmatprep.subr.mxu0 0.0
        %1750 = vmatpush2.msra.mxu0 0.0
        %1751 = vmatprep.subr.mxu0 0.0
        %1752 = vmatpush2.msra.mxu0 0.0
        %1753 = vmatprep.subr.mxu0 0.0
        %1754 = vmatpush2.msra.mxu0 0.0
        %1755 = vmatprep.subr.mxu0 0.0
        %1756 = vmatpush2.msra.mxu0 0.0
        %1757 = vmatprep.subr.mxu0 0.0
        %1758 = vmatpush2.msra.mxu0 0.0
        %1759 = vmatprep.subr.mxu0 0.0
        %1760 = vmatpush2.msra.mxu0 0.0
        %1761 = vmatprep.subr.mxu0 0.0
        %1762 = vmatpush2.msra.mxu0 0.0
        %1763 = vmatprep.subr.mxu0 0.0
        %1764 = vmatpush2.msra.mxu0 0.0
        %1765 = vmatprep.subr.mxu0 0.0
        %1766 = vmatpush2.msra.mxu0 0.0
        %1767 = vmatprep.subr.mxu0 0.0
        %1768 = vmatpush2.msra.mxu0 0.0
        %1769 = vmatprep.subr.mxu0 0.0
        %1770 = vmatpush2.msra.mxu0 0.0
        %1771 = vmatprep.subr.mxu0 0.0
        %1772 = vmatpush2.msra.mxu0 0.0
        %1773 = vmatprep.subr.mxu0 0.0
        %1774 = vmatpush2.msra.mxu0 0.0
        %1775 = vmatprep.subr.mxu0 0.0
        %1776 = vmatpush2.msra.mxu0 0.0
        %1777 = vmatprep.subr.mxu0 0.0
        %1778 = vmatpush2.msra.mxu0 0.0
        %1779 = vmatprep.subr.mxu0 0.0
        %1780 = vmatpush2.msra.mxu0 0.0
        %1781 = vmatprep.mubr.f32.mxu0 0.0
        %v1782 = vand.u32 %v1145, 4294901760
        %1783 = vmatmul.mubr.f32.gmra.mxu0 %v1782
        %v1784 = vpop.f32.mrf.mxu0
        %v1785 = vadd.f32 %v1698, %v1784
        %v1786 = vpop.f32.mrf.mxu0
        %1787 = vdwg.mxu0
        %v1788 = vtanh.pop %v1785
        %v1789 = vld [vmem:[#allocation5] sm:$0xff]
        %v1790 = vld [vmem:[#allocation5 + $0x30] sm:$0xff]
        %v1791 = vld [vmem:[#allocation5 + $0x60] sm:$0xff]
        %v1792 = vld [vmem:[#allocation5 + $0x90] sm:$0xff]
        %vm1793 = vcmask 261120
        %v1795 = vsel %vm1793, %v1788, 0
        %1797 = vmatprep.subr.mxu0 0.0
        %1798 = vmatpush1.msra.mxu0 0.0
        %1799 = vmatprep.subr.mxu0 0.0
        %1800 = vmatpush1.msra.mxu0 0.0
        %1801 = vmatprep.subr.mxu0 0.0
        %1802 = vmatpush1.msra.mxu0 0.0
        %1803 = vmatprep.subr.mxu0 0.0
        %1804 = vmatpush1.msra.mxu0 0.0
        %1805 = vmatprep.subr.mxu0 0.0
        %1806 = vmatpush1.msra.mxu0 0.0
        %1807 = vmatprep.subr.mxu0 0.0
        %1808 = vmatpush1.msra.mxu0 0.0
        %1809 = vmatprep.subr.mxu0 0.0
        %1810 = vmatpush1.msra.mxu0 0.0
        %1811 = vmatprep.subr.mxu0 0.0
        %1812 = vmatpush1.msra.mxu0 0.0
        %1813 = vmatprep.subr.mxu0 0.0
        %1814 = vmatpush1.msra.mxu0 0.0
        %1815 = vmatprep.subr.mxu0 0.0
        %1816 = vmatpush1.msra.mxu0 0.0
        %1817 = vmatprep.subr.mxu0 0.0
        %1818 = vmatpush1.msra.mxu0 0.0
        %1819 = vmatprep.subr.mxu0 0.0
        %1820 = vmatpush1.msra.mxu0 0.0
        %1821 = vmatprep.subr.mxu0 0.0
        %v1822 = vand.u32 %v1792, 4294901760
        %1823 = vmatpush1.msra.mxu0 %v1822
        %1824 = vmatprep.subr.mxu0 0.0
        %v1825 = vand.u32 %v1791, 4294901760
        %1826 = vmatpush1.msra.mxu0 %v1825
        %1827 = vmatprep.subr.mxu0 0.0
        %v1828 = vand.u32 %v1790, 4294901760
        %1829 = vmatpush1.msra.mxu0 %v1828
        %1830 = vmatprep.subr.mxu0 0.0
        %v1831 = vand.u32 %v1789, 4294901760
        %1832 = vmatpush1.msra.mxu0 %v1831
        %1833 = vmatprep.subr.mxu0 0.0
        %1834 = vmatpush2.msra.mxu0 0.0
        %1835 = vmatprep.subr.mxu0 0.0
        %1836 = vmatpush2.msra.mxu0 0.0
        %1837 = vmatprep.subr.mxu0 0.0
        %1838 = vmatpush2.msra.mxu0 0.0
        %1839 = vmatprep.subr.mxu0 0.0
        %1840 = vmatpush2.msra.mxu0 0.0
        %1841 = vmatprep.subr.mxu0 0.0
        %1842 = vmatpush2.msra.mxu0 0.0
        %1843 = vmatprep.subr.mxu0 0.0
        %1844 = vmatpush2.msra.mxu0 0.0
        %1845 = vmatprep.subr.mxu0 0.0
        %1846 = vmatpush2.msra.mxu0 0.0
        %1847 = vmatprep.subr.mxu0 0.0
        %1848 = vmatpush2.msra.mxu0 0.0
        %1849 = vmatprep.subr.mxu0 0.0
        %1850 = vmatpush2.msra.mxu0 0.0
        %1851 = vmatprep.subr.mxu0 0.0
        %1852 = vmatpush2.msra.mxu0 0.0
        %1853 = vmatprep.subr.mxu0 0.0
        %1854 = vmatpush2.msra.mxu0 0.0
        %1855 = vmatprep.subr.mxu0 0.0
        %1856 = vmatpush2.msra.mxu0 0.0
        %1857 = vmatprep.subr.mxu0 0.0
        %1858 = vmatpush2.msra.mxu0 0.0
        %1859 = vmatprep.subr.mxu0 0.0
        %1860 = vmatpush2.msra.mxu0 0.0
        %1861 = vmatprep.subr.mxu0 0.0
        %1862 = vmatpush2.msra.mxu0 0.0
        %1863 = vmatprep.subr.mxu0 0.0
        %1864 = vmatpush2.msra.mxu0 0.0
        %1865 = vmatprep.mubr.f32.mxu0 0.0
        %v1866 = vand.u32 %v1795, 4294901760
        %v1867 = vsub.f32 %v1795, %v1866
        %v1868 = vand.u32 %v1867, 4294901760
        %v1869 = vsub.f32 %v1867, %v1868
        %v1870 = vand.u32 %v1869, 4294901760
        %1871 = vmatmul.mubr.f32.gmra.mxu0 %v1870
        %v1872 = vpop.f32.mrf.mxu0
        %v1873 = vadd.f32 0.0, %v1872
        %v1874 = vpop.f32.mrf.mxu0
        %1875 = vdwg.mxu0
        %1876 = vmatprep.subr.mxu0 0.0
        %1877 = vmatpush1.msra.mxu0 0.0
        %1878 = vmatprep.subr.mxu0 0.0
        %1879 = vmatpush1.msra.mxu0 0.0
        %1880 = vmatprep.subr.mxu0 0.0
        %1881 = vmatpush1.msra.mxu0 0.0
        %1882 = vmatprep.subr.mxu0 0.0
        %1883 = vmatpush1.msra.mxu0 0.0
        %1884 = vmatprep.subr.mxu0 0.0
        %1885 = vmatpush1.msra.mxu0 0.0
        %1886 = vmatprep.subr.mxu0 0.0
        %1887 = vmatpush1.msra.mxu0 0.0
        %1888 = vmatprep.subr.mxu0 0.0
        %1889 = vmatpush1.msra.mxu0 0.0
        %1890 = vmatprep.subr.mxu0 0.0
        %1891 = vmatpush1.msra.mxu0 0.0
        %1892 = vmatprep.subr.mxu0 0.0
        %1893 = vmatpush1.msra.mxu0 0.0
        %1894 = vmatprep.subr.mxu0 0.0
        %1895 = vmatpush1.msra.mxu0 0.0
        %1896 = vmatprep.subr.mxu0 0.0
        %1897 = vmatpush1.msra.mxu0 0.0
        %1898 = vmatprep.subr.mxu0 0.0
        %1899 = vmatpush1.msra.mxu0 0.0
        %1900 = vmatprep.subr.mxu0 0.0
        %v1901 = vand.u32 %v1792, 4294901760
        %v1902 = vsub.f32 %v1792, %v1901
        %v1903 = vand.u32 %v1902, 4294901760
        %v1904 = vsub.f32 %v1902, %v1903
        %v1905 = vand.u32 %v1904, 4294901760
        %1906 = vmatpush1.msra.mxu0 %v1905
        %1907 = vmatprep.subr.mxu0 0.0
        %v1908 = vand.u32 %v1791, 4294901760
        %v1909 = vsub.f32 %v1791, %v1908
        %v1910 = vand.u32 %v1909, 4294901760
        %v1911 = vsub.f32 %v1909, %v1910
        %v1912 = vand.u32 %v1911, 4294901760
        %1913 = vmatpush1.msra.mxu0 %v1912
        %1914 = vmatprep.subr.mxu0 0.0
        %v1915 = vand.u32 %v1790, 4294901760
        %v1916 = vsub.f32 %v1790, %v1915
        %v1917 = vand.u32 %v1916, 4294901760
        %v1918 = vsub.f32 %v1916, %v1917
        %v1919 = vand.u32 %v1918, 4294901760
        %1920 = vmatpush1.msra.mxu0 %v1919
        %1921 = vmatprep.subr.mxu0 0.0
        %v1922 = vand.u32 %v1789, 4294901760
        %v1923 = vsub.f32 %v1789, %v1922
        %v1924 = vand.u32 %v1923, 4294901760
        %v1925 = vsub.f32 %v1923, %v1924
        %v1926 = vand.u32 %v1925, 4294901760
        %1927 = vmatpush1.msra.mxu0 %v1926
        %1928 = vmatprep.subr.mxu0 0.0
        %1929 = vmatpush2.msra.mxu0 0.0
        %1930 = vmatprep.subr.mxu0 0.0
        %1931 = vmatpush2.msra.mxu0 0.0
        %1932 = vmatprep.subr.mxu0 0.0
        %1933 = vmatpush2.msra.mxu0 0.0
        %1934 = vmatprep.subr.mxu0 0.0
        %1935 = vmatpush2.msra.mxu0 0.0
        %1936 = vmatprep.subr.mxu0 0.0
        %1937 = vmatpush2.msra.mxu0 0.0
        %1938 = vmatprep.subr.mxu0 0.0
        %1939 = vmatpush2.msra.mxu0 0.0
        %1940 = vmatprep.subr.mxu0 0.0
        %1941 = vmatpush2.msra.mxu0 0.0
        %1942 = vmatprep.subr.mxu0 0.0
        %1943 = vmatpush2.msra.mxu0 0.0
        %1944 = vmatprep.subr.mxu0 0.0
        %1945 = vmatpush2.msra.mxu0 0.0
        %1946 = vmatprep.subr.mxu0 0.0
        %1947 = vmatpush2.msra.mxu0 0.0
        %1948 = vmatprep.subr.mxu0 0.0
        %1949 = vmatpush2.msra.mxu0 0.0
        %1950 = vmatprep.subr.mxu0 0.0
        %1951 = vmatpush2.msra.mxu0 0.0
        %1952 = vmatprep.subr.mxu0 0.0
        %1953 = vmatpush2.msra.mxu0 0.0
        %1954 = vmatprep.subr.mxu0 0.0
        %1955 = vmatpush2.msra.mxu0 0.0
        %1956 = vmatprep.subr.mxu0 0.0
        %1957 = vmatpush2.msra.mxu0 0.0
        %1958 = vmatprep.subr.mxu0 0.0
        %1959 = vmatpush2.msra.mxu0 0.0
        %1960 = vmatprep.mubr.f32.mxu0 0.0
        %v1961 = vand.u32 %v1795, 4294901760
        %1962 = vmatmul.mubr.f32.gmra.mxu0 %v1961
        %v1963 = vpop.f32.mrf.mxu0
        %v1964 = vadd.f32 %v1873, %v1963
        %v1965 = vpop.f32.mrf.mxu0
        %1966 = vdwg.mxu0
        %1967 = vmatprep.subr.mxu0 0.0
        %1968 = vmatpush1.msra.mxu0 0.0
        %1969 = vmatprep.subr.mxu0 0.0
        %1970 = vmatpush1.msra.mxu0 0.0
        %1971 = vmatprep.subr.mxu0 0.0
        %1972 = vmatpush1.msra.mxu0 0.0
        %1973 = vmatprep.subr.mxu0 0.0
        %1974 = vmatpush1.msra.mxu0 0.0
        %1975 = vmatprep.subr.mxu0 0.0
        %1976 = vmatpush1.msra.mxu0 0.0
        %1977 = vmatprep.subr.mxu0 0.0
        %1978 = vmatpush1.msra.mxu0 0.0
        %1979 = vmatprep.subr.mxu0 0.0
        %1980 = vmatpush1.msra.mxu0 0.0
        %1981 = vmatprep.subr.mxu0 0.0
        %1982 = vmatpush1.msra.mxu0 0.0
        %1983 = vmatprep.subr.mxu0 0.0
        %1984 = vmatpush1.msra.mxu0 0.0
        %1985 = vmatprep.subr.mxu0 0.0
        %1986 = vmatpush1.msra.mxu0 0.0
        %1987 = vmatprep.subr.mxu0 0.0
        %1988 = vmatpush1.msra.mxu0 0.0
        %1989 = vmatprep.subr.mxu0 0.0
        %1990 = vmatpush1.msra.mxu0 0.0
        %1991 = vmatprep.subr.mxu0 0.0
        %v1992 = vand.u32 %v1792, 4294901760
        %v1993 = vsub.f32 %v1792, %v1992
        %1994 = vmatpush1.msra.mxu0 %v1993
        %1995 = vmatprep.subr.mxu0 0.0
        %v1996 = vand.u32 %v1791, 4294901760
        %v1997 = vsub.f32 %v1791, %v1996
        %1998 = vmatpush1.msra.mxu0 %v1997
        %1999 = vmatprep.subr.mxu0 0.0
        %v2000 = vand.u32 %v1790, 4294901760
        %v2001 = vsub.f32 %v1790, %v2000
        %2002 = vmatpush1.msra.mxu0 %v2001
        %2003 = vmatprep.subr.mxu0 0.0
        %v2004 = vand.u32 %v1789, 4294901760
        %v2005 = vsub.f32 %v1789, %v2004
        %2006 = vmatpush1.msra.mxu0 %v2005
        %2007 = vmatprep.subr.mxu0 0.0
        %2008 = vmatpush2.msra.mxu0 0.0
        %2009 = vmatprep.subr.mxu0 0.0
        %2010 = vmatpush2.msra.mxu0 0.0
        %2011 = vmatprep.subr.mxu0 0.0
        %2012 = vmatpush2.msra.mxu0 0.0
        %2013 = vmatprep.subr.mxu0 0.0
        %2014 = vmatpush2.msra.mxu0 0.0
        %2015 = vmatprep.subr.mxu0 0.0
        %2016 = vmatpush2.msra.mxu0 0.0
        %2017 = vmatprep.subr.mxu0 0.0
        %2018 = vmatpush2.msra.mxu0 0.0
        %2019 = vmatprep.subr.mxu0 0.0
        %2020 = vmatpush2.msra.mxu0 0.0
        %2021 = vmatprep.subr.mxu0 0.0
        %2022 = vmatpush2.msra.mxu0 0.0
        %2023 = vmatprep.subr.mxu0 0.0
        %2024 = vmatpush2.msra.mxu0 0.0
        %2025 = vmatprep.subr.mxu0 0.0
        %2026 = vmatpush2.msra.mxu0 0.0
        %2027 = vmatprep.subr.mxu0 0.0
        %2028 = vmatpush2.msra.mxu0 0.0
        %2029 = vmatprep.subr.mxu0 0.0
        %2030 = vmatpush2.msra.mxu0 0.0
        %2031 = vmatprep.subr.mxu0 0.0
        %2032 = vmatpush2.msra.mxu0 0.0
        %2033 = vmatprep.subr.mxu0 0.0
        %2034 = vmatpush2.msra.mxu0 0.0
        %2035 = vmatprep.subr.mxu0 0.0
        %2036 = vmatpush2.msra.mxu0 0.0
        %2037 = vmatprep.subr.mxu0 0.0
        %2038 = vmatpush2.msra.mxu0 0.0
        %2039 = vmatprep.mubr.f32.mxu0 0.0
        %v2040 = vand.u32 %v1795, 4294901760
        %v2041 = vsub.f32 %v1795, %v2040
        %2042 = vmatmul.mubr.f32.gmra.mxu0 %v2041
        %v2043 = vpop.f32.mrf.mxu0
        %v2044 = vadd.f32 %v1964, %v2043
        %v2045 = vpop.f32.mrf.mxu0
        %2046 = vdwg.mxu0
        %2047 = vmatprep.subr.mxu0 0.0
        %2048 = vmatpush1.msra.mxu0 0.0
        %2049 = vmatprep.subr.mxu0 0.0
        %2050 = vmatpush1.msra.mxu0 0.0
        %2051 = vmatprep.subr.mxu0 0.0
        %2052 = vmatpush1.msra.mxu0 0.0
        %2053 = vmatprep.subr.mxu0 0.0
        %2054 = vmatpush1.msra.mxu0 0.0
        %2055 = vmatprep.subr.mxu0 0.0
        %2056 = vmatpush1.msra.mxu0 0.0
        %2057 = vmatprep.subr.mxu0 0.0
        %2058 = vmatpush1.msra.mxu0 0.0
        %2059 = vmatprep.subr.mxu0 0.0
        %2060 = vmatpush1.msra.mxu0 0.0
        %2061 = vmatprep.subr.mxu0 0.0
        %2062 = vmatpush1.msra.mxu0 0.0
        %2063 = vmatprep.subr.mxu0 0.0
        %2064 = vmatpush1.msra.mxu0 0.0
        %2065 = vmatprep.subr.mxu0 0.0
        %2066 = vmatpush1.msra.mxu0 0.0
        %2067 = vmatprep.subr.mxu0 0.0
        %2068 = vmatpush1.msra.mxu0 0.0
        %2069 = vmatprep.subr.mxu0 0.0
        %2070 = vmatpush1.msra.mxu0 0.0
        %2071 = vmatprep.subr.mxu0 0.0
        %v2072 = vand.u32 %v1792, 4294901760
        %2073 = vmatpush1.msra.mxu0 %v2072
        %2074 = vmatprep.subr.mxu0 0.0
        %v2075 = vand.u32 %v1791, 4294901760
        %2076 = vmatpush1.msra.mxu0 %v2075
        %2077 = vmatprep.subr.mxu0 0.0
        %v2078 = vand.u32 %v1790, 4294901760
        %2079 = vmatpush1.msra.mxu0 %v2078
        %2080 = vmatprep.subr.mxu0 0.0
        %v2081 = vand.u32 %v1789, 4294901760
        %2082 = vmatpush1.msra.mxu0 %v2081
        %2083 = vmatprep.subr.mxu0 0.0
        %2084 = vmatpush2.msra.mxu0 0.0
        %2085 = vmatprep.subr.mxu0 0.0
        %2086 = vmatpush2.msra.mxu0 0.0
        %2087 = vmatprep.subr.mxu0 0.0
        %2088 = vmatpush2.msra.mxu0 0.0
        %2089 = vmatprep.subr.mxu0 0.0
        %2090 = vmatpush2.msra.mxu0 0.0
        %2091 = vmatprep.subr.mxu0 0.0
        %2092 = vmatpush2.msra.mxu0 0.0
        %2093 = vmatprep.subr.mxu0 0.0
        %2094 = vmatpush2.msra.mxu0 0.0
        %2095 = vmatprep.subr.mxu0 0.0
        %2096 = vmatpush2.msra.mxu0 0.0
        %2097 = vmatprep.subr.mxu0 0.0
        %2098 = vmatpush2.msra.mxu0 0.0
        %2099 = vmatprep.subr.mxu0 0.0
        %2100 = vmatpush2.msra.mxu0 0.0
        %2101 = vmatprep.subr.mxu0 0.0
        %2102 = vmatpush2.msra.mxu0 0.0
        %2103 = vmatprep.subr.mxu0 0.0
        %2104 = vmatpush2.msra.mxu0 0.0
        %2105 = vmatprep.subr.mxu0 0.0
        %2106 = vmatpush2.msra.mxu0 0.0
        %2107 = vmatprep.subr.mxu0 0.0
        %2108 = vmatpush2.msra.mxu0 0.0
        %2109 = vmatprep.subr.mxu0 0.0
        %2110 = vmatpush2.msra.mxu0 0.0
        %2111 = vmatprep.subr.mxu0 0.0
        %2112 = vmatpush2.msra.mxu0 0.0
        %2113 = vmatprep.subr.mxu0 0.0
        %2114 = vmatpush2.msra.mxu0 0.0
        %2115 = vmatprep.mubr.f32.mxu0 0.0
        %v2116 = vand.u32 %v1795, 4294901760
        %v2117 = vsub.f32 %v1795, %v2116
        %v2118 = vand.u32 %v2117, 4294901760
        %2119 = vmatmul.mubr.f32.gmra.mxu0 %v2118
        %v2120 = vpop.f32.mrf.mxu0
        %v2121 = vadd.f32 %v2044, %v2120
        %v2122 = vpop.f32.mrf.mxu0
        %2123 = vdwg.mxu0
        %2124 = vmatprep.subr.mxu0 0.0
        %2125 = vmatpush1.msra.mxu0 0.0
        %2126 = vmatprep.subr.mxu0 0.0
        %2127 = vmatpush1.msra.mxu0 0.0
        %2128 = vmatprep.subr.mxu0 0.0
        %2129 = vmatpush1.msra.mxu0 0.0
        %2130 = vmatprep.subr.mxu0 0.0
        %2131 = vmatpush1.msra.mxu0 0.0
        %2132 = vmatprep.subr.mxu0 0.0
        %2133 = vmatpush1.msra.mxu0 0.0
        %2134 = vmatprep.subr.mxu0 0.0
        %2135 = vmatpush1.msra.mxu0 0.0
        %2136 = vmatprep.subr.mxu0 0.0
        %2137 = vmatpush1.msra.mxu0 0.0
        %2138 = vmatprep.subr.mxu0 0.0
        %2139 = vmatpush1.msra.mxu0 0.0
        %2140 = vmatprep.subr.mxu0 0.0
        %2141 = vmatpush1.msra.mxu0 0.0
        %2142 = vmatprep.subr.mxu0 0.0
        %2143 = vmatpush1.msra.mxu0 0.0
        %2144 = vmatprep.subr.mxu0 0.0
        %2145 = vmatpush1.msra.mxu0 0.0
        %2146 = vmatprep.subr.mxu0 0.0
        %2147 = vmatpush1.msra.mxu0 0.0
        %2148 = vmatprep.subr.mxu0 0.0
        %v2149 = vand.u32 %v1792, 4294901760
        %v2150 = vsub.f32 %v1792, %v2149
        %v2151 = vand.u32 %v2150, 4294901760
        %2152 = vmatpush1.msra.mxu0 %v2151
        %2153 = vmatprep.subr.mxu0 0.0
        %v2154 = vand.u32 %v1791, 4294901760
        %v2155 = vsub.f32 %v1791, %v2154
        %v2156 = vand.u32 %v2155, 4294901760
        %2157 = vmatpush1.msra.mxu0 %v2156
        %2158 = vmatprep.subr.mxu0 0.0
        %v2159 = vand.u32 %v1790, 4294901760
        %v2160 = vsub.f32 %v1790, %v2159
        %v2161 = vand.u32 %v2160, 4294901760
        %2162 = vmatpush1.msra.mxu0 %v2161
        %2163 = vmatprep.subr.mxu0 0.0
        %v2164 = vand.u32 %v1789, 4294901760
        %v2165 = vsub.f32 %v1789, %v2164
        %v2166 = vand.u32 %v2165, 4294901760
        %2167 = vmatpush1.msra.mxu0 %v2166
        %2168 = vmatprep.subr.mxu0 0.0
        %2169 = vmatpush2.msra.mxu0 0.0
        %2170 = vmatprep.subr.mxu0 0.0
        %2171 = vmatpush2.msra.mxu0 0.0
        %2172 = vmatprep.subr.mxu0 0.0
        %2173 = vmatpush2.msra.mxu0 0.0
        %2174 = vmatprep.subr.mxu0 0.0
        %2175 = vmatpush2.msra.mxu0 0.0
        %2176 = vmatprep.subr.mxu0 0.0
        %2177 = vmatpush2.msra.mxu0 0.0
        %2178 = vmatprep.subr.mxu0 0.0
        %2179 = vmatpush2.msra.mxu0 0.0
        %2180 = vmatprep.subr.mxu0 0.0
        %2181 = vmatpush2.msra.mxu0 0.0
        %2182 = vmatprep.subr.mxu0 0.0
        %2183 = vmatpush2.msra.mxu0 0.0
        %2184 = vmatprep.subr.mxu0 0.0
        %2185 = vmatpush2.msra.mxu0 0.0
        %2186 = vmatprep.subr.mxu0 0.0
        %2187 = vmatpush2.msra.mxu0 0.0
        %2188 = vmatprep.subr.mxu0 0.0
        %2189 = vmatpush2.msra.mxu0 0.0
        %2190 = vmatprep.subr.mxu0 0.0
        %2191 = vmatpush2.msra.mxu0 0.0
        %2192 = vmatprep.subr.mxu0 0.0
        %2193 = vmatpush2.msra.mxu0 0.0
        %2194 = vmatprep.subr.mxu0 0.0
        %2195 = vmatpush2.msra.mxu0 0.0
        %2196 = vmatprep.subr.mxu0 0.0
        %2197 = vmatpush2.msra.mxu0 0.0
        %2198 = vmatprep.subr.mxu0 0.0
        %2199 = vmatpush2.msra.mxu0 0.0
        %2200 = vmatprep.mubr.f32.mxu0 0.0
        %v2201 = vand.u32 %v1795, 4294901760
        %2202 = vmatmul.mubr.f32.gmra.mxu0 %v2201
        %v2203 = vpop.f32.mrf.mxu0
        %v2204 = vadd.f32 %v2121, %v2203
        %v2205 = vpop.f32.mrf.mxu0
        %2206 = vdwg.mxu0
        %2207 = vmatprep.subr.mxu0 0.0
        %2208 = vmatpush1.msra.mxu0 0.0
        %2209 = vmatprep.subr.mxu0 0.0
        %2210 = vmatpush1.msra.mxu0 0.0
        %2211 = vmatprep.subr.mxu0 0.0
        %2212 = vmatpush1.msra.mxu0 0.0
        %2213 = vmatprep.subr.mxu0 0.0
        %2214 = vmatpush1.msra.mxu0 0.0
        %2215 = vmatprep.subr.mxu0 0.0
        %2216 = vmatpush1.msra.mxu0 0.0
        %2217 = vmatprep.subr.mxu0 0.0
        %2218 = vmatpush1.msra.mxu0 0.0
        %2219 = vmatprep.subr.mxu0 0.0
        %2220 = vmatpush1.msra.mxu0 0.0
        %2221 = vmatprep.subr.mxu0 0.0
        %2222 = vmatpush1.msra.mxu0 0.0
        %2223 = vmatprep.subr.mxu0 0.0
        %2224 = vmatpush1.msra.mxu0 0.0
        %2225 = vmatprep.subr.mxu0 0.0
        %2226 = vmatpush1.msra.mxu0 0.0
        %2227 = vmatprep.subr.mxu0 0.0
        %2228 = vmatpush1.msra.mxu0 0.0
        %2229 = vmatprep.subr.mxu0 0.0
        %2230 = vmatpush1.msra.mxu0 0.0
        %2231 = vmatprep.subr.mxu0 0.0
        %v2232 = vand.u32 %v1792, 4294901760
        %2233 = vmatpush1.msra.mxu0 %v2232
        %2234 = vmatprep.subr.mxu0 0.0
        %v2235 = vand.u32 %v1791, 4294901760
        %2236 = vmatpush1.msra.mxu0 %v2235
        %2237 = vmatprep.subr.mxu0 0.0
        %v2238 = vand.u32 %v1790, 4294901760
        %2239 = vmatpush1.msra.mxu0 %v2238
        %2240 = vmatprep.subr.mxu0 0.0
        %v2241 = vand.u32 %v1789, 4294901760
        %2242 = vmatpush1.msra.mxu0 %v2241
        %2243 = vmatprep.subr.mxu0 0.0
        %2244 = vmatpush2.msra.mxu0 0.0
        %2245 = vmatprep.subr.mxu0 0.0
        %2246 = vmatpush2.msra.mxu0 0.0
        %2247 = vmatprep.subr.mxu0 0.0
        %2248 = vmatpush2.msra.mxu0 0.0
        %2249 = vmatprep.subr.mxu0 0.0
        %2250 = vmatpush2.msra.mxu0 0.0
        %2251 = vmatprep.subr.mxu0 0.0
        %2252 = vmatpush2.msra.mxu0 0.0
        %2253 = vmatprep.subr.mxu0 0.0
        %2254 = vmatpush2.msra.mxu0 0.0
        %2255 = vmatprep.subr.mxu0 0.0
        %2256 = vmatpush2.msra.mxu0 0.0
        %2257 = vmatprep.subr.mxu0 0.0
        %2258 = vmatpush2.msra.mxu0 0.0
        %2259 = vmatprep.subr.mxu0 0.0
        %2260 = vmatpush2.msra.mxu0 0.0
        %2261 = vmatprep.subr.mxu0 0.0
        %2262 = vmatpush2.msra.mxu0 0.0
        %2263 = vmatprep.subr.mxu0 0.0
        %2264 = vmatpush2.msra.mxu0 0.0
        %2265 = vmatprep.subr.mxu0 0.0
        %2266 = vmatpush2.msra.mxu0 0.0
        %2267 = vmatprep.subr.mxu0 0.0
        %2268 = vmatpush2.msra.mxu0 0.0
        %2269 = vmatprep.subr.mxu0 0.0
        %2270 = vmatpush2.msra.mxu0 0.0
        %2271 = vmatprep.subr.mxu0 0.0
        %2272 = vmatpush2.msra.mxu0 0.0
        %2273 = vmatprep.subr.mxu0 0.0
        %2274 = vmatpush2.msra.mxu0 0.0
        %2275 = vmatprep.mubr.f32.mxu0 0.0
        %v2276 = vand.u32 %v1795, 4294901760
        %2277 = vmatmul.mubr.f32.gmra.mxu0 %v2276
        %v2278 = vpop.f32.mrf.mxu0
        %v2279 = vadd.f32 %v2204, %v2278
        %v2280 = vpop.f32.mrf.mxu0
        %2281 = vdwg.mxu0
        %v2283 = vcombine.high %v2279, %v2279
        %v2285 = vunpack.c.l.s4 1983009808
        %v2286 = vunpack.c.0.s8 %v2285
        %v2287 = vlaneseq
        %v2288 = vshrl.u32 %v2287, 7
        %v2289 = vsub.s32 %v2286, %v2288
        %v2290 = vrot.slane %v2279, %v2289
        %v2292 = vunpack.c.l.s4 1983009808
        %v2293 = vunpack.c.0.s8 %v2292
        %v2294 = vlaneseq
        %v2295 = vshrl.u32 %v2294, 7
        %v2296 = vsub.s32 %v2293, %v2295
        %v2297 = vrot.slane %v2283, %v2296
        %v2298 = vcombine.high %v2290, %v2290
        %v2299 = vcombine.high %v2297, %v2297
        %v2304 = vld [vmem:[%s4] sm:$0xf]
        %v2307 = vunpack.c.l.s4 1966171168
        %v2308 = vunpack.c.0.s8 %v2307
        %v2309 = vlaneseq
        %v2310 = vshrl.u32 %v2309, 7
        %v2311 = vsub.s32 %v2308, %v2310
        %v2312 = vrot.slane %v2304, %v2311
        %v2313 = vcombine.high %v2312, %v2312
        %v2315 = vunpack.c.l.s4 1966171168
        %v2316 = vunpack.c.0.s8 %v2315
        %v2317 = vlaneseq
        %v2318 = vshrl.u32 %v2317, 7
        %v2319 = vsub.s32 %v2316, %v2318
        %v2320 = vrot.slane %v2312, %v2319
        %v2322 = vunpack.c.l.s4 1966171168
        %v2323 = vunpack.c.0.s8 %v2322
        %v2324 = vlaneseq
        %v2325 = vshrl.u32 %v2324, 7
        %v2326 = vsub.s32 %v2323, %v2325
        %v2327 = vrot.slane %v2313, %v2326
        %v2328 = vcombine.high %v2320, %v2320
        %v2329 = vcombine.high %v2327, %v2327
        %v2330 = vlaneseq
        %v2331 = vshrl.u32 %v2330, 7
        %v2332 = vsub.s32 0, %v2331
        %v2333 = vrot.slane %v2320, %v2332
        %v2334 = vlaneseq
        %v2335 = vshrl.u32 %v2334, 7
        %v2336 = vsub.s32 0, %v2335
        %v2337 = vrot.slane %v2327, %v2336
        %v2338 = vlaneseq
        %v2339 = vshrl.u32 %v2338, 7
        %v2340 = vsub.s32 0, %v2339
        %v2341 = vrot.slane %v2328, %v2340
        %v2342 = vlaneseq
        %v2343 = vshrl.u32 %v2342, 7
        %v2344 = vsub.s32 0, %v2343
        %v2345 = vrot.slane %v2329, %v2344
        %v2350 = vadd.f32 %v2290, %v2333
        %v2351 = vadd.f32 %v2298, %v2337
        %v2352 = vadd.f32 %v2297, %v2341
        %v2353 = vadd.f32 %v2299, %v2345
        %v2354 = vmul.f32 %v2350, %v394
        %v2355 = vmul.f32 %v2351, %v395
        %v2356 = vmul.f32 %v2352, %v396
        %v2357 = vmul.f32 %v2353, %v397
        %vm2358 = vcmask 1041408
        %v2359 = vsel %vm2358, %v2354, 0.0
        %v2360 = vsel %vm2358, %v2355, 0.0
        %v2361 = vadd.f32 %v2359, %v2360
        %v2362 = vsel %vm2358, %v2356, 0.0
        %v2363 = vadd.f32 %v2361, %v2362
        %v2364 = vsel %vm2358, %v2357, 0.0
        %v2365 = vadd.f32 %v2363, %v2364
        %2366 = vst [vmem:[%s377] sm:$0x3] %v2365
        %v2367 = vld [vmem:[#allocation5 + $0x8] sm:$0xff]
        %v2368 = vld [vmem:[#allocation5 + $0x38] sm:$0xff]
        %v2369 = vld [vmem:[#allocation5 + $0x68] sm:$0xff]
        %v2370 = vld [vmem:[#allocation5 + $0x98] sm:$0xff]
        %2371 = vmatprep.subr.mxu0 0.0
        %2372 = vmatpush1.msra.mxu0 0.0
        %2373 = vmatprep.subr.mxu0 0.0
        %2374 = vmatpush1.msra.mxu0 0.0
        %2375 = vmatprep.subr.mxu0 0.0
        %2376 = vmatpush1.msra.mxu0 0.0
        %2377 = vmatprep.subr.mxu0 0.0
        %2378 = vmatpush1.msra.mxu0 0.0
        %2379 = vmatprep.subr.mxu0 0.0
        %2380 = vmatpush1.msra.mxu0 0.0
        %2381 = vmatprep.subr.mxu0 0.0
        %2382 = vmatpush1.msra.mxu0 0.0
        %2383 = vmatprep.subr.mxu0 0.0
        %2384 = vmatpush1.msra.mxu0 0.0
        %2385 = vmatprep.subr.mxu0 0.0
        %2386 = vmatpush1.msra.mxu0 0.0
        %2387 = vmatprep.subr.mxu0 0.0
        %2388 = vmatpush1.msra.mxu0 0.0
        %2389 = vmatprep.subr.mxu0 0.0
        %2390 = vmatpush1.msra.mxu0 0.0
        %2391 = vmatprep.subr.mxu0 0.0
        %2392 = vmatpush1.msra.mxu0 0.0
        %2393 = vmatprep.subr.mxu0 0.0
        %2394 = vmatpush1.msra.mxu0 0.0
        %2395 = vmatprep.subr.mxu0 0.0
        %v2396 = vand.u32 %v2370, 4294901760
        %2397 = vmatpush1.msra.mxu0 %v2396
        %2398 = vmatprep.subr.mxu0 0.0
        %v2399 = vand.u32 %v2369, 4294901760
        %2400 = vmatpush1.msra.mxu0 %v2399
        %2401 = vmatprep.subr.mxu0 0.0
        %v2402 = vand.u32 %v2368, 4294901760
        %2403 = vmatpush1.msra.mxu0 %v2402
        %2404 = vmatprep.subr.mxu0 0.0
        %v2405 = vand.u32 %v2367, 4294901760
        %2406 = vmatpush1.msra.mxu0 %v2405
        %2407 = vmatprep.subr.mxu0 0.0
        %2408 = vmatpush2.msra.mxu0 0.0
        %2409 = vmatprep.subr.mxu0 0.0
        %2410 = vmatpush2.msra.mxu0 0.0
        %2411 = vmatprep.subr.mxu0 0.0
        %2412 = vmatpush2.msra.mxu0 0.0
        %2413 = vmatprep.subr.mxu0 0.0
        %2414 = vmatpush2.msra.mxu0 0.0
        %2415 = vmatprep.subr.mxu0 0.0
        %2416 = vmatpush2.msra.mxu0 0.0
        %2417 = vmatprep.subr.mxu0 0.0
        %2418 = vmatpush2.msra.mxu0 0.0
        %2419 = vmatprep.subr.mxu0 0.0
        %2420 = vmatpush2.msra.mxu0 0.0
        %2421 = vmatprep.subr.mxu0 0.0
        %2422 = vmatpush2.msra.mxu0 0.0
        %2423 = vmatprep.subr.mxu0 0.0
        %2424 = vmatpush2.msra.mxu0 0.0
        %2425 = vmatprep.subr.mxu0 0.0
        %2426 = vmatpush2.msra.mxu0 0.0
        %2427 = vmatprep.subr.mxu0 0.0
        %2428 = vmatpush2.msra.mxu0 0.0
        %2429 = vmatprep.subr.mxu0 0.0
        %2430 = vmatpush2.msra.mxu0 0.0
        %2431 = vmatprep.subr.mxu0 0.0
        %2432 = vmatpush2.msra.mxu0 0.0
        %2433 = vmatprep.subr.mxu0 0.0
        %2434 = vmatpush2.msra.mxu0 0.0
        %2435 = vmatprep.subr.mxu0 0.0
        %2436 = vmatpush2.msra.mxu0 0.0
        %2437 = vmatprep.subr.mxu0 0.0
        %2438 = vmatpush2.msra.mxu0 0.0
        %2439 = vmatprep.mubr.f32.mxu0 0.0
        %v2440 = vand.u32 %v1795, 4294901760
        %v2441 = vsub.f32 %v1795, %v2440
        %v2442 = vand.u32 %v2441, 4294901760
        %v2443 = vsub.f32 %v2441, %v2442
        %v2444 = vand.u32 %v2443, 4294901760
        %2445 = vmatmul.mubr.f32.gmra.mxu0 %v2444
        %v2446 = vpop.f32.mrf.mxu0
        %v2447 = vadd.f32 0.0, %v2446
        %v2448 = vpop.f32.mrf.mxu0
        %2449 = vdwg.mxu0
        %2450 = vmatprep.subr.mxu0 0.0
        %2451 = vmatpush1.msra.mxu0 0.0
        %2452 = vmatprep.subr.mxu0 0.0
        %2453 = vmatpush1.msra.mxu0 0.0
        %2454 = vmatprep.subr.mxu0 0.0
        %2455 = vmatpush1.msra.mxu0 0.0
        %2456 = vmatprep.subr.mxu0 0.0
        %2457 = vmatpush1.msra.mxu0 0.0
        %2458 = vmatprep.subr.mxu0 0.0
        %2459 = vmatpush1.msra.mxu0 0.0
        %2460 = vmatprep.subr.mxu0 0.0
        %2461 = vmatpush1.msra.mxu0 0.0
        %2462 = vmatprep.subr.mxu0 0.0
        %2463 = vmatpush1.msra.mxu0 0.0
        %2464 = vmatprep.subr.mxu0 0.0
        %2465 = vmatpush1.msra.mxu0 0.0
        %2466 = vmatprep.subr.mxu0 0.0
        %2467 = vmatpush1.msra.mxu0 0.0
        %2468 = vmatprep.subr.mxu0 0.0
        %2469 = vmatpush1.msra.mxu0 0.0
        %2470 = vmatprep.subr.mxu0 0.0
        %2471 = vmatpush1.msra.mxu0 0.0
        %2472 = vmatprep.subr.mxu0 0.0
        %2473 = vmatpush1.msra.mxu0 0.0
        %2474 = vmatprep.subr.mxu0 0.0
        %v2475 = vand.u32 %v2370, 4294901760
        %v2476 = vsub.f32 %v2370, %v2475
        %v2477 = vand.u32 %v2476, 4294901760
        %v2478 = vsub.f32 %v2476, %v2477
        %v2479 = vand.u32 %v2478, 4294901760
        %2480 = vmatpush1.msra.mxu0 %v2479
        %2481 = vmatprep.subr.mxu0 0.0
        %v2482 = vand.u32 %v2369, 4294901760
        %v2483 = vsub.f32 %v2369, %v2482
        %v2484 = vand.u32 %v2483, 4294901760
        %v2485 = vsub.f32 %v2483, %v2484
        %v2486 = vand.u32 %v2485, 4294901760
        %2487 = vmatpush1.msra.mxu0 %v2486
        %2488 = vmatprep.subr.mxu0 0.0
        %v2489 = vand.u32 %v2368, 4294901760
        %v2490 = vsub.f32 %v2368, %v2489
        %v2491 = vand.u32 %v2490, 4294901760
        %v2492 = vsub.f32 %v2490, %v2491
        %v2493 = vand.u32 %v2492, 4294901760
        %2494 = vmatpush1.msra.mxu0 %v2493
        %2495 = vmatprep.subr.mxu0 0.0
        %v2496 = vand.u32 %v2367, 4294901760
        %v2497 = vsub.f32 %v2367, %v2496
        %v2498 = vand.u32 %v2497, 4294901760
        %v2499 = vsub.f32 %v2497, %v2498
        %v2500 = vand.u32 %v2499, 4294901760
        %2501 = vmatpush1.msra.mxu0 %v2500
        %2502 = vmatprep.subr.mxu0 0.0
        %2503 = vmatpush2.msra.mxu0 0.0
        %2504 = vmatprep.subr.mxu0 0.0
        %2505 = vmatpush2.msra.mxu0 0.0
        %2506 = vmatprep.subr.mxu0 0.0
        %2507 = vmatpush2.msra.mxu0 0.0
        %2508 = vmatprep.subr.mxu0 0.0
        %2509 = vmatpush2.msra.mxu0 0.0
        %2510 = vmatprep.subr.mxu0 0.0
        %2511 = vmatpush2.msra.mxu0 0.0
        %2512 = vmatprep.subr.mxu0 0.0
        %2513 = vmatpush2.msra.mxu0 0.0
        %2514 = vmatprep.subr.mxu0 0.0
        %2515 = vmatpush2.msra.mxu0 0.0
        %2516 = vmatprep.subr.mxu0 0.0
        %2517 = vmatpush2.msra.mxu0 0.0
        %2518 = vmatprep.subr.mxu0 0.0
        %2519 = vmatpush2.msra.mxu0 0.0
        %2520 = vmatprep.subr.mxu0 0.0
        %2521 = vmatpush2.msra.mxu0 0.0
        %2522 = vmatprep.subr.mxu0 0.0
        %2523 = vmatpush2.msra.mxu0 0.0
        %2524 = vmatprep.subr.mxu0 0.0
        %2525 = vmatpush2.msra.mxu0 0.0
        %2526 = vmatprep.subr.mxu0 0.0
        %2527 = vmatpush2.msra.mxu0 0.0
        %2528 = vmatprep.subr.mxu0 0.0
        %2529 = vmatpush2.msra.mxu0 0.0
        %2530 = vmatprep.subr.mxu0 0.0
        %2531 = vmatpush2.msra.mxu0 0.0
        %2532 = vmatprep.subr.mxu0 0.0
        %2533 = vmatpush2.msra.mxu0 0.0
        %2534 = vmatprep.mubr.f32.mxu0 0.0
        %v2535 = vand.u32 %v1795, 4294901760
        %2536 = vmatmul.mubr.f32.gmra.mxu0 %v2535
        %v2537 = vpop.f32.mrf.mxu0
        %v2538 = vadd.f32 %v2447, %v2537
        %v2539 = vpop.f32.mrf.mxu0
        %2540 = vdwg.mxu0
        %2541 = vmatprep.subr.mxu0 0.0
        %2542 = vmatpush1.msra.mxu0 0.0
        %2543 = vmatprep.subr.mxu0 0.0
        %2544 = vmatpush1.msra.mxu0 0.0
        %2545 = vmatprep.subr.mxu0 0.0
        %2546 = vmatpush1.msra.mxu0 0.0
        %2547 = vmatprep.subr.mxu0 0.0
        %2548 = vmatpush1.msra.mxu0 0.0
        %2549 = vmatprep.subr.mxu0 0.0
        %2550 = vmatpush1.msra.mxu0 0.0
        %2551 = vmatprep.subr.mxu0 0.0
        %2552 = vmatpush1.msra.mxu0 0.0
        %2553 = vmatprep.subr.mxu0 0.0
        %2554 = vmatpush1.msra.mxu0 0.0
        %2555 = vmatprep.subr.mxu0 0.0
        %2556 = vmatpush1.msra.mxu0 0.0
        %2557 = vmatprep.subr.mxu0 0.0
        %2558 = vmatpush1.msra.mxu0 0.0
        %2559 = vmatprep.subr.mxu0 0.0
        %2560 = vmatpush1.msra.mxu0 0.0
        %2561 = vmatprep.subr.mxu0 0.0
        %2562 = vmatpush1.msra.mxu0 0.0
        %2563 = vmatprep.subr.mxu0 0.0
        %2564 = vmatpush1.msra.mxu0 0.0
        %2565 = vmatprep.subr.mxu0 0.0
        %v2566 = vand.u32 %v2370, 4294901760
        %v2567 = vsub.f32 %v2370, %v2566
        %2568 = vmatpush1.msra.mxu0 %v2567
        %2569 = vmatprep.subr.mxu0 0.0
        %v2570 = vand.u32 %v2369, 4294901760
        %v2571 = vsub.f32 %v2369, %v2570
        %2572 = vmatpush1.msra.mxu0 %v2571
        %2573 = vmatprep.subr.mxu0 0.0
        %v2574 = vand.u32 %v2368, 4294901760
        %v2575 = vsub.f32 %v2368, %v2574
        %2576 = vmatpush1.msra.mxu0 %v2575
        %2577 = vmatprep.subr.mxu0 0.0
        %v2578 = vand.u32 %v2367, 4294901760
        %v2579 = vsub.f32 %v2367, %v2578
        %2580 = vmatpush1.msra.mxu0 %v2579
        %2581 = vmatprep.subr.mxu0 0.0
        %2582 = vmatpush2.msra.mxu0 0.0
        %2583 = vmatprep.subr.mxu0 0.0
        %2584 = vmatpush2.msra.mxu0 0.0
        %2585 = vmatprep.subr.mxu0 0.0
        %2586 = vmatpush2.msra.mxu0 0.0
        %2587 = vmatprep.subr.mxu0 0.0
        %2588 = vmatpush2.msra.mxu0 0.0
        %2589 = vmatprep.subr.mxu0 0.0
        %2590 = vmatpush2.msra.mxu0 0.0
        %2591 = vmatprep.subr.mxu0 0.0
        %2592 = vmatpush2.msra.mxu0 0.0
        %2593 = vmatprep.subr.mxu0 0.0
        %2594 = vmatpush2.msra.mxu0 0.0
        %2595 = vmatprep.subr.mxu0 0.0
        %2596 = vmatpush2.msra.mxu0 0.0
        %2597 = vmatprep.subr.mxu0 0.0
        %2598 = vmatpush2.msra.mxu0 0.0
        %2599 = vmatprep.subr.mxu0 0.0
        %2600 = vmatpush2.msra.mxu0 0.0
        %2601 = vmatprep.subr.mxu0 0.0
        %2602 = vmatpush2.msra.mxu0 0.0
        %2603 = vmatprep.subr.mxu0 0.0
        %2604 = vmatpush2.msra.mxu0 0.0
        %2605 = vmatprep.subr.mxu0 0.0
        %2606 = vmatpush2.msra.mxu0 0.0
        %2607 = vmatprep.subr.mxu0 0.0
        %2608 = vmatpush2.msra.mxu0 0.0
        %2609 = vmatprep.subr.mxu0 0.0
        %2610 = vmatpush2.msra.mxu0 0.0
        %2611 = vmatprep.subr.mxu0 0.0
        %2612 = vmatpush2.msra.mxu0 0.0
        %2613 = vmatprep.mubr.f32.mxu0 0.0
        %v2614 = vand.u32 %v1795, 4294901760
        %v2615 = vsub.f32 %v1795, %v2614
        %2616 = vmatmul.mubr.f32.gmra.mxu0 %v2615
        %v2617 = vpop.f32.mrf.mxu0
        %v2618 = vadd.f32 %v2538, %v2617
        %v2619 = vpop.f32.mrf.mxu0
        %2620 = vdwg.mxu0
        %2621 = vmatprep.subr.mxu0 0.0
        %2622 = vmatpush1.msra.mxu0 0.0
        %2623 = vmatprep.subr.mxu0 0.0
        %2624 = vmatpush1.msra.mxu0 0.0
        %2625 = vmatprep.subr.mxu0 0.0
        %2626 = vmatpush1.msra.mxu0 0.0
        %2627 = vmatprep.subr.mxu0 0.0
        %2628 = vmatpush1.msra.mxu0 0.0
        %2629 = vmatprep.subr.mxu0 0.0
        %2630 = vmatpush1.msra.mxu0 0.0
        %2631 = vmatprep.subr.mxu0 0.0
        %2632 = vmatpush1.msra.mxu0 0.0
        %2633 = vmatprep.subr.mxu0 0.0
        %2634 = vmatpush1.msra.mxu0 0.0
        %2635 = vmatprep.subr.mxu0 0.0
        %2636 = vmatpush1.msra.mxu0 0.0
        %2637 = vmatprep.subr.mxu0 0.0
        %2638 = vmatpush1.msra.mxu0 0.0
        %2639 = vmatprep.subr.mxu0 0.0
        %2640 = vmatpush1.msra.mxu0 0.0
        %2641 = vmatprep.subr.mxu0 0.0
        %2642 = vmatpush1.msra.mxu0 0.0
        %2643 = vmatprep.subr.mxu0 0.0
        %2644 = vmatpush1.msra.mxu0 0.0
        %2645 = vmatprep.subr.mxu0 0.0
        %v2646 = vand.u32 %v2370, 4294901760
        %2647 = vmatpush1.msra.mxu0 %v2646
        %2648 = vmatprep.subr.mxu0 0.0
        %v2649 = vand.u32 %v2369, 4294901760
        %2650 = vmatpush1.msra.mxu0 %v2649
        %2651 = vmatprep.subr.mxu0 0.0
        %v2652 = vand.u32 %v2368, 4294901760
        %2653 = vmatpush1.msra.mxu0 %v2652
        %2654 = vmatprep.subr.mxu0 0.0
        %v2655 = vand.u32 %v2367, 4294901760
        %2656 = vmatpush1.msra.mxu0 %v2655
        %2657 = vmatprep.subr.mxu0 0.0
        %2658 = vmatpush2.msra.mxu0 0.0
        %2659 = vmatprep.subr.mxu0 0.0
        %2660 = vmatpush2.msra.mxu0 0.0
        %2661 = vmatprep.subr.mxu0 0.0
        %2662 = vmatpush2.msra.mxu0 0.0
        %2663 = vmatprep.subr.mxu0 0.0
        %2664 = vmatpush2.msra.mxu0 0.0
        %2665 = vmatprep.subr.mxu0 0.0
        %2666 = vmatpush2.msra.mxu0 0.0
        %2667 = vmatprep.subr.mxu0 0.0
        %2668 = vmatpush2.msra.mxu0 0.0
        %2669 = vmatprep.subr.mxu0 0.0
        %2670 = vmatpush2.msra.mxu0 0.0
        %2671 = vmatprep.subr.mxu0 0.0
        %2672 = vmatpush2.msra.mxu0 0.0
        %2673 = vmatprep.subr.mxu0 0.0
        %2674 = vmatpush2.msra.mxu0 0.0
        %2675 = vmatprep.subr.mxu0 0.0
        %2676 = vmatpush2.msra.mxu0 0.0
        %2677 = vmatprep.subr.mxu0 0.0
        %2678 = vmatpush2.msra.mxu0 0.0
        %2679 = vmatprep.subr.mxu0 0.0
        %2680 = vmatpush2.msra.mxu0 0.0
        %2681 = vmatprep.subr.mxu0 0.0
        %2682 = vmatpush2.msra.mxu0 0.0
        %2683 = vmatprep.subr.mxu0 0.0
        %2684 = vmatpush2.msra.mxu0 0.0
        %2685 = vmatprep.subr.mxu0 0.0
        %2686 = vmatpush2.msra.mxu0 0.0
        %2687 = vmatprep.subr.mxu0 0.0
        %2688 = vmatpush2.msra.mxu0 0.0
        %2689 = vmatprep.mubr.f32.mxu0 0.0
        %v2690 = vand.u32 %v1795, 4294901760
        %v2691 = vsub.f32 %v1795, %v2690
        %v2692 = vand.u32 %v2691, 4294901760
        %2693 = vmatmul.mubr.f32.gmra.mxu0 %v2692
        %v2694 = vpop.f32.mrf.mxu0
        %v2695 = vadd.f32 %v2618, %v2694
        %v2696 = vpop.f32.mrf.mxu0
        %2697 = vdwg.mxu0
        %2698 = vmatprep.subr.mxu0 0.0
        %2699 = vmatpush1.msra.mxu0 0.0
        %2700 = vmatprep.subr.mxu0 0.0
        %2701 = vmatpush1.msra.mxu0 0.0
        %2702 = vmatprep.subr.mxu0 0.0
        %2703 = vmatpush1.msra.mxu0 0.0
        %2704 = vmatprep.subr.mxu0 0.0
        %2705 = vmatpush1.msra.mxu0 0.0
        %2706 = vmatprep.subr.mxu0 0.0
        %2707 = vmatpush1.msra.mxu0 0.0
        %2708 = vmatprep.subr.mxu0 0.0
        %2709 = vmatpush1.msra.mxu0 0.0
        %2710 = vmatprep.subr.mxu0 0.0
        %2711 = vmatpush1.msra.mxu0 0.0
        %2712 = vmatprep.subr.mxu0 0.0
        %2713 = vmatpush1.msra.mxu0 0.0
        %2714 = vmatprep.subr.mxu0 0.0
        %2715 = vmatpush1.msra.mxu0 0.0
        %2716 = vmatprep.subr.mxu0 0.0
        %2717 = vmatpush1.msra.mxu0 0.0
        %2718 = vmatprep.subr.mxu0 0.0
        %2719 = vmatpush1.msra.mxu0 0.0
        %2720 = vmatprep.subr.mxu0 0.0
        %2721 = vmatpush1.msra.mxu0 0.0
        %2722 = vmatprep.subr.mxu0 0.0
        %v2723 = vand.u32 %v2370, 4294901760
        %v2724 = vsub.f32 %v2370, %v2723
        %v2725 = vand.u32 %v2724, 4294901760
        %2726 = vmatpush1.msra.mxu0 %v2725
        %2727 = vmatprep.subr.mxu0 0.0
        %v2728 = vand.u32 %v2369, 4294901760
        %v2729 = vsub.f32 %v2369, %v2728
        %v2730 = vand.u32 %v2729, 4294901760
        %2731 = vmatpush1.msra.mxu0 %v2730
        %2732 = vmatprep.subr.mxu0 0.0
        %v2733 = vand.u32 %v2368, 4294901760
        %v2734 = vsub.f32 %v2368, %v2733
        %v2735 = vand.u32 %v2734, 4294901760
        %2736 = vmatpush1.msra.mxu0 %v2735
        %2737 = vmatprep.subr.mxu0 0.0
        %v2738 = vand.u32 %v2367, 4294901760
        %v2739 = vsub.f32 %v2367, %v2738
        %v2740 = vand.u32 %v2739, 4294901760
        %2741 = vmatpush1.msra.mxu0 %v2740
        %2742 = vmatprep.subr.mxu0 0.0
        %2743 = vmatpush2.msra.mxu0 0.0
        %2744 = vmatprep.subr.mxu0 0.0
        %2745 = vmatpush2.msra.mxu0 0.0
        %2746 = vmatprep.subr.mxu0 0.0
        %2747 = vmatpush2.msra.mxu0 0.0
        %2748 = vmatprep.subr.mxu0 0.0
        %2749 = vmatpush2.msra.mxu0 0.0
        %2750 = vmatprep.subr.mxu0 0.0
        %2751 = vmatpush2.msra.mxu0 0.0
        %2752 = vmatprep.subr.mxu0 0.0
        %2753 = vmatpush2.msra.mxu0 0.0
        %2754 = vmatprep.subr.mxu0 0.0
        %2755 = vmatpush2.msra.mxu0 0.0
        %2756 = vmatprep.subr.mxu0 0.0
        %2757 = vmatpush2.msra.mxu0 0.0
        %2758 = vmatprep.subr.mxu0 0.0
        %2759 = vmatpush2.msra.mxu0 0.0
        %2760 = vmatprep.subr.mxu0 0.0
        %2761 = vmatpush2.msra.mxu0 0.0
        %2762 = vmatprep.subr.mxu0 0.0
        %2763 = vmatpush2.msra.mxu0 0.0
        %2764 = vmatprep.subr.mxu0 0.0
        %2765 = vmatpush2.msra.mxu0 0.0
        %2766 = vmatprep.subr.mxu0 0.0
        %2767 = vmatpush2.msra.mxu0 0.0
        %2768 = vmatprep.subr.mxu0 0.0
        %2769 = vmatpush2.msra.mxu0 0.0
        %2770 = vmatprep.subr.mxu0 0.0
        %2771 = vmatpush2.msra.mxu0 0.0
        %2772 = vmatprep.subr.mxu0 0.0
        %2773 = vmatpush2.msra.mxu0 0.0
        %2774 = vmatprep.mubr.f32.mxu0 0.0
        %v2775 = vand.u32 %v1795, 4294901760
        %2776 = vmatmul.mubr.f32.gmra.mxu0 %v2775
        %v2777 = vpop.f32.mrf.mxu0
        %v2778 = vadd.f32 %v2695, %v2777
        %v2779 = vpop.f32.mrf.mxu0
        %2780 = vdwg.mxu0
        %2781 = vmatprep.subr.mxu0 0.0
        %2782 = vmatpush1.msra.mxu0 0.0
        %2783 = vmatprep.subr.mxu0 0.0
        %2784 = vmatpush1.msra.mxu0 0.0
        %2785 = vmatprep.subr.mxu0 0.0
        %2786 = vmatpush1.msra.mxu0 0.0
        %2787 = vmatprep.subr.mxu0 0.0
        %2788 = vmatpush1.msra.mxu0 0.0
        %2789 = vmatprep.subr.mxu0 0.0
        %2790 = vmatpush1.msra.mxu0 0.0
        %2791 = vmatprep.subr.mxu0 0.0
        %2792 = vmatpush1.msra.mxu0 0.0
        %2793 = vmatprep.subr.mxu0 0.0
        %2794 = vmatpush1.msra.mxu0 0.0
        %2795 = vmatprep.subr.mxu0 0.0
        %2796 = vmatpush1.msra.mxu0 0.0
        %2797 = vmatprep.subr.mxu0 0.0
        %2798 = vmatpush1.msra.mxu0 0.0
        %2799 = vmatprep.subr.mxu0 0.0
        %2800 = vmatpush1.msra.mxu0 0.0
        %2801 = vmatprep.subr.mxu0 0.0
        %2802 = vmatpush1.msra.mxu0 0.0
        %2803 = vmatprep.subr.mxu0 0.0
        %2804 = vmatpush1.msra.mxu0 0.0
        %2805 = vmatprep.subr.mxu0 0.0
        %v2806 = vand.u32 %v2370, 4294901760
        %2807 = vmatpush1.msra.mxu0 %v2806
        %2808 = vmatprep.subr.mxu0 0.0
        %v2809 = vand.u32 %v2369, 4294901760
        %2810 = vmatpush1.msra.mxu0 %v2809
        %2811 = vmatprep.subr.mxu0 0.0
        %v2812 = vand.u32 %v2368, 4294901760
        %2813 = vmatpush1.msra.mxu0 %v2812
        %2814 = vmatprep.subr.mxu0 0.0
        %v2815 = vand.u32 %v2367, 4294901760
        %2816 = vmatpush1.msra.mxu0 %v2815
        %2817 = vmatprep.subr.mxu0 0.0
        %2818 = vmatpush2.msra.mxu0 0.0
        %2819 = vmatprep.subr.mxu0 0.0
        %2820 = vmatpush2.msra.mxu0 0.0
        %2821 = vmatprep.subr.mxu0 0.0
        %2822 = vmatpush2.msra.mxu0 0.0
        %2823 = vmatprep.subr.mxu0 0.0
        %2824 = vmatpush2.msra.mxu0 0.0
        %2825 = vmatprep.subr.mxu0 0.0
        %2826 = vmatpush2.msra.mxu0 0.0
        %2827 = vmatprep.subr.mxu0 0.0
        %2828 = vmatpush2.msra.mxu0 0.0
        %2829 = vmatprep.subr.mxu0 0.0
        %2830 = vmatpush2.msra.mxu0 0.0
        %2831 = vmatprep.subr.mxu0 0.0
        %2832 = vmatpush2.msra.mxu0 0.0
        %2833 = vmatprep.subr.mxu0 0.0
        %2834 = vmatpush2.msra.mxu0 0.0
        %2835 = vmatprep.subr.mxu0 0.0
        %2836 = vmatpush2.msra.mxu0 0.0
        %2837 = vmatprep.subr.mxu0 0.0
        %2838 = vmatpush2.msra.mxu0 0.0
        %2839 = vmatprep.subr.mxu0 0.0
        %2840 = vmatpush2.msra.mxu0 0.0
        %2841 = vmatprep.subr.mxu0 0.0
        %2842 = vmatpush2.msra.mxu0 0.0
        %2843 = vmatprep.subr.mxu0 0.0
        %2844 = vmatpush2.msra.mxu0 0.0
        %2845 = vmatprep.subr.mxu0 0.0
        %2846 = vmatpush2.msra.mxu0 0.0
        %2847 = vmatprep.subr.mxu0 0.0
        %2848 = vmatpush2.msra.mxu0 0.0
        %2849 = vmatprep.mubr.f32.mxu0 0.0
        %v2850 = vand.u32 %v1795, 4294901760
        %2851 = vmatmul.mubr.f32.gmra.mxu0 %v2850
        %v2852 = vpop.f32.mrf.mxu0
        %v2853 = vadd.f32 %v2778, %v2852
        %v2854 = vpop.f32.mrf.mxu0
        %2855 = vdwg.mxu0
        %v2857 = vcombine.high %v2853, %v2853
        %v2859 = vunpack.c.l.s4 1983009808
        %v2860 = vunpack.c.0.s8 %v2859
        %v2861 = vlaneseq
        %v2862 = vshrl.u32 %v2861, 7
        %v2863 = vsub.s32 %v2860, %v2862
        %v2864 = vrot.slane %v2853, %v2863
        %v2866 = vunpack.c.l.s4 1983009808
        %v2867 = vunpack.c.0.s8 %v2866
        %v2868 = vlaneseq
        %v2869 = vshrl.u32 %v2868, 7
        %v2870 = vsub.s32 %v2867, %v2869
        %v2871 = vrot.slane %v2857, %v2870
        %v2872 = vcombine.high %v2864, %v2864
        %v2873 = vcombine.high %v2871, %v2871
        %v2878 = vld [vmem:[%s4 + $0x4] sm:$0xf]
        %v2881 = vunpack.c.l.s4 1966171168
        %v2882 = vunpack.c.0.s8 %v2881
        %v2883 = vlaneseq
        %v2884 = vshrl.u32 %v2883, 7
        %v2885 = vsub.s32 %v2882, %v2884
        %v2886 = vrot.slane %v2878, %v2885
        %v2887 = vcombine.high %v2886, %v2886
        %v2889 = vunpack.c.l.s4 1966171168
        %v2890 = vunpack.c.0.s8 %v2889
        %v2891 = vlaneseq
        %v2892 = vshrl.u32 %v2891, 7
        %v2893 = vsub.s32 %v2890, %v2892
        %v2894 = vrot.slane %v2886, %v2893
        %v2896 = vunpack.c.l.s4 1966171168
        %v2897 = vunpack.c.0.s8 %v2896
        %v2898 = vlaneseq
        %v2899 = vshrl.u32 %v2898, 7
        %v2900 = vsub.s32 %v2897, %v2899
        %v2901 = vrot.slane %v2887, %v2900
        %v2902 = vcombine.high %v2894, %v2894
        %v2903 = vcombine.high %v2901, %v2901
        %v2904 = vlaneseq
        %v2905 = vshrl.u32 %v2904, 7
        %v2906 = vsub.s32 0, %v2905
        %v2907 = vrot.slane %v2894, %v2906
        %v2908 = vlaneseq
        %v2909 = vshrl.u32 %v2908, 7
        %v2910 = vsub.s32 0, %v2909
        %v2911 = vrot.slane %v2901, %v2910
        %v2912 = vlaneseq
        %v2913 = vshrl.u32 %v2912, 7
        %v2914 = vsub.s32 0, %v2913
        %v2915 = vrot.slane %v2902, %v2914
        %v2916 = vlaneseq
        %v2917 = vshrl.u32 %v2916, 7
        %v2918 = vsub.s32 0, %v2917
        %v2919 = vrot.slane %v2903, %v2918
        %v2924 = vadd.f32 %v2864, %v2907
        %v2925 = vadd.f32 %v2872, %v2911
        %v2926 = vadd.f32 %v2871, %v2915
        %v2927 = vadd.f32 %v2873, %v2919
        %v2928 = vmul.f32 %v2924, %v394
        %v2929 = vmul.f32 %v2925, %v395
        %v2930 = vmul.f32 %v2926, %v396
        %v2931 = vmul.f32 %v2927, %v397
        %v2932 = vsel %vm2358, %v2928, 0.0
        %v2933 = vsel %vm2358, %v2929, 0.0
        %v2934 = vadd.f32 %v2932, %v2933
        %v2935 = vsel %vm2358, %v2930, 0.0
        %v2936 = vadd.f32 %v2934, %v2935
        %v2937 = vsel %vm2358, %v2931, 0.0
        %v2938 = vadd.f32 %v2936, %v2937
        %s2939 = scalar_lea.vmem %s377, 2 [#allocation8]
        %2940 = vst [vmem:[%s2939] sm:$0x3] %v2938
        %v2941 = vld [vmem:[#allocation5 + $0x10] sm:$0xff]
        %v2942 = vld [vmem:[#allocation5 + $0x40] sm:$0xff]
        %v2943 = vld [vmem:[#allocation5 + $0x70] sm:$0xff]
        %v2944 = vld [vmem:[#allocation5 + $0xa0] sm:$0xff]
        %2945 = vmatprep.subr.mxu0 0.0
        %2946 = vmatpush1.msra.mxu0 0.0
        %2947 = vmatprep.subr.mxu0 0.0
        %2948 = vmatpush1.msra.mxu0 0.0
        %2949 = vmatprep.subr.mxu0 0.0
        %2950 = vmatpush1.msra.mxu0 0.0
        %2951 = vmatprep.subr.mxu0 0.0
        %2952 = vmatpush1.msra.mxu0 0.0
        %2953 = vmatprep.subr.mxu0 0.0
        %2954 = vmatpush1.msra.mxu0 0.0
        %2955 = vmatprep.subr.mxu0 0.0
        %2956 = vmatpush1.msra.mxu0 0.0
        %2957 = vmatprep.subr.mxu0 0.0
        %2958 = vmatpush1.msra.mxu0 0.0
        %2959 = vmatprep.subr.mxu0 0.0
        %2960 = vmatpush1.msra.mxu0 0.0
        %2961 = vmatprep.subr.mxu0 0.0
        %2962 = vmatpush1.msra.mxu0 0.0
        %2963 = vmatprep.subr.mxu0 0.0
        %2964 = vmatpush1.msra.mxu0 0.0
        %2965 = vmatprep.subr.mxu0 0.0
        %2966 = vmatpush1.msra.mxu0 0.0
        %2967 = vmatprep.subr.mxu0 0.0
        %2968 = vmatpush1.msra.mxu0 0.0
        %2969 = vmatprep.subr.mxu0 0.0
        %v2970 = vand.u32 %v2944, 4294901760
        %2971 = vmatpush1.msra.mxu0 %v2970
        %2972 = vmatprep.subr.mxu0 0.0
        %v2973 = vand.u32 %v2943, 4294901760
        %2974 = vmatpush1.msra.mxu0 %v2973
        %2975 = vmatprep.subr.mxu0 0.0
        %v2976 = vand.u32 %v2942, 4294901760
        %2977 = vmatpush1.msra.mxu0 %v2976
        %2978 = vmatprep.subr.mxu0 0.0
        %v2979 = vand.u32 %v2941, 4294901760
        %2980 = vmatpush1.msra.mxu0 %v2979
        %2981 = vmatprep.subr.mxu0 0.0
        %2982 = vmatpush2.msra.mxu0 0.0
        %2983 = vmatprep.subr.mxu0 0.0
        %2984 = vmatpush2.msra.mxu0 0.0
        %2985 = vmatprep.subr.mxu0 0.0
        %2986 = vmatpush2.msra.mxu0 0.0
        %2987 = vmatprep.subr.mxu0 0.0
        %2988 = vmatpush2.msra.mxu0 0.0
        %2989 = vmatprep.subr.mxu0 0.0
        %2990 = vmatpush2.msra.mxu0 0.0
        %2991 = vmatprep.subr.mxu0 0.0
        %2992 = vmatpush2.msra.mxu0 0.0
        %2993 = vmatprep.subr.mxu0 0.0
        %2994 = vmatpush2.msra.mxu0 0.0
        %2995 = vmatprep.subr.mxu0 0.0
        %2996 = vmatpush2.msra.mxu0 0.0
        %2997 = vmatprep.subr.mxu0 0.0
        %2998 = vmatpush2.msra.mxu0 0.0
        %2999 = vmatprep.subr.mxu0 0.0
        %3000 = vmatpush2.msra.mxu0 0.0
        %3001 = vmatprep.subr.mxu0 0.0
        %3002 = vmatpush2.msra.mxu0 0.0
        %3003 = vmatprep.subr.mxu0 0.0
        %3004 = vmatpush2.msra.mxu0 0.0
        %3005 = vmatprep.subr.mxu0 0.0
        %3006 = vmatpush2.msra.mxu0 0.0
        %3007 = vmatprep.subr.mxu0 0.0
        %3008 = vmatpush2.msra.mxu0 0.0
        %3009 = vmatprep.subr.mxu0 0.0
        %3010 = vmatpush2.msra.mxu0 0.0
        %3011 = vmatprep.subr.mxu0 0.0
        %3012 = vmatpush2.msra.mxu0 0.0
        %3013 = vmatprep.mubr.f32.mxu0 0.0
        %v3014 = vand.u32 %v1795, 4294901760
        %v3015 = vsub.f32 %v1795, %v3014
        %v3016 = vand.u32 %v3015, 4294901760
        %v3017 = vsub.f32 %v3015, %v3016
        %v3018 = vand.u32 %v3017, 4294901760
        %3019 = vmatmul.mubr.f32.gmra.mxu0 %v3018
        %v3020 = vpop.f32.mrf.mxu0
        %v3021 = vadd.f32 0.0, %v3020
        %v3022 = vpop.f32.mrf.mxu0
        %3023 = vdwg.mxu0
        %3024 = vmatprep.subr.mxu0 0.0
        %3025 = vmatpush1.msra.mxu0 0.0
        %3026 = vmatprep.subr.mxu0 0.0
        %3027 = vmatpush1.msra.mxu0 0.0
        %3028 = vmatprep.subr.mxu0 0.0
        %3029 = vmatpush1.msra.mxu0 0.0
        %3030 = vmatprep.subr.mxu0 0.0
        %3031 = vmatpush1.msra.mxu0 0.0
        %3032 = vmatprep.subr.mxu0 0.0
        %3033 = vmatpush1.msra.mxu0 0.0
        %3034 = vmatprep.subr.mxu0 0.0
        %3035 = vmatpush1.msra.mxu0 0.0
        %3036 = vmatprep.subr.mxu0 0.0
        %3037 = vmatpush1.msra.mxu0 0.0
        %3038 = vmatprep.subr.mxu0 0.0
        %3039 = vmatpush1.msra.mxu0 0.0
        %3040 = vmatprep.subr.mxu0 0.0
        %3041 = vmatpush1.msra.mxu0 0.0
        %3042 = vmatprep.subr.mxu0 0.0
        %3043 = vmatpush1.msra.mxu0 0.0
        %3044 = vmatprep.subr.mxu0 0.0
        %3045 = vmatpush1.msra.mxu0 0.0
        %3046 = vmatprep.subr.mxu0 0.0
        %3047 = vmatpush1.msra.mxu0 0.0
        %3048 = vmatprep.subr.mxu0 0.0
        %v3049 = vand.u32 %v2944, 4294901760
        %v3050 = vsub.f32 %v2944, %v3049
        %v3051 = vand.u32 %v3050, 4294901760
        %v3052 = vsub.f32 %v3050, %v3051
        %v3053 = vand.u32 %v3052, 4294901760
        %3054 = vmatpush1.msra.mxu0 %v3053
        %3055 = vmatprep.subr.mxu0 0.0
        %v3056 = vand.u32 %v2943, 4294901760
        %v3057 = vsub.f32 %v2943, %v3056
        %v3058 = vand.u32 %v3057, 4294901760
        %v3059 = vsub.f32 %v3057, %v3058
        %v3060 = vand.u32 %v3059, 4294901760
        %3061 = vmatpush1.msra.mxu0 %v3060
        %3062 = vmatprep.subr.mxu0 0.0
        %v3063 = vand.u32 %v2942, 4294901760
        %v3064 = vsub.f32 %v2942, %v3063
        %v3065 = vand.u32 %v3064, 4294901760
        %v3066 = vsub.f32 %v3064, %v3065
        %v3067 = vand.u32 %v3066, 4294901760
        %3068 = vmatpush1.msra.mxu0 %v3067
        %3069 = vmatprep.subr.mxu0 0.0
        %v3070 = vand.u32 %v2941, 4294901760
        %v3071 = vsub.f32 %v2941, %v3070
        %v3072 = vand.u32 %v3071, 4294901760
        %v3073 = vsub.f32 %v3071, %v3072
        %v3074 = vand.u32 %v3073, 4294901760
        %3075 = vmatpush1.msra.mxu0 %v3074
        %3076 = vmatprep.subr.mxu0 0.0
        %3077 = vmatpush2.msra.mxu0 0.0
        %3078 = vmatprep.subr.mxu0 0.0
        %3079 = vmatpush2.msra.mxu0 0.0
        %3080 = vmatprep.subr.mxu0 0.0
        %3081 = vmatpush2.msra.mxu0 0.0
        %3082 = vmatprep.subr.mxu0 0.0
        %3083 = vmatpush2.msra.mxu0 0.0
        %3084 = vmatprep.subr.mxu0 0.0
        %3085 = vmatpush2.msra.mxu0 0.0
        %3086 = vmatprep.subr.mxu0 0.0
        %3087 = vmatpush2.msra.mxu0 0.0
        %3088 = vmatprep.subr.mxu0 0.0
        %3089 = vmatpush2.msra.mxu0 0.0
        %3090 = vmatprep.subr.mxu0 0.0
        %3091 = vmatpush2.msra.mxu0 0.0
        %3092 = vmatprep.subr.mxu0 0.0
        %3093 = vmatpush2.msra.mxu0 0.0
        %3094 = vmatprep.subr.mxu0 0.0
        %3095 = vmatpush2.msra.mxu0 0.0
        %3096 = vmatprep.subr.mxu0 0.0
        %3097 = vmatpush2.msra.mxu0 0.0
        %3098 = vmatprep.subr.mxu0 0.0
        %3099 = vmatpush2.msra.mxu0 0.0
        %3100 = vmatprep.subr.mxu0 0.0
        %3101 = vmatpush2.msra.mxu0 0.0
        %3102 = vmatprep.subr.mxu0 0.0
        %3103 = vmatpush2.msra.mxu0 0.0
        %3104 = vmatprep.subr.mxu0 0.0
        %3105 = vmatpush2.msra.mxu0 0.0
        %3106 = vmatprep.subr.mxu0 0.0
        %3107 = vmatpush2.msra.mxu0 0.0
        %3108 = vmatprep.mubr.f32.mxu0 0.0
        %v3109 = vand.u32 %v1795, 4294901760
        %3110 = vmatmul.mubr.f32.gmra.mxu0 %v3109
        %v3111 = vpop.f32.mrf.mxu0
        %v3112 = vadd.f32 %v3021, %v3111
        %v3113 = vpop.f32.mrf.mxu0
        %3114 = vdwg.mxu0
        %3115 = vmatprep.subr.mxu0 0.0
        %3116 = vmatpush1.msra.mxu0 0.0
        %3117 = vmatprep.subr.mxu0 0.0
        %3118 = vmatpush1.msra.mxu0 0.0
        %3119 = vmatprep.subr.mxu0 0.0
        %3120 = vmatpush1.msra.mxu0 0.0
        %3121 = vmatprep.subr.mxu0 0.0
        %3122 = vmatpush1.msra.mxu0 0.0
        %3123 = vmatprep.subr.mxu0 0.0
        %3124 = vmatpush1.msra.mxu0 0.0
        %3125 = vmatprep.subr.mxu0 0.0
        %3126 = vmatpush1.msra.mxu0 0.0
        %3127 = vmatprep.subr.mxu0 0.0
        %3128 = vmatpush1.msra.mxu0 0.0
        %3129 = vmatprep.subr.mxu0 0.0
        %3130 = vmatpush1.msra.mxu0 0.0
        %3131 = vmatprep.subr.mxu0 0.0
        %3132 = vmatpush1.msra.mxu0 0.0
        %3133 = vmatprep.subr.mxu0 0.0
        %3134 = vmatpush1.msra.mxu0 0.0
        %3135 = vmatprep.subr.mxu0 0.0
        %3136 = vmatpush1.msra.mxu0 0.0
        %3137 = vmatprep.subr.mxu0 0.0
        %3138 = vmatpush1.msra.mxu0 0.0
        %3139 = vmatprep.subr.mxu0 0.0
        %v3140 = vand.u32 %v2944, 4294901760
        %v3141 = vsub.f32 %v2944, %v3140
        %3142 = vmatpush1.msra.mxu0 %v3141
        %3143 = vmatprep.subr.mxu0 0.0
        %v3144 = vand.u32 %v2943, 4294901760
        %v3145 = vsub.f32 %v2943, %v3144
        %3146 = vmatpush1.msra.mxu0 %v3145
        %3147 = vmatprep.subr.mxu0 0.0
        %v3148 = vand.u32 %v2942, 4294901760
        %v3149 = vsub.f32 %v2942, %v3148
        %3150 = vmatpush1.msra.mxu0 %v3149
        %3151 = vmatprep.subr.mxu0 0.0
        %v3152 = vand.u32 %v2941, 4294901760
        %v3153 = vsub.f32 %v2941, %v3152
        %3154 = vmatpush1.msra.mxu0 %v3153
        %3155 = vmatprep.subr.mxu0 0.0
        %3156 = vmatpush2.msra.mxu0 0.0
        %3157 = vmatprep.subr.mxu0 0.0
        %3158 = vmatpush2.msra.mxu0 0.0
        %3159 = vmatprep.subr.mxu0 0.0
        %3160 = vmatpush2.msra.mxu0 0.0
        %3161 = vmatprep.subr.mxu0 0.0
        %3162 = vmatpush2.msra.mxu0 0.0
        %3163 = vmatprep.subr.mxu0 0.0
        %3164 = vmatpush2.msra.mxu0 0.0
        %3165 = vmatprep.subr.mxu0 0.0
        %3166 = vmatpush2.msra.mxu0 0.0
        %3167 = vmatprep.subr.mxu0 0.0
        %3168 = vmatpush2.msra.mxu0 0.0
        %3169 = vmatprep.subr.mxu0 0.0
        %3170 = vmatpush2.msra.mxu0 0.0
        %3171 = vmatprep.subr.mxu0 0.0
        %3172 = vmatpush2.msra.mxu0 0.0
        %3173 = vmatprep.subr.mxu0 0.0
        %3174 = vmatpush2.msra.mxu0 0.0
        %3175 = vmatprep.subr.mxu0 0.0
        %3176 = vmatpush2.msra.mxu0 0.0
        %3177 = vmatprep.subr.mxu0 0.0
        %3178 = vmatpush2.msra.mxu0 0.0
        %3179 = vmatprep.subr.mxu0 0.0
        %3180 = vmatpush2.msra.mxu0 0.0
        %3181 = vmatprep.subr.mxu0 0.0
        %3182 = vmatpush2.msra.mxu0 0.0
        %3183 = vmatprep.subr.mxu0 0.0
        %3184 = vmatpush2.msra.mxu0 0.0
        %3185 = vmatprep.subr.mxu0 0.0
        %3186 = vmatpush2.msra.mxu0 0.0
        %3187 = vmatprep.mubr.f32.mxu0 0.0
        %v3188 = vand.u32 %v1795, 4294901760
        %v3189 = vsub.f32 %v1795, %v3188
        %3190 = vmatmul.mubr.f32.gmra.mxu0 %v3189
        %v3191 = vpop.f32.mrf.mxu0
        %v3192 = vadd.f32 %v3112, %v3191
        %v3193 = vpop.f32.mrf.mxu0
        %3194 = vdwg.mxu0
        %3195 = vmatprep.subr.mxu0 0.0
        %3196 = vmatpush1.msra.mxu0 0.0
        %3197 = vmatprep.subr.mxu0 0.0
        %3198 = vmatpush1.msra.mxu0 0.0
        %3199 = vmatprep.subr.mxu0 0.0
        %3200 = vmatpush1.msra.mxu0 0.0
        %3201 = vmatprep.subr.mxu0 0.0
        %3202 = vmatpush1.msra.mxu0 0.0
        %3203 = vmatprep.subr.mxu0 0.0
        %3204 = vmatpush1.msra.mxu0 0.0
        %3205 = vmatprep.subr.mxu0 0.0
        %3206 = vmatpush1.msra.mxu0 0.0
        %3207 = vmatprep.subr.mxu0 0.0
        %3208 = vmatpush1.msra.mxu0 0.0
        %3209 = vmatprep.subr.mxu0 0.0
        %3210 = vmatpush1.msra.mxu0 0.0
        %3211 = vmatprep.subr.mxu0 0.0
        %3212 = vmatpush1.msra.mxu0 0.0
        %3213 = vmatprep.subr.mxu0 0.0
        %3214 = vmatpush1.msra.mxu0 0.0
        %3215 = vmatprep.subr.mxu0 0.0
        %3216 = vmatpush1.msra.mxu0 0.0
        %3217 = vmatprep.subr.mxu0 0.0
        %3218 = vmatpush1.msra.mxu0 0.0
        %3219 = vmatprep.subr.mxu0 0.0
        %v3220 = vand.u32 %v2944, 4294901760
        %3221 = vmatpush1.msra.mxu0 %v3220
        %3222 = vmatprep.subr.mxu0 0.0
        %v3223 = vand.u32 %v2943, 4294901760
        %3224 = vmatpush1.msra.mxu0 %v3223
        %3225 = vmatprep.subr.mxu0 0.0
        %v3226 = vand.u32 %v2942, 4294901760
        %3227 = vmatpush1.msra.mxu0 %v3226
        %3228 = vmatprep.subr.mxu0 0.0
        %v3229 = vand.u32 %v2941, 4294901760
        %3230 = vmatpush1.msra.mxu0 %v3229
        %3231 = vmatprep.subr.mxu0 0.0
        %3232 = vmatpush2.msra.mxu0 0.0
        %3233 = vmatprep.subr.mxu0 0.0
        %3234 = vmatpush2.msra.mxu0 0.0
        %3235 = vmatprep.subr.mxu0 0.0
        %3236 = vmatpush2.msra.mxu0 0.0
        %3237 = vmatprep.subr.mxu0 0.0
        %3238 = vmatpush2.msra.mxu0 0.0
        %3239 = vmatprep.subr.mxu0 0.0
        %3240 = vmatpush2.msra.mxu0 0.0
        %3241 = vmatprep.subr.mxu0 0.0
        %3242 = vmatpush2.msra.mxu0 0.0
        %3243 = vmatprep.subr.mxu0 0.0
        %3244 = vmatpush2.msra.mxu0 0.0
        %3245 = vmatprep.subr.mxu0 0.0
        %3246 = vmatpush2.msra.mxu0 0.0
        %3247 = vmatprep.subr.mxu0 0.0
        %3248 = vmatpush2.msra.mxu0 0.0
        %3249 = vmatprep.subr.mxu0 0.0
        %3250 = vmatpush2.msra.mxu0 0.0
        %3251 = vmatprep.subr.mxu0 0.0
        %3252 = vmatpush2.msra.mxu0 0.0
        %3253 = vmatprep.subr.mxu0 0.0
        %3254 = vmatpush2.msra.mxu0 0.0
        %3255 = vmatprep.subr.mxu0 0.0
        %3256 = vmatpush2.msra.mxu0 0.0
        %3257 = vmatprep.subr.mxu0 0.0
        %3258 = vmatpush2.msra.mxu0 0.0
        %3259 = vmatprep.subr.mxu0 0.0
        %3260 = vmatpush2.msra.mxu0 0.0
        %3261 = vmatprep.subr.mxu0 0.0
        %3262 = vmatpush2.msra.mxu0 0.0
        %3263 = vmatprep.mubr.f32.mxu0 0.0
        %v3264 = vand.u32 %v1795, 4294901760
        %v3265 = vsub.f32 %v1795, %v3264
        %v3266 = vand.u32 %v3265, 4294901760
        %3267 = vmatmul.mubr.f32.gmra.mxu0 %v3266
        %v3268 = vpop.f32.mrf.mxu0
        %v3269 = vadd.f32 %v3192, %v3268
        %v3270 = vpop.f32.mrf.mxu0
        %3271 = vdwg.mxu0
        %3272 = vmatprep.subr.mxu0 0.0
        %3273 = vmatpush1.msra.mxu0 0.0
        %3274 = vmatprep.subr.mxu0 0.0
        %3275 = vmatpush1.msra.mxu0 0.0
        %3276 = vmatprep.subr.mxu0 0.0
        %3277 = vmatpush1.msra.mxu0 0.0
        %3278 = vmatprep.subr.mxu0 0.0
        %3279 = vmatpush1.msra.mxu0 0.0
        %3280 = vmatprep.subr.mxu0 0.0
        %3281 = vmatpush1.msra.mxu0 0.0
        %3282 = vmatprep.subr.mxu0 0.0
        %3283 = vmatpush1.msra.mxu0 0.0
        %3284 = vmatprep.subr.mxu0 0.0
        %3285 = vmatpush1.msra.mxu0 0.0
        %3286 = vmatprep.subr.mxu0 0.0
        %3287 = vmatpush1.msra.mxu0 0.0
        %3288 = vmatprep.subr.mxu0 0.0
        %3289 = vmatpush1.msra.mxu0 0.0
        %3290 = vmatprep.subr.mxu0 0.0
        %3291 = vmatpush1.msra.mxu0 0.0
        %3292 = vmatprep.subr.mxu0 0.0
        %3293 = vmatpush1.msra.mxu0 0.0
        %3294 = vmatprep.subr.mxu0 0.0
        %3295 = vmatpush1.msra.mxu0 0.0
        %3296 = vmatprep.subr.mxu0 0.0
        %v3297 = vand.u32 %v2944, 4294901760
        %v3298 = vsub.f32 %v2944, %v3297
        %v3299 = vand.u32 %v3298, 4294901760
        %3300 = vmatpush1.msra.mxu0 %v3299
        %3301 = vmatprep.subr.mxu0 0.0
        %v3302 = vand.u32 %v2943, 4294901760
        %v3303 = vsub.f32 %v2943, %v3302
        %v3304 = vand.u32 %v3303, 4294901760
        %3305 = vmatpush1.msra.mxu0 %v3304
        %3306 = vmatprep.subr.mxu0 0.0
        %v3307 = vand.u32 %v2942, 4294901760
        %v3308 = vsub.f32 %v2942, %v3307
        %v3309 = vand.u32 %v3308, 4294901760
        %3310 = vmatpush1.msra.mxu0 %v3309
        %3311 = vmatprep.subr.mxu0 0.0
        %v3312 = vand.u32 %v2941, 4294901760
        %v3313 = vsub.f32 %v2941, %v3312
        %v3314 = vand.u32 %v3313, 4294901760
        %3315 = vmatpush1.msra.mxu0 %v3314
        %3316 = vmatprep.subr.mxu0 0.0
        %3317 = vmatpush2.msra.mxu0 0.0
        %3318 = vmatprep.subr.mxu0 0.0
        %3319 = vmatpush2.msra.mxu0 0.0
        %3320 = vmatprep.subr.mxu0 0.0
        %3321 = vmatpush2.msra.mxu0 0.0
        %3322 = vmatprep.subr.mxu0 0.0
        %3323 = vmatpush2.msra.mxu0 0.0
        %3324 = vmatprep.subr.mxu0 0.0
        %3325 = vmatpush2.msra.mxu0 0.0
        %3326 = vmatprep.subr.mxu0 0.0
        %3327 = vmatpush2.msra.mxu0 0.0
        %3328 = vmatprep.subr.mxu0 0.0
        %3329 = vmatpush2.msra.mxu0 0.0
        %3330 = vmatprep.subr.mxu0 0.0
        %3331 = vmatpush2.msra.mxu0 0.0
        %3332 = vmatprep.subr.mxu0 0.0
        %3333 = vmatpush2.msra.mxu0 0.0
        %3334 = vmatprep.subr.mxu0 0.0
        %3335 = vmatpush2.msra.mxu0 0.0
        %3336 = vmatprep.subr.mxu0 0.0
        %3337 = vmatpush2.msra.mxu0 0.0
        %3338 = vmatprep.subr.mxu0 0.0
        %3339 = vmatpush2.msra.mxu0 0.0
        %3340 = vmatprep.subr.mxu0 0.0
        %3341 = vmatpush2.msra.mxu0 0.0
        %3342 = vmatprep.subr.mxu0 0.0
        %3343 = vmatpush2.msra.mxu0 0.0
        %3344 = vmatprep.subr.mxu0 0.0
        %3345 = vmatpush2.msra.mxu0 0.0
        %3346 = vmatprep.subr.mxu0 0.0
        %3347 = vmatpush2.msra.mxu0 0.0
        %3348 = vmatprep.mubr.f32.mxu0 0.0
        %v3349 = vand.u32 %v1795, 4294901760
        %3350 = vmatmul.mubr.f32.gmra.mxu0 %v3349
        %v3351 = vpop.f32.mrf.mxu0
        %v3352 = vadd.f32 %v3269, %v3351
        %v3353 = vpop.f32.mrf.mxu0
        %3354 = vdwg.mxu0
        %3355 = vmatprep.subr.mxu0 0.0
        %3356 = vmatpush1.msra.mxu0 0.0
        %3357 = vmatprep.subr.mxu0 0.0
        %3358 = vmatpush1.msra.mxu0 0.0
        %3359 = vmatprep.subr.mxu0 0.0
        %3360 = vmatpush1.msra.mxu0 0.0
        %3361 = vmatprep.subr.mxu0 0.0
        %3362 = vmatpush1.msra.mxu0 0.0
        %3363 = vmatprep.subr.mxu0 0.0
        %3364 = vmatpush1.msra.mxu0 0.0
        %3365 = vmatprep.subr.mxu0 0.0
        %3366 = vmatpush1.msra.mxu0 0.0
        %3367 = vmatprep.subr.mxu0 0.0
        %3368 = vmatpush1.msra.mxu0 0.0
        %3369 = vmatprep.subr.mxu0 0.0
        %3370 = vmatpush1.msra.mxu0 0.0
        %3371 = vmatprep.subr.mxu0 0.0
        %3372 = vmatpush1.msra.mxu0 0.0
        %3373 = vmatprep.subr.mxu0 0.0
        %3374 = vmatpush1.msra.mxu0 0.0
        %3375 = vmatprep.subr.mxu0 0.0
        %3376 = vmatpush1.msra.mxu0 0.0
        %3377 = vmatprep.subr.mxu0 0.0
        %3378 = vmatpush1.msra.mxu0 0.0
        %3379 = vmatprep.subr.mxu0 0.0
        %v3380 = vand.u32 %v2944, 4294901760
        %3381 = vmatpush1.msra.mxu0 %v3380
        %3382 = vmatprep.subr.mxu0 0.0
        %v3383 = vand.u32 %v2943, 4294901760
        %3384 = vmatpush1.msra.mxu0 %v3383
        %3385 = vmatprep.subr.mxu0 0.0
        %v3386 = vand.u32 %v2942, 4294901760
        %3387 = vmatpush1.msra.mxu0 %v3386
        %3388 = vmatprep.subr.mxu0 0.0
        %v3389 = vand.u32 %v2941, 4294901760
        %3390 = vmatpush1.msra.mxu0 %v3389
        %3391 = vmatprep.subr.mxu0 0.0
        %3392 = vmatpush2.msra.mxu0 0.0
        %3393 = vmatprep.subr.mxu0 0.0
        %3394 = vmatpush2.msra.mxu0 0.0
        %3395 = vmatprep.subr.mxu0 0.0
        %3396 = vmatpush2.msra.mxu0 0.0
        %3397 = vmatprep.subr.mxu0 0.0
        %3398 = vmatpush2.msra.mxu0 0.0
        %3399 = vmatprep.subr.mxu0 0.0
        %3400 = vmatpush2.msra.mxu0 0.0
        %3401 = vmatprep.subr.mxu0 0.0
        %3402 = vmatpush2.msra.mxu0 0.0
        %3403 = vmatprep.subr.mxu0 0.0
        %3404 = vmatpush2.msra.mxu0 0.0
        %3405 = vmatprep.subr.mxu0 0.0
        %3406 = vmatpush2.msra.mxu0 0.0
        %3407 = vmatprep.subr.mxu0 0.0
        %3408 = vmatpush2.msra.mxu0 0.0
        %3409 = vmatprep.subr.mxu0 0.0
        %3410 = vmatpush2.msra.mxu0 0.0
        %3411 = vmatprep.subr.mxu0 0.0
        %3412 = vmatpush2.msra.mxu0 0.0
        %3413 = vmatprep.subr.mxu0 0.0
        %3414 = vmatpush2.msra.mxu0 0.0
        %3415 = vmatprep.subr.mxu0 0.0
        %3416 = vmatpush2.msra.mxu0 0.0
        %3417 = vmatprep.subr.mxu0 0.0
        %3418 = vmatpush2.msra.mxu0 0.0
        %3419 = vmatprep.subr.mxu0 0.0
        %3420 = vmatpush2.msra.mxu0 0.0
        %3421 = vmatprep.subr.mxu0 0.0
        %3422 = vmatpush2.msra.mxu0 0.0
        %3423 = vmatprep.mubr.f32.mxu0 0.0
        %v3424 = vand.u32 %v1795, 4294901760
        %3425 = vmatmul.mubr.f32.gmra.mxu0 %v3424
        %v3426 = vpop.f32.mrf.mxu0
        %v3427 = vadd.f32 %v3352, %v3426
        %v3428 = vpop.f32.mrf.mxu0
        %3429 = vdwg.mxu0
        %v3431 = vcombine.high %v3427, %v3427
        %v3433 = vunpack.c.l.s4 1983009808
        %v3434 = vunpack.c.0.s8 %v3433
        %v3435 = vlaneseq
        %v3436 = vshrl.u32 %v3435, 7
        %v3437 = vsub.s32 %v3434, %v3436
        %v3438 = vrot.slane %v3427, %v3437
        %v3440 = vunpack.c.l.s4 1983009808
        %v3441 = vunpack.c.0.s8 %v3440
        %v3442 = vlaneseq
        %v3443 = vshrl.u32 %v3442, 7
        %v3444 = vsub.s32 %v3441, %v3443
        %v3445 = vrot.slane %v3431, %v3444
        %v3446 = vcombine.high %v3438, %v3438
        %v3447 = vcombine.high %v3445, %v3445
        %v3452 = vld [vmem:[%s4 + $0x8] sm:$0xf]
        %v3455 = vunpack.c.l.s4 1966171168
        %v3456 = vunpack.c.0.s8 %v3455
        %v3457 = vlaneseq
        %v3458 = vshrl.u32 %v3457, 7
        %v3459 = vsub.s32 %v3456, %v3458
        %v3460 = vrot.slane %v3452, %v3459
        %v3461 = vcombine.high %v3460, %v3460
        %v3463 = vunpack.c.l.s4 1966171168
        %v3464 = vunpack.c.0.s8 %v3463
        %v3465 = vlaneseq
        %v3466 = vshrl.u32 %v3465, 7
        %v3467 = vsub.s32 %v3464, %v3466
        %v3468 = vrot.slane %v3460, %v3467
        %v3470 = vunpack.c.l.s4 1966171168
        %v3471 = vunpack.c.0.s8 %v3470
        %v3472 = vlaneseq
        %v3473 = vshrl.u32 %v3472, 7
        %v3474 = vsub.s32 %v3471, %v3473
        %v3475 = vrot.slane %v3461, %v3474
        %v3476 = vcombine.high %v3468, %v3468
        %v3477 = vcombine.high %v3475, %v3475
        %v3478 = vlaneseq
        %v3479 = vshrl.u32 %v3478, 7
        %v3480 = vsub.s32 0, %v3479
        %v3481 = vrot.slane %v3468, %v3480
        %v3482 = vlaneseq
        %v3483 = vshrl.u32 %v3482, 7
        %v3484 = vsub.s32 0, %v3483
        %v3485 = vrot.slane %v3475, %v3484
        %v3486 = vlaneseq
        %v3487 = vshrl.u32 %v3486, 7
        %v3488 = vsub.s32 0, %v3487
        %v3489 = vrot.slane %v3476, %v3488
        %v3490 = vlaneseq
        %v3491 = vshrl.u32 %v3490, 7
        %v3492 = vsub.s32 0, %v3491
        %v3493 = vrot.slane %v3477, %v3492
        %v3498 = vadd.f32 %v3438, %v3481
        %v3499 = vadd.f32 %v3446, %v3485
        %v3500 = vadd.f32 %v3445, %v3489
        %v3501 = vadd.f32 %v3447, %v3493
        %v3502 = vmul.f32 %v3498, %v394
        %v3503 = vmul.f32 %v3499, %v395
        %v3504 = vmul.f32 %v3500, %v396
        %v3505 = vmul.f32 %v3501, %v397
        %v3506 = vsel %vm2358, %v3502, 0.0
        %v3507 = vsel %vm2358, %v3503, 0.0
        %v3508 = vadd.f32 %v3506, %v3507
        %v3509 = vsel %vm2358, %v3504, 0.0
        %v3510 = vadd.f32 %v3508, %v3509
        %v3511 = vsel %vm2358, %v3505, 0.0
        %v3512 = vadd.f32 %v3510, %v3511
        %3513 = vst [vmem:[%s384] sm:$0x3] %v3512
        %v3514 = vld [vmem:[#allocation5 + $0x18] sm:$0xff]
        %v3515 = vld [vmem:[#allocation5 + $0x48] sm:$0xff]
        %v3516 = vld [vmem:[#allocation5 + $0x78] sm:$0xff]
        %v3517 = vld [vmem:[#allocation5 + $0xa8] sm:$0xff]
        %3518 = vmatprep.subr.mxu0 0.0
        %3519 = vmatpush1.msra.mxu0 0.0
        %3520 = vmatprep.subr.mxu0 0.0
        %3521 = vmatpush1.msra.mxu0 0.0
        %3522 = vmatprep.subr.mxu0 0.0
        %3523 = vmatpush1.msra.mxu0 0.0
        %3524 = vmatprep.subr.mxu0 0.0
        %3525 = vmatpush1.msra.mxu0 0.0
        %3526 = vmatprep.subr.mxu0 0.0
        %3527 = vmatpush1.msra.mxu0 0.0
        %3528 = vmatprep.subr.mxu0 0.0
        %3529 = vmatpush1.msra.mxu0 0.0
        %3530 = vmatprep.subr.mxu0 0.0
        %3531 = vmatpush1.msra.mxu0 0.0
        %3532 = vmatprep.subr.mxu0 0.0
        %3533 = vmatpush1.msra.mxu0 0.0
        %3534 = vmatprep.subr.mxu0 0.0
        %3535 = vmatpush1.msra.mxu0 0.0
        %3536 = vmatprep.subr.mxu0 0.0
        %3537 = vmatpush1.msra.mxu0 0.0
        %3538 = vmatprep.subr.mxu0 0.0
        %3539 = vmatpush1.msra.mxu0 0.0
        %3540 = vmatprep.subr.mxu0 0.0
        %3541 = vmatpush1.msra.mxu0 0.0
        %3542 = vmatprep.subr.mxu0 0.0
        %v3543 = vand.u32 %v3517, 4294901760
        %3544 = vmatpush1.msra.mxu0 %v3543
        %3545 = vmatprep.subr.mxu0 0.0
        %v3546 = vand.u32 %v3516, 4294901760
        %3547 = vmatpush1.msra.mxu0 %v3546
        %3548 = vmatprep.subr.mxu0 0.0
        %v3549 = vand.u32 %v3515, 4294901760
        %3550 = vmatpush1.msra.mxu0 %v3549
        %3551 = vmatprep.subr.mxu0 0.0
        %v3552 = vand.u32 %v3514, 4294901760
        %3553 = vmatpush1.msra.mxu0 %v3552
        %3554 = vmatprep.subr.mxu0 0.0
        %3555 = vmatpush2.msra.mxu0 0.0
        %3556 = vmatprep.subr.mxu0 0.0
        %3557 = vmatpush2.msra.mxu0 0.0
        %3558 = vmatprep.subr.mxu0 0.0
        %3559 = vmatpush2.msra.mxu0 0.0
        %3560 = vmatprep.subr.mxu0 0.0
        %3561 = vmatpush2.msra.mxu0 0.0
        %3562 = vmatprep.subr.mxu0 0.0
        %3563 = vmatpush2.msra.mxu0 0.0
        %3564 = vmatprep.subr.mxu0 0.0
        %3565 = vmatpush2.msra.mxu0 0.0
        %3566 = vmatprep.subr.mxu0 0.0
        %3567 = vmatpush2.msra.mxu0 0.0
        %3568 = vmatprep.subr.mxu0 0.0
        %3569 = vmatpush2.msra.mxu0 0.0
        %3570 = vmatprep.subr.mxu0 0.0
        %3571 = vmatpush2.msra.mxu0 0.0
        %3572 = vmatprep.subr.mxu0 0.0
        %3573 = vmatpush2.msra.mxu0 0.0
        %3574 = vmatprep.subr.mxu0 0.0
        %3575 = vmatpush2.msra.mxu0 0.0
        %3576 = vmatprep.subr.mxu0 0.0
        %3577 = vmatpush2.msra.mxu0 0.0
        %3578 = vmatprep.subr.mxu0 0.0
        %3579 = vmatpush2.msra.mxu0 0.0
        %3580 = vmatprep.subr.mxu0 0.0
        %3581 = vmatpush2.msra.mxu0 0.0
        %3582 = vmatprep.subr.mxu0 0.0
        %3583 = vmatpush2.msra.mxu0 0.0
        %3584 = vmatprep.subr.mxu0 0.0
        %3585 = vmatpush2.msra.mxu0 0.0
        %3586 = vmatprep.mubr.f32.mxu0 0.0
        %v3587 = vand.u32 %v1795, 4294901760
        %v3588 = vsub.f32 %v1795, %v3587
        %v3589 = vand.u32 %v3588, 4294901760
        %v3590 = vsub.f32 %v3588, %v3589
        %v3591 = vand.u32 %v3590, 4294901760
        %3592 = vmatmul.mubr.f32.gmra.mxu0 %v3591
        %v3593 = vpop.f32.mrf.mxu0
        %v3594 = vadd.f32 0.0, %v3593
        %v3595 = vpop.f32.mrf.mxu0
        %3596 = vdwg.mxu0
        %3597 = vmatprep.subr.mxu0 0.0
        %3598 = vmatpush1.msra.mxu0 0.0
        %3599 = vmatprep.subr.mxu0 0.0
        %3600 = vmatpush1.msra.mxu0 0.0
        %3601 = vmatprep.subr.mxu0 0.0
        %3602 = vmatpush1.msra.mxu0 0.0
        %3603 = vmatprep.subr.mxu0 0.0
        %3604 = vmatpush1.msra.mxu0 0.0
        %3605 = vmatprep.subr.mxu0 0.0
        %3606 = vmatpush1.msra.mxu0 0.0
        %3607 = vmatprep.subr.mxu0 0.0
        %3608 = vmatpush1.msra.mxu0 0.0
        %3609 = vmatprep.subr.mxu0 0.0
        %3610 = vmatpush1.msra.mxu0 0.0
        %3611 = vmatprep.subr.mxu0 0.0
        %3612 = vmatpush1.msra.mxu0 0.0
        %3613 = vmatprep.subr.mxu0 0.0
        %3614 = vmatpush1.msra.mxu0 0.0
        %3615 = vmatprep.subr.mxu0 0.0
        %3616 = vmatpush1.msra.mxu0 0.0
        %3617 = vmatprep.subr.mxu0 0.0
        %3618 = vmatpush1.msra.mxu0 0.0
        %3619 = vmatprep.subr.mxu0 0.0
        %3620 = vmatpush1.msra.mxu0 0.0
        %3621 = vmatprep.subr.mxu0 0.0
        %v3622 = vand.u32 %v3517, 4294901760
        %v3623 = vsub.f32 %v3517, %v3622
        %v3624 = vand.u32 %v3623, 4294901760
        %v3625 = vsub.f32 %v3623, %v3624
        %v3626 = vand.u32 %v3625, 4294901760
        %3627 = vmatpush1.msra.mxu0 %v3626
        %3628 = vmatprep.subr.mxu0 0.0
        %v3629 = vand.u32 %v3516, 4294901760
        %v3630 = vsub.f32 %v3516, %v3629
        %v3631 = vand.u32 %v3630, 4294901760
        %v3632 = vsub.f32 %v3630, %v3631
        %v3633 = vand.u32 %v3632, 4294901760
        %3634 = vmatpush1.msra.mxu0 %v3633
        %3635 = vmatprep.subr.mxu0 0.0
        %v3636 = vand.u32 %v3515, 4294901760
        %v3637 = vsub.f32 %v3515, %v3636
        %v3638 = vand.u32 %v3637, 4294901760
        %v3639 = vsub.f32 %v3637, %v3638
        %v3640 = vand.u32 %v3639, 4294901760
        %3641 = vmatpush1.msra.mxu0 %v3640
        %3642 = vmatprep.subr.mxu0 0.0
        %v3643 = vand.u32 %v3514, 4294901760
        %v3644 = vsub.f32 %v3514, %v3643
        %v3645 = vand.u32 %v3644, 4294901760
        %v3646 = vsub.f32 %v3644, %v3645
        %v3647 = vand.u32 %v3646, 4294901760
        %3648 = vmatpush1.msra.mxu0 %v3647
        %3649 = vmatprep.subr.mxu0 0.0
        %3650 = vmatpush2.msra.mxu0 0.0
        %3651 = vmatprep.subr.mxu0 0.0
        %3652 = vmatpush2.msra.mxu0 0.0
        %3653 = vmatprep.subr.mxu0 0.0
        %3654 = vmatpush2.msra.mxu0 0.0
        %3655 = vmatprep.subr.mxu0 0.0
        %3656 = vmatpush2.msra.mxu0 0.0
        %3657 = vmatprep.subr.mxu0 0.0
        %3658 = vmatpush2.msra.mxu0 0.0
        %3659 = vmatprep.subr.mxu0 0.0
        %3660 = vmatpush2.msra.mxu0 0.0
        %3661 = vmatprep.subr.mxu0 0.0
        %3662 = vmatpush2.msra.mxu0 0.0
        %3663 = vmatprep.subr.mxu0 0.0
        %3664 = vmatpush2.msra.mxu0 0.0
        %3665 = vmatprep.subr.mxu0 0.0
        %3666 = vmatpush2.msra.mxu0 0.0
        %3667 = vmatprep.subr.mxu0 0.0
        %3668 = vmatpush2.msra.mxu0 0.0
        %3669 = vmatprep.subr.mxu0 0.0
        %3670 = vmatpush2.msra.mxu0 0.0
        %3671 = vmatprep.subr.mxu0 0.0
        %3672 = vmatpush2.msra.mxu0 0.0
        %3673 = vmatprep.subr.mxu0 0.0
        %3674 = vmatpush2.msra.mxu0 0.0
        %3675 = vmatprep.subr.mxu0 0.0
        %3676 = vmatpush2.msra.mxu0 0.0
        %3677 = vmatprep.subr.mxu0 0.0
        %3678 = vmatpush2.msra.mxu0 0.0
        %3679 = vmatprep.subr.mxu0 0.0
        %3680 = vmatpush2.msra.mxu0 0.0
        %3681 = vmatprep.mubr.f32.mxu0 0.0
        %v3682 = vand.u32 %v1795, 4294901760
        %3683 = vmatmul.mubr.f32.gmra.mxu0 %v3682
        %v3684 = vpop.f32.mrf.mxu0
        %v3685 = vadd.f32 %v3594, %v3684
        %v3686 = vpop.f32.mrf.mxu0
        %3687 = vdwg.mxu0
        %3688 = vmatprep.subr.mxu0 0.0
        %3689 = vmatpush1.msra.mxu0 0.0
        %3690 = vmatprep.subr.mxu0 0.0
        %3691 = vmatpush1.msra.mxu0 0.0
        %3692 = vmatprep.subr.mxu0 0.0
        %3693 = vmatpush1.msra.mxu0 0.0
        %3694 = vmatprep.subr.mxu0 0.0
        %3695 = vmatpush1.msra.mxu0 0.0
        %3696 = vmatprep.subr.mxu0 0.0
        %3697 = vmatpush1.msra.mxu0 0.0
        %3698 = vmatprep.subr.mxu0 0.0
        %3699 = vmatpush1.msra.mxu0 0.0
        %3700 = vmatprep.subr.mxu0 0.0
        %3701 = vmatpush1.msra.mxu0 0.0
        %3702 = vmatprep.subr.mxu0 0.0
        %3703 = vmatpush1.msra.mxu0 0.0
        %3704 = vmatprep.subr.mxu0 0.0
        %3705 = vmatpush1.msra.mxu0 0.0
        %3706 = vmatprep.subr.mxu0 0.0
        %3707 = vmatpush1.msra.mxu0 0.0
        %3708 = vmatprep.subr.mxu0 0.0
        %3709 = vmatpush1.msra.mxu0 0.0
        %3710 = vmatprep.subr.mxu0 0.0
        %3711 = vmatpush1.msra.mxu0 0.0
        %3712 = vmatprep.subr.mxu0 0.0
        %v3713 = vand.u32 %v3517, 4294901760
        %v3714 = vsub.f32 %v3517, %v3713
        %3715 = vmatpush1.msra.mxu0 %v3714
        %3716 = vmatprep.subr.mxu0 0.0
        %v3717 = vand.u32 %v3516, 4294901760
        %v3718 = vsub.f32 %v3516, %v3717
        %3719 = vmatpush1.msra.mxu0 %v3718
        %3720 = vmatprep.subr.mxu0 0.0
        %v3721 = vand.u32 %v3515, 4294901760
        %v3722 = vsub.f32 %v3515, %v3721
        %3723 = vmatpush1.msra.mxu0 %v3722
        %3724 = vmatprep.subr.mxu0 0.0
        %v3725 = vand.u32 %v3514, 4294901760
        %v3726 = vsub.f32 %v3514, %v3725
        %3727 = vmatpush1.msra.mxu0 %v3726
        %3728 = vmatprep.subr.mxu0 0.0
        %3729 = vmatpush2.msra.mxu0 0.0
        %3730 = vmatprep.subr.mxu0 0.0
        %3731 = vmatpush2.msra.mxu0 0.0
        %3732 = vmatprep.subr.mxu0 0.0
        %3733 = vmatpush2.msra.mxu0 0.0
        %3734 = vmatprep.subr.mxu0 0.0
        %3735 = vmatpush2.msra.mxu0 0.0
        %3736 = vmatprep.subr.mxu0 0.0
        %3737 = vmatpush2.msra.mxu0 0.0
        %3738 = vmatprep.subr.mxu0 0.0
        %3739 = vmatpush2.msra.mxu0 0.0
        %3740 = vmatprep.subr.mxu0 0.0
        %3741 = vmatpush2.msra.mxu0 0.0
        %3742 = vmatprep.subr.mxu0 0.0
        %3743 = vmatpush2.msra.mxu0 0.0
        %3744 = vmatprep.subr.mxu0 0.0
        %3745 = vmatpush2.msra.mxu0 0.0
        %3746 = vmatprep.subr.mxu0 0.0
        %3747 = vmatpush2.msra.mxu0 0.0
        %3748 = vmatprep.subr.mxu0 0.0
        %3749 = vmatpush2.msra.mxu0 0.0
        %3750 = vmatprep.subr.mxu0 0.0
        %3751 = vmatpush2.msra.mxu0 0.0
        %3752 = vmatprep.subr.mxu0 0.0
        %3753 = vmatpush2.msra.mxu0 0.0
        %3754 = vmatprep.subr.mxu0 0.0
        %3755 = vmatpush2.msra.mxu0 0.0
        %3756 = vmatprep.subr.mxu0 0.0
        %3757 = vmatpush2.msra.mxu0 0.0
        %3758 = vmatprep.subr.mxu0 0.0
        %3759 = vmatpush2.msra.mxu0 0.0
        %3760 = vmatprep.mubr.f32.mxu0 0.0
        %v3761 = vand.u32 %v1795, 4294901760
        %v3762 = vsub.f32 %v1795, %v3761
        %3763 = vmatmul.mubr.f32.gmra.mxu0 %v3762
        %v3764 = vpop.f32.mrf.mxu0
        %v3765 = vadd.f32 %v3685, %v3764
        %v3766 = vpop.f32.mrf.mxu0
        %3767 = vdwg.mxu0
        %3768 = vmatprep.subr.mxu0 0.0
        %3769 = vmatpush1.msra.mxu0 0.0
        %3770 = vmatprep.subr.mxu0 0.0
        %3771 = vmatpush1.msra.mxu0 0.0
        %3772 = vmatprep.subr.mxu0 0.0
        %3773 = vmatpush1.msra.mxu0 0.0
        %3774 = vmatprep.subr.mxu0 0.0
        %3775 = vmatpush1.msra.mxu0 0.0
        %3776 = vmatprep.subr.mxu0 0.0
        %3777 = vmatpush1.msra.mxu0 0.0
        %3778 = vmatprep.subr.mxu0 0.0
        %3779 = vmatpush1.msra.mxu0 0.0
        %3780 = vmatprep.subr.mxu0 0.0
        %3781 = vmatpush1.msra.mxu0 0.0
        %3782 = vmatprep.subr.mxu0 0.0
        %3783 = vmatpush1.msra.mxu0 0.0
        %3784 = vmatprep.subr.mxu0 0.0
        %3785 = vmatpush1.msra.mxu0 0.0
        %3786 = vmatprep.subr.mxu0 0.0
        %3787 = vmatpush1.msra.mxu0 0.0
        %3788 = vmatprep.subr.mxu0 0.0
        %3789 = vmatpush1.msra.mxu0 0.0
        %3790 = vmatprep.subr.mxu0 0.0
        %3791 = vmatpush1.msra.mxu0 0.0
        %3792 = vmatprep.subr.mxu0 0.0
        %v3793 = vand.u32 %v3517, 4294901760
        %3794 = vmatpush1.msra.mxu0 %v3793
        %3795 = vmatprep.subr.mxu0 0.0
        %v3796 = vand.u32 %v3516, 4294901760
        %3797 = vmatpush1.msra.mxu0 %v3796
        %3798 = vmatprep.subr.mxu0 0.0
        %v3799 = vand.u32 %v3515, 4294901760
        %3800 = vmatpush1.msra.mxu0 %v3799
        %3801 = vmatprep.subr.mxu0 0.0
        %v3802 = vand.u32 %v3514, 4294901760
        %3803 = vmatpush1.msra.mxu0 %v3802
        %3804 = vmatprep.subr.mxu0 0.0
        %3805 = vmatpush2.msra.mxu0 0.0
        %3806 = vmatprep.subr.mxu0 0.0
        %3807 = vmatpush2.msra.mxu0 0.0
        %3808 = vmatprep.subr.mxu0 0.0
        %3809 = vmatpush2.msra.mxu0 0.0
        %3810 = vmatprep.subr.mxu0 0.0
        %3811 = vmatpush2.msra.mxu0 0.0
        %3812 = vmatprep.subr.mxu0 0.0
        %3813 = vmatpush2.msra.mxu0 0.0
        %3814 = vmatprep.subr.mxu0 0.0
        %3815 = vmatpush2.msra.mxu0 0.0
        %3816 = vmatprep.subr.mxu0 0.0
        %3817 = vmatpush2.msra.mxu0 0.0
        %3818 = vmatprep.subr.mxu0 0.0
        %3819 = vmatpush2.msra.mxu0 0.0
        %3820 = vmatprep.subr.mxu0 0.0
        %3821 = vmatpush2.msra.mxu0 0.0
        %3822 = vmatprep.subr.mxu0 0.0
        %3823 = vmatpush2.msra.mxu0 0.0
        %3824 = vmatprep.subr.mxu0 0.0
        %3825 = vmatpush2.msra.mxu0 0.0
        %3826 = vmatprep.subr.mxu0 0.0
        %3827 = vmatpush2.msra.mxu0 0.0
        %3828 = vmatprep.subr.mxu0 0.0
        %3829 = vmatpush2.msra.mxu0 0.0
        %3830 = vmatprep.subr.mxu0 0.0
        %3831 = vmatpush2.msra.mxu0 0.0
        %3832 = vmatprep.subr.mxu0 0.0
        %3833 = vmatpush2.msra.mxu0 0.0
        %3834 = vmatprep.subr.mxu0 0.0
        %3835 = vmatpush2.msra.mxu0 0.0
        %3836 = vmatprep.mubr.f32.mxu0 0.0
        %v3837 = vand.u32 %v1795, 4294901760
        %v3838 = vsub.f32 %v1795, %v3837
        %v3839 = vand.u32 %v3838, 4294901760
        %3840 = vmatmul.mubr.f32.gmra.mxu0 %v3839
        %v3841 = vpop.f32.mrf.mxu0
        %v3842 = vadd.f32 %v3765, %v3841
        %v3843 = vpop.f32.mrf.mxu0
        %3844 = vdwg.mxu0
        %3845 = vmatprep.subr.mxu0 0.0
        %3846 = vmatpush1.msra.mxu0 0.0
        %3847 = vmatprep.subr.mxu0 0.0
        %3848 = vmatpush1.msra.mxu0 0.0
        %3849 = vmatprep.subr.mxu0 0.0
        %3850 = vmatpush1.msra.mxu0 0.0
        %3851 = vmatprep.subr.mxu0 0.0
        %3852 = vmatpush1.msra.mxu0 0.0
        %3853 = vmatprep.subr.mxu0 0.0
        %3854 = vmatpush1.msra.mxu0 0.0
        %3855 = vmatprep.subr.mxu0 0.0
        %3856 = vmatpush1.msra.mxu0 0.0
        %3857 = vmatprep.subr.mxu0 0.0
        %3858 = vmatpush1.msra.mxu0 0.0
        %3859 = vmatprep.subr.mxu0 0.0
        %3860 = vmatpush1.msra.mxu0 0.0
        %3861 = vmatprep.subr.mxu0 0.0
        %3862 = vmatpush1.msra.mxu0 0.0
        %3863 = vmatprep.subr.mxu0 0.0
        %3864 = vmatpush1.msra.mxu0 0.0
        %3865 = vmatprep.subr.mxu0 0.0
        %3866 = vmatpush1.msra.mxu0 0.0
        %3867 = vmatprep.subr.mxu0 0.0
        %3868 = vmatpush1.msra.mxu0 0.0
        %3869 = vmatprep.subr.mxu0 0.0
        %v3870 = vand.u32 %v3517, 4294901760
        %v3871 = vsub.f32 %v3517, %v3870
        %v3872 = vand.u32 %v3871, 4294901760
        %3873 = vmatpush1.msra.mxu0 %v3872
        %3874 = vmatprep.subr.mxu0 0.0
        %v3875 = vand.u32 %v3516, 4294901760
        %v3876 = vsub.f32 %v3516, %v3875
        %v3877 = vand.u32 %v3876, 4294901760
        %3878 = vmatpush1.msra.mxu0 %v3877
        %3879 = vmatprep.subr.mxu0 0.0
        %v3880 = vand.u32 %v3515, 4294901760
        %v3881 = vsub.f32 %v3515, %v3880
        %v3882 = vand.u32 %v3881, 4294901760
        %3883 = vmatpush1.msra.mxu0 %v3882
        %3884 = vmatprep.subr.mxu0 0.0
        %v3885 = vand.u32 %v3514, 4294901760
        %v3886 = vsub.f32 %v3514, %v3885
        %v3887 = vand.u32 %v3886, 4294901760
        %3888 = vmatpush1.msra.mxu0 %v3887
        %3889 = vmatprep.subr.mxu0 0.0
        %3890 = vmatpush2.msra.mxu0 0.0
        %3891 = vmatprep.subr.mxu0 0.0
        %3892 = vmatpush2.msra.mxu0 0.0
        %3893 = vmatprep.subr.mxu0 0.0
        %3894 = vmatpush2.msra.mxu0 0.0
        %3895 = vmatprep.subr.mxu0 0.0
        %3896 = vmatpush2.msra.mxu0 0.0
        %3897 = vmatprep.subr.mxu0 0.0
        %3898 = vmatpush2.msra.mxu0 0.0
        %3899 = vmatprep.subr.mxu0 0.0
        %3900 = vmatpush2.msra.mxu0 0.0
        %3901 = vmatprep.subr.mxu0 0.0
        %3902 = vmatpush2.msra.mxu0 0.0
        %3903 = vmatprep.subr.mxu0 0.0
        %3904 = vmatpush2.msra.mxu0 0.0
        %3905 = vmatprep.subr.mxu0 0.0
        %3906 = vmatpush2.msra.mxu0 0.0
        %3907 = vmatprep.subr.mxu0 0.0
        %3908 = vmatpush2.msra.mxu0 0.0
        %3909 = vmatprep.subr.mxu0 0.0
        %3910 = vmatpush2.msra.mxu0 0.0
        %3911 = vmatprep.subr.mxu0 0.0
        %3912 = vmatpush2.msra.mxu0 0.0
        %3913 = vmatprep.subr.mxu0 0.0
        %3914 = vmatpush2.msra.mxu0 0.0
        %3915 = vmatprep.subr.mxu0 0.0
        %3916 = vmatpush2.msra.mxu0 0.0
        %3917 = vmatprep.subr.mxu0 0.0
        %3918 = vmatpush2.msra.mxu0 0.0
        %3919 = vmatprep.subr.mxu0 0.0
        %3920 = vmatpush2.msra.mxu0 0.0
        %3921 = vmatprep.mubr.f32.mxu0 0.0
        %v3922 = vand.u32 %v1795, 4294901760
        %3923 = vmatmul.mubr.f32.gmra.mxu0 %v3922
        %v3924 = vpop.f32.mrf.mxu0
        %v3925 = vadd.f32 %v3842, %v3924
        %v3926 = vpop.f32.mrf.mxu0
        %3927 = vdwg.mxu0
        %3928 = vmatprep.subr.mxu0 0.0
        %3929 = vmatpush1.msra.mxu0 0.0
        %3930 = vmatprep.subr.mxu0 0.0
        %3931 = vmatpush1.msra.mxu0 0.0
        %3932 = vmatprep.subr.mxu0 0.0
        %3933 = vmatpush1.msra.mxu0 0.0
        %3934 = vmatprep.subr.mxu0 0.0
        %3935 = vmatpush1.msra.mxu0 0.0
        %3936 = vmatprep.subr.mxu0 0.0
        %3937 = vmatpush1.msra.mxu0 0.0
        %3938 = vmatprep.subr.mxu0 0.0
        %3939 = vmatpush1.msra.mxu0 0.0
        %3940 = vmatprep.subr.mxu0 0.0
        %3941 = vmatpush1.msra.mxu0 0.0
        %3942 = vmatprep.subr.mxu0 0.0
        %3943 = vmatpush1.msra.mxu0 0.0
        %3944 = vmatprep.subr.mxu0 0.0
        %3945 = vmatpush1.msra.mxu0 0.0
        %3946 = vmatprep.subr.mxu0 0.0
        %3947 = vmatpush1.msra.mxu0 0.0
        %3948 = vmatprep.subr.mxu0 0.0
        %3949 = vmatpush1.msra.mxu0 0.0
        %3950 = vmatprep.subr.mxu0 0.0
        %3951 = vmatpush1.msra.mxu0 0.0
        %3952 = vmatprep.subr.mxu0 0.0
        %v3953 = vand.u32 %v3517, 4294901760
        %3954 = vmatpush1.msra.mxu0 %v3953
        %3955 = vmatprep.subr.mxu0 0.0
        %v3956 = vand.u32 %v3516, 4294901760
        %3957 = vmatpush1.msra.mxu0 %v3956
        %3958 = vmatprep.subr.mxu0 0.0
        %v3959 = vand.u32 %v3515, 4294901760
        %3960 = vmatpush1.msra.mxu0 %v3959
        %3961 = vmatprep.subr.mxu0 0.0
        %v3962 = vand.u32 %v3514, 4294901760
        %3963 = vmatpush1.msra.mxu0 %v3962
        %3964 = vmatprep.subr.mxu0 0.0
        %3965 = vmatpush2.msra.mxu0 0.0
        %3966 = vmatprep.subr.mxu0 0.0
        %3967 = vmatpush2.msra.mxu0 0.0
        %3968 = vmatprep.subr.mxu0 0.0
        %3969 = vmatpush2.msra.mxu0 0.0
        %3970 = vmatprep.subr.mxu0 0.0
        %3971 = vmatpush2.msra.mxu0 0.0
        %3972 = vmatprep.subr.mxu0 0.0
        %3973 = vmatpush2.msra.mxu0 0.0
        %3974 = vmatprep.subr.mxu0 0.0
        %3975 = vmatpush2.msra.mxu0 0.0
        %3976 = vmatprep.subr.mxu0 0.0
        %3977 = vmatpush2.msra.mxu0 0.0
        %3978 = vmatprep.subr.mxu0 0.0
        %3979 = vmatpush2.msra.mxu0 0.0
        %3980 = vmatprep.subr.mxu0 0.0
        %3981 = vmatpush2.msra.mxu0 0.0
        %3982 = vmatprep.subr.mxu0 0.0
        %3983 = vmatpush2.msra.mxu0 0.0
        %3984 = vmatprep.subr.mxu0 0.0
        %3985 = vmatpush2.msra.mxu0 0.0
        %3986 = vmatprep.subr.mxu0 0.0
        %3987 = vmatpush2.msra.mxu0 0.0
        %3988 = vmatprep.subr.mxu0 0.0
        %3989 = vmatpush2.msra.mxu0 0.0
        %3990 = vmatprep.subr.mxu0 0.0
        %3991 = vmatpush2.msra.mxu0 0.0
        %3992 = vmatprep.subr.mxu0 0.0
        %3993 = vmatpush2.msra.mxu0 0.0
        %3994 = vmatprep.subr.mxu0 0.0
        %3995 = vmatpush2.msra.mxu0 0.0
        %3996 = vmatprep.mubr.f32.mxu0 0.0
        %v3997 = vand.u32 %v1795, 4294901760
        %3998 = vmatmul.mubr.f32.gmra.mxu0 %v3997
        %v3999 = vpop.f32.mrf.mxu0
        %v4000 = vadd.f32 %v3925, %v3999
        %v4001 = vpop.f32.mrf.mxu0
        %4002 = vdwg.mxu0
        %v4004 = vcombine.high %v4000, %v4000
        %v4006 = vunpack.c.l.s4 1983009808
        %v4007 = vunpack.c.0.s8 %v4006
        %v4008 = vlaneseq
        %v4009 = vshrl.u32 %v4008, 7
        %v4010 = vsub.s32 %v4007, %v4009
        %v4011 = vrot.slane %v4000, %v4010
        %v4013 = vunpack.c.l.s4 1983009808
        %v4014 = vunpack.c.0.s8 %v4013
        %v4015 = vlaneseq
        %v4016 = vshrl.u32 %v4015, 7
        %v4017 = vsub.s32 %v4014, %v4016
        %v4018 = vrot.slane %v4004, %v4017
        %v4019 = vcombine.high %v4011, %v4011
        %v4020 = vcombine.high %v4018, %v4018
        %v4025 = vld [vmem:[%s4 + $0xc] sm:$0xf]
        %v4028 = vunpack.c.l.s4 1966171168
        %v4029 = vunpack.c.0.s8 %v4028
        %v4030 = vlaneseq
        %v4031 = vshrl.u32 %v4030, 7
        %v4032 = vsub.s32 %v4029, %v4031
        %v4033 = vrot.slane %v4025, %v4032
        %v4034 = vcombine.high %v4033, %v4033
        %v4036 = vunpack.c.l.s4 1966171168
        %v4037 = vunpack.c.0.s8 %v4036
        %v4038 = vlaneseq
        %v4039 = vshrl.u32 %v4038, 7
        %v4040 = vsub.s32 %v4037, %v4039
        %v4041 = vrot.slane %v4033, %v4040
        %v4043 = vunpack.c.l.s4 1966171168
        %v4044 = vunpack.c.0.s8 %v4043
        %v4045 = vlaneseq
        %v4046 = vshrl.u32 %v4045, 7
        %v4047 = vsub.s32 %v4044, %v4046
        %v4048 = vrot.slane %v4034, %v4047
        %v4049 = vcombine.high %v4041, %v4041
        %v4050 = vcombine.high %v4048, %v4048
        %v4051 = vlaneseq
        %v4052 = vshrl.u32 %v4051, 7
        %v4053 = vsub.s32 0, %v4052
        %v4054 = vrot.slane %v4041, %v4053
        %v4055 = vlaneseq
        %v4056 = vshrl.u32 %v4055, 7
        %v4057 = vsub.s32 0, %v4056
        %v4058 = vrot.slane %v4048, %v4057
        %v4059 = vlaneseq
        %v4060 = vshrl.u32 %v4059, 7
        %v4061 = vsub.s32 0, %v4060
        %v4062 = vrot.slane %v4049, %v4061
        %v4063 = vlaneseq
        %v4064 = vshrl.u32 %v4063, 7
        %v4065 = vsub.s32 0, %v4064
        %v4066 = vrot.slane %v4050, %v4065
        %v4071 = vadd.f32 %v4011, %v4054
        %v4072 = vadd.f32 %v4019, %v4058
        %v4073 = vadd.f32 %v4018, %v4062
        %v4074 = vadd.f32 %v4020, %v4066
        %v4075 = vmul.f32 %v4071, %v394
        %v4076 = vmul.f32 %v4072, %v395
        %v4077 = vmul.f32 %v4073, %v396
        %v4078 = vmul.f32 %v4074, %v397
        %v4079 = vsel %vm2358, %v4075, 0.0
        %v4080 = vsel %vm2358, %v4076, 0.0
        %v4081 = vadd.f32 %v4079, %v4080
        %v4082 = vsel %vm2358, %v4077, 0.0
        %v4083 = vadd.f32 %v4081, %v4082
        %v4084 = vsel %vm2358, %v4078, 0.0
        %v4085 = vadd.f32 %v4083, %v4084
        %s4086 = scalar_lea.vmem %s384, 2 [#allocation9]
        %4087 = vst [vmem:[%s4086] sm:$0x3] %v4085
        %v4088 = vld [vmem:[#allocation5 + $0x20] sm:$0xff]
        %v4089 = vld [vmem:[#allocation5 + $0x50] sm:$0xff]
        %v4090 = vld [vmem:[#allocation5 + $0x80] sm:$0xff]
        %v4091 = vld [vmem:[#allocation5 + $0xb0] sm:$0xff]
        %4092 = vmatprep.subr.mxu0 0.0
        %4093 = vmatpush1.msra.mxu0 0.0
        %4094 = vmatprep.subr.mxu0 0.0
        %4095 = vmatpush1.msra.mxu0 0.0
        %4096 = vmatprep.subr.mxu0 0.0
        %4097 = vmatpush1.msra.mxu0 0.0
        %4098 = vmatprep.subr.mxu0 0.0
        %4099 = vmatpush1.msra.mxu0 0.0
        %4100 = vmatprep.subr.mxu0 0.0
        %4101 = vmatpush1.msra.mxu0 0.0
        %4102 = vmatprep.subr.mxu0 0.0
        %4103 = vmatpush1.msra.mxu0 0.0
        %4104 = vmatprep.subr.mxu0 0.0
        %4105 = vmatpush1.msra.mxu0 0.0
        %4106 = vmatprep.subr.mxu0 0.0
        %4107 = vmatpush1.msra.mxu0 0.0
        %4108 = vmatprep.subr.mxu0 0.0
        %4109 = vmatpush1.msra.mxu0 0.0
        %4110 = vmatprep.subr.mxu0 0.0
        %4111 = vmatpush1.msra.mxu0 0.0
        %4112 = vmatprep.subr.mxu0 0.0
        %4113 = vmatpush1.msra.mxu0 0.0
        %4114 = vmatprep.subr.mxu0 0.0
        %4115 = vmatpush1.msra.mxu0 0.0
        %4116 = vmatprep.subr.mxu0 0.0
        %v4117 = vand.u32 %v4091, 4294901760
        %4118 = vmatpush1.msra.mxu0 %v4117
        %4119 = vmatprep.subr.mxu0 0.0
        %v4120 = vand.u32 %v4090, 4294901760
        %4121 = vmatpush1.msra.mxu0 %v4120
        %4122 = vmatprep.subr.mxu0 0.0
        %v4123 = vand.u32 %v4089, 4294901760
        %4124 = vmatpush1.msra.mxu0 %v4123
        %4125 = vmatprep.subr.mxu0 0.0
        %v4126 = vand.u32 %v4088, 4294901760
        %4127 = vmatpush1.msra.mxu0 %v4126
        %4128 = vmatprep.subr.mxu0 0.0
        %4129 = vmatpush2.msra.mxu0 0.0
        %4130 = vmatprep.subr.mxu0 0.0
        %4131 = vmatpush2.msra.mxu0 0.0
        %4132 = vmatprep.subr.mxu0 0.0
        %4133 = vmatpush2.msra.mxu0 0.0
        %4134 = vmatprep.subr.mxu0 0.0
        %4135 = vmatpush2.msra.mxu0 0.0
        %4136 = vmatprep.subr.mxu0 0.0
        %4137 = vmatpush2.msra.mxu0 0.0
        %4138 = vmatprep.subr.mxu0 0.0
        %4139 = vmatpush2.msra.mxu0 0.0
        %4140 = vmatprep.subr.mxu0 0.0
        %4141 = vmatpush2.msra.mxu0 0.0
        %4142 = vmatprep.subr.mxu0 0.0
        %4143 = vmatpush2.msra.mxu0 0.0
        %4144 = vmatprep.subr.mxu0 0.0
        %4145 = vmatpush2.msra.mxu0 0.0
        %4146 = vmatprep.subr.mxu0 0.0
        %4147 = vmatpush2.msra.mxu0 0.0
        %4148 = vmatprep.subr.mxu0 0.0
        %4149 = vmatpush2.msra.mxu0 0.0
        %4150 = vmatprep.subr.mxu0 0.0
        %4151 = vmatpush2.msra.mxu0 0.0
        %4152 = vmatprep.subr.mxu0 0.0
        %4153 = vmatpush2.msra.mxu0 0.0
        %4154 = vmatprep.subr.mxu0 0.0
        %4155 = vmatpush2.msra.mxu0 0.0
        %4156 = vmatprep.subr.mxu0 0.0
        %4157 = vmatpush2.msra.mxu0 0.0
        %4158 = vmatprep.subr.mxu0 0.0
        %4159 = vmatpush2.msra.mxu0 0.0
        %4160 = vmatprep.mubr.f32.mxu0 0.0
        %v4161 = vand.u32 %v1795, 4294901760
        %v4162 = vsub.f32 %v1795, %v4161
        %v4163 = vand.u32 %v4162, 4294901760
        %v4164 = vsub.f32 %v4162, %v4163
        %v4165 = vand.u32 %v4164, 4294901760
        %4166 = vmatmul.mubr.f32.gmra.mxu0 %v4165
        %v4167 = vpop.f32.mrf.mxu0
        %v4168 = vadd.f32 0.0, %v4167
        %v4169 = vpop.f32.mrf.mxu0
        %4170 = vdwg.mxu0
        %4171 = vmatprep.subr.mxu0 0.0
        %4172 = vmatpush1.msra.mxu0 0.0
        %4173 = vmatprep.subr.mxu0 0.0
        %4174 = vmatpush1.msra.mxu0 0.0
        %4175 = vmatprep.subr.mxu0 0.0
        %4176 = vmatpush1.msra.mxu0 0.0
        %4177 = vmatprep.subr.mxu0 0.0
        %4178 = vmatpush1.msra.mxu0 0.0
        %4179 = vmatprep.subr.mxu0 0.0
        %4180 = vmatpush1.msra.mxu0 0.0
        %4181 = vmatprep.subr.mxu0 0.0
        %4182 = vmatpush1.msra.mxu0 0.0
        %4183 = vmatprep.subr.mxu0 0.0
        %4184 = vmatpush1.msra.mxu0 0.0
        %4185 = vmatprep.subr.mxu0 0.0
        %4186 = vmatpush1.msra.mxu0 0.0
        %4187 = vmatprep.subr.mxu0 0.0
        %4188 = vmatpush1.msra.mxu0 0.0
        %4189 = vmatprep.subr.mxu0 0.0
        %4190 = vmatpush1.msra.mxu0 0.0
        %4191 = vmatprep.subr.mxu0 0.0
        %4192 = vmatpush1.msra.mxu0 0.0
        %4193 = vmatprep.subr.mxu0 0.0
        %4194 = vmatpush1.msra.mxu0 0.0
        %4195 = vmatprep.subr.mxu0 0.0
        %v4196 = vand.u32 %v4091, 4294901760
        %v4197 = vsub.f32 %v4091, %v4196
        %v4198 = vand.u32 %v4197, 4294901760
        %v4199 = vsub.f32 %v4197, %v4198
        %v4200 = vand.u32 %v4199, 4294901760
        %4201 = vmatpush1.msra.mxu0 %v4200
        %4202 = vmatprep.subr.mxu0 0.0
        %v4203 = vand.u32 %v4090, 4294901760
        %v4204 = vsub.f32 %v4090, %v4203
        %v4205 = vand.u32 %v4204, 4294901760
        %v4206 = vsub.f32 %v4204, %v4205
        %v4207 = vand.u32 %v4206, 4294901760
        %4208 = vmatpush1.msra.mxu0 %v4207
        %4209 = vmatprep.subr.mxu0 0.0
        %v4210 = vand.u32 %v4089, 4294901760
        %v4211 = vsub.f32 %v4089, %v4210
        %v4212 = vand.u32 %v4211, 4294901760
        %v4213 = vsub.f32 %v4211, %v4212
        %v4214 = vand.u32 %v4213, 4294901760
        %4215 = vmatpush1.msra.mxu0 %v4214
        %4216 = vmatprep.subr.mxu0 0.0
        %v4217 = vand.u32 %v4088, 4294901760
        %v4218 = vsub.f32 %v4088, %v4217
        %v4219 = vand.u32 %v4218, 4294901760
        %v4220 = vsub.f32 %v4218, %v4219
        %v4221 = vand.u32 %v4220, 4294901760
        %4222 = vmatpush1.msra.mxu0 %v4221
        %4223 = vmatprep.subr.mxu0 0.0
        %4224 = vmatpush2.msra.mxu0 0.0
        %4225 = vmatprep.subr.mxu0 0.0
        %4226 = vmatpush2.msra.mxu0 0.0
        %4227 = vmatprep.subr.mxu0 0.0
        %4228 = vmatpush2.msra.mxu0 0.0
        %4229 = vmatprep.subr.mxu0 0.0
        %4230 = vmatpush2.msra.mxu0 0.0
        %4231 = vmatprep.subr.mxu0 0.0
        %4232 = vmatpush2.msra.mxu0 0.0
        %4233 = vmatprep.subr.mxu0 0.0
        %4234 = vmatpush2.msra.mxu0 0.0
        %4235 = vmatprep.subr.mxu0 0.0
        %4236 = vmatpush2.msra.mxu0 0.0
        %4237 = vmatprep.subr.mxu0 0.0
        %4238 = vmatpush2.msra.mxu0 0.0
        %4239 = vmatprep.subr.mxu0 0.0
        %4240 = vmatpush2.msra.mxu0 0.0
        %4241 = vmatprep.subr.mxu0 0.0
        %4242 = vmatpush2.msra.mxu0 0.0
        %4243 = vmatprep.subr.mxu0 0.0
        %4244 = vmatpush2.msra.mxu0 0.0
        %4245 = vmatprep.subr.mxu0 0.0
        %4246 = vmatpush2.msra.mxu0 0.0
        %4247 = vmatprep.subr.mxu0 0.0
        %4248 = vmatpush2.msra.mxu0 0.0
        %4249 = vmatprep.subr.mxu0 0.0
        %4250 = vmatpush2.msra.mxu0 0.0
        %4251 = vmatprep.subr.mxu0 0.0
        %4252 = vmatpush2.msra.mxu0 0.0
        %4253 = vmatprep.subr.mxu0 0.0
        %4254 = vmatpush2.msra.mxu0 0.0
        %4255 = vmatprep.mubr.f32.mxu0 0.0
        %v4256 = vand.u32 %v1795, 4294901760
        %4257 = vmatmul.mubr.f32.gmra.mxu0 %v4256
        %v4258 = vpop.f32.mrf.mxu0
        %v4259 = vadd.f32 %v4168, %v4258
        %v4260 = vpop.f32.mrf.mxu0
        %4261 = vdwg.mxu0
        %4262 = vmatprep.subr.mxu0 0.0
        %4263 = vmatpush1.msra.mxu0 0.0
        %4264 = vmatprep.subr.mxu0 0.0
        %4265 = vmatpush1.msra.mxu0 0.0
        %4266 = vmatprep.subr.mxu0 0.0
        %4267 = vmatpush1.msra.mxu0 0.0
        %4268 = vmatprep.subr.mxu0 0.0
        %4269 = vmatpush1.msra.mxu0 0.0
        %4270 = vmatprep.subr.mxu0 0.0
        %4271 = vmatpush1.msra.mxu0 0.0
        %4272 = vmatprep.subr.mxu0 0.0
        %4273 = vmatpush1.msra.mxu0 0.0
        %4274 = vmatprep.subr.mxu0 0.0
        %4275 = vmatpush1.msra.mxu0 0.0
        %4276 = vmatprep.subr.mxu0 0.0
        %4277 = vmatpush1.msra.mxu0 0.0
        %4278 = vmatprep.subr.mxu0 0.0
        %4279 = vmatpush1.msra.mxu0 0.0
        %4280 = vmatprep.subr.mxu0 0.0
        %4281 = vmatpush1.msra.mxu0 0.0
        %4282 = vmatprep.subr.mxu0 0.0
        %4283 = vmatpush1.msra.mxu0 0.0
        %4284 = vmatprep.subr.mxu0 0.0
        %4285 = vmatpush1.msra.mxu0 0.0
        %4286 = vmatprep.subr.mxu0 0.0
        %v4287 = vand.u32 %v4091, 4294901760
        %v4288 = vsub.f32 %v4091, %v4287
        %4289 = vmatpush1.msra.mxu0 %v4288
        %4290 = vmatprep.subr.mxu0 0.0
        %v4291 = vand.u32 %v4090, 4294901760
        %v4292 = vsub.f32 %v4090, %v4291
        %4293 = vmatpush1.msra.mxu0 %v4292
        %4294 = vmatprep.subr.mxu0 0.0
        %v4295 = vand.u32 %v4089, 4294901760
        %v4296 = vsub.f32 %v4089, %v4295
        %4297 = vmatpush1.msra.mxu0 %v4296
        %4298 = vmatprep.subr.mxu0 0.0
        %v4299 = vand.u32 %v4088, 4294901760
        %v4300 = vsub.f32 %v4088, %v4299
        %4301 = vmatpush1.msra.mxu0 %v4300
        %4302 = vmatprep.subr.mxu0 0.0
        %4303 = vmatpush2.msra.mxu0 0.0
        %4304 = vmatprep.subr.mxu0 0.0
        %4305 = vmatpush2.msra.mxu0 0.0
        %4306 = vmatprep.subr.mxu0 0.0
        %4307 = vmatpush2.msra.mxu0 0.0
        %4308 = vmatprep.subr.mxu0 0.0
        %4309 = vmatpush2.msra.mxu0 0.0
        %4310 = vmatprep.subr.mxu0 0.0
        %4311 = vmatpush2.msra.mxu0 0.0
        %4312 = vmatprep.subr.mxu0 0.0
        %4313 = vmatpush2.msra.mxu0 0.0
        %4314 = vmatprep.subr.mxu0 0.0
        %4315 = vmatpush2.msra.mxu0 0.0
        %4316 = vmatprep.subr.mxu0 0.0
        %4317 = vmatpush2.msra.mxu0 0.0
        %4318 = vmatprep.subr.mxu0 0.0
        %4319 = vmatpush2.msra.mxu0 0.0
        %4320 = vmatprep.subr.mxu0 0.0
        %4321 = vmatpush2.msra.mxu0 0.0
        %4322 = vmatprep.subr.mxu0 0.0
        %4323 = vmatpush2.msra.mxu0 0.0
        %4324 = vmatprep.subr.mxu0 0.0
        %4325 = vmatpush2.msra.mxu0 0.0
        %4326 = vmatprep.subr.mxu0 0.0
        %4327 = vmatpush2.msra.mxu0 0.0
        %4328 = vmatprep.subr.mxu0 0.0
        %4329 = vmatpush2.msra.mxu0 0.0
        %4330 = vmatprep.subr.mxu0 0.0
        %4331 = vmatpush2.msra.mxu0 0.0
        %4332 = vmatprep.subr.mxu0 0.0
        %4333 = vmatpush2.msra.mxu0 0.0
        %4334 = vmatprep.mubr.f32.mxu0 0.0
        %v4335 = vand.u32 %v1795, 4294901760
        %v4336 = vsub.f32 %v1795, %v4335
        %4337 = vmatmul.mubr.f32.gmra.mxu0 %v4336
        %v4338 = vpop.f32.mrf.mxu0
        %v4339 = vadd.f32 %v4259, %v4338
        %v4340 = vpop.f32.mrf.mxu0
        %4341 = vdwg.mxu0
        %4342 = vmatprep.subr.mxu0 0.0
        %4343 = vmatpush1.msra.mxu0 0.0
        %4344 = vmatprep.subr.mxu0 0.0
        %4345 = vmatpush1.msra.mxu0 0.0
        %4346 = vmatprep.subr.mxu0 0.0
        %4347 = vmatpush1.msra.mxu0 0.0
        %4348 = vmatprep.subr.mxu0 0.0
        %4349 = vmatpush1.msra.mxu0 0.0
        %4350 = vmatprep.subr.mxu0 0.0
        %4351 = vmatpush1.msra.mxu0 0.0
        %4352 = vmatprep.subr.mxu0 0.0
        %4353 = vmatpush1.msra.mxu0 0.0
        %4354 = vmatprep.subr.mxu0 0.0
        %4355 = vmatpush1.msra.mxu0 0.0
        %4356 = vmatprep.subr.mxu0 0.0
        %4357 = vmatpush1.msra.mxu0 0.0
        %4358 = vmatprep.subr.mxu0 0.0
        %4359 = vmatpush1.msra.mxu0 0.0
        %4360 = vmatprep.subr.mxu0 0.0
        %4361 = vmatpush1.msra.mxu0 0.0
        %4362 = vmatprep.subr.mxu0 0.0
        %4363 = vmatpush1.msra.mxu0 0.0
        %4364 = vmatprep.subr.mxu0 0.0
        %4365 = vmatpush1.msra.mxu0 0.0
        %4366 = vmatprep.subr.mxu0 0.0
        %v4367 = vand.u32 %v4091, 4294901760
        %4368 = vmatpush1.msra.mxu0 %v4367
        %4369 = vmatprep.subr.mxu0 0.0
        %v4370 = vand.u32 %v4090, 4294901760
        %4371 = vmatpush1.msra.mxu0 %v4370
        %4372 = vmatprep.subr.mxu0 0.0
        %v4373 = vand.u32 %v4089, 4294901760
        %4374 = vmatpush1.msra.mxu0 %v4373
        %4375 = vmatprep.subr.mxu0 0.0
        %v4376 = vand.u32 %v4088, 4294901760
        %4377 = vmatpush1.msra.mxu0 %v4376
        %4378 = vmatprep.subr.mxu0 0.0
        %4379 = vmatpush2.msra.mxu0 0.0
        %4380 = vmatprep.subr.mxu0 0.0
        %4381 = vmatpush2.msra.mxu0 0.0
        %4382 = vmatprep.subr.mxu0 0.0
        %4383 = vmatpush2.msra.mxu0 0.0
        %4384 = vmatprep.subr.mxu0 0.0
        %4385 = vmatpush2.msra.mxu0 0.0
        %4386 = vmatprep.subr.mxu0 0.0
        %4387 = vmatpush2.msra.mxu0 0.0
        %4388 = vmatprep.subr.mxu0 0.0
        %4389 = vmatpush2.msra.mxu0 0.0
        %4390 = vmatprep.subr.mxu0 0.0
        %4391 = vmatpush2.msra.mxu0 0.0
        %4392 = vmatprep.subr.mxu0 0.0
        %4393 = vmatpush2.msra.mxu0 0.0
        %4394 = vmatprep.subr.mxu0 0.0
        %4395 = vmatpush2.msra.mxu0 0.0
        %4396 = vmatprep.subr.mxu0 0.0
        %4397 = vmatpush2.msra.mxu0 0.0
        %4398 = vmatprep.subr.mxu0 0.0
        %4399 = vmatpush2.msra.mxu0 0.0
        %4400 = vmatprep.subr.mxu0 0.0
        %4401 = vmatpush2.msra.mxu0 0.0
        %4402 = vmatprep.subr.mxu0 0.0
        %4403 = vmatpush2.msra.mxu0 0.0
        %4404 = vmatprep.subr.mxu0 0.0
        %4405 = vmatpush2.msra.mxu0 0.0
        %4406 = vmatprep.subr.mxu0 0.0
        %4407 = vmatpush2.msra.mxu0 0.0
        %4408 = vmatprep.subr.mxu0 0.0
        %4409 = vmatpush2.msra.mxu0 0.0
        %4410 = vmatprep.mubr.f32.mxu0 0.0
        %v4411 = vand.u32 %v1795, 4294901760
        %v4412 = vsub.f32 %v1795, %v4411
        %v4413 = vand.u32 %v4412, 4294901760
        %4414 = vmatmul.mubr.f32.gmra.mxu0 %v4413
        %v4415 = vpop.f32.mrf.mxu0
        %v4416 = vadd.f32 %v4339, %v4415
        %v4417 = vpop.f32.mrf.mxu0
        %4418 = vdwg.mxu0
        %4419 = vmatprep.subr.mxu0 0.0
        %4420 = vmatpush1.msra.mxu0 0.0
        %4421 = vmatprep.subr.mxu0 0.0
        %4422 = vmatpush1.msra.mxu0 0.0
        %4423 = vmatprep.subr.mxu0 0.0
        %4424 = vmatpush1.msra.mxu0 0.0
        %4425 = vmatprep.subr.mxu0 0.0
        %4426 = vmatpush1.msra.mxu0 0.0
        %4427 = vmatprep.subr.mxu0 0.0
        %4428 = vmatpush1.msra.mxu0 0.0
        %4429 = vmatprep.subr.mxu0 0.0
        %4430 = vmatpush1.msra.mxu0 0.0
        %4431 = vmatprep.subr.mxu0 0.0
        %4432 = vmatpush1.msra.mxu0 0.0
        %4433 = vmatprep.subr.mxu0 0.0
        %4434 = vmatpush1.msra.mxu0 0.0
        %4435 = vmatprep.subr.mxu0 0.0
        %4436 = vmatpush1.msra.mxu0 0.0
        %4437 = vmatprep.subr.mxu0 0.0
        %4438 = vmatpush1.msra.mxu0 0.0
        %4439 = vmatprep.subr.mxu0 0.0
        %4440 = vmatpush1.msra.mxu0 0.0
        %4441 = vmatprep.subr.mxu0 0.0
        %4442 = vmatpush1.msra.mxu0 0.0
        %4443 = vmatprep.subr.mxu0 0.0
        %v4444 = vand.u32 %v4091, 4294901760
        %v4445 = vsub.f32 %v4091, %v4444
        %v4446 = vand.u32 %v4445, 4294901760
        %4447 = vmatpush1.msra.mxu0 %v4446
        %4448 = vmatprep.subr.mxu0 0.0
        %v4449 = vand.u32 %v4090, 4294901760
        %v4450 = vsub.f32 %v4090, %v4449
        %v4451 = vand.u32 %v4450, 4294901760
        %4452 = vmatpush1.msra.mxu0 %v4451
        %4453 = vmatprep.subr.mxu0 0.0
        %v4454 = vand.u32 %v4089, 4294901760
        %v4455 = vsub.f32 %v4089, %v4454
        %v4456 = vand.u32 %v4455, 4294901760
        %4457 = vmatpush1.msra.mxu0 %v4456
        %4458 = vmatprep.subr.mxu0 0.0
        %v4459 = vand.u32 %v4088, 4294901760
        %v4460 = vsub.f32 %v4088, %v4459
        %v4461 = vand.u32 %v4460, 4294901760
        %4462 = vmatpush1.msra.mxu0 %v4461
        %4463 = vmatprep.subr.mxu0 0.0
        %4464 = vmatpush2.msra.mxu0 0.0
        %4465 = vmatprep.subr.mxu0 0.0
        %4466 = vmatpush2.msra.mxu0 0.0
        %4467 = vmatprep.subr.mxu0 0.0
        %4468 = vmatpush2.msra.mxu0 0.0
        %4469 = vmatprep.subr.mxu0 0.0
        %4470 = vmatpush2.msra.mxu0 0.0
        %4471 = vmatprep.subr.mxu0 0.0
        %4472 = vmatpush2.msra.mxu0 0.0
        %4473 = vmatprep.subr.mxu0 0.0
        %4474 = vmatpush2.msra.mxu0 0.0
        %4475 = vmatprep.subr.mxu0 0.0
        %4476 = vmatpush2.msra.mxu0 0.0
        %4477 = vmatprep.subr.mxu0 0.0
        %4478 = vmatpush2.msra.mxu0 0.0
        %4479 = vmatprep.subr.mxu0 0.0
        %4480 = vmatpush2.msra.mxu0 0.0
        %4481 = vmatprep.subr.mxu0 0.0
        %4482 = vmatpush2.msra.mxu0 0.0
        %4483 = vmatprep.subr.mxu0 0.0
        %4484 = vmatpush2.msra.mxu0 0.0
        %4485 = vmatprep.subr.mxu0 0.0
        %4486 = vmatpush2.msra.mxu0 0.0
        %4487 = vmatprep.subr.mxu0 0.0
        %4488 = vmatpush2.msra.mxu0 0.0
        %4489 = vmatprep.subr.mxu0 0.0
        %4490 = vmatpush2.msra.mxu0 0.0
        %4491 = vmatprep.subr.mxu0 0.0
        %4492 = vmatpush2.msra.mxu0 0.0
        %4493 = vmatprep.subr.mxu0 0.0
        %4494 = vmatpush2.msra.mxu0 0.0
        %4495 = vmatprep.mubr.f32.mxu0 0.0
        %v4496 = vand.u32 %v1795, 4294901760
        %4497 = vmatmul.mubr.f32.gmra.mxu0 %v4496
        %v4498 = vpop.f32.mrf.mxu0
        %v4499 = vadd.f32 %v4416, %v4498
        %v4500 = vpop.f32.mrf.mxu0
        %4501 = vdwg.mxu0
        %4502 = vmatprep.subr.mxu0 0.0
        %4503 = vmatpush1.msra.mxu0 0.0
        %4504 = vmatprep.subr.mxu0 0.0
        %4505 = vmatpush1.msra.mxu0 0.0
        %4506 = vmatprep.subr.mxu0 0.0
        %4507 = vmatpush1.msra.mxu0 0.0
        %4508 = vmatprep.subr.mxu0 0.0
        %4509 = vmatpush1.msra.mxu0 0.0
        %4510 = vmatprep.subr.mxu0 0.0
        %4511 = vmatpush1.msra.mxu0 0.0
        %4512 = vmatprep.subr.mxu0 0.0
        %4513 = vmatpush1.msra.mxu0 0.0
        %4514 = vmatprep.subr.mxu0 0.0
        %4515 = vmatpush1.msra.mxu0 0.0
        %4516 = vmatprep.subr.mxu0 0.0
        %4517 = vmatpush1.msra.mxu0 0.0
        %4518 = vmatprep.subr.mxu0 0.0
        %4519 = vmatpush1.msra.mxu0 0.0
        %4520 = vmatprep.subr.mxu0 0.0
        %4521 = vmatpush1.msra.mxu0 0.0
        %4522 = vmatprep.subr.mxu0 0.0
        %4523 = vmatpush1.msra.mxu0 0.0
        %4524 = vmatprep.subr.mxu0 0.0
        %4525 = vmatpush1.msra.mxu0 0.0
        %4526 = vmatprep.subr.mxu0 0.0
        %v4527 = vand.u32 %v4091, 4294901760
        %4528 = vmatpush1.msra.mxu0 %v4527
        %4529 = vmatprep.subr.mxu0 0.0
        %v4530 = vand.u32 %v4090, 4294901760
        %4531 = vmatpush1.msra.mxu0 %v4530
        %4532 = vmatprep.subr.mxu0 0.0
        %v4533 = vand.u32 %v4089, 4294901760
        %4534 = vmatpush1.msra.mxu0 %v4533
        %4535 = vmatprep.subr.mxu0 0.0
        %v4536 = vand.u32 %v4088, 4294901760
        %4537 = vmatpush1.msra.mxu0 %v4536
        %4538 = vmatprep.subr.mxu0 0.0
        %4539 = vmatpush2.msra.mxu0 0.0
        %4540 = vmatprep.subr.mxu0 0.0
        %4541 = vmatpush2.msra.mxu0 0.0
        %4542 = vmatprep.subr.mxu0 0.0
        %4543 = vmatpush2.msra.mxu0 0.0
        %4544 = vmatprep.subr.mxu0 0.0
        %4545 = vmatpush2.msra.mxu0 0.0
        %4546 = vmatprep.subr.mxu0 0.0
        %4547 = vmatpush2.msra.mxu0 0.0
        %4548 = vmatprep.subr.mxu0 0.0
        %4549 = vmatpush2.msra.mxu0 0.0
        %4550 = vmatprep.subr.mxu0 0.0
        %4551 = vmatpush2.msra.mxu0 0.0
        %4552 = vmatprep.subr.mxu0 0.0
        %4553 = vmatpush2.msra.mxu0 0.0
        %4554 = vmatprep.subr.mxu0 0.0
        %4555 = vmatpush2.msra.mxu0 0.0
        %4556 = vmatprep.subr.mxu0 0.0
        %4557 = vmatpush2.msra.mxu0 0.0
        %4558 = vmatprep.subr.mxu0 0.0
        %4559 = vmatpush2.msra.mxu0 0.0
        %4560 = vmatprep.subr.mxu0 0.0
        %4561 = vmatpush2.msra.mxu0 0.0
        %4562 = vmatprep.subr.mxu0 0.0
        %4563 = vmatpush2.msra.mxu0 0.0
        %4564 = vmatprep.subr.mxu0 0.0
        %4565 = vmatpush2.msra.mxu0 0.0
        %4566 = vmatprep.subr.mxu0 0.0
        %4567 = vmatpush2.msra.mxu0 0.0
        %4568 = vmatprep.subr.mxu0 0.0
        %4569 = vmatpush2.msra.mxu0 0.0
        %4570 = vmatprep.mubr.f32.mxu0 0.0
        %v4571 = vand.u32 %v1795, 4294901760
        %4572 = vmatmul.mubr.f32.gmra.mxu0 %v4571
        %v4573 = vpop.f32.mrf.mxu0
        %v4574 = vadd.f32 %v4499, %v4573
        %v4575 = vpop.f32.mrf.mxu0
        %4576 = vdwg.mxu0
        %v4578 = vcombine.high %v4574, %v4574
        %v4580 = vunpack.c.l.s4 1983009808
        %v4581 = vunpack.c.0.s8 %v4580
        %v4582 = vlaneseq
        %v4583 = vshrl.u32 %v4582, 7
        %v4584 = vsub.s32 %v4581, %v4583
        %v4585 = vrot.slane %v4574, %v4584
        %v4587 = vunpack.c.l.s4 1983009808
        %v4588 = vunpack.c.0.s8 %v4587
        %v4589 = vlaneseq
        %v4590 = vshrl.u32 %v4589, 7
        %v4591 = vsub.s32 %v4588, %v4590
        %v4592 = vrot.slane %v4578, %v4591
        %v4593 = vcombine.high %v4585, %v4585
        %v4594 = vcombine.high %v4592, %v4592
        %v4599 = vld [vmem:[%s4 + $0x10] sm:$0xf]
        %v4602 = vunpack.c.l.s4 1966171168
        %v4603 = vunpack.c.0.s8 %v4602
        %v4604 = vlaneseq
        %v4605 = vshrl.u32 %v4604, 7
        %v4606 = vsub.s32 %v4603, %v4605
        %v4607 = vrot.slane %v4599, %v4606
        %v4608 = vcombine.high %v4607, %v4607
        %v4610 = vunpack.c.l.s4 1966171168
        %v4611 = vunpack.c.0.s8 %v4610
        %v4612 = vlaneseq
        %v4613 = vshrl.u32 %v4612, 7
        %v4614 = vsub.s32 %v4611, %v4613
        %v4615 = vrot.slane %v4607, %v4614
        %v4617 = vunpack.c.l.s4 1966171168
        %v4618 = vunpack.c.0.s8 %v4617
        %v4619 = vlaneseq
        %v4620 = vshrl.u32 %v4619, 7
        %v4621 = vsub.s32 %v4618, %v4620
        %v4622 = vrot.slane %v4608, %v4621
        %v4623 = vcombine.high %v4615, %v4615
        %v4624 = vcombine.high %v4622, %v4622
        %v4625 = vlaneseq
        %v4626 = vshrl.u32 %v4625, 7
        %v4627 = vsub.s32 0, %v4626
        %v4628 = vrot.slane %v4615, %v4627
        %v4629 = vlaneseq
        %v4630 = vshrl.u32 %v4629, 7
        %v4631 = vsub.s32 0, %v4630
        %v4632 = vrot.slane %v4622, %v4631
        %v4633 = vlaneseq
        %v4634 = vshrl.u32 %v4633, 7
        %v4635 = vsub.s32 0, %v4634
        %v4636 = vrot.slane %v4623, %v4635
        %v4637 = vlaneseq
        %v4638 = vshrl.u32 %v4637, 7
        %v4639 = vsub.s32 0, %v4638
        %v4640 = vrot.slane %v4624, %v4639
        %v4645 = vadd.f32 %v4585, %v4628
        %v4646 = vadd.f32 %v4593, %v4632
        %v4647 = vadd.f32 %v4592, %v4636
        %v4648 = vadd.f32 %v4594, %v4640
        %v4649 = vmul.f32 %v4645, %v394
        %v4650 = vmul.f32 %v4646, %v395
        %v4651 = vmul.f32 %v4647, %v396
        %v4652 = vmul.f32 %v4648, %v397
        %v4653 = vsel %vm2358, %v4649, 0.0
        %v4654 = vsel %vm2358, %v4650, 0.0
        %v4655 = vadd.f32 %v4653, %v4654
        %v4656 = vsel %vm2358, %v4651, 0.0
        %v4657 = vadd.f32 %v4655, %v4656
        %v4658 = vsel %vm2358, %v4652, 0.0
        %v4659 = vadd.f32 %v4657, %v4658
        %s4660 = scalar_lea.vmem %s384, 4 [#allocation9]
        %4661 = vst [vmem:[%s4660] sm:$0x3] %v4659
        %v4662 = vld [vmem:[#allocation5 + $0x28] sm:$0xff]
        %v4663 = vld [vmem:[#allocation5 + $0x58] sm:$0xff]
        %v4664 = vld [vmem:[#allocation5 + $0x88] sm:$0xff]
        %v4665 = vld [vmem:[#allocation5 + $0xb8] sm:$0xff]
        %4666 = vmatprep.subr.mxu0 0.0
        %4667 = vmatpush1.msra.mxu0 0.0
        %4668 = vmatprep.subr.mxu0 0.0
        %4669 = vmatpush1.msra.mxu0 0.0
        %4670 = vmatprep.subr.mxu0 0.0
        %4671 = vmatpush1.msra.mxu0 0.0
        %4672 = vmatprep.subr.mxu0 0.0
        %4673 = vmatpush1.msra.mxu0 0.0
        %4674 = vmatprep.subr.mxu0 0.0
        %4675 = vmatpush1.msra.mxu0 0.0
        %4676 = vmatprep.subr.mxu0 0.0
        %4677 = vmatpush1.msra.mxu0 0.0
        %4678 = vmatprep.subr.mxu0 0.0
        %4679 = vmatpush1.msra.mxu0 0.0
        %4680 = vmatprep.subr.mxu0 0.0
        %4681 = vmatpush1.msra.mxu0 0.0
        %4682 = vmatprep.subr.mxu0 0.0
        %4683 = vmatpush1.msra.mxu0 0.0
        %4684 = vmatprep.subr.mxu0 0.0
        %4685 = vmatpush1.msra.mxu0 0.0
        %4686 = vmatprep.subr.mxu0 0.0
        %4687 = vmatpush1.msra.mxu0 0.0
        %4688 = vmatprep.subr.mxu0 0.0
        %4689 = vmatpush1.msra.mxu0 0.0
        %4690 = vmatprep.subr.mxu0 0.0
        %v4691 = vand.u32 %v4665, 4294901760
        %4692 = vmatpush1.msra.mxu0 %v4691
        %4693 = vmatprep.subr.mxu0 0.0
        %v4694 = vand.u32 %v4664, 4294901760
        %4695 = vmatpush1.msra.mxu0 %v4694
        %4696 = vmatprep.subr.mxu0 0.0
        %v4697 = vand.u32 %v4663, 4294901760
        %4698 = vmatpush1.msra.mxu0 %v4697
        %4699 = vmatprep.subr.mxu0 0.0
        %v4700 = vand.u32 %v4662, 4294901760
        %4701 = vmatpush1.msra.mxu0 %v4700
        %4702 = vmatprep.subr.mxu0 0.0
        %4703 = vmatpush2.msra.mxu0 0.0
        %4704 = vmatprep.subr.mxu0 0.0
        %4705 = vmatpush2.msra.mxu0 0.0
        %4706 = vmatprep.subr.mxu0 0.0
        %4707 = vmatpush2.msra.mxu0 0.0
        %4708 = vmatprep.subr.mxu0 0.0
        %4709 = vmatpush2.msra.mxu0 0.0
        %4710 = vmatprep.subr.mxu0 0.0
        %4711 = vmatpush2.msra.mxu0 0.0
        %4712 = vmatprep.subr.mxu0 0.0
        %4713 = vmatpush2.msra.mxu0 0.0
        %4714 = vmatprep.subr.mxu0 0.0
        %4715 = vmatpush2.msra.mxu0 0.0
        %4716 = vmatprep.subr.mxu0 0.0
        %4717 = vmatpush2.msra.mxu0 0.0
        %4718 = vmatprep.subr.mxu0 0.0
        %4719 = vmatpush2.msra.mxu0 0.0
        %4720 = vmatprep.subr.mxu0 0.0
        %4721 = vmatpush2.msra.mxu0 0.0
        %4722 = vmatprep.subr.mxu0 0.0
        %4723 = vmatpush2.msra.mxu0 0.0
        %4724 = vmatprep.subr.mxu0 0.0
        %4725 = vmatpush2.msra.mxu0 0.0
        %4726 = vmatprep.subr.mxu0 0.0
        %4727 = vmatpush2.msra.mxu0 0.0
        %4728 = vmatprep.subr.mxu0 0.0
        %4729 = vmatpush2.msra.mxu0 0.0
        %4730 = vmatprep.subr.mxu0 0.0
        %4731 = vmatpush2.msra.mxu0 0.0
        %4732 = vmatprep.subr.mxu0 0.0
        %4733 = vmatpush2.msra.mxu0 0.0
        %4734 = vmatprep.mubr.f32.mxu0 0.0
        %v4735 = vand.u32 %v1795, 4294901760
        %v4736 = vsub.f32 %v1795, %v4735
        %v4737 = vand.u32 %v4736, 4294901760
        %v4738 = vsub.f32 %v4736, %v4737
        %v4739 = vand.u32 %v4738, 4294901760
        %4740 = vmatmul.mubr.f32.gmra.mxu0 %v4739
        %v4741 = vpop.f32.mrf.mxu0
        %v4742 = vadd.f32 0.0, %v4741
        %v4743 = vpop.f32.mrf.mxu0
        %4744 = vdwg.mxu0
        %4745 = vmatprep.subr.mxu0 0.0
        %4746 = vmatpush1.msra.mxu0 0.0
        %4747 = vmatprep.subr.mxu0 0.0
        %4748 = vmatpush1.msra.mxu0 0.0
        %4749 = vmatprep.subr.mxu0 0.0
        %4750 = vmatpush1.msra.mxu0 0.0
        %4751 = vmatprep.subr.mxu0 0.0
        %4752 = vmatpush1.msra.mxu0 0.0
        %4753 = vmatprep.subr.mxu0 0.0
        %4754 = vmatpush1.msra.mxu0 0.0
        %4755 = vmatprep.subr.mxu0 0.0
        %4756 = vmatpush1.msra.mxu0 0.0
        %4757 = vmatprep.subr.mxu0 0.0
        %4758 = vmatpush1.msra.mxu0 0.0
        %4759 = vmatprep.subr.mxu0 0.0
        %4760 = vmatpush1.msra.mxu0 0.0
        %4761 = vmatprep.subr.mxu0 0.0
        %4762 = vmatpush1.msra.mxu0 0.0
        %4763 = vmatprep.subr.mxu0 0.0
        %4764 = vmatpush1.msra.mxu0 0.0
        %4765 = vmatprep.subr.mxu0 0.0
        %4766 = vmatpush1.msra.mxu0 0.0
        %4767 = vmatprep.subr.mxu0 0.0
        %4768 = vmatpush1.msra.mxu0 0.0
        %4769 = vmatprep.subr.mxu0 0.0
        %v4770 = vand.u32 %v4665, 4294901760
        %v4771 = vsub.f32 %v4665, %v4770
        %v4772 = vand.u32 %v4771, 4294901760
        %v4773 = vsub.f32 %v4771, %v4772
        %v4774 = vand.u32 %v4773, 4294901760
        %4775 = vmatpush1.msra.mxu0 %v4774
        %4776 = vmatprep.subr.mxu0 0.0
        %v4777 = vand.u32 %v4664, 4294901760
        %v4778 = vsub.f32 %v4664, %v4777
        %v4779 = vand.u32 %v4778, 4294901760
        %v4780 = vsub.f32 %v4778, %v4779
        %v4781 = vand.u32 %v4780, 4294901760
        %4782 = vmatpush1.msra.mxu0 %v4781
        %4783 = vmatprep.subr.mxu0 0.0
        %v4784 = vand.u32 %v4663, 4294901760
        %v4785 = vsub.f32 %v4663, %v4784
        %v4786 = vand.u32 %v4785, 4294901760
        %v4787 = vsub.f32 %v4785, %v4786
        %v4788 = vand.u32 %v4787, 4294901760
        %4789 = vmatpush1.msra.mxu0 %v4788
        %4790 = vmatprep.subr.mxu0 0.0
        %v4791 = vand.u32 %v4662, 4294901760
        %v4792 = vsub.f32 %v4662, %v4791
        %v4793 = vand.u32 %v4792, 4294901760
        %v4794 = vsub.f32 %v4792, %v4793
        %v4795 = vand.u32 %v4794, 4294901760
        %4796 = vmatpush1.msra.mxu0 %v4795
        %4797 = vmatprep.subr.mxu0 0.0
        %4798 = vmatpush2.msra.mxu0 0.0
        %4799 = vmatprep.subr.mxu0 0.0
        %4800 = vmatpush2.msra.mxu0 0.0
        %4801 = vmatprep.subr.mxu0 0.0
        %4802 = vmatpush2.msra.mxu0 0.0
        %4803 = vmatprep.subr.mxu0 0.0
        %4804 = vmatpush2.msra.mxu0 0.0
        %4805 = vmatprep.subr.mxu0 0.0
        %4806 = vmatpush2.msra.mxu0 0.0
        %4807 = vmatprep.subr.mxu0 0.0
        %4808 = vmatpush2.msra.mxu0 0.0
        %4809 = vmatprep.subr.mxu0 0.0
        %4810 = vmatpush2.msra.mxu0 0.0
        %4811 = vmatprep.subr.mxu0 0.0
        %4812 = vmatpush2.msra.mxu0 0.0
        %4813 = vmatprep.subr.mxu0 0.0
        %4814 = vmatpush2.msra.mxu0 0.0
        %4815 = vmatprep.subr.mxu0 0.0
        %4816 = vmatpush2.msra.mxu0 0.0
        %4817 = vmatprep.subr.mxu0 0.0
        %4818 = vmatpush2.msra.mxu0 0.0
        %4819 = vmatprep.subr.mxu0 0.0
        %4820 = vmatpush2.msra.mxu0 0.0
        %4821 = vmatprep.subr.mxu0 0.0
        %4822 = vmatpush2.msra.mxu0 0.0
        %4823 = vmatprep.subr.mxu0 0.0
        %4824 = vmatpush2.msra.mxu0 0.0
        %4825 = vmatprep.subr.mxu0 0.0
        %4826 = vmatpush2.msra.mxu0 0.0
        %4827 = vmatprep.subr.mxu0 0.0
        %4828 = vmatpush2.msra.mxu0 0.0
        %4829 = vmatprep.mubr.f32.mxu0 0.0
        %v4830 = vand.u32 %v1795, 4294901760
        %4831 = vmatmul.mubr.f32.gmra.mxu0 %v4830
        %v4832 = vpop.f32.mrf.mxu0
        %v4833 = vadd.f32 %v4742, %v4832
        %v4834 = vpop.f32.mrf.mxu0
        %4835 = vdwg.mxu0
        %4836 = vmatprep.subr.mxu0 0.0
        %4837 = vmatpush1.msra.mxu0 0.0
        %4838 = vmatprep.subr.mxu0 0.0
        %4839 = vmatpush1.msra.mxu0 0.0
        %4840 = vmatprep.subr.mxu0 0.0
        %4841 = vmatpush1.msra.mxu0 0.0
        %4842 = vmatprep.subr.mxu0 0.0
        %4843 = vmatpush1.msra.mxu0 0.0
        %4844 = vmatprep.subr.mxu0 0.0
        %4845 = vmatpush1.msra.mxu0 0.0
        %4846 = vmatprep.subr.mxu0 0.0
        %4847 = vmatpush1.msra.mxu0 0.0
        %4848 = vmatprep.subr.mxu0 0.0
        %4849 = vmatpush1.msra.mxu0 0.0
        %4850 = vmatprep.subr.mxu0 0.0
        %4851 = vmatpush1.msra.mxu0 0.0
        %4852 = vmatprep.subr.mxu0 0.0
        %4853 = vmatpush1.msra.mxu0 0.0
        %4854 = vmatprep.subr.mxu0 0.0
        %4855 = vmatpush1.msra.mxu0 0.0
        %4856 = vmatprep.subr.mxu0 0.0
        %4857 = vmatpush1.msra.mxu0 0.0
        %4858 = vmatprep.subr.mxu0 0.0
        %4859 = vmatpush1.msra.mxu0 0.0
        %4860 = vmatprep.subr.mxu0 0.0
        %v4861 = vand.u32 %v4665, 4294901760
        %v4862 = vsub.f32 %v4665, %v4861
        %4863 = vmatpush1.msra.mxu0 %v4862
        %4864 = vmatprep.subr.mxu0 0.0
        %v4865 = vand.u32 %v4664, 4294901760
        %v4866 = vsub.f32 %v4664, %v4865
        %4867 = vmatpush1.msra.mxu0 %v4866
        %4868 = vmatprep.subr.mxu0 0.0
        %v4869 = vand.u32 %v4663, 4294901760
        %v4870 = vsub.f32 %v4663, %v4869
        %4871 = vmatpush1.msra.mxu0 %v4870
        %4872 = vmatprep.subr.mxu0 0.0
        %v4873 = vand.u32 %v4662, 4294901760
        %v4874 = vsub.f32 %v4662, %v4873
        %4875 = vmatpush1.msra.mxu0 %v4874
        %4876 = vmatprep.subr.mxu0 0.0
        %4877 = vmatpush2.msra.mxu0 0.0
        %4878 = vmatprep.subr.mxu0 0.0
        %4879 = vmatpush2.msra.mxu0 0.0
        %4880 = vmatprep.subr.mxu0 0.0
        %4881 = vmatpush2.msra.mxu0 0.0
        %4882 = vmatprep.subr.mxu0 0.0
        %4883 = vmatpush2.msra.mxu0 0.0
        %4884 = vmatprep.subr.mxu0 0.0
        %4885 = vmatpush2.msra.mxu0 0.0
        %4886 = vmatprep.subr.mxu0 0.0
        %4887 = vmatpush2.msra.mxu0 0.0
        %4888 = vmatprep.subr.mxu0 0.0
        %4889 = vmatpush2.msra.mxu0 0.0
        %4890 = vmatprep.subr.mxu0 0.0
        %4891 = vmatpush2.msra.mxu0 0.0
        %4892 = vmatprep.subr.mxu0 0.0
        %4893 = vmatpush2.msra.mxu0 0.0
        %4894 = vmatprep.subr.mxu0 0.0
        %4895 = vmatpush2.msra.mxu0 0.0
        %4896 = vmatprep.subr.mxu0 0.0
        %4897 = vmatpush2.msra.mxu0 0.0
        %4898 = vmatprep.subr.mxu0 0.0
        %4899 = vmatpush2.msra.mxu0 0.0
        %4900 = vmatprep.subr.mxu0 0.0
        %4901 = vmatpush2.msra.mxu0 0.0
        %4902 = vmatprep.subr.mxu0 0.0
        %4903 = vmatpush2.msra.mxu0 0.0
        %4904 = vmatprep.subr.mxu0 0.0
        %4905 = vmatpush2.msra.mxu0 0.0
        %4906 = vmatprep.subr.mxu0 0.0
        %4907 = vmatpush2.msra.mxu0 0.0
        %4908 = vmatprep.mubr.f32.mxu0 0.0
        %v4909 = vand.u32 %v1795, 4294901760
        %v4910 = vsub.f32 %v1795, %v4909
        %4911 = vmatmul.mubr.f32.gmra.mxu0 %v4910
        %v4912 = vpop.f32.mrf.mxu0
        %v4913 = vadd.f32 %v4833, %v4912
        %v4914 = vpop.f32.mrf.mxu0
        %4915 = vdwg.mxu0
        %4916 = vmatprep.subr.mxu0 0.0
        %4917 = vmatpush1.msra.mxu0 0.0
        %4918 = vmatprep.subr.mxu0 0.0
        %4919 = vmatpush1.msra.mxu0 0.0
        %4920 = vmatprep.subr.mxu0 0.0
        %4921 = vmatpush1.msra.mxu0 0.0
        %4922 = vmatprep.subr.mxu0 0.0
        %4923 = vmatpush1.msra.mxu0 0.0
        %4924 = vmatprep.subr.mxu0 0.0
        %4925 = vmatpush1.msra.mxu0 0.0
        %4926 = vmatprep.subr.mxu0 0.0
        %4927 = vmatpush1.msra.mxu0 0.0
        %4928 = vmatprep.subr.mxu0 0.0
        %4929 = vmatpush1.msra.mxu0 0.0
        %4930 = vmatprep.subr.mxu0 0.0
        %4931 = vmatpush1.msra.mxu0 0.0
        %4932 = vmatprep.subr.mxu0 0.0
        %4933 = vmatpush1.msra.mxu0 0.0
        %4934 = vmatprep.subr.mxu0 0.0
        %4935 = vmatpush1.msra.mxu0 0.0
        %4936 = vmatprep.subr.mxu0 0.0
        %4937 = vmatpush1.msra.mxu0 0.0
        %4938 = vmatprep.subr.mxu0 0.0
        %4939 = vmatpush1.msra.mxu0 0.0
        %4940 = vmatprep.subr.mxu0 0.0
        %v4941 = vand.u32 %v4665, 4294901760
        %4942 = vmatpush1.msra.mxu0 %v4941
        %4943 = vmatprep.subr.mxu0 0.0
        %v4944 = vand.u32 %v4664, 4294901760
        %4945 = vmatpush1.msra.mxu0 %v4944
        %4946 = vmatprep.subr.mxu0 0.0
        %v4947 = vand.u32 %v4663, 4294901760
        %4948 = vmatpush1.msra.mxu0 %v4947
        %4949 = vmatprep.subr.mxu0 0.0
        %v4950 = vand.u32 %v4662, 4294901760
        %4951 = vmatpush1.msra.mxu0 %v4950
        %4952 = vmatprep.subr.mxu0 0.0
        %4953 = vmatpush2.msra.mxu0 0.0
        %4954 = vmatprep.subr.mxu0 0.0
        %4955 = vmatpush2.msra.mxu0 0.0
        %4956 = vmatprep.subr.mxu0 0.0
        %4957 = vmatpush2.msra.mxu0 0.0
        %4958 = vmatprep.subr.mxu0 0.0
        %4959 = vmatpush2.msra.mxu0 0.0
        %4960 = vmatprep.subr.mxu0 0.0
        %4961 = vmatpush2.msra.mxu0 0.0
        %4962 = vmatprep.subr.mxu0 0.0
        %4963 = vmatpush2.msra.mxu0 0.0
        %4964 = vmatprep.subr.mxu0 0.0
        %4965 = vmatpush2.msra.mxu0 0.0
        %4966 = vmatprep.subr.mxu0 0.0
        %4967 = vmatpush2.msra.mxu0 0.0
        %4968 = vmatprep.subr.mxu0 0.0
        %4969 = vmatpush2.msra.mxu0 0.0
        %4970 = vmatprep.subr.mxu0 0.0
        %4971 = vmatpush2.msra.mxu0 0.0
        %4972 = vmatprep.subr.mxu0 0.0
        %4973 = vmatpush2.msra.mxu0 0.0
        %4974 = vmatprep.subr.mxu0 0.0
        %4975 = vmatpush2.msra.mxu0 0.0
        %4976 = vmatprep.subr.mxu0 0.0
        %4977 = vmatpush2.msra.mxu0 0.0
        %4978 = vmatprep.subr.mxu0 0.0
        %4979 = vmatpush2.msra.mxu0 0.0
        %4980 = vmatprep.subr.mxu0 0.0
        %4981 = vmatpush2.msra.mxu0 0.0
        %4982 = vmatprep.subr.mxu0 0.0
        %4983 = vmatpush2.msra.mxu0 0.0
        %4984 = vmatprep.mubr.f32.mxu0 0.0
        %v4985 = vand.u32 %v1795, 4294901760
        %v4986 = vsub.f32 %v1795, %v4985
        %v4987 = vand.u32 %v4986, 4294901760
        %4988 = vmatmul.mubr.f32.gmra.mxu0 %v4987
        %v4989 = vpop.f32.mrf.mxu0
        %v4990 = vadd.f32 %v4913, %v4989
        %v4991 = vpop.f32.mrf.mxu0
        %4992 = vdwg.mxu0
        %4993 = vmatprep.subr.mxu0 0.0
        %4994 = vmatpush1.msra.mxu0 0.0
        %4995 = vmatprep.subr.mxu0 0.0
        %4996 = vmatpush1.msra.mxu0 0.0
        %4997 = vmatprep.subr.mxu0 0.0
        %4998 = vmatpush1.msra.mxu0 0.0
        %4999 = vmatprep.subr.mxu0 0.0
        %5000 = vmatpush1.msra.mxu0 0.0
        %5001 = vmatprep.subr.mxu0 0.0
        %5002 = vmatpush1.msra.mxu0 0.0
        %5003 = vmatprep.subr.mxu0 0.0
        %5004 = vmatpush1.msra.mxu0 0.0
        %5005 = vmatprep.subr.mxu0 0.0
        %5006 = vmatpush1.msra.mxu0 0.0
        %5007 = vmatprep.subr.mxu0 0.0
        %5008 = vmatpush1.msra.mxu0 0.0
        %5009 = vmatprep.subr.mxu0 0.0
        %5010 = vmatpush1.msra.mxu0 0.0
        %5011 = vmatprep.subr.mxu0 0.0
        %5012 = vmatpush1.msra.mxu0 0.0
        %5013 = vmatprep.subr.mxu0 0.0
        %5014 = vmatpush1.msra.mxu0 0.0
        %5015 = vmatprep.subr.mxu0 0.0
        %5016 = vmatpush1.msra.mxu0 0.0
        %5017 = vmatprep.subr.mxu0 0.0
        %v5018 = vand.u32 %v4665, 4294901760
        %v5019 = vsub.f32 %v4665, %v5018
        %v5020 = vand.u32 %v5019, 4294901760
        %5021 = vmatpush1.msra.mxu0 %v5020
        %5022 = vmatprep.subr.mxu0 0.0
        %v5023 = vand.u32 %v4664, 4294901760
        %v5024 = vsub.f32 %v4664, %v5023
        %v5025 = vand.u32 %v5024, 4294901760
        %5026 = vmatpush1.msra.mxu0 %v5025
        %5027 = vmatprep.subr.mxu0 0.0
        %v5028 = vand.u32 %v4663, 4294901760
        %v5029 = vsub.f32 %v4663, %v5028
        %v5030 = vand.u32 %v5029, 4294901760
        %5031 = vmatpush1.msra.mxu0 %v5030
        %5032 = vmatprep.subr.mxu0 0.0
        %v5033 = vand.u32 %v4662, 4294901760
        %v5034 = vsub.f32 %v4662, %v5033
        %v5035 = vand.u32 %v5034, 4294901760
        %5036 = vmatpush1.msra.mxu0 %v5035
        %5037 = vmatprep.subr.mxu0 0.0
        %5038 = vmatpush2.msra.mxu0 0.0
        %5039 = vmatprep.subr.mxu0 0.0
        %5040 = vmatpush2.msra.mxu0 0.0
        %5041 = vmatprep.subr.mxu0 0.0
        %5042 = vmatpush2.msra.mxu0 0.0
        %5043 = vmatprep.subr.mxu0 0.0
        %5044 = vmatpush2.msra.mxu0 0.0
        %5045 = vmatprep.subr.mxu0 0.0
        %5046 = vmatpush2.msra.mxu0 0.0
        %5047 = vmatprep.subr.mxu0 0.0
        %5048 = vmatpush2.msra.mxu0 0.0
        %5049 = vmatprep.subr.mxu0 0.0
        %5050 = vmatpush2.msra.mxu0 0.0
        %5051 = vmatprep.subr.mxu0 0.0
        %5052 = vmatpush2.msra.mxu0 0.0
        %5053 = vmatprep.subr.mxu0 0.0
        %5054 = vmatpush2.msra.mxu0 0.0
        %5055 = vmatprep.subr.mxu0 0.0
        %5056 = vmatpush2.msra.mxu0 0.0
        %5057 = vmatprep.subr.mxu0 0.0
        %5058 = vmatpush2.msra.mxu0 0.0
        %5059 = vmatprep.subr.mxu0 0.0
        %5060 = vmatpush2.msra.mxu0 0.0
        %5061 = vmatprep.subr.mxu0 0.0
        %5062 = vmatpush2.msra.mxu0 0.0
        %5063 = vmatprep.subr.mxu0 0.0
        %5064 = vmatpush2.msra.mxu0 0.0
        %5065 = vmatprep.subr.mxu0 0.0
        %5066 = vmatpush2.msra.mxu0 0.0
        %5067 = vmatprep.subr.mxu0 0.0
        %5068 = vmatpush2.msra.mxu0 0.0
        %5069 = vmatprep.mubr.f32.mxu0 0.0
        %v5070 = vand.u32 %v1795, 4294901760
        %5071 = vmatmul.mubr.f32.gmra.mxu0 %v5070
        %v5072 = vpop.f32.mrf.mxu0
        %v5073 = vadd.f32 %v4990, %v5072
        %v5074 = vpop.f32.mrf.mxu0
        %5075 = vdwg.mxu0
        %5076 = vmatprep.subr.mxu0 0.0
        %5077 = vmatpush1.msra.mxu0 0.0
        %5078 = vmatprep.subr.mxu0 0.0
        %5079 = vmatpush1.msra.mxu0 0.0
        %5080 = vmatprep.subr.mxu0 0.0
        %5081 = vmatpush1.msra.mxu0 0.0
        %5082 = vmatprep.subr.mxu0 0.0
        %5083 = vmatpush1.msra.mxu0 0.0
        %5084 = vmatprep.subr.mxu0 0.0
        %5085 = vmatpush1.msra.mxu0 0.0
        %5086 = vmatprep.subr.mxu0 0.0
        %5087 = vmatpush1.msra.mxu0 0.0
        %5088 = vmatprep.subr.mxu0 0.0
        %5089 = vmatpush1.msra.mxu0 0.0
        %5090 = vmatprep.subr.mxu0 0.0
        %5091 = vmatpush1.msra.mxu0 0.0
        %5092 = vmatprep.subr.mxu0 0.0
        %5093 = vmatpush1.msra.mxu0 0.0
        %5094 = vmatprep.subr.mxu0 0.0
        %5095 = vmatpush1.msra.mxu0 0.0
        %5096 = vmatprep.subr.mxu0 0.0
        %5097 = vmatpush1.msra.mxu0 0.0
        %5098 = vmatprep.subr.mxu0 0.0
        %5099 = vmatpush1.msra.mxu0 0.0
        %5100 = vmatprep.subr.mxu0 0.0
        %v5101 = vand.u32 %v4665, 4294901760
        %5102 = vmatpush1.msra.mxu0 %v5101
        %5103 = vmatprep.subr.mxu0 0.0
        %v5104 = vand.u32 %v4664, 4294901760
        %5105 = vmatpush1.msra.mxu0 %v5104
        %5106 = vmatprep.subr.mxu0 0.0
        %v5107 = vand.u32 %v4663, 4294901760
        %5108 = vmatpush1.msra.mxu0 %v5107
        %5109 = vmatprep.subr.mxu0 0.0
        %v5110 = vand.u32 %v4662, 4294901760
        %5111 = vmatpush1.msra.mxu0 %v5110
        %5112 = vmatprep.subr.mxu0 0.0
        %5113 = vmatpush2.msra.mxu0 0.0
        %5114 = vmatprep.subr.mxu0 0.0
        %5115 = vmatpush2.msra.mxu0 0.0
        %5116 = vmatprep.subr.mxu0 0.0
        %5117 = vmatpush2.msra.mxu0 0.0
        %5118 = vmatprep.subr.mxu0 0.0
        %5119 = vmatpush2.msra.mxu0 0.0
        %5120 = vmatprep.subr.mxu0 0.0
        %5121 = vmatpush2.msra.mxu0 0.0
        %5122 = vmatprep.subr.mxu0 0.0
        %5123 = vmatpush2.msra.mxu0 0.0
        %5124 = vmatprep.subr.mxu0 0.0
        %5125 = vmatpush2.msra.mxu0 0.0
        %5126 = vmatprep.subr.mxu0 0.0
        %5127 = vmatpush2.msra.mxu0 0.0
        %5128 = vmatprep.subr.mxu0 0.0
        %5129 = vmatpush2.msra.mxu0 0.0
        %5130 = vmatprep.subr.mxu0 0.0
        %5131 = vmatpush2.msra.mxu0 0.0
        %5132 = vmatprep.subr.mxu0 0.0
        %5133 = vmatpush2.msra.mxu0 0.0
        %5134 = vmatprep.subr.mxu0 0.0
        %5135 = vmatpush2.msra.mxu0 0.0
        %5136 = vmatprep.subr.mxu0 0.0
        %5137 = vmatpush2.msra.mxu0 0.0
        %5138 = vmatprep.subr.mxu0 0.0
        %5139 = vmatpush2.msra.mxu0 0.0
        %5140 = vmatprep.subr.mxu0 0.0
        %5141 = vmatpush2.msra.mxu0 0.0
        %5142 = vmatprep.subr.mxu0 0.0
        %5143 = vmatpush2.msra.mxu0 0.0
        %5144 = vmatprep.mubr.f32.mxu0 0.0
        %v5145 = vand.u32 %v1795, 4294901760
        %5146 = vmatmul.mubr.f32.gmra.mxu0 %v5145
        %v5147 = vpop.f32.mrf.mxu0
        %v5148 = vadd.f32 %v5073, %v5147
        %v5149 = vpop.f32.mrf.mxu0
        %5150 = vdwg.mxu0
        %v5152 = vcombine.high %v5148, %v5148
        %v5154 = vunpack.c.l.s4 1983009808
        %v5155 = vunpack.c.0.s8 %v5154
        %v5156 = vlaneseq
        %v5157 = vshrl.u32 %v5156, 7
        %v5158 = vsub.s32 %v5155, %v5157
        %v5159 = vrot.slane %v5148, %v5158
        %v5161 = vunpack.c.l.s4 1983009808
        %v5162 = vunpack.c.0.s8 %v5161
        %v5163 = vlaneseq
        %v5164 = vshrl.u32 %v5163, 7
        %v5165 = vsub.s32 %v5162, %v5164
        %v5166 = vrot.slane %v5152, %v5165
        %v5167 = vcombine.high %v5159, %v5159
        %v5168 = vcombine.high %v5166, %v5166
        %v5173 = vld [vmem:[%s4 + $0x14] sm:$0xf]
        %v5176 = vunpack.c.l.s4 1966171168
        %v5177 = vunpack.c.0.s8 %v5176
        %v5178 = vlaneseq
        %v5179 = vshrl.u32 %v5178, 7
        %v5180 = vsub.s32 %v5177, %v5179
        %v5181 = vrot.slane %v5173, %v5180
        %v5182 = vcombine.high %v5181, %v5181
        %v5184 = vunpack.c.l.s4 1966171168
        %v5185 = vunpack.c.0.s8 %v5184
        %v5186 = vlaneseq
        %v5187 = vshrl.u32 %v5186, 7
        %v5188 = vsub.s32 %v5185, %v5187
        %v5189 = vrot.slane %v5181, %v5188
        %v5191 = vunpack.c.l.s4 1966171168
        %v5192 = vunpack.c.0.s8 %v5191
        %v5193 = vlaneseq
        %v5194 = vshrl.u32 %v5193, 7
        %v5195 = vsub.s32 %v5192, %v5194
        %v5196 = vrot.slane %v5182, %v5195
        %v5197 = vcombine.high %v5189, %v5189
        %v5198 = vcombine.high %v5196, %v5196
        %v5199 = vlaneseq
        %v5200 = vshrl.u32 %v5199, 7
        %v5201 = vsub.s32 0, %v5200
        %v5202 = vrot.slane %v5189, %v5201
        %v5203 = vlaneseq
        %v5204 = vshrl.u32 %v5203, 7
        %v5205 = vsub.s32 0, %v5204
        %v5206 = vrot.slane %v5196, %v5205
        %v5207 = vlaneseq
        %v5208 = vshrl.u32 %v5207, 7
        %v5209 = vsub.s32 0, %v5208
        %v5210 = vrot.slane %v5197, %v5209
        %v5211 = vlaneseq
        %v5212 = vshrl.u32 %v5211, 7
        %v5213 = vsub.s32 0, %v5212
        %v5214 = vrot.slane %v5198, %v5213
        %v5219 = vadd.f32 %v5159, %v5202
        %v5220 = vadd.f32 %v5167, %v5206
        %v5221 = vadd.f32 %v5166, %v5210
        %v5222 = vadd.f32 %v5168, %v5214
        %v5223 = vmul.f32 %v5219, %v394
        %v5224 = vmul.f32 %v5220, %v395
        %v5225 = vmul.f32 %v5221, %v396
        %v5226 = vmul.f32 %v5222, %v397
        %v5227 = vsel %vm2358, %v5223, 0.0
        %v5228 = vsel %vm2358, %v5224, 0.0
        %v5229 = vadd.f32 %v5227, %v5228
        %v5230 = vsel %vm2358, %v5225, 0.0
        %v5231 = vadd.f32 %v5229, %v5230
        %v5232 = vsel %vm2358, %v5226, 0.0
        %v5233 = vadd.f32 %v5231, %v5232
        %s5234 = scalar_lea.vmem %s384, 6 [#allocation9]
        %5235 = vst [vmem:[%s5234] sm:$0x3] %v5233
        %v5236 = vcombine.high %v1788, %v1788
        %v5238 = vunpack.c.l.s4 1983009808
        %v5239 = vunpack.c.0.s8 %v5238
        %v5240 = vlaneseq
        %v5241 = vshrl.u32 %v5240, 7
        %v5242 = vsub.s32 %v5239, %v5241
        %v5243 = vrot.slane %v1788, %v5242
        %v5245 = vunpack.c.l.s4 1983009808
        %v5246 = vunpack.c.0.s8 %v5245
        %v5247 = vlaneseq
        %v5248 = vshrl.u32 %v5247, 7
        %v5249 = vsub.s32 %v5246, %v5248
        %v5250 = vrot.slane %v5236, %v5249
        %v5251 = vcombine.high %v5243, %v5243
        %v5252 = vcombine.high %v5250, %v5250
        %v5253 = vld [vmem:[#allocation7] sm:$0xff]
        %v5254 = vld [vmem:[#allocation7 + $0x8] sm:$0xff]
        %v5255 = vld [vmem:[#allocation7 + $0x10] sm:$0xff]
        %v5256 = vld [vmem:[#allocation7 + $0x18] sm:$0xff]
        %s5257 = scalar_lea.vmem [#allocation7], 32
        %v5258 = vld [vmem:[%s5257] sm:$0xff]
        %v5259 = vld [vmem:[%s5257 + $0x8] sm:$0xff]
        %v5260 = vld [vmem:[%s5257 + $0x10] sm:$0xff]
        %v5261 = vld [vmem:[%s5257 + $0x18] sm:$0xff]
        %v5262 = vsel %vm1793, %v5251, 0
        %5264 = vmatprep.subr.mxu0 0.0
        %5265 = vmatpush1.msra.mxu0 0.0
        %5266 = vmatprep.subr.mxu0 0.0
        %5267 = vmatpush1.msra.mxu0 0.0
        %5268 = vmatprep.subr.mxu0 0.0
        %5269 = vmatpush1.msra.mxu0 0.0
        %5270 = vmatprep.subr.mxu0 0.0
        %5271 = vmatpush1.msra.mxu0 0.0
        %5272 = vmatprep.subr.mxu0 0.0
        %5273 = vmatpush1.msra.mxu0 0.0
        %5274 = vmatprep.subr.mxu0 0.0
        %5275 = vmatpush1.msra.mxu0 0.0
        %5276 = vmatprep.subr.mxu0 0.0
        %5277 = vmatpush1.msra.mxu0 0.0
        %5278 = vmatprep.subr.mxu0 0.0
        %5279 = vmatpush1.msra.mxu0 0.0
        %5280 = vmatprep.subr.mxu0 0.0
        %5281 = vmatpush1.msra.mxu0 0.0
        %5282 = vmatprep.subr.mxu0 0.0
        %5283 = vmatpush1.msra.mxu0 0.0
        %5284 = vmatprep.subr.mxu0 0.0
        %5285 = vmatpush1.msra.mxu0 0.0
        %5286 = vmatprep.subr.mxu0 0.0
        %5287 = vmatpush1.msra.mxu0 0.0
        %5288 = vmatprep.subr.mxu0 0.0
        %v5289 = vand.u32 %v5261, 4294901760
        %5290 = vmatpush1.msra.mxu0 %v5289
        %5291 = vmatprep.subr.mxu0 0.0
        %v5292 = vand.u32 %v5260, 4294901760
        %5293 = vmatpush1.msra.mxu0 %v5292
        %5294 = vmatprep.subr.mxu0 0.0
        %v5295 = vand.u32 %v5259, 4294901760
        %5296 = vmatpush1.msra.mxu0 %v5295
        %5297 = vmatprep.subr.mxu0 0.0
        %v5298 = vand.u32 %v5258, 4294901760
        %5299 = vmatpush1.msra.mxu0 %v5298
        %5300 = vmatprep.subr.mxu0 0.0
        %5301 = vmatpush2.msra.mxu0 0.0
        %5302 = vmatprep.subr.mxu0 0.0
        %5303 = vmatpush2.msra.mxu0 0.0
        %5304 = vmatprep.subr.mxu0 0.0
        %5305 = vmatpush2.msra.mxu0 0.0
        %5306 = vmatprep.subr.mxu0 0.0
        %5307 = vmatpush2.msra.mxu0 0.0
        %5308 = vmatprep.subr.mxu0 0.0
        %5309 = vmatpush2.msra.mxu0 0.0
        %5310 = vmatprep.subr.mxu0 0.0
        %5311 = vmatpush2.msra.mxu0 0.0
        %5312 = vmatprep.subr.mxu0 0.0
        %5313 = vmatpush2.msra.mxu0 0.0
        %5314 = vmatprep.subr.mxu0 0.0
        %5315 = vmatpush2.msra.mxu0 0.0
        %5316 = vmatprep.subr.mxu0 0.0
        %5317 = vmatpush2.msra.mxu0 0.0
        %5318 = vmatprep.subr.mxu0 0.0
        %5319 = vmatpush2.msra.mxu0 0.0
        %5320 = vmatprep.subr.mxu0 0.0
        %5321 = vmatpush2.msra.mxu0 0.0
        %5322 = vmatprep.subr.mxu0 0.0
        %5323 = vmatpush2.msra.mxu0 0.0
        %5324 = vmatprep.subr.mxu0 0.0
        %5325 = vmatpush2.msra.mxu0 0.0
        %5326 = vmatprep.subr.mxu0 0.0
        %5327 = vmatpush2.msra.mxu0 0.0
        %5328 = vmatprep.subr.mxu0 0.0
        %5329 = vmatpush2.msra.mxu0 0.0
        %5330 = vmatprep.subr.mxu0 0.0
        %5331 = vmatpush2.msra.mxu0 0.0
        %5332 = vmatprep.mubr.f32.mxu0 0.0
        %v5333 = vand.u32 %v5262, 4294901760
        %v5334 = vsub.f32 %v5262, %v5333
        %v5335 = vand.u32 %v5334, 4294901760
        %v5336 = vsub.f32 %v5334, %v5335
        %v5337 = vand.u32 %v5336, 4294901760
        %5338 = vmatmul.mubr.f32.gmra.mxu0 %v5337
        %v5339 = vpop.f32.mrf.mxu0
        %v5340 = vadd.f32 0.0, %v5339
        %v5341 = vpop.f32.mrf.mxu0
        %5342 = vdwg.mxu0
        %5343 = vmatprep.subr.mxu0 0.0
        %5344 = vmatpush1.msra.mxu0 0.0
        %5345 = vmatprep.subr.mxu0 0.0
        %5346 = vmatpush1.msra.mxu0 0.0
        %5347 = vmatprep.subr.mxu0 0.0
        %5348 = vmatpush1.msra.mxu0 0.0
        %5349 = vmatprep.subr.mxu0 0.0
        %5350 = vmatpush1.msra.mxu0 0.0
        %5351 = vmatprep.subr.mxu0 0.0
        %5352 = vmatpush1.msra.mxu0 0.0
        %5353 = vmatprep.subr.mxu0 0.0
        %5354 = vmatpush1.msra.mxu0 0.0
        %5355 = vmatprep.subr.mxu0 0.0
        %5356 = vmatpush1.msra.mxu0 0.0
        %5357 = vmatprep.subr.mxu0 0.0
        %5358 = vmatpush1.msra.mxu0 0.0
        %5359 = vmatprep.subr.mxu0 0.0
        %5360 = vmatpush1.msra.mxu0 0.0
        %5361 = vmatprep.subr.mxu0 0.0
        %5362 = vmatpush1.msra.mxu0 0.0
        %5363 = vmatprep.subr.mxu0 0.0
        %5364 = vmatpush1.msra.mxu0 0.0
        %5365 = vmatprep.subr.mxu0 0.0
        %5366 = vmatpush1.msra.mxu0 0.0
        %5367 = vmatprep.subr.mxu0 0.0
        %v5368 = vand.u32 %v5261, 4294901760
        %v5369 = vsub.f32 %v5261, %v5368
        %v5370 = vand.u32 %v5369, 4294901760
        %v5371 = vsub.f32 %v5369, %v5370
        %v5372 = vand.u32 %v5371, 4294901760
        %5373 = vmatpush1.msra.mxu0 %v5372
        %5374 = vmatprep.subr.mxu0 0.0
        %v5375 = vand.u32 %v5260, 4294901760
        %v5376 = vsub.f32 %v5260, %v5375
        %v5377 = vand.u32 %v5376, 4294901760
        %v5378 = vsub.f32 %v5376, %v5377
        %v5379 = vand.u32 %v5378, 4294901760
        %5380 = vmatpush1.msra.mxu0 %v5379
        %5381 = vmatprep.subr.mxu0 0.0
        %v5382 = vand.u32 %v5259, 4294901760
        %v5383 = vsub.f32 %v5259, %v5382
        %v5384 = vand.u32 %v5383, 4294901760
        %v5385 = vsub.f32 %v5383, %v5384
        %v5386 = vand.u32 %v5385, 4294901760
        %5387 = vmatpush1.msra.mxu0 %v5386
        %5388 = vmatprep.subr.mxu0 0.0
        %v5389 = vand.u32 %v5258, 4294901760
        %v5390 = vsub.f32 %v5258, %v5389
        %v5391 = vand.u32 %v5390, 4294901760
        %v5392 = vsub.f32 %v5390, %v5391
        %v5393 = vand.u32 %v5392, 4294901760
        %5394 = vmatpush1.msra.mxu0 %v5393
        %5395 = vmatprep.subr.mxu0 0.0
        %5396 = vmatpush2.msra.mxu0 0.0
        %5397 = vmatprep.subr.mxu0 0.0
        %5398 = vmatpush2.msra.mxu0 0.0
        %5399 = vmatprep.subr.mxu0 0.0
        %5400 = vmatpush2.msra.mxu0 0.0
        %5401 = vmatprep.subr.mxu0 0.0
        %5402 = vmatpush2.msra.mxu0 0.0
        %5403 = vmatprep.subr.mxu0 0.0
        %5404 = vmatpush2.msra.mxu0 0.0
        %5405 = vmatprep.subr.mxu0 0.0
        %5406 = vmatpush2.msra.mxu0 0.0
        %5407 = vmatprep.subr.mxu0 0.0
        %5408 = vmatpush2.msra.mxu0 0.0
        %5409 = vmatprep.subr.mxu0 0.0
        %5410 = vmatpush2.msra.mxu0 0.0
        %5411 = vmatprep.subr.mxu0 0.0
        %5412 = vmatpush2.msra.mxu0 0.0
        %5413 = vmatprep.subr.mxu0 0.0
        %5414 = vmatpush2.msra.mxu0 0.0
        %5415 = vmatprep.subr.mxu0 0.0
        %5416 = vmatpush2.msra.mxu0 0.0
        %5417 = vmatprep.subr.mxu0 0.0
        %5418 = vmatpush2.msra.mxu0 0.0
        %5419 = vmatprep.subr.mxu0 0.0
        %5420 = vmatpush2.msra.mxu0 0.0
        %5421 = vmatprep.subr.mxu0 0.0
        %5422 = vmatpush2.msra.mxu0 0.0
        %5423 = vmatprep.subr.mxu0 0.0
        %5424 = vmatpush2.msra.mxu0 0.0
        %5425 = vmatprep.subr.mxu0 0.0
        %5426 = vmatpush2.msra.mxu0 0.0
        %5427 = vmatprep.mubr.f32.mxu0 0.0
        %v5428 = vand.u32 %v5262, 4294901760
        %5429 = vmatmul.mubr.f32.gmra.mxu0 %v5428
        %v5430 = vpop.f32.mrf.mxu0
        %v5431 = vadd.f32 %v5340, %v5430
        %v5432 = vpop.f32.mrf.mxu0
        %5433 = vdwg.mxu0
        %5434 = vmatprep.subr.mxu0 0.0
        %5435 = vmatpush1.msra.mxu0 0.0
        %5436 = vmatprep.subr.mxu0 0.0
        %5437 = vmatpush1.msra.mxu0 0.0
        %5438 = vmatprep.subr.mxu0 0.0
        %5439 = vmatpush1.msra.mxu0 0.0
        %5440 = vmatprep.subr.mxu0 0.0
        %5441 = vmatpush1.msra.mxu0 0.0
        %5442 = vmatprep.subr.mxu0 0.0
        %5443 = vmatpush1.msra.mxu0 0.0
        %5444 = vmatprep.subr.mxu0 0.0
        %5445 = vmatpush1.msra.mxu0 0.0
        %5446 = vmatprep.subr.mxu0 0.0
        %5447 = vmatpush1.msra.mxu0 0.0
        %5448 = vmatprep.subr.mxu0 0.0
        %5449 = vmatpush1.msra.mxu0 0.0
        %5450 = vmatprep.subr.mxu0 0.0
        %5451 = vmatpush1.msra.mxu0 0.0
        %5452 = vmatprep.subr.mxu0 0.0
        %5453 = vmatpush1.msra.mxu0 0.0
        %5454 = vmatprep.subr.mxu0 0.0
        %5455 = vmatpush1.msra.mxu0 0.0
        %5456 = vmatprep.subr.mxu0 0.0
        %5457 = vmatpush1.msra.mxu0 0.0
        %5458 = vmatprep.subr.mxu0 0.0
        %v5459 = vand.u32 %v5261, 4294901760
        %v5460 = vsub.f32 %v5261, %v5459
        %5461 = vmatpush1.msra.mxu0 %v5460
        %5462 = vmatprep.subr.mxu0 0.0
        %v5463 = vand.u32 %v5260, 4294901760
        %v5464 = vsub.f32 %v5260, %v5463
        %5465 = vmatpush1.msra.mxu0 %v5464
        %5466 = vmatprep.subr.mxu0 0.0
        %v5467 = vand.u32 %v5259, 4294901760
        %v5468 = vsub.f32 %v5259, %v5467
        %5469 = vmatpush1.msra.mxu0 %v5468
        %5470 = vmatprep.subr.mxu0 0.0
        %v5471 = vand.u32 %v5258, 4294901760
        %v5472 = vsub.f32 %v5258, %v5471
        %5473 = vmatpush1.msra.mxu0 %v5472
        %5474 = vmatprep.subr.mxu0 0.0
        %5475 = vmatpush2.msra.mxu0 0.0
        %5476 = vmatprep.subr.mxu0 0.0
        %5477 = vmatpush2.msra.mxu0 0.0
        %5478 = vmatprep.subr.mxu0 0.0
        %5479 = vmatpush2.msra.mxu0 0.0
        %5480 = vmatprep.subr.mxu0 0.0
        %5481 = vmatpush2.msra.mxu0 0.0
        %5482 = vmatprep.subr.mxu0 0.0
        %5483 = vmatpush2.msra.mxu0 0.0
        %5484 = vmatprep.subr.mxu0 0.0
        %5485 = vmatpush2.msra.mxu0 0.0
        %5486 = vmatprep.subr.mxu0 0.0
        %5487 = vmatpush2.msra.mxu0 0.0
        %5488 = vmatprep.subr.mxu0 0.0
        %5489 = vmatpush2.msra.mxu0 0.0
        %5490 = vmatprep.subr.mxu0 0.0
        %5491 = vmatpush2.msra.mxu0 0.0
        %5492 = vmatprep.subr.mxu0 0.0
        %5493 = vmatpush2.msra.mxu0 0.0
        %5494 = vmatprep.subr.mxu0 0.0
        %5495 = vmatpush2.msra.mxu0 0.0
        %5496 = vmatprep.subr.mxu0 0.0
        %5497 = vmatpush2.msra.mxu0 0.0
        %5498 = vmatprep.subr.mxu0 0.0
        %5499 = vmatpush2.msra.mxu0 0.0
        %5500 = vmatprep.subr.mxu0 0.0
        %5501 = vmatpush2.msra.mxu0 0.0
        %5502 = vmatprep.subr.mxu0 0.0
        %5503 = vmatpush2.msra.mxu0 0.0
        %5504 = vmatprep.subr.mxu0 0.0
        %5505 = vmatpush2.msra.mxu0 0.0
        %5506 = vmatprep.mubr.f32.mxu0 0.0
        %v5507 = vand.u32 %v5262, 4294901760
        %v5508 = vsub.f32 %v5262, %v5507
        %5509 = vmatmul.mubr.f32.gmra.mxu0 %v5508
        %v5510 = vpop.f32.mrf.mxu0
        %v5511 = vadd.f32 %v5431, %v5510
        %v5512 = vpop.f32.mrf.mxu0
        %5513 = vdwg.mxu0
        %5514 = vmatprep.subr.mxu0 0.0
        %5515 = vmatpush1.msra.mxu0 0.0
        %5516 = vmatprep.subr.mxu0 0.0
        %5517 = vmatpush1.msra.mxu0 0.0
        %5518 = vmatprep.subr.mxu0 0.0
        %5519 = vmatpush1.msra.mxu0 0.0
        %5520 = vmatprep.subr.mxu0 0.0
        %5521 = vmatpush1.msra.mxu0 0.0
        %5522 = vmatprep.subr.mxu0 0.0
        %5523 = vmatpush1.msra.mxu0 0.0
        %5524 = vmatprep.subr.mxu0 0.0
        %5525 = vmatpush1.msra.mxu0 0.0
        %5526 = vmatprep.subr.mxu0 0.0
        %5527 = vmatpush1.msra.mxu0 0.0
        %5528 = vmatprep.subr.mxu0 0.0
        %5529 = vmatpush1.msra.mxu0 0.0
        %5530 = vmatprep.subr.mxu0 0.0
        %5531 = vmatpush1.msra.mxu0 0.0
        %5532 = vmatprep.subr.mxu0 0.0
        %5533 = vmatpush1.msra.mxu0 0.0
        %5534 = vmatprep.subr.mxu0 0.0
        %5535 = vmatpush1.msra.mxu0 0.0
        %5536 = vmatprep.subr.mxu0 0.0
        %5537 = vmatpush1.msra.mxu0 0.0
        %5538 = vmatprep.subr.mxu0 0.0
        %v5539 = vand.u32 %v5261, 4294901760
        %5540 = vmatpush1.msra.mxu0 %v5539
        %5541 = vmatprep.subr.mxu0 0.0
        %v5542 = vand.u32 %v5260, 4294901760
        %5543 = vmatpush1.msra.mxu0 %v5542
        %5544 = vmatprep.subr.mxu0 0.0
        %v5545 = vand.u32 %v5259, 4294901760
        %5546 = vmatpush1.msra.mxu0 %v5545
        %5547 = vmatprep.subr.mxu0 0.0
        %v5548 = vand.u32 %v5258, 4294901760
        %5549 = vmatpush1.msra.mxu0 %v5548
        %5550 = vmatprep.subr.mxu0 0.0
        %5551 = vmatpush2.msra.mxu0 0.0
        %5552 = vmatprep.subr.mxu0 0.0
        %5553 = vmatpush2.msra.mxu0 0.0
        %5554 = vmatprep.subr.mxu0 0.0
        %5555 = vmatpush2.msra.mxu0 0.0
        %5556 = vmatprep.subr.mxu0 0.0
        %5557 = vmatpush2.msra.mxu0 0.0
        %5558 = vmatprep.subr.mxu0 0.0
        %5559 = vmatpush2.msra.mxu0 0.0
        %5560 = vmatprep.subr.mxu0 0.0
        %5561 = vmatpush2.msra.mxu0 0.0
        %5562 = vmatprep.subr.mxu0 0.0
        %5563 = vmatpush2.msra.mxu0 0.0
        %5564 = vmatprep.subr.mxu0 0.0
        %5565 = vmatpush2.msra.mxu0 0.0
        %5566 = vmatprep.subr.mxu0 0.0
        %5567 = vmatpush2.msra.mxu0 0.0
        %5568 = vmatprep.subr.mxu0 0.0
        %5569 = vmatpush2.msra.mxu0 0.0
        %5570 = vmatprep.subr.mxu0 0.0
        %5571 = vmatpush2.msra.mxu0 0.0
        %5572 = vmatprep.subr.mxu0 0.0
        %5573 = vmatpush2.msra.mxu0 0.0
        %5574 = vmatprep.subr.mxu0 0.0
        %5575 = vmatpush2.msra.mxu0 0.0
        %5576 = vmatprep.subr.mxu0 0.0
        %5577 = vmatpush2.msra.mxu0 0.0
        %5578 = vmatprep.subr.mxu0 0.0
        %5579 = vmatpush2.msra.mxu0 0.0
        %5580 = vmatprep.subr.mxu0 0.0
        %5581 = vmatpush2.msra.mxu0 0.0
        %5582 = vmatprep.mubr.f32.mxu0 0.0
        %v5583 = vand.u32 %v5262, 4294901760
        %v5584 = vsub.f32 %v5262, %v5583
        %v5585 = vand.u32 %v5584, 4294901760
        %5586 = vmatmul.mubr.f32.gmra.mxu0 %v5585
        %v5587 = vpop.f32.mrf.mxu0
        %v5588 = vadd.f32 %v5511, %v5587
        %v5589 = vpop.f32.mrf.mxu0
        %5590 = vdwg.mxu0
        %5591 = vmatprep.subr.mxu0 0.0
        %5592 = vmatpush1.msra.mxu0 0.0
        %5593 = vmatprep.subr.mxu0 0.0
        %5594 = vmatpush1.msra.mxu0 0.0
        %5595 = vmatprep.subr.mxu0 0.0
        %5596 = vmatpush1.msra.mxu0 0.0
        %5597 = vmatprep.subr.mxu0 0.0
        %5598 = vmatpush1.msra.mxu0 0.0
        %5599 = vmatprep.subr.mxu0 0.0
        %5600 = vmatpush1.msra.mxu0 0.0
        %5601 = vmatprep.subr.mxu0 0.0
        %5602 = vmatpush1.msra.mxu0 0.0
        %5603 = vmatprep.subr.mxu0 0.0
        %5604 = vmatpush1.msra.mxu0 0.0
        %5605 = vmatprep.subr.mxu0 0.0
        %5606 = vmatpush1.msra.mxu0 0.0
        %5607 = vmatprep.subr.mxu0 0.0
        %5608 = vmatpush1.msra.mxu0 0.0
        %5609 = vmatprep.subr.mxu0 0.0
        %5610 = vmatpush1.msra.mxu0 0.0
        %5611 = vmatprep.subr.mxu0 0.0
        %5612 = vmatpush1.msra.mxu0 0.0
        %5613 = vmatprep.subr.mxu0 0.0
        %5614 = vmatpush1.msra.mxu0 0.0
        %5615 = vmatprep.subr.mxu0 0.0
        %v5616 = vand.u32 %v5261, 4294901760
        %v5617 = vsub.f32 %v5261, %v5616
        %v5618 = vand.u32 %v5617, 4294901760
        %5619 = vmatpush1.msra.mxu0 %v5618
        %5620 = vmatprep.subr.mxu0 0.0
        %v5621 = vand.u32 %v5260, 4294901760
        %v5622 = vsub.f32 %v5260, %v5621
        %v5623 = vand.u32 %v5622, 4294901760
        %5624 = vmatpush1.msra.mxu0 %v5623
        %5625 = vmatprep.subr.mxu0 0.0
        %v5626 = vand.u32 %v5259, 4294901760
        %v5627 = vsub.f32 %v5259, %v5626
        %v5628 = vand.u32 %v5627, 4294901760
        %5629 = vmatpush1.msra.mxu0 %v5628
        %5630 = vmatprep.subr.mxu0 0.0
        %v5631 = vand.u32 %v5258, 4294901760
        %v5632 = vsub.f32 %v5258, %v5631
        %v5633 = vand.u32 %v5632, 4294901760
        %5634 = vmatpush1.msra.mxu0 %v5633
        %5635 = vmatprep.subr.mxu0 0.0
        %5636 = vmatpush2.msra.mxu0 0.0
        %5637 = vmatprep.subr.mxu0 0.0
        %5638 = vmatpush2.msra.mxu0 0.0
        %5639 = vmatprep.subr.mxu0 0.0
        %5640 = vmatpush2.msra.mxu0 0.0
        %5641 = vmatprep.subr.mxu0 0.0
        %5642 = vmatpush2.msra.mxu0 0.0
        %5643 = vmatprep.subr.mxu0 0.0
        %5644 = vmatpush2.msra.mxu0 0.0
        %5645 = vmatprep.subr.mxu0 0.0
        %5646 = vmatpush2.msra.mxu0 0.0
        %5647 = vmatprep.subr.mxu0 0.0
        %5648 = vmatpush2.msra.mxu0 0.0
        %5649 = vmatprep.subr.mxu0 0.0
        %5650 = vmatpush2.msra.mxu0 0.0
        %5651 = vmatprep.subr.mxu0 0.0
        %5652 = vmatpush2.msra.mxu0 0.0
        %5653 = vmatprep.subr.mxu0 0.0
        %5654 = vmatpush2.msra.mxu0 0.0
        %5655 = vmatprep.subr.mxu0 0.0
        %5656 = vmatpush2.msra.mxu0 0.0
        %5657 = vmatprep.subr.mxu0 0.0
        %5658 = vmatpush2.msra.mxu0 0.0
        %5659 = vmatprep.subr.mxu0 0.0
        %5660 = vmatpush2.msra.mxu0 0.0
        %5661 = vmatprep.subr.mxu0 0.0
        %5662 = vmatpush2.msra.mxu0 0.0
        %5663 = vmatprep.subr.mxu0 0.0
        %5664 = vmatpush2.msra.mxu0 0.0
        %5665 = vmatprep.subr.mxu0 0.0
        %5666 = vmatpush2.msra.mxu0 0.0
        %5667 = vmatprep.mubr.f32.mxu0 0.0
        %v5668 = vand.u32 %v5262, 4294901760
        %5669 = vmatmul.mubr.f32.gmra.mxu0 %v5668
        %v5670 = vpop.f32.mrf.mxu0
        %v5671 = vadd.f32 %v5588, %v5670
        %v5672 = vpop.f32.mrf.mxu0
        %5673 = vdwg.mxu0
        %5674 = vmatprep.subr.mxu0 0.0
        %5675 = vmatpush1.msra.mxu0 0.0
        %5676 = vmatprep.subr.mxu0 0.0
        %5677 = vmatpush1.msra.mxu0 0.0
        %5678 = vmatprep.subr.mxu0 0.0
        %5679 = vmatpush1.msra.mxu0 0.0
        %5680 = vmatprep.subr.mxu0 0.0
        %5681 = vmatpush1.msra.mxu0 0.0
        %5682 = vmatprep.subr.mxu0 0.0
        %5683 = vmatpush1.msra.mxu0 0.0
        %5684 = vmatprep.subr.mxu0 0.0
        %5685 = vmatpush1.msra.mxu0 0.0
        %5686 = vmatprep.subr.mxu0 0.0
        %5687 = vmatpush1.msra.mxu0 0.0
        %5688 = vmatprep.subr.mxu0 0.0
        %5689 = vmatpush1.msra.mxu0 0.0
        %5690 = vmatprep.subr.mxu0 0.0
        %5691 = vmatpush1.msra.mxu0 0.0
        %5692 = vmatprep.subr.mxu0 0.0
        %5693 = vmatpush1.msra.mxu0 0.0
        %5694 = vmatprep.subr.mxu0 0.0
        %5695 = vmatpush1.msra.mxu0 0.0
        %5696 = vmatprep.subr.mxu0 0.0
        %5697 = vmatpush1.msra.mxu0 0.0
        %5698 = vmatprep.subr.mxu0 0.0
        %v5699 = vand.u32 %v5261, 4294901760
        %5700 = vmatpush1.msra.mxu0 %v5699
        %5701 = vmatprep.subr.mxu0 0.0
        %v5702 = vand.u32 %v5260, 4294901760
        %5703 = vmatpush1.msra.mxu0 %v5702
        %5704 = vmatprep.subr.mxu0 0.0
        %v5705 = vand.u32 %v5259, 4294901760
        %5706 = vmatpush1.msra.mxu0 %v5705
        %5707 = vmatprep.subr.mxu0 0.0
        %v5708 = vand.u32 %v5258, 4294901760
        %5709 = vmatpush1.msra.mxu0 %v5708
        %5710 = vmatprep.subr.mxu0 0.0
        %5711 = vmatpush2.msra.mxu0 0.0
        %5712 = vmatprep.subr.mxu0 0.0
        %5713 = vmatpush2.msra.mxu0 0.0
        %5714 = vmatprep.subr.mxu0 0.0
        %5715 = vmatpush2.msra.mxu0 0.0
        %5716 = vmatprep.subr.mxu0 0.0
        %5717 = vmatpush2.msra.mxu0 0.0
        %5718 = vmatprep.subr.mxu0 0.0
        %5719 = vmatpush2.msra.mxu0 0.0
        %5720 = vmatprep.subr.mxu0 0.0
        %5721 = vmatpush2.msra.mxu0 0.0
        %5722 = vmatprep.subr.mxu0 0.0
        %5723 = vmatpush2.msra.mxu0 0.0
        %5724 = vmatprep.subr.mxu0 0.0
        %5725 = vmatpush2.msra.mxu0 0.0
        %5726 = vmatprep.subr.mxu0 0.0
        %5727 = vmatpush2.msra.mxu0 0.0
        %5728 = vmatprep.subr.mxu0 0.0
        %5729 = vmatpush2.msra.mxu0 0.0
        %5730 = vmatprep.subr.mxu0 0.0
        %5731 = vmatpush2.msra.mxu0 0.0
        %5732 = vmatprep.subr.mxu0 0.0
        %5733 = vmatpush2.msra.mxu0 0.0
        %5734 = vmatprep.subr.mxu0 0.0
        %5735 = vmatpush2.msra.mxu0 0.0
        %5736 = vmatprep.subr.mxu0 0.0
        %5737 = vmatpush2.msra.mxu0 0.0
        %5738 = vmatprep.subr.mxu0 0.0
        %5739 = vmatpush2.msra.mxu0 0.0
        %5740 = vmatprep.subr.mxu0 0.0
        %5741 = vmatpush2.msra.mxu0 0.0
        %5742 = vmatprep.mubr.f32.mxu0 0.0
        %v5743 = vand.u32 %v5262, 4294901760
        %5744 = vmatmul.mubr.f32.gmra.mxu0 %v5743
        %v5745 = vpop.f32.mrf.mxu0
        %v5746 = vadd.f32 %v5671, %v5745
        %v5747 = vpop.f32.mrf.mxu0
        %5748 = vdwg.mxu0
        %v5749 = vsel %vm1793, %v5243, 0
        %5751 = vmatprep.subr.mxu0 0.0
        %5752 = vmatpush1.msra.mxu0 0.0
        %5753 = vmatprep.subr.mxu0 0.0
        %5754 = vmatpush1.msra.mxu0 0.0
        %5755 = vmatprep.subr.mxu0 0.0
        %5756 = vmatpush1.msra.mxu0 0.0
        %5757 = vmatprep.subr.mxu0 0.0
        %5758 = vmatpush1.msra.mxu0 0.0
        %5759 = vmatprep.subr.mxu0 0.0
        %5760 = vmatpush1.msra.mxu0 0.0
        %5761 = vmatprep.subr.mxu0 0.0
        %5762 = vmatpush1.msra.mxu0 0.0
        %5763 = vmatprep.subr.mxu0 0.0
        %5764 = vmatpush1.msra.mxu0 0.0
        %5765 = vmatprep.subr.mxu0 0.0
        %5766 = vmatpush1.msra.mxu0 0.0
        %5767 = vmatprep.subr.mxu0 0.0
        %5768 = vmatpush1.msra.mxu0 0.0
        %5769 = vmatprep.subr.mxu0 0.0
        %5770 = vmatpush1.msra.mxu0 0.0
        %5771 = vmatprep.subr.mxu0 0.0
        %5772 = vmatpush1.msra.mxu0 0.0
        %5773 = vmatprep.subr.mxu0 0.0
        %5774 = vmatpush1.msra.mxu0 0.0
        %5775 = vmatprep.subr.mxu0 0.0
        %v5776 = vand.u32 %v5256, 4294901760
        %5777 = vmatpush1.msra.mxu0 %v5776
        %5778 = vmatprep.subr.mxu0 0.0
        %v5779 = vand.u32 %v5255, 4294901760
        %5780 = vmatpush1.msra.mxu0 %v5779
        %5781 = vmatprep.subr.mxu0 0.0
        %v5782 = vand.u32 %v5254, 4294901760
        %5783 = vmatpush1.msra.mxu0 %v5782
        %5784 = vmatprep.subr.mxu0 0.0
        %v5785 = vand.u32 %v5253, 4294901760
        %5786 = vmatpush1.msra.mxu0 %v5785
        %5787 = vmatprep.subr.mxu0 0.0
        %5788 = vmatpush2.msra.mxu0 0.0
        %5789 = vmatprep.subr.mxu0 0.0
        %5790 = vmatpush2.msra.mxu0 0.0
        %5791 = vmatprep.subr.mxu0 0.0
        %5792 = vmatpush2.msra.mxu0 0.0
        %5793 = vmatprep.subr.mxu0 0.0
        %5794 = vmatpush2.msra.mxu0 0.0
        %5795 = vmatprep.subr.mxu0 0.0
        %5796 = vmatpush2.msra.mxu0 0.0
        %5797 = vmatprep.subr.mxu0 0.0
        %5798 = vmatpush2.msra.mxu0 0.0
        %5799 = vmatprep.subr.mxu0 0.0
        %5800 = vmatpush2.msra.mxu0 0.0
        %5801 = vmatprep.subr.mxu0 0.0
        %5802 = vmatpush2.msra.mxu0 0.0
        %5803 = vmatprep.subr.mxu0 0.0
        %5804 = vmatpush2.msra.mxu0 0.0
        %5805 = vmatprep.subr.mxu0 0.0
        %5806 = vmatpush2.msra.mxu0 0.0
        %5807 = vmatprep.subr.mxu0 0.0
        %5808 = vmatpush2.msra.mxu0 0.0
        %5809 = vmatprep.subr.mxu0 0.0
        %5810 = vmatpush2.msra.mxu0 0.0
        %5811 = vmatprep.subr.mxu0 0.0
        %5812 = vmatpush2.msra.mxu0 0.0
        %5813 = vmatprep.subr.mxu0 0.0
        %5814 = vmatpush2.msra.mxu0 0.0
        %5815 = vmatprep.subr.mxu0 0.0
        %5816 = vmatpush2.msra.mxu0 0.0
        %5817 = vmatprep.subr.mxu0 0.0
        %5818 = vmatpush2.msra.mxu0 0.0
        %5819 = vmatprep.mubr.f32.mxu0 0.0
        %v5820 = vand.u32 %v5749, 4294901760
        %v5821 = vsub.f32 %v5749, %v5820
        %v5822 = vand.u32 %v5821, 4294901760
        %v5823 = vsub.f32 %v5821, %v5822
        %v5824 = vand.u32 %v5823, 4294901760
        %5825 = vmatmul.mubr.f32.gmra.mxu0 %v5824
        %v5826 = vpop.f32.mrf.mxu0
        %v5827 = vadd.f32 %v5746, %v5826
        %v5828 = vpop.f32.mrf.mxu0
        %5829 = vdwg.mxu0
        %5830 = vmatprep.subr.mxu0 0.0
        %5831 = vmatpush1.msra.mxu0 0.0
        %5832 = vmatprep.subr.mxu0 0.0
        %5833 = vmatpush1.msra.mxu0 0.0
        %5834 = vmatprep.subr.mxu0 0.0
        %5835 = vmatpush1.msra.mxu0 0.0
        %5836 = vmatprep.subr.mxu0 0.0
        %5837 = vmatpush1.msra.mxu0 0.0
        %5838 = vmatprep.subr.mxu0 0.0
        %5839 = vmatpush1.msra.mxu0 0.0
        %5840 = vmatprep.subr.mxu0 0.0
        %5841 = vmatpush1.msra.mxu0 0.0
        %5842 = vmatprep.subr.mxu0 0.0
        %5843 = vmatpush1.msra.mxu0 0.0
        %5844 = vmatprep.subr.mxu0 0.0
        %5845 = vmatpush1.msra.mxu0 0.0
        %5846 = vmatprep.subr.mxu0 0.0
        %5847 = vmatpush1.msra.mxu0 0.0
        %5848 = vmatprep.subr.mxu0 0.0
        %5849 = vmatpush1.msra.mxu0 0.0
        %5850 = vmatprep.subr.mxu0 0.0
        %5851 = vmatpush1.msra.mxu0 0.0
        %5852 = vmatprep.subr.mxu0 0.0
        %5853 = vmatpush1.msra.mxu0 0.0
        %5854 = vmatprep.subr.mxu0 0.0
        %v5855 = vand.u32 %v5256, 4294901760
        %v5856 = vsub.f32 %v5256, %v5855
        %v5857 = vand.u32 %v5856, 4294901760
        %v5858 = vsub.f32 %v5856, %v5857
        %v5859 = vand.u32 %v5858, 4294901760
        %5860 = vmatpush1.msra.mxu0 %v5859
        %5861 = vmatprep.subr.mxu0 0.0
        %v5862 = vand.u32 %v5255, 4294901760
        %v5863 = vsub.f32 %v5255, %v5862
        %v5864 = vand.u32 %v5863, 4294901760
        %v5865 = vsub.f32 %v5863, %v5864
        %v5866 = vand.u32 %v5865, 4294901760
        %5867 = vmatpush1.msra.mxu0 %v5866
        %5868 = vmatprep.subr.mxu0 0.0
        %v5869 = vand.u32 %v5254, 4294901760
        %v5870 = vsub.f32 %v5254, %v5869
        %v5871 = vand.u32 %v5870, 4294901760
        %v5872 = vsub.f32 %v5870, %v5871
        %v5873 = vand.u32 %v5872, 4294901760
        %5874 = vmatpush1.msra.mxu0 %v5873
        %5875 = vmatprep.subr.mxu0 0.0
        %v5876 = vand.u32 %v5253, 4294901760
        %v5877 = vsub.f32 %v5253, %v5876
        %v5878 = vand.u32 %v5877, 4294901760
        %v5879 = vsub.f32 %v5877, %v5878
        %v5880 = vand.u32 %v5879, 4294901760
        %5881 = vmatpush1.msra.mxu0 %v5880
        %5882 = vmatprep.subr.mxu0 0.0
        %5883 = vmatpush2.msra.mxu0 0.0
        %5884 = vmatprep.subr.mxu0 0.0
        %5885 = vmatpush2.msra.mxu0 0.0
        %5886 = vmatprep.subr.mxu0 0.0
        %5887 = vmatpush2.msra.mxu0 0.0
        %5888 = vmatprep.subr.mxu0 0.0
        %5889 = vmatpush2.msra.mxu0 0.0
        %5890 = vmatprep.subr.mxu0 0.0
        %5891 = vmatpush2.msra.mxu0 0.0
        %5892 = vmatprep.subr.mxu0 0.0
        %5893 = vmatpush2.msra.mxu0 0.0
        %5894 = vmatprep.subr.mxu0 0.0
        %5895 = vmatpush2.msra.mxu0 0.0
        %5896 = vmatprep.subr.mxu0 0.0
        %5897 = vmatpush2.msra.mxu0 0.0
        %5898 = vmatprep.subr.mxu0 0.0
        %5899 = vmatpush2.msra.mxu0 0.0
        %5900 = vmatprep.subr.mxu0 0.0
        %5901 = vmatpush2.msra.mxu0 0.0
        %5902 = vmatprep.subr.mxu0 0.0
        %5903 = vmatpush2.msra.mxu0 0.0
        %5904 = vmatprep.subr.mxu0 0.0
        %5905 = vmatpush2.msra.mxu0 0.0
        %5906 = vmatprep.subr.mxu0 0.0
        %5907 = vmatpush2.msra.mxu0 0.0
        %5908 = vmatprep.subr.mxu0 0.0
        %5909 = vmatpush2.msra.mxu0 0.0
        %5910 = vmatprep.subr.mxu0 0.0
        %5911 = vmatpush2.msra.mxu0 0.0
        %5912 = vmatprep.subr.mxu0 0.0
        %5913 = vmatpush2.msra.mxu0 0.0
        %5914 = vmatprep.mubr.f32.mxu0 0.0
        %v5915 = vand.u32 %v5749, 4294901760
        %5916 = vmatmul.mubr.f32.gmra.mxu0 %v5915
        %v5917 = vpop.f32.mrf.mxu0
        %v5918 = vadd.f32 %v5827, %v5917
        %v5919 = vpop.f32.mrf.mxu0
        %5920 = vdwg.mxu0
        %5921 = vmatprep.subr.mxu0 0.0
        %5922 = vmatpush1.msra.mxu0 0.0
        %5923 = vmatprep.subr.mxu0 0.0
        %5924 = vmatpush1.msra.mxu0 0.0
        %5925 = vmatprep.subr.mxu0 0.0
        %5926 = vmatpush1.msra.mxu0 0.0
        %5927 = vmatprep.subr.mxu0 0.0
        %5928 = vmatpush1.msra.mxu0 0.0
        %5929 = vmatprep.subr.mxu0 0.0
        %5930 = vmatpush1.msra.mxu0 0.0
        %5931 = vmatprep.subr.mxu0 0.0
        %5932 = vmatpush1.msra.mxu0 0.0
        %5933 = vmatprep.subr.mxu0 0.0
        %5934 = vmatpush1.msra.mxu0 0.0
        %5935 = vmatprep.subr.mxu0 0.0
        %5936 = vmatpush1.msra.mxu0 0.0
        %5937 = vmatprep.subr.mxu0 0.0
        %5938 = vmatpush1.msra.mxu0 0.0
        %5939 = vmatprep.subr.mxu0 0.0
        %5940 = vmatpush1.msra.mxu0 0.0
        %5941 = vmatprep.subr.mxu0 0.0
        %5942 = vmatpush1.msra.mxu0 0.0
        %5943 = vmatprep.subr.mxu0 0.0
        %5944 = vmatpush1.msra.mxu0 0.0
        %5945 = vmatprep.subr.mxu0 0.0
        %v5946 = vand.u32 %v5256, 4294901760
        %v5947 = vsub.f32 %v5256, %v5946
        %5948 = vmatpush1.msra.mxu0 %v5947
        %5949 = vmatprep.subr.mxu0 0.0
        %v5950 = vand.u32 %v5255, 4294901760
        %v5951 = vsub.f32 %v5255, %v5950
        %5952 = vmatpush1.msra.mxu0 %v5951
        %5953 = vmatprep.subr.mxu0 0.0
        %v5954 = vand.u32 %v5254, 4294901760
        %v5955 = vsub.f32 %v5254, %v5954
        %5956 = vmatpush1.msra.mxu0 %v5955
        %5957 = vmatprep.subr.mxu0 0.0
        %v5958 = vand.u32 %v5253, 4294901760
        %v5959 = vsub.f32 %v5253, %v5958
        %5960 = vmatpush1.msra.mxu0 %v5959
        %5961 = vmatprep.subr.mxu0 0.0
        %5962 = vmatpush2.msra.mxu0 0.0
        %5963 = vmatprep.subr.mxu0 0.0
        %5964 = vmatpush2.msra.mxu0 0.0
        %5965 = vmatprep.subr.mxu0 0.0
        %5966 = vmatpush2.msra.mxu0 0.0
        %5967 = vmatprep.subr.mxu0 0.0
        %5968 = vmatpush2.msra.mxu0 0.0
        %5969 = vmatprep.subr.mxu0 0.0
        %5970 = vmatpush2.msra.mxu0 0.0
        %5971 = vmatprep.subr.mxu0 0.0
        %5972 = vmatpush2.msra.mxu0 0.0
        %5973 = vmatprep.subr.mxu0 0.0
        %5974 = vmatpush2.msra.mxu0 0.0
        %5975 = vmatprep.subr.mxu0 0.0
        %5976 = vmatpush2.msra.mxu0 0.0
        %5977 = vmatprep.subr.mxu0 0.0
        %5978 = vmatpush2.msra.mxu0 0.0
        %5979 = vmatprep.subr.mxu0 0.0
        %5980 = vmatpush2.msra.mxu0 0.0
        %5981 = vmatprep.subr.mxu0 0.0
        %5982 = vmatpush2.msra.mxu0 0.0
        %5983 = vmatprep.subr.mxu0 0.0
        %5984 = vmatpush2.msra.mxu0 0.0
        %5985 = vmatprep.subr.mxu0 0.0
        %5986 = vmatpush2.msra.mxu0 0.0
        %5987 = vmatprep.subr.mxu0 0.0
        %5988 = vmatpush2.msra.mxu0 0.0
        %5989 = vmatprep.subr.mxu0 0.0
        %5990 = vmatpush2.msra.mxu0 0.0
        %5991 = vmatprep.subr.mxu0 0.0
        %5992 = vmatpush2.msra.mxu0 0.0
        %5993 = vmatprep.mubr.f32.mxu0 0.0
        %v5994 = vand.u32 %v5749, 4294901760
        %v5995 = vsub.f32 %v5749, %v5994
        %5996 = vmatmul.mubr.f32.gmra.mxu0 %v5995
        %v5997 = vpop.f32.mrf.mxu0
        %v5998 = vadd.f32 %v5918, %v5997
        %v5999 = vpop.f32.mrf.mxu0
        %6000 = vdwg.mxu0
        %6001 = vmatprep.subr.mxu0 0.0
        %6002 = vmatpush1.msra.mxu0 0.0
        %6003 = vmatprep.subr.mxu0 0.0
        %6004 = vmatpush1.msra.mxu0 0.0
        %6005 = vmatprep.subr.mxu0 0.0
        %6006 = vmatpush1.msra.mxu0 0.0
        %6007 = vmatprep.subr.mxu0 0.0
        %6008 = vmatpush1.msra.mxu0 0.0
        %6009 = vmatprep.subr.mxu0 0.0
        %6010 = vmatpush1.msra.mxu0 0.0
        %6011 = vmatprep.subr.mxu0 0.0
        %6012 = vmatpush1.msra.mxu0 0.0
        %6013 = vmatprep.subr.mxu0 0.0
        %6014 = vmatpush1.msra.mxu0 0.0
        %6015 = vmatprep.subr.mxu0 0.0
        %6016 = vmatpush1.msra.mxu0 0.0
        %6017 = vmatprep.subr.mxu0 0.0
        %6018 = vmatpush1.msra.mxu0 0.0
        %6019 = vmatprep.subr.mxu0 0.0
        %6020 = vmatpush1.msra.mxu0 0.0
        %6021 = vmatprep.subr.mxu0 0.0
        %6022 = vmatpush1.msra.mxu0 0.0
        %6023 = vmatprep.subr.mxu0 0.0
        %6024 = vmatpush1.msra.mxu0 0.0
        %6025 = vmatprep.subr.mxu0 0.0
        %v6026 = vand.u32 %v5256, 4294901760
        %6027 = vmatpush1.msra.mxu0 %v6026
        %6028 = vmatprep.subr.mxu0 0.0
        %v6029 = vand.u32 %v5255, 4294901760
        %6030 = vmatpush1.msra.mxu0 %v6029
        %6031 = vmatprep.subr.mxu0 0.0
        %v6032 = vand.u32 %v5254, 4294901760
        %6033 = vmatpush1.msra.mxu0 %v6032
        %6034 = vmatprep.subr.mxu0 0.0
        %v6035 = vand.u32 %v5253, 4294901760
        %6036 = vmatpush1.msra.mxu0 %v6035
        %6037 = vmatprep.subr.mxu0 0.0
        %6038 = vmatpush2.msra.mxu0 0.0
        %6039 = vmatprep.subr.mxu0 0.0
        %6040 = vmatpush2.msra.mxu0 0.0
        %6041 = vmatprep.subr.mxu0 0.0
        %6042 = vmatpush2.msra.mxu0 0.0
        %6043 = vmatprep.subr.mxu0 0.0
        %6044 = vmatpush2.msra.mxu0 0.0
        %6045 = vmatprep.subr.mxu0 0.0
        %6046 = vmatpush2.msra.mxu0 0.0
        %6047 = vmatprep.subr.mxu0 0.0
        %6048 = vmatpush2.msra.mxu0 0.0
        %6049 = vmatprep.subr.mxu0 0.0
        %6050 = vmatpush2.msra.mxu0 0.0
        %6051 = vmatprep.subr.mxu0 0.0
        %6052 = vmatpush2.msra.mxu0 0.0
        %6053 = vmatprep.subr.mxu0 0.0
        %6054 = vmatpush2.msra.mxu0 0.0
        %6055 = vmatprep.subr.mxu0 0.0
        %6056 = vmatpush2.msra.mxu0 0.0
        %6057 = vmatprep.subr.mxu0 0.0
        %6058 = vmatpush2.msra.mxu0 0.0
        %6059 = vmatprep.subr.mxu0 0.0
        %6060 = vmatpush2.msra.mxu0 0.0
        %6061 = vmatprep.subr.mxu0 0.0
        %6062 = vmatpush2.msra.mxu0 0.0
        %6063 = vmatprep.subr.mxu0 0.0
        %6064 = vmatpush2.msra.mxu0 0.0
        %6065 = vmatprep.subr.mxu0 0.0
        %6066 = vmatpush2.msra.mxu0 0.0
        %6067 = vmatprep.subr.mxu0 0.0
        %6068 = vmatpush2.msra.mxu0 0.0
        %6069 = vmatprep.mubr.f32.mxu0 0.0
        %v6070 = vand.u32 %v5749, 4294901760
        %v6071 = vsub.f32 %v5749, %v6070
        %v6072 = vand.u32 %v6071, 4294901760
        %6073 = vmatmul.mubr.f32.gmra.mxu0 %v6072
        %v6074 = vpop.f32.mrf.mxu0
        %v6075 = vadd.f32 %v5998, %v6074
        %v6076 = vpop.f32.mrf.mxu0
        %6077 = vdwg.mxu0
        %6078 = vmatprep.subr.mxu0 0.0
        %6079 = vmatpush1.msra.mxu0 0.0
        %6080 = vmatprep.subr.mxu0 0.0
        %6081 = vmatpush1.msra.mxu0 0.0
        %6082 = vmatprep.subr.mxu0 0.0
        %6083 = vmatpush1.msra.mxu0 0.0
        %6084 = vmatprep.subr.mxu0 0.0
        %6085 = vmatpush1.msra.mxu0 0.0
        %6086 = vmatprep.subr.mxu0 0.0
        %6087 = vmatpush1.msra.mxu0 0.0
        %6088 = vmatprep.subr.mxu0 0.0
        %6089 = vmatpush1.msra.mxu0 0.0
        %6090 = vmatprep.subr.mxu0 0.0
        %6091 = vmatpush1.msra.mxu0 0.0
        %6092 = vmatprep.subr.mxu0 0.0
        %6093 = vmatpush1.msra.mxu0 0.0
        %6094 = vmatprep.subr.mxu0 0.0
        %6095 = vmatpush1.msra.mxu0 0.0
        %6096 = vmatprep.subr.mxu0 0.0
        %6097 = vmatpush1.msra.mxu0 0.0
        %6098 = vmatprep.subr.mxu0 0.0
        %6099 = vmatpush1.msra.mxu0 0.0
        %6100 = vmatprep.subr.mxu0 0.0
        %6101 = vmatpush1.msra.mxu0 0.0
        %6102 = vmatprep.subr.mxu0 0.0
        %v6103 = vand.u32 %v5256, 4294901760
        %v6104 = vsub.f32 %v5256, %v6103
        %v6105 = vand.u32 %v6104, 4294901760
        %6106 = vmatpush1.msra.mxu0 %v6105
        %6107 = vmatprep.subr.mxu0 0.0
        %v6108 = vand.u32 %v5255, 4294901760
        %v6109 = vsub.f32 %v5255, %v6108
        %v6110 = vand.u32 %v6109, 4294901760
        %6111 = vmatpush1.msra.mxu0 %v6110
        %6112 = vmatprep.subr.mxu0 0.0
        %v6113 = vand.u32 %v5254, 4294901760
        %v6114 = vsub.f32 %v5254, %v6113
        %v6115 = vand.u32 %v6114, 4294901760
        %6116 = vmatpush1.msra.mxu0 %v6115
        %6117 = vmatprep.subr.mxu0 0.0
        %v6118 = vand.u32 %v5253, 4294901760
        %v6119 = vsub.f32 %v5253, %v6118
        %v6120 = vand.u32 %v6119, 4294901760
        %6121 = vmatpush1.msra.mxu0 %v6120
        %6122 = vmatprep.subr.mxu0 0.0
        %6123 = vmatpush2.msra.mxu0 0.0
        %6124 = vmatprep.subr.mxu0 0.0
        %6125 = vmatpush2.msra.mxu0 0.0
        %6126 = vmatprep.subr.mxu0 0.0
        %6127 = vmatpush2.msra.mxu0 0.0
        %6128 = vmatprep.subr.mxu0 0.0
        %6129 = vmatpush2.msra.mxu0 0.0
        %6130 = vmatprep.subr.mxu0 0.0
        %6131 = vmatpush2.msra.mxu0 0.0
        %6132 = vmatprep.subr.mxu0 0.0
        %6133 = vmatpush2.msra.mxu0 0.0
        %6134 = vmatprep.subr.mxu0 0.0
        %6135 = vmatpush2.msra.mxu0 0.0
        %6136 = vmatprep.subr.mxu0 0.0
        %6137 = vmatpush2.msra.mxu0 0.0
        %6138 = vmatprep.subr.mxu0 0.0
        %6139 = vmatpush2.msra.mxu0 0.0
        %6140 = vmatprep.subr.mxu0 0.0
        %6141 = vmatpush2.msra.mxu0 0.0
        %6142 = vmatprep.subr.mxu0 0.0
        %6143 = vmatpush2.msra.mxu0 0.0
        %6144 = vmatprep.subr.mxu0 0.0
        %6145 = vmatpush2.msra.mxu0 0.0
        %6146 = vmatprep.subr.mxu0 0.0
        %6147 = vmatpush2.msra.mxu0 0.0
        %6148 = vmatprep.subr.mxu0 0.0
        %6149 = vmatpush2.msra.mxu0 0.0
        %6150 = vmatprep.subr.mxu0 0.0
        %6151 = vmatpush2.msra.mxu0 0.0
        %6152 = vmatprep.subr.mxu0 0.0
        %6153 = vmatpush2.msra.mxu0 0.0
        %6154 = vmatprep.mubr.f32.mxu0 0.0
        %v6155 = vand.u32 %v5749, 4294901760
        %6156 = vmatmul.mubr.f32.gmra.mxu0 %v6155
        %v6157 = vpop.f32.mrf.mxu0
        %v6158 = vadd.f32 %v6075, %v6157
        %v6159 = vpop.f32.mrf.mxu0
        %6160 = vdwg.mxu0
        %6161 = vmatprep.subr.mxu0 0.0
        %6162 = vmatpush1.msra.mxu0 0.0
        %6163 = vmatprep.subr.mxu0 0.0
        %6164 = vmatpush1.msra.mxu0 0.0
        %6165 = vmatprep.subr.mxu0 0.0
        %6166 = vmatpush1.msra.mxu0 0.0
        %6167 = vmatprep.subr.mxu0 0.0
        %6168 = vmatpush1.msra.mxu0 0.0
        %6169 = vmatprep.subr.mxu0 0.0
        %6170 = vmatpush1.msra.mxu0 0.0
        %6171 = vmatprep.subr.mxu0 0.0
        %6172 = vmatpush1.msra.mxu0 0.0
        %6173 = vmatprep.subr.mxu0 0.0
        %6174 = vmatpush1.msra.mxu0 0.0
        %6175 = vmatprep.subr.mxu0 0.0
        %6176 = vmatpush1.msra.mxu0 0.0
        %6177 = vmatprep.subr.mxu0 0.0
        %6178 = vmatpush1.msra.mxu0 0.0
        %6179 = vmatprep.subr.mxu0 0.0
        %6180 = vmatpush1.msra.mxu0 0.0
        %6181 = vmatprep.subr.mxu0 0.0
        %6182 = vmatpush1.msra.mxu0 0.0
        %6183 = vmatprep.subr.mxu0 0.0
        %6184 = vmatpush1.msra.mxu0 0.0
        %6185 = vmatprep.subr.mxu0 0.0
        %v6186 = vand.u32 %v5256, 4294901760
        %6187 = vmatpush1.msra.mxu0 %v6186
        %6188 = vmatprep.subr.mxu0 0.0
        %v6189 = vand.u32 %v5255, 4294901760
        %6190 = vmatpush1.msra.mxu0 %v6189
        %6191 = vmatprep.subr.mxu0 0.0
        %v6192 = vand.u32 %v5254, 4294901760
        %6193 = vmatpush1.msra.mxu0 %v6192
        %6194 = vmatprep.subr.mxu0 0.0
        %v6195 = vand.u32 %v5253, 4294901760
        %6196 = vmatpush1.msra.mxu0 %v6195
        %6197 = vmatprep.subr.mxu0 0.0
        %6198 = vmatpush2.msra.mxu0 0.0
        %6199 = vmatprep.subr.mxu0 0.0
        %6200 = vmatpush2.msra.mxu0 0.0
        %6201 = vmatprep.subr.mxu0 0.0
        %6202 = vmatpush2.msra.mxu0 0.0
        %6203 = vmatprep.subr.mxu0 0.0
        %6204 = vmatpush2.msra.mxu0 0.0
        %6205 = vmatprep.subr.mxu0 0.0
        %6206 = vmatpush2.msra.mxu0 0.0
        %6207 = vmatprep.subr.mxu0 0.0
        %6208 = vmatpush2.msra.mxu0 0.0
        %6209 = vmatprep.subr.mxu0 0.0
        %6210 = vmatpush2.msra.mxu0 0.0
        %6211 = vmatprep.subr.mxu0 0.0
        %6212 = vmatpush2.msra.mxu0 0.0
        %6213 = vmatprep.subr.mxu0 0.0
        %6214 = vmatpush2.msra.mxu0 0.0
        %6215 = vmatprep.subr.mxu0 0.0
        %6216 = vmatpush2.msra.mxu0 0.0
        %6217 = vmatprep.subr.mxu0 0.0
        %6218 = vmatpush2.msra.mxu0 0.0
        %6219 = vmatprep.subr.mxu0 0.0
        %6220 = vmatpush2.msra.mxu0 0.0
        %6221 = vmatprep.subr.mxu0 0.0
        %6222 = vmatpush2.msra.mxu0 0.0
        %6223 = vmatprep.subr.mxu0 0.0
        %6224 = vmatpush2.msra.mxu0 0.0
        %6225 = vmatprep.subr.mxu0 0.0
        %6226 = vmatpush2.msra.mxu0 0.0
        %6227 = vmatprep.subr.mxu0 0.0
        %6228 = vmatpush2.msra.mxu0 0.0
        %6229 = vmatprep.mubr.f32.mxu0 0.0
        %v6230 = vand.u32 %v5749, 4294901760
        %6231 = vmatmul.mubr.f32.gmra.mxu0 %v6230
        %v6232 = vpop.f32.mrf.mxu0
        %v6233 = vadd.f32 %v6158, %v6232
        %v6234 = vpop.f32.mrf.mxu0
        %6235 = vdwg.mxu0
        %s6236 = scalar_lea.vmem [#allocation7], 64
        %v6237 = vld [vmem:[%s6236] sm:$0xff]
        %v6238 = vld [vmem:[%s6236 + $0x8] sm:$0xff]
        %v6239 = vld [vmem:[%s6236 + $0x10] sm:$0xff]
        %v6240 = vld [vmem:[%s6236 + $0x18] sm:$0xff]
        %v6241 = vsel %vm1793, %v5250, 0
        %6243 = vmatprep.subr.mxu0 0.0
        %6244 = vmatpush1.msra.mxu0 0.0
        %6245 = vmatprep.subr.mxu0 0.0
        %6246 = vmatpush1.msra.mxu0 0.0
        %6247 = vmatprep.subr.mxu0 0.0
        %6248 = vmatpush1.msra.mxu0 0.0
        %6249 = vmatprep.subr.mxu0 0.0
        %6250 = vmatpush1.msra.mxu0 0.0
        %6251 = vmatprep.subr.mxu0 0.0
        %6252 = vmatpush1.msra.mxu0 0.0
        %6253 = vmatprep.subr.mxu0 0.0
        %6254 = vmatpush1.msra.mxu0 0.0
        %6255 = vmatprep.subr.mxu0 0.0
        %6256 = vmatpush1.msra.mxu0 0.0
        %6257 = vmatprep.subr.mxu0 0.0
        %6258 = vmatpush1.msra.mxu0 0.0
        %6259 = vmatprep.subr.mxu0 0.0
        %6260 = vmatpush1.msra.mxu0 0.0
        %6261 = vmatprep.subr.mxu0 0.0
        %6262 = vmatpush1.msra.mxu0 0.0
        %6263 = vmatprep.subr.mxu0 0.0
        %6264 = vmatpush1.msra.mxu0 0.0
        %6265 = vmatprep.subr.mxu0 0.0
        %6266 = vmatpush1.msra.mxu0 0.0
        %6267 = vmatprep.subr.mxu0 0.0
        %v6268 = vand.u32 %v6240, 4294901760
        %6269 = vmatpush1.msra.mxu0 %v6268
        %6270 = vmatprep.subr.mxu0 0.0
        %v6271 = vand.u32 %v6239, 4294901760
        %6272 = vmatpush1.msra.mxu0 %v6271
        %6273 = vmatprep.subr.mxu0 0.0
        %v6274 = vand.u32 %v6238, 4294901760
        %6275 = vmatpush1.msra.mxu0 %v6274
        %6276 = vmatprep.subr.mxu0 0.0
        %v6277 = vand.u32 %v6237, 4294901760
        %6278 = vmatpush1.msra.mxu0 %v6277
        %6279 = vmatprep.subr.mxu0 0.0
        %6280 = vmatpush2.msra.mxu0 0.0
        %6281 = vmatprep.subr.mxu0 0.0
        %6282 = vmatpush2.msra.mxu0 0.0
        %6283 = vmatprep.subr.mxu0 0.0
        %6284 = vmatpush2.msra.mxu0 0.0
        %6285 = vmatprep.subr.mxu0 0.0
        %6286 = vmatpush2.msra.mxu0 0.0
        %6287 = vmatprep.subr.mxu0 0.0
        %6288 = vmatpush2.msra.mxu0 0.0
        %6289 = vmatprep.subr.mxu0 0.0
        %6290 = vmatpush2.msra.mxu0 0.0
        %6291 = vmatprep.subr.mxu0 0.0
        %6292 = vmatpush2.msra.mxu0 0.0
        %6293 = vmatprep.subr.mxu0 0.0
        %6294 = vmatpush2.msra.mxu0 0.0
        %6295 = vmatprep.subr.mxu0 0.0
        %6296 = vmatpush2.msra.mxu0 0.0
        %6297 = vmatprep.subr.mxu0 0.0
        %6298 = vmatpush2.msra.mxu0 0.0
        %6299 = vmatprep.subr.mxu0 0.0
        %6300 = vmatpush2.msra.mxu0 0.0
        %6301 = vmatprep.subr.mxu0 0.0
        %6302 = vmatpush2.msra.mxu0 0.0
        %6303 = vmatprep.subr.mxu0 0.0
        %6304 = vmatpush2.msra.mxu0 0.0
        %6305 = vmatprep.subr.mxu0 0.0
        %6306 = vmatpush2.msra.mxu0 0.0
        %6307 = vmatprep.subr.mxu0 0.0
        %6308 = vmatpush2.msra.mxu0 0.0
        %6309 = vmatprep.subr.mxu0 0.0
        %6310 = vmatpush2.msra.mxu0 0.0
        %6311 = vmatprep.mubr.f32.mxu0 0.0
        %v6312 = vand.u32 %v6241, 4294901760
        %v6313 = vsub.f32 %v6241, %v6312
        %v6314 = vand.u32 %v6313, 4294901760
        %v6315 = vsub.f32 %v6313, %v6314
        %v6316 = vand.u32 %v6315, 4294901760
        %6317 = vmatmul.mubr.f32.gmra.mxu0 %v6316
        %v6318 = vpop.f32.mrf.mxu0
        %v6319 = vadd.f32 0.0, %v6318
        %v6320 = vpop.f32.mrf.mxu0
        %6321 = vdwg.mxu0
        %6322 = vmatprep.subr.mxu0 0.0
        %6323 = vmatpush1.msra.mxu0 0.0
        %6324 = vmatprep.subr.mxu0 0.0
        %6325 = vmatpush1.msra.mxu0 0.0
        %6326 = vmatprep.subr.mxu0 0.0
        %6327 = vmatpush1.msra.mxu0 0.0
        %6328 = vmatprep.subr.mxu0 0.0
        %6329 = vmatpush1.msra.mxu0 0.0
        %6330 = vmatprep.subr.mxu0 0.0
        %6331 = vmatpush1.msra.mxu0 0.0
        %6332 = vmatprep.subr.mxu0 0.0
        %6333 = vmatpush1.msra.mxu0 0.0
        %6334 = vmatprep.subr.mxu0 0.0
        %6335 = vmatpush1.msra.mxu0 0.0
        %6336 = vmatprep.subr.mxu0 0.0
        %6337 = vmatpush1.msra.mxu0 0.0
        %6338 = vmatprep.subr.mxu0 0.0
        %6339 = vmatpush1.msra.mxu0 0.0
        %6340 = vmatprep.subr.mxu0 0.0
        %6341 = vmatpush1.msra.mxu0 0.0
        %6342 = vmatprep.subr.mxu0 0.0
        %6343 = vmatpush1.msra.mxu0 0.0
        %6344 = vmatprep.subr.mxu0 0.0
        %6345 = vmatpush1.msra.mxu0 0.0
        %6346 = vmatprep.subr.mxu0 0.0
        %v6347 = vand.u32 %v6240, 4294901760
        %v6348 = vsub.f32 %v6240, %v6347
        %v6349 = vand.u32 %v6348, 4294901760
        %v6350 = vsub.f32 %v6348, %v6349
        %v6351 = vand.u32 %v6350, 4294901760
        %6352 = vmatpush1.msra.mxu0 %v6351
        %6353 = vmatprep.subr.mxu0 0.0
        %v6354 = vand.u32 %v6239, 4294901760
        %v6355 = vsub.f32 %v6239, %v6354
        %v6356 = vand.u32 %v6355, 4294901760
        %v6357 = vsub.f32 %v6355, %v6356
        %v6358 = vand.u32 %v6357, 4294901760
        %6359 = vmatpush1.msra.mxu0 %v6358
        %6360 = vmatprep.subr.mxu0 0.0
        %v6361 = vand.u32 %v6238, 4294901760
        %v6362 = vsub.f32 %v6238, %v6361
        %v6363 = vand.u32 %v6362, 4294901760
        %v6364 = vsub.f32 %v6362, %v6363
        %v6365 = vand.u32 %v6364, 4294901760
        %6366 = vmatpush1.msra.mxu0 %v6365
        %6367 = vmatprep.subr.mxu0 0.0
        %v6368 = vand.u32 %v6237, 4294901760
        %v6369 = vsub.f32 %v6237, %v6368
        %v6370 = vand.u32 %v6369, 4294901760
        %v6371 = vsub.f32 %v6369, %v6370
        %v6372 = vand.u32 %v6371, 4294901760
        %6373 = vmatpush1.msra.mxu0 %v6372
        %6374 = vmatprep.subr.mxu0 0.0
        %6375 = vmatpush2.msra.mxu0 0.0
        %6376 = vmatprep.subr.mxu0 0.0
        %6377 = vmatpush2.msra.mxu0 0.0
        %6378 = vmatprep.subr.mxu0 0.0
        %6379 = vmatpush2.msra.mxu0 0.0
        %6380 = vmatprep.subr.mxu0 0.0
        %6381 = vmatpush2.msra.mxu0 0.0
        %6382 = vmatprep.subr.mxu0 0.0
        %6383 = vmatpush2.msra.mxu0 0.0
        %6384 = vmatprep.subr.mxu0 0.0
        %6385 = vmatpush2.msra.mxu0 0.0
        %6386 = vmatprep.subr.mxu0 0.0
        %6387 = vmatpush2.msra.mxu0 0.0
        %6388 = vmatprep.subr.mxu0 0.0
        %6389 = vmatpush2.msra.mxu0 0.0
        %6390 = vmatprep.subr.mxu0 0.0
        %6391 = vmatpush2.msra.mxu0 0.0
        %6392 = vmatprep.subr.mxu0 0.0
        %6393 = vmatpush2.msra.mxu0 0.0
        %6394 = vmatprep.subr.mxu0 0.0
        %6395 = vmatpush2.msra.mxu0 0.0
        %6396 = vmatprep.subr.mxu0 0.0
        %6397 = vmatpush2.msra.mxu0 0.0
        %6398 = vmatprep.subr.mxu0 0.0
        %6399 = vmatpush2.msra.mxu0 0.0
        %6400 = vmatprep.subr.mxu0 0.0
        %6401 = vmatpush2.msra.mxu0 0.0
        %6402 = vmatprep.subr.mxu0 0.0
        %6403 = vmatpush2.msra.mxu0 0.0
        %6404 = vmatprep.subr.mxu0 0.0
        %6405 = vmatpush2.msra.mxu0 0.0
        %6406 = vmatprep.mubr.f32.mxu0 0.0
        %v6407 = vand.u32 %v6241, 4294901760
        %6408 = vmatmul.mubr.f32.gmra.mxu0 %v6407
        %v6409 = vpop.f32.mrf.mxu0
        %v6410 = vadd.f32 %v6319, %v6409
        %v6411 = vpop.f32.mrf.mxu0
        %6412 = vdwg.mxu0
        %6413 = vmatprep.subr.mxu0 0.0
        %6414 = vmatpush1.msra.mxu0 0.0
        %6415 = vmatprep.subr.mxu0 0.0
        %6416 = vmatpush1.msra.mxu0 0.0
        %6417 = vmatprep.subr.mxu0 0.0
        %6418 = vmatpush1.msra.mxu0 0.0
        %6419 = vmatprep.subr.mxu0 0.0
        %6420 = vmatpush1.msra.mxu0 0.0
        %6421 = vmatprep.subr.mxu0 0.0
        %6422 = vmatpush1.msra.mxu0 0.0
        %6423 = vmatprep.subr.mxu0 0.0
        %6424 = vmatpush1.msra.mxu0 0.0
        %6425 = vmatprep.subr.mxu0 0.0
        %6426 = vmatpush1.msra.mxu0 0.0
        %6427 = vmatprep.subr.mxu0 0.0
        %6428 = vmatpush1.msra.mxu0 0.0
        %6429 = vmatprep.subr.mxu0 0.0
        %6430 = vmatpush1.msra.mxu0 0.0
        %6431 = vmatprep.subr.mxu0 0.0
        %6432 = vmatpush1.msra.mxu0 0.0
        %6433 = vmatprep.subr.mxu0 0.0
        %6434 = vmatpush1.msra.mxu0 0.0
        %6435 = vmatprep.subr.mxu0 0.0
        %6436 = vmatpush1.msra.mxu0 0.0
        %6437 = vmatprep.subr.mxu0 0.0
        %v6438 = vand.u32 %v6240, 4294901760
        %v6439 = vsub.f32 %v6240, %v6438
        %6440 = vmatpush1.msra.mxu0 %v6439
        %6441 = vmatprep.subr.mxu0 0.0
        %v6442 = vand.u32 %v6239, 4294901760
        %v6443 = vsub.f32 %v6239, %v6442
        %6444 = vmatpush1.msra.mxu0 %v6443
        %6445 = vmatprep.subr.mxu0 0.0
        %v6446 = vand.u32 %v6238, 4294901760
        %v6447 = vsub.f32 %v6238, %v6446
        %6448 = vmatpush1.msra.mxu0 %v6447
        %6449 = vmatprep.subr.mxu0 0.0
        %v6450 = vand.u32 %v6237, 4294901760
        %v6451 = vsub.f32 %v6237, %v6450
        %6452 = vmatpush1.msra.mxu0 %v6451
        %6453 = vmatprep.subr.mxu0 0.0
        %6454 = vmatpush2.msra.mxu0 0.0
        %6455 = vmatprep.subr.mxu0 0.0
        %6456 = vmatpush2.msra.mxu0 0.0
        %6457 = vmatprep.subr.mxu0 0.0
        %6458 = vmatpush2.msra.mxu0 0.0
        %6459 = vmatprep.subr.mxu0 0.0
        %6460 = vmatpush2.msra.mxu0 0.0
        %6461 = vmatprep.subr.mxu0 0.0
        %6462 = vmatpush2.msra.mxu0 0.0
        %6463 = vmatprep.subr.mxu0 0.0
        %6464 = vmatpush2.msra.mxu0 0.0
        %6465 = vmatprep.subr.mxu0 0.0
        %6466 = vmatpush2.msra.mxu0 0.0
        %6467 = vmatprep.subr.mxu0 0.0
        %6468 = vmatpush2.msra.mxu0 0.0
        %6469 = vmatprep.subr.mxu0 0.0
        %6470 = vmatpush2.msra.mxu0 0.0
        %6471 = vmatprep.subr.mxu0 0.0
        %6472 = vmatpush2.msra.mxu0 0.0
        %6473 = vmatprep.subr.mxu0 0.0
        %6474 = vmatpush2.msra.mxu0 0.0
        %6475 = vmatprep.subr.mxu0 0.0
        %6476 = vmatpush2.msra.mxu0 0.0
        %6477 = vmatprep.subr.mxu0 0.0
        %6478 = vmatpush2.msra.mxu0 0.0
        %6479 = vmatprep.subr.mxu0 0.0
        %6480 = vmatpush2.msra.mxu0 0.0
        %6481 = vmatprep.subr.mxu0 0.0
        %6482 = vmatpush2.msra.mxu0 0.0
        %6483 = vmatprep.subr.mxu0 0.0
        %6484 = vmatpush2.msra.mxu0 0.0
        %6485 = vmatprep.mubr.f32.mxu0 0.0
        %v6486 = vand.u32 %v6241, 4294901760
        %v6487 = vsub.f32 %v6241, %v6486
        %6488 = vmatmul.mubr.f32.gmra.mxu0 %v6487
        %v6489 = vpop.f32.mrf.mxu0
        %v6490 = vadd.f32 %v6410, %v6489
        %v6491 = vpop.f32.mrf.mxu0
        %6492 = vdwg.mxu0
        %6493 = vmatprep.subr.mxu0 0.0
        %6494 = vmatpush1.msra.mxu0 0.0
        %6495 = vmatprep.subr.mxu0 0.0
        %6496 = vmatpush1.msra.mxu0 0.0
        %6497 = vmatprep.subr.mxu0 0.0
        %6498 = vmatpush1.msra.mxu0 0.0
        %6499 = vmatprep.subr.mxu0 0.0
        %6500 = vmatpush1.msra.mxu0 0.0
        %6501 = vmatprep.subr.mxu0 0.0
        %6502 = vmatpush1.msra.mxu0 0.0
        %6503 = vmatprep.subr.mxu0 0.0
        %6504 = vmatpush1.msra.mxu0 0.0
        %6505 = vmatprep.subr.mxu0 0.0
        %6506 = vmatpush1.msra.mxu0 0.0
        %6507 = vmatprep.subr.mxu0 0.0
        %6508 = vmatpush1.msra.mxu0 0.0
        %6509 = vmatprep.subr.mxu0 0.0
        %6510 = vmatpush1.msra.mxu0 0.0
        %6511 = vmatprep.subr.mxu0 0.0
        %6512 = vmatpush1.msra.mxu0 0.0
        %6513 = vmatprep.subr.mxu0 0.0
        %6514 = vmatpush1.msra.mxu0 0.0
        %6515 = vmatprep.subr.mxu0 0.0
        %6516 = vmatpush1.msra.mxu0 0.0
        %6517 = vmatprep.subr.mxu0 0.0
        %v6518 = vand.u32 %v6240, 4294901760
        %6519 = vmatpush1.msra.mxu0 %v6518
        %6520 = vmatprep.subr.mxu0 0.0
        %v6521 = vand.u32 %v6239, 4294901760
        %6522 = vmatpush1.msra.mxu0 %v6521
        %6523 = vmatprep.subr.mxu0 0.0
        %v6524 = vand.u32 %v6238, 4294901760
        %6525 = vmatpush1.msra.mxu0 %v6524
        %6526 = vmatprep.subr.mxu0 0.0
        %v6527 = vand.u32 %v6237, 4294901760
        %6528 = vmatpush1.msra.mxu0 %v6527
        %6529 = vmatprep.subr.mxu0 0.0
        %6530 = vmatpush2.msra.mxu0 0.0
        %6531 = vmatprep.subr.mxu0 0.0
        %6532 = vmatpush2.msra.mxu0 0.0
        %6533 = vmatprep.subr.mxu0 0.0
        %6534 = vmatpush2.msra.mxu0 0.0
        %6535 = vmatprep.subr.mxu0 0.0
        %6536 = vmatpush2.msra.mxu0 0.0
        %6537 = vmatprep.subr.mxu0 0.0
        %6538 = vmatpush2.msra.mxu0 0.0
        %6539 = vmatprep.subr.mxu0 0.0
        %6540 = vmatpush2.msra.mxu0 0.0
        %6541 = vmatprep.subr.mxu0 0.0
        %6542 = vmatpush2.msra.mxu0 0.0
        %6543 = vmatprep.subr.mxu0 0.0
        %6544 = vmatpush2.msra.mxu0 0.0
        %6545 = vmatprep.subr.mxu0 0.0
        %6546 = vmatpush2.msra.mxu0 0.0
        %6547 = vmatprep.subr.mxu0 0.0
        %6548 = vmatpush2.msra.mxu0 0.0
        %6549 = vmatprep.subr.mxu0 0.0
        %6550 = vmatpush2.msra.mxu0 0.0
        %6551 = vmatprep.subr.mxu0 0.0
        %6552 = vmatpush2.msra.mxu0 0.0
        %6553 = vmatprep.subr.mxu0 0.0
        %6554 = vmatpush2.msra.mxu0 0.0
        %6555 = vmatprep.subr.mxu0 0.0
        %6556 = vmatpush2.msra.mxu0 0.0
        %6557 = vmatprep.subr.mxu0 0.0
        %6558 = vmatpush2.msra.mxu0 0.0
        %6559 = vmatprep.subr.mxu0 0.0
        %6560 = vmatpush2.msra.mxu0 0.0
        %6561 = vmatprep.mubr.f32.mxu0 0.0
        %v6562 = vand.u32 %v6241, 4294901760
        %v6563 = vsub.f32 %v6241, %v6562
        %v6564 = vand.u32 %v6563, 4294901760
        %6565 = vmatmul.mubr.f32.gmra.mxu0 %v6564
        %v6566 = vpop.f32.mrf.mxu0
        %v6567 = vadd.f32 %v6490, %v6566
        %v6568 = vpop.f32.mrf.mxu0
        %6569 = vdwg.mxu0
        %6570 = vmatprep.subr.mxu0 0.0
        %6571 = vmatpush1.msra.mxu0 0.0
        %6572 = vmatprep.subr.mxu0 0.0
        %6573 = vmatpush1.msra.mxu0 0.0
        %6574 = vmatprep.subr.mxu0 0.0
        %6575 = vmatpush1.msra.mxu0 0.0
        %6576 = vmatprep.subr.mxu0 0.0
        %6577 = vmatpush1.msra.mxu0 0.0
        %6578 = vmatprep.subr.mxu0 0.0
        %6579 = vmatpush1.msra.mxu0 0.0
        %6580 = vmatprep.subr.mxu0 0.0
        %6581 = vmatpush1.msra.mxu0 0.0
        %6582 = vmatprep.subr.mxu0 0.0
        %6583 = vmatpush1.msra.mxu0 0.0
        %6584 = vmatprep.subr.mxu0 0.0
        %6585 = vmatpush1.msra.mxu0 0.0
        %6586 = vmatprep.subr.mxu0 0.0
        %6587 = vmatpush1.msra.mxu0 0.0
        %6588 = vmatprep.subr.mxu0 0.0
        %6589 = vmatpush1.msra.mxu0 0.0
        %6590 = vmatprep.subr.mxu0 0.0
        %6591 = vmatpush1.msra.mxu0 0.0
        %6592 = vmatprep.subr.mxu0 0.0
        %6593 = vmatpush1.msra.mxu0 0.0
        %6594 = vmatprep.subr.mxu0 0.0
        %v6595 = vand.u32 %v6240, 4294901760
        %v6596 = vsub.f32 %v6240, %v6595
        %v6597 = vand.u32 %v6596, 4294901760
        %6598 = vmatpush1.msra.mxu0 %v6597
        %6599 = vmatprep.subr.mxu0 0.0
        %v6600 = vand.u32 %v6239, 4294901760
        %v6601 = vsub.f32 %v6239, %v6600
        %v6602 = vand.u32 %v6601, 4294901760
        %6603 = vmatpush1.msra.mxu0 %v6602
        %6604 = vmatprep.subr.mxu0 0.0
        %v6605 = vand.u32 %v6238, 4294901760
        %v6606 = vsub.f32 %v6238, %v6605
        %v6607 = vand.u32 %v6606, 4294901760
        %6608 = vmatpush1.msra.mxu0 %v6607
        %6609 = vmatprep.subr.mxu0 0.0
        %v6610 = vand.u32 %v6237, 4294901760
        %v6611 = vsub.f32 %v6237, %v6610
        %v6612 = vand.u32 %v6611, 4294901760
        %6613 = vmatpush1.msra.mxu0 %v6612
        %6614 = vmatprep.subr.mxu0 0.0
        %6615 = vmatpush2.msra.mxu0 0.0
        %6616 = vmatprep.subr.mxu0 0.0
        %6617 = vmatpush2.msra.mxu0 0.0
        %6618 = vmatprep.subr.mxu0 0.0
        %6619 = vmatpush2.msra.mxu0 0.0
        %6620 = vmatprep.subr.mxu0 0.0
        %6621 = vmatpush2.msra.mxu0 0.0
        %6622 = vmatprep.subr.mxu0 0.0
        %6623 = vmatpush2.msra.mxu0 0.0
        %6624 = vmatprep.subr.mxu0 0.0
        %6625 = vmatpush2.msra.mxu0 0.0
        %6626 = vmatprep.subr.mxu0 0.0
        %6627 = vmatpush2.msra.mxu0 0.0
        %6628 = vmatprep.subr.mxu0 0.0
        %6629 = vmatpush2.msra.mxu0 0.0
        %6630 = vmatprep.subr.mxu0 0.0
        %6631 = vmatpush2.msra.mxu0 0.0
        %6632 = vmatprep.subr.mxu0 0.0
        %6633 = vmatpush2.msra.mxu0 0.0
        %6634 = vmatprep.subr.mxu0 0.0
        %6635 = vmatpush2.msra.mxu0 0.0
        %6636 = vmatprep.subr.mxu0 0.0
        %6637 = vmatpush2.msra.mxu0 0.0
        %6638 = vmatprep.subr.mxu0 0.0
        %6639 = vmatpush2.msra.mxu0 0.0
        %6640 = vmatprep.subr.mxu0 0.0
        %6641 = vmatpush2.msra.mxu0 0.0
        %6642 = vmatprep.subr.mxu0 0.0
        %6643 = vmatpush2.msra.mxu0 0.0
        %6644 = vmatprep.subr.mxu0 0.0
        %6645 = vmatpush2.msra.mxu0 0.0
        %6646 = vmatprep.mubr.f32.mxu0 0.0
        %v6647 = vand.u32 %v6241, 4294901760
        %6648 = vmatmul.mubr.f32.gmra.mxu0 %v6647
        %v6649 = vpop.f32.mrf.mxu0
        %v6650 = vadd.f32 %v6567, %v6649
        %v6651 = vpop.f32.mrf.mxu0
        %6652 = vdwg.mxu0
        %6653 = vmatprep.subr.mxu0 0.0
        %6654 = vmatpush1.msra.mxu0 0.0
        %6655 = vmatprep.subr.mxu0 0.0
        %6656 = vmatpush1.msra.mxu0 0.0
        %6657 = vmatprep.subr.mxu0 0.0
        %6658 = vmatpush1.msra.mxu0 0.0
        %6659 = vmatprep.subr.mxu0 0.0
        %6660 = vmatpush1.msra.mxu0 0.0
        %6661 = vmatprep.subr.mxu0 0.0
        %6662 = vmatpush1.msra.mxu0 0.0
        %6663 = vmatprep.subr.mxu0 0.0
        %6664 = vmatpush1.msra.mxu0 0.0
        %6665 = vmatprep.subr.mxu0 0.0
        %6666 = vmatpush1.msra.mxu0 0.0
        %6667 = vmatprep.subr.mxu0 0.0
        %6668 = vmatpush1.msra.mxu0 0.0
        %6669 = vmatprep.subr.mxu0 0.0
        %6670 = vmatpush1.msra.mxu0 0.0
        %6671 = vmatprep.subr.mxu0 0.0
        %6672 = vmatpush1.msra.mxu0 0.0
        %6673 = vmatprep.subr.mxu0 0.0
        %6674 = vmatpush1.msra.mxu0 0.0
        %6675 = vmatprep.subr.mxu0 0.0
        %6676 = vmatpush1.msra.mxu0 0.0
        %6677 = vmatprep.subr.mxu0 0.0
        %v6678 = vand.u32 %v6240, 4294901760
        %6679 = vmatpush1.msra.mxu0 %v6678
        %6680 = vmatprep.subr.mxu0 0.0
        %v6681 = vand.u32 %v6239, 4294901760
        %6682 = vmatpush1.msra.mxu0 %v6681
        %6683 = vmatprep.subr.mxu0 0.0
        %v6684 = vand.u32 %v6238, 4294901760
        %6685 = vmatpush1.msra.mxu0 %v6684
        %6686 = vmatprep.subr.mxu0 0.0
        %v6687 = vand.u32 %v6237, 4294901760
        %6688 = vmatpush1.msra.mxu0 %v6687
        %6689 = vmatprep.subr.mxu0 0.0
        %6690 = vmatpush2.msra.mxu0 0.0
        %6691 = vmatprep.subr.mxu0 0.0
        %6692 = vmatpush2.msra.mxu0 0.0
        %6693 = vmatprep.subr.mxu0 0.0
        %6694 = vmatpush2.msra.mxu0 0.0
        %6695 = vmatprep.subr.mxu0 0.0
        %6696 = vmatpush2.msra.mxu0 0.0
        %6697 = vmatprep.subr.mxu0 0.0
        %6698 = vmatpush2.msra.mxu0 0.0
        %6699 = vmatprep.subr.mxu0 0.0
        %6700 = vmatpush2.msra.mxu0 0.0
        %6701 = vmatprep.subr.mxu0 0.0
        %6702 = vmatpush2.msra.mxu0 0.0
        %6703 = vmatprep.subr.mxu0 0.0
        %6704 = vmatpush2.msra.mxu0 0.0
        %6705 = vmatprep.subr.mxu0 0.0
        %6706 = vmatpush2.msra.mxu0 0.0
        %6707 = vmatprep.subr.mxu0 0.0
        %6708 = vmatpush2.msra.mxu0 0.0
        %6709 = vmatprep.subr.mxu0 0.0
        %6710 = vmatpush2.msra.mxu0 0.0
        %6711 = vmatprep.subr.mxu0 0.0
        %6712 = vmatpush2.msra.mxu0 0.0
        %6713 = vmatprep.subr.mxu0 0.0
        %6714 = vmatpush2.msra.mxu0 0.0
        %6715 = vmatprep.subr.mxu0 0.0
        %6716 = vmatpush2.msra.mxu0 0.0
        %6717 = vmatprep.subr.mxu0 0.0
        %6718 = vmatpush2.msra.mxu0 0.0
        %6719 = vmatprep.subr.mxu0 0.0
        %6720 = vmatpush2.msra.mxu0 0.0
        %6721 = vmatprep.mubr.f32.mxu0 0.0
        %v6722 = vand.u32 %v6241, 4294901760
        %6723 = vmatmul.mubr.f32.gmra.mxu0 %v6722
        %v6724 = vpop.f32.mrf.mxu0
        %v6725 = vadd.f32 %v6650, %v6724
        %v6726 = vpop.f32.mrf.mxu0
        %6727 = vdwg.mxu0
        %v6728 = vadd.f32 %v6233, %v6725
        %s6729 = scalar_lea.vmem [#allocation7], 96
        %v6730 = vld [vmem:[%s6729] sm:$0xff]
        %v6731 = vld [vmem:[%s6729 + $0x8] sm:$0xff]
        %v6732 = vld [vmem:[%s6729 + $0x10] sm:$0xff]
        %v6733 = vld [vmem:[%s6729 + $0x18] sm:$0xff]
        %v6734 = vsel %vm1793, %v5252, 0
        %6736 = vmatprep.subr.mxu0 0.0
        %6737 = vmatpush1.msra.mxu0 0.0
        %6738 = vmatprep.subr.mxu0 0.0
        %6739 = vmatpush1.msra.mxu0 0.0
        %6740 = vmatprep.subr.mxu0 0.0
        %6741 = vmatpush1.msra.mxu0 0.0
        %6742 = vmatprep.subr.mxu0 0.0
        %6743 = vmatpush1.msra.mxu0 0.0
        %6744 = vmatprep.subr.mxu0 0.0
        %6745 = vmatpush1.msra.mxu0 0.0
        %6746 = vmatprep.subr.mxu0 0.0
        %6747 = vmatpush1.msra.mxu0 0.0
        %6748 = vmatprep.subr.mxu0 0.0
        %6749 = vmatpush1.msra.mxu0 0.0
        %6750 = vmatprep.subr.mxu0 0.0
        %6751 = vmatpush1.msra.mxu0 0.0
        %6752 = vmatprep.subr.mxu0 0.0
        %6753 = vmatpush1.msra.mxu0 0.0
        %6754 = vmatprep.subr.mxu0 0.0
        %6755 = vmatpush1.msra.mxu0 0.0
        %6756 = vmatprep.subr.mxu0 0.0
        %6757 = vmatpush1.msra.mxu0 0.0
        %6758 = vmatprep.subr.mxu0 0.0
        %6759 = vmatpush1.msra.mxu0 0.0
        %6760 = vmatprep.subr.mxu0 0.0
        %v6761 = vand.u32 %v6733, 4294901760
        %6762 = vmatpush1.msra.mxu0 %v6761
        %6763 = vmatprep.subr.mxu0 0.0
        %v6764 = vand.u32 %v6732, 4294901760
        %6765 = vmatpush1.msra.mxu0 %v6764
        %6766 = vmatprep.subr.mxu0 0.0
        %v6767 = vand.u32 %v6731, 4294901760
        %6768 = vmatpush1.msra.mxu0 %v6767
        %6769 = vmatprep.subr.mxu0 0.0
        %v6770 = vand.u32 %v6730, 4294901760
        %6771 = vmatpush1.msra.mxu0 %v6770
        %6772 = vmatprep.subr.mxu0 0.0
        %6773 = vmatpush2.msra.mxu0 0.0
        %6774 = vmatprep.subr.mxu0 0.0
        %6775 = vmatpush2.msra.mxu0 0.0
        %6776 = vmatprep.subr.mxu0 0.0
        %6777 = vmatpush2.msra.mxu0 0.0
        %6778 = vmatprep.subr.mxu0 0.0
        %6779 = vmatpush2.msra.mxu0 0.0
        %6780 = vmatprep.subr.mxu0 0.0
        %6781 = vmatpush2.msra.mxu0 0.0
        %6782 = vmatprep.subr.mxu0 0.0
        %6783 = vmatpush2.msra.mxu0 0.0
        %6784 = vmatprep.subr.mxu0 0.0
        %6785 = vmatpush2.msra.mxu0 0.0
        %6786 = vmatprep.subr.mxu0 0.0
        %6787 = vmatpush2.msra.mxu0 0.0
        %6788 = vmatprep.subr.mxu0 0.0
        %6789 = vmatpush2.msra.mxu0 0.0
        %6790 = vmatprep.subr.mxu0 0.0
        %6791 = vmatpush2.msra.mxu0 0.0
        %6792 = vmatprep.subr.mxu0 0.0
        %6793 = vmatpush2.msra.mxu0 0.0
        %6794 = vmatprep.subr.mxu0 0.0
        %6795 = vmatpush2.msra.mxu0 0.0
        %6796 = vmatprep.subr.mxu0 0.0
        %6797 = vmatpush2.msra.mxu0 0.0
        %6798 = vmatprep.subr.mxu0 0.0
        %6799 = vmatpush2.msra.mxu0 0.0
        %6800 = vmatprep.subr.mxu0 0.0
        %6801 = vmatpush2.msra.mxu0 0.0
        %6802 = vmatprep.subr.mxu0 0.0
        %6803 = vmatpush2.msra.mxu0 0.0
        %6804 = vmatprep.mubr.f32.mxu0 0.0
        %v6805 = vand.u32 %v6734, 4294901760
        %v6806 = vsub.f32 %v6734, %v6805
        %v6807 = vand.u32 %v6806, 4294901760
        %v6808 = vsub.f32 %v6806, %v6807
        %v6809 = vand.u32 %v6808, 4294901760
        %6810 = vmatmul.mubr.f32.gmra.mxu0 %v6809
        %v6811 = vpop.f32.mrf.mxu0
        %v6812 = vadd.f32 0.0, %v6811
        %v6813 = vpop.f32.mrf.mxu0
        %6814 = vdwg.mxu0
        %6815 = vmatprep.subr.mxu0 0.0
        %6816 = vmatpush1.msra.mxu0 0.0
        %6817 = vmatprep.subr.mxu0 0.0
        %6818 = vmatpush1.msra.mxu0 0.0
        %6819 = vmatprep.subr.mxu0 0.0
        %6820 = vmatpush1.msra.mxu0 0.0
        %6821 = vmatprep.subr.mxu0 0.0
        %6822 = vmatpush1.msra.mxu0 0.0
        %6823 = vmatprep.subr.mxu0 0.0
        %6824 = vmatpush1.msra.mxu0 0.0
        %6825 = vmatprep.subr.mxu0 0.0
        %6826 = vmatpush1.msra.mxu0 0.0
        %6827 = vmatprep.subr.mxu0 0.0
        %6828 = vmatpush1.msra.mxu0 0.0
        %6829 = vmatprep.subr.mxu0 0.0
        %6830 = vmatpush1.msra.mxu0 0.0
        %6831 = vmatprep.subr.mxu0 0.0
        %6832 = vmatpush1.msra.mxu0 0.0
        %6833 = vmatprep.subr.mxu0 0.0
        %6834 = vmatpush1.msra.mxu0 0.0
        %6835 = vmatprep.subr.mxu0 0.0
        %6836 = vmatpush1.msra.mxu0 0.0
        %6837 = vmatprep.subr.mxu0 0.0
        %6838 = vmatpush1.msra.mxu0 0.0
        %6839 = vmatprep.subr.mxu0 0.0
        %v6840 = vand.u32 %v6733, 4294901760
        %v6841 = vsub.f32 %v6733, %v6840
        %v6842 = vand.u32 %v6841, 4294901760
        %v6843 = vsub.f32 %v6841, %v6842
        %v6844 = vand.u32 %v6843, 4294901760
        %6845 = vmatpush1.msra.mxu0 %v6844
        %6846 = vmatprep.subr.mxu0 0.0
        %v6847 = vand.u32 %v6732, 4294901760
        %v6848 = vsub.f32 %v6732, %v6847
        %v6849 = vand.u32 %v6848, 4294901760
        %v6850 = vsub.f32 %v6848, %v6849
        %v6851 = vand.u32 %v6850, 4294901760
        %6852 = vmatpush1.msra.mxu0 %v6851
        %6853 = vmatprep.subr.mxu0 0.0
        %v6854 = vand.u32 %v6731, 4294901760
        %v6855 = vsub.f32 %v6731, %v6854
        %v6856 = vand.u32 %v6855, 4294901760
        %v6857 = vsub.f32 %v6855, %v6856
        %v6858 = vand.u32 %v6857, 4294901760
        %6859 = vmatpush1.msra.mxu0 %v6858
        %6860 = vmatprep.subr.mxu0 0.0
        %v6861 = vand.u32 %v6730, 4294901760
        %v6862 = vsub.f32 %v6730, %v6861
        %v6863 = vand.u32 %v6862, 4294901760
        %v6864 = vsub.f32 %v6862, %v6863
        %v6865 = vand.u32 %v6864, 4294901760
        %6866 = vmatpush1.msra.mxu0 %v6865
        %6867 = vmatprep.subr.mxu0 0.0
        %6868 = vmatpush2.msra.mxu0 0.0
        %6869 = vmatprep.subr.mxu0 0.0
        %6870 = vmatpush2.msra.mxu0 0.0
        %6871 = vmatprep.subr.mxu0 0.0
        %6872 = vmatpush2.msra.mxu0 0.0
        %6873 = vmatprep.subr.mxu0 0.0
        %6874 = vmatpush2.msra.mxu0 0.0
        %6875 = vmatprep.subr.mxu0 0.0
        %6876 = vmatpush2.msra.mxu0 0.0
        %6877 = vmatprep.subr.mxu0 0.0
        %6878 = vmatpush2.msra.mxu0 0.0
        %6879 = vmatprep.subr.mxu0 0.0
        %6880 = vmatpush2.msra.mxu0 0.0
        %6881 = vmatprep.subr.mxu0 0.0
        %6882 = vmatpush2.msra.mxu0 0.0
        %6883 = vmatprep.subr.mxu0 0.0
        %6884 = vmatpush2.msra.mxu0 0.0
        %6885 = vmatprep.subr.mxu0 0.0
        %6886 = vmatpush2.msra.mxu0 0.0
        %6887 = vmatprep.subr.mxu0 0.0
        %6888 = vmatpush2.msra.mxu0 0.0
        %6889 = vmatprep.subr.mxu0 0.0
        %6890 = vmatpush2.msra.mxu0 0.0
        %6891 = vmatprep.subr.mxu0 0.0
        %6892 = vmatpush2.msra.mxu0 0.0
        %6893 = vmatprep.subr.mxu0 0.0
        %6894 = vmatpush2.msra.mxu0 0.0
        %6895 = vmatprep.subr.mxu0 0.0
        %6896 = vmatpush2.msra.mxu0 0.0
        %6897 = vmatprep.subr.mxu0 0.0
        %6898 = vmatpush2.msra.mxu0 0.0
        %6899 = vmatprep.mubr.f32.mxu0 0.0
        %v6900 = vand.u32 %v6734, 4294901760
        %6901 = vmatmul.mubr.f32.gmra.mxu0 %v6900
        %v6902 = vpop.f32.mrf.mxu0
        %v6903 = vadd.f32 %v6812, %v6902
        %v6904 = vpop.f32.mrf.mxu0
        %6905 = vdwg.mxu0
        %6906 = vmatprep.subr.mxu0 0.0
        %6907 = vmatpush1.msra.mxu0 0.0
        %6908 = vmatprep.subr.mxu0 0.0
        %6909 = vmatpush1.msra.mxu0 0.0
        %6910 = vmatprep.subr.mxu0 0.0
        %6911 = vmatpush1.msra.mxu0 0.0
        %6912 = vmatprep.subr.mxu0 0.0
        %6913 = vmatpush1.msra.mxu0 0.0
        %6914 = vmatprep.subr.mxu0 0.0
        %6915 = vmatpush1.msra.mxu0 0.0
        %6916 = vmatprep.subr.mxu0 0.0
        %6917 = vmatpush1.msra.mxu0 0.0
        %6918 = vmatprep.subr.mxu0 0.0
        %6919 = vmatpush1.msra.mxu0 0.0
        %6920 = vmatprep.subr.mxu0 0.0
        %6921 = vmatpush1.msra.mxu0 0.0
        %6922 = vmatprep.subr.mxu0 0.0
        %6923 = vmatpush1.msra.mxu0 0.0
        %6924 = vmatprep.subr.mxu0 0.0
        %6925 = vmatpush1.msra.mxu0 0.0
        %6926 = vmatprep.subr.mxu0 0.0
        %6927 = vmatpush1.msra.mxu0 0.0
        %6928 = vmatprep.subr.mxu0 0.0
        %6929 = vmatpush1.msra.mxu0 0.0
        %6930 = vmatprep.subr.mxu0 0.0
        %v6931 = vand.u32 %v6733, 4294901760
        %v6932 = vsub.f32 %v6733, %v6931
        %6933 = vmatpush1.msra.mxu0 %v6932
        %6934 = vmatprep.subr.mxu0 0.0
        %v6935 = vand.u32 %v6732, 4294901760
        %v6936 = vsub.f32 %v6732, %v6935
        %6937 = vmatpush1.msra.mxu0 %v6936
        %6938 = vmatprep.subr.mxu0 0.0
        %v6939 = vand.u32 %v6731, 4294901760
        %v6940 = vsub.f32 %v6731, %v6939
        %6941 = vmatpush1.msra.mxu0 %v6940
        %6942 = vmatprep.subr.mxu0 0.0
        %v6943 = vand.u32 %v6730, 4294901760
        %v6944 = vsub.f32 %v6730, %v6943
        %6945 = vmatpush1.msra.mxu0 %v6944
        %6946 = vmatprep.subr.mxu0 0.0
        %6947 = vmatpush2.msra.mxu0 0.0
        %6948 = vmatprep.subr.mxu0 0.0
        %6949 = vmatpush2.msra.mxu0 0.0
        %6950 = vmatprep.subr.mxu0 0.0
        %6951 = vmatpush2.msra.mxu0 0.0
        %6952 = vmatprep.subr.mxu0 0.0
        %6953 = vmatpush2.msra.mxu0 0.0
        %6954 = vmatprep.subr.mxu0 0.0
        %6955 = vmatpush2.msra.mxu0 0.0
        %6956 = vmatprep.subr.mxu0 0.0
        %6957 = vmatpush2.msra.mxu0 0.0
        %6958 = vmatprep.subr.mxu0 0.0
        %6959 = vmatpush2.msra.mxu0 0.0
        %6960 = vmatprep.subr.mxu0 0.0
        %6961 = vmatpush2.msra.mxu0 0.0
        %6962 = vmatprep.subr.mxu0 0.0
        %6963 = vmatpush2.msra.mxu0 0.0
        %6964 = vmatprep.subr.mxu0 0.0
        %6965 = vmatpush2.msra.mxu0 0.0
        %6966 = vmatprep.subr.mxu0 0.0
        %6967 = vmatpush2.msra.mxu0 0.0
        %6968 = vmatprep.subr.mxu0 0.0
        %6969 = vmatpush2.msra.mxu0 0.0
        %6970 = vmatprep.subr.mxu0 0.0
        %6971 = vmatpush2.msra.mxu0 0.0
        %6972 = vmatprep.subr.mxu0 0.0
        %6973 = vmatpush2.msra.mxu0 0.0
        %6974 = vmatprep.subr.mxu0 0.0
        %6975 = vmatpush2.msra.mxu0 0.0
        %6976 = vmatprep.subr.mxu0 0.0
        %6977 = vmatpush2.msra.mxu0 0.0
        %6978 = vmatprep.mubr.f32.mxu0 0.0
        %v6979 = vand.u32 %v6734, 4294901760
        %v6980 = vsub.f32 %v6734, %v6979
        %6981 = vmatmul.mubr.f32.gmra.mxu0 %v6980
        %v6982 = vpop.f32.mrf.mxu0
        %v6983 = vadd.f32 %v6903, %v6982
        %v6984 = vpop.f32.mrf.mxu0
        %6985 = vdwg.mxu0
        %6986 = vmatprep.subr.mxu0 0.0
        %6987 = vmatpush1.msra.mxu0 0.0
        %6988 = vmatprep.subr.mxu0 0.0
        %6989 = vmatpush1.msra.mxu0 0.0
        %6990 = vmatprep.subr.mxu0 0.0
        %6991 = vmatpush1.msra.mxu0 0.0
        %6992 = vmatprep.subr.mxu0 0.0
        %6993 = vmatpush1.msra.mxu0 0.0
        %6994 = vmatprep.subr.mxu0 0.0
        %6995 = vmatpush1.msra.mxu0 0.0
        %6996 = vmatprep.subr.mxu0 0.0
        %6997 = vmatpush1.msra.mxu0 0.0
        %6998 = vmatprep.subr.mxu0 0.0
        %6999 = vmatpush1.msra.mxu0 0.0
        %7000 = vmatprep.subr.mxu0 0.0
        %7001 = vmatpush1.msra.mxu0 0.0
        %7002 = vmatprep.subr.mxu0 0.0
        %7003 = vmatpush1.msra.mxu0 0.0
        %7004 = vmatprep.subr.mxu0 0.0
        %7005 = vmatpush1.msra.mxu0 0.0
        %7006 = vmatprep.subr.mxu0 0.0
        %7007 = vmatpush1.msra.mxu0 0.0
        %7008 = vmatprep.subr.mxu0 0.0
        %7009 = vmatpush1.msra.mxu0 0.0
        %7010 = vmatprep.subr.mxu0 0.0
        %v7011 = vand.u32 %v6733, 4294901760
        %7012 = vmatpush1.msra.mxu0 %v7011
        %7013 = vmatprep.subr.mxu0 0.0
        %v7014 = vand.u32 %v6732, 4294901760
        %7015 = vmatpush1.msra.mxu0 %v7014
        %7016 = vmatprep.subr.mxu0 0.0
        %v7017 = vand.u32 %v6731, 4294901760
        %7018 = vmatpush1.msra.mxu0 %v7017
        %7019 = vmatprep.subr.mxu0 0.0
        %v7020 = vand.u32 %v6730, 4294901760
        %7021 = vmatpush1.msra.mxu0 %v7020
        %7022 = vmatprep.subr.mxu0 0.0
        %7023 = vmatpush2.msra.mxu0 0.0
        %7024 = vmatprep.subr.mxu0 0.0
        %7025 = vmatpush2.msra.mxu0 0.0
        %7026 = vmatprep.subr.mxu0 0.0
        %7027 = vmatpush2.msra.mxu0 0.0
        %7028 = vmatprep.subr.mxu0 0.0
        %7029 = vmatpush2.msra.mxu0 0.0
        %7030 = vmatprep.subr.mxu0 0.0
        %7031 = vmatpush2.msra.mxu0 0.0
        %7032 = vmatprep.subr.mxu0 0.0
        %7033 = vmatpush2.msra.mxu0 0.0
        %7034 = vmatprep.subr.mxu0 0.0
        %7035 = vmatpush2.msra.mxu0 0.0
        %7036 = vmatprep.subr.mxu0 0.0
        %7037 = vmatpush2.msra.mxu0 0.0
        %7038 = vmatprep.subr.mxu0 0.0
        %7039 = vmatpush2.msra.mxu0 0.0
        %7040 = vmatprep.subr.mxu0 0.0
        %7041 = vmatpush2.msra.mxu0 0.0
        %7042 = vmatprep.subr.mxu0 0.0
        %7043 = vmatpush2.msra.mxu0 0.0
        %7044 = vmatprep.subr.mxu0 0.0
        %7045 = vmatpush2.msra.mxu0 0.0
        %7046 = vmatprep.subr.mxu0 0.0
        %7047 = vmatpush2.msra.mxu0 0.0
        %7048 = vmatprep.subr.mxu0 0.0
        %7049 = vmatpush2.msra.mxu0 0.0
        %7050 = vmatprep.subr.mxu0 0.0
        %7051 = vmatpush2.msra.mxu0 0.0
        %7052 = vmatprep.subr.mxu0 0.0
        %7053 = vmatpush2.msra.mxu0 0.0
        %7054 = vmatprep.mubr.f32.mxu0 0.0
        %v7055 = vand.u32 %v6734, 4294901760
        %v7056 = vsub.f32 %v6734, %v7055
        %v7057 = vand.u32 %v7056, 4294901760
        %7058 = vmatmul.mubr.f32.gmra.mxu0 %v7057
        %v7059 = vpop.f32.mrf.mxu0
        %v7060 = vadd.f32 %v6983, %v7059
        %v7061 = vpop.f32.mrf.mxu0
        %7062 = vdwg.mxu0
        %7063 = vmatprep.subr.mxu0 0.0
        %7064 = vmatpush1.msra.mxu0 0.0
        %7065 = vmatprep.subr.mxu0 0.0
        %7066 = vmatpush1.msra.mxu0 0.0
        %7067 = vmatprep.subr.mxu0 0.0
        %7068 = vmatpush1.msra.mxu0 0.0
        %7069 = vmatprep.subr.mxu0 0.0
        %7070 = vmatpush1.msra.mxu0 0.0
        %7071 = vmatprep.subr.mxu0 0.0
        %7072 = vmatpush1.msra.mxu0 0.0
        %7073 = vmatprep.subr.mxu0 0.0
        %7074 = vmatpush1.msra.mxu0 0.0
        %7075 = vmatprep.subr.mxu0 0.0
        %7076 = vmatpush1.msra.mxu0 0.0
        %7077 = vmatprep.subr.mxu0 0.0
        %7078 = vmatpush1.msra.mxu0 0.0
        %7079 = vmatprep.subr.mxu0 0.0
        %7080 = vmatpush1.msra.mxu0 0.0
        %7081 = vmatprep.subr.mxu0 0.0
        %7082 = vmatpush1.msra.mxu0 0.0
        %7083 = vmatprep.subr.mxu0 0.0
        %7084 = vmatpush1.msra.mxu0 0.0
        %7085 = vmatprep.subr.mxu0 0.0
        %7086 = vmatpush1.msra.mxu0 0.0
        %7087 = vmatprep.subr.mxu0 0.0
        %v7088 = vand.u32 %v6733, 4294901760
        %v7089 = vsub.f32 %v6733, %v7088
        %v7090 = vand.u32 %v7089, 4294901760
        %7091 = vmatpush1.msra.mxu0 %v7090
        %7092 = vmatprep.subr.mxu0 0.0
        %v7093 = vand.u32 %v6732, 4294901760
        %v7094 = vsub.f32 %v6732, %v7093
        %v7095 = vand.u32 %v7094, 4294901760
        %7096 = vmatpush1.msra.mxu0 %v7095
        %7097 = vmatprep.subr.mxu0 0.0
        %v7098 = vand.u32 %v6731, 4294901760
        %v7099 = vsub.f32 %v6731, %v7098
        %v7100 = vand.u32 %v7099, 4294901760
        %7101 = vmatpush1.msra.mxu0 %v7100
        %7102 = vmatprep.subr.mxu0 0.0
        %v7103 = vand.u32 %v6730, 4294901760
        %v7104 = vsub.f32 %v6730, %v7103
        %v7105 = vand.u32 %v7104, 4294901760
        %7106 = vmatpush1.msra.mxu0 %v7105
        %7107 = vmatprep.subr.mxu0 0.0
        %7108 = vmatpush2.msra.mxu0 0.0
        %7109 = vmatprep.subr.mxu0 0.0
        %7110 = vmatpush2.msra.mxu0 0.0
        %7111 = vmatprep.subr.mxu0 0.0
        %7112 = vmatpush2.msra.mxu0 0.0
        %7113 = vmatprep.subr.mxu0 0.0
        %7114 = vmatpush2.msra.mxu0 0.0
        %7115 = vmatprep.subr.mxu0 0.0
        %7116 = vmatpush2.msra.mxu0 0.0
        %7117 = vmatprep.subr.mxu0 0.0
        %7118 = vmatpush2.msra.mxu0 0.0
        %7119 = vmatprep.subr.mxu0 0.0
        %7120 = vmatpush2.msra.mxu0 0.0
        %7121 = vmatprep.subr.mxu0 0.0
        %7122 = vmatpush2.msra.mxu0 0.0
        %7123 = vmatprep.subr.mxu0 0.0
        %7124 = vmatpush2.msra.mxu0 0.0
        %7125 = vmatprep.subr.mxu0 0.0
        %7126 = vmatpush2.msra.mxu0 0.0
        %7127 = vmatprep.subr.mxu0 0.0
        %7128 = vmatpush2.msra.mxu0 0.0
        %7129 = vmatprep.subr.mxu0 0.0
        %7130 = vmatpush2.msra.mxu0 0.0
        %7131 = vmatprep.subr.mxu0 0.0
        %7132 = vmatpush2.msra.mxu0 0.0
        %7133 = vmatprep.subr.mxu0 0.0
        %7134 = vmatpush2.msra.mxu0 0.0
        %7135 = vmatprep.subr.mxu0 0.0
        %7136 = vmatpush2.msra.mxu0 0.0
        %7137 = vmatprep.subr.mxu0 0.0
        %7138 = vmatpush2.msra.mxu0 0.0
        %7139 = vmatprep.mubr.f32.mxu0 0.0
        %v7140 = vand.u32 %v6734, 4294901760
        %7141 = vmatmul.mubr.f32.gmra.mxu0 %v7140
        %v7142 = vpop.f32.mrf.mxu0
        %v7143 = vadd.f32 %v7060, %v7142
        %v7144 = vpop.f32.mrf.mxu0
        %7145 = vdwg.mxu0
        %7146 = vmatprep.subr.mxu0 0.0
        %7147 = vmatpush1.msra.mxu0 0.0
        %7148 = vmatprep.subr.mxu0 0.0
        %7149 = vmatpush1.msra.mxu0 0.0
        %7150 = vmatprep.subr.mxu0 0.0
        %7151 = vmatpush1.msra.mxu0 0.0
        %7152 = vmatprep.subr.mxu0 0.0
        %7153 = vmatpush1.msra.mxu0 0.0
        %7154 = vmatprep.subr.mxu0 0.0
        %7155 = vmatpush1.msra.mxu0 0.0
        %7156 = vmatprep.subr.mxu0 0.0
        %7157 = vmatpush1.msra.mxu0 0.0
        %7158 = vmatprep.subr.mxu0 0.0
        %7159 = vmatpush1.msra.mxu0 0.0
        %7160 = vmatprep.subr.mxu0 0.0
        %7161 = vmatpush1.msra.mxu0 0.0
        %7162 = vmatprep.subr.mxu0 0.0
        %7163 = vmatpush1.msra.mxu0 0.0
        %7164 = vmatprep.subr.mxu0 0.0
        %7165 = vmatpush1.msra.mxu0 0.0
        %7166 = vmatprep.subr.mxu0 0.0
        %7167 = vmatpush1.msra.mxu0 0.0
        %7168 = vmatprep.subr.mxu0 0.0
        %7169 = vmatpush1.msra.mxu0 0.0
        %7170 = vmatprep.subr.mxu0 0.0
        %v7171 = vand.u32 %v6733, 4294901760
        %7172 = vmatpush1.msra.mxu0 %v7171
        %7173 = vmatprep.subr.mxu0 0.0
        %v7174 = vand.u32 %v6732, 4294901760
        %7175 = vmatpush1.msra.mxu0 %v7174
        %7176 = vmatprep.subr.mxu0 0.0
        %v7177 = vand.u32 %v6731, 4294901760
        %7178 = vmatpush1.msra.mxu0 %v7177
        %7179 = vmatprep.subr.mxu0 0.0
        %v7180 = vand.u32 %v6730, 4294901760
        %7181 = vmatpush1.msra.mxu0 %v7180
        %7182 = vmatprep.subr.mxu0 0.0
        %7183 = vmatpush2.msra.mxu0 0.0
        %7184 = vmatprep.subr.mxu0 0.0
        %7185 = vmatpush2.msra.mxu0 0.0
        %7186 = vmatprep.subr.mxu0 0.0
        %7187 = vmatpush2.msra.mxu0 0.0
        %7188 = vmatprep.subr.mxu0 0.0
        %7189 = vmatpush2.msra.mxu0 0.0
        %7190 = vmatprep.subr.mxu0 0.0
        %7191 = vmatpush2.msra.mxu0 0.0
        %7192 = vmatprep.subr.mxu0 0.0
        %7193 = vmatpush2.msra.mxu0 0.0
        %7194 = vmatprep.subr.mxu0 0.0
        %7195 = vmatpush2.msra.mxu0 0.0
        %7196 = vmatprep.subr.mxu0 0.0
        %7197 = vmatpush2.msra.mxu0 0.0
        %7198 = vmatprep.subr.mxu0 0.0
        %7199 = vmatpush2.msra.mxu0 0.0
        %7200 = vmatprep.subr.mxu0 0.0
        %7201 = vmatpush2.msra.mxu0 0.0
        %7202 = vmatprep.subr.mxu0 0.0
        %7203 = vmatpush2.msra.mxu0 0.0
        %7204 = vmatprep.subr.mxu0 0.0
        %7205 = vmatpush2.msra.mxu0 0.0
        %7206 = vmatprep.subr.mxu0 0.0
        %7207 = vmatpush2.msra.mxu0 0.0
        %7208 = vmatprep.subr.mxu0 0.0
        %7209 = vmatpush2.msra.mxu0 0.0
        %7210 = vmatprep.subr.mxu0 0.0
        %7211 = vmatpush2.msra.mxu0 0.0
        %7212 = vmatprep.subr.mxu0 0.0
        %7213 = vmatpush2.msra.mxu0 0.0
        %7214 = vmatprep.mubr.f32.mxu0 0.0
        %v7215 = vand.u32 %v6734, 4294901760
        %7216 = vmatmul.mubr.f32.gmra.mxu0 %v7215
        %v7217 = vpop.f32.mrf.mxu0
        %v7218 = vadd.f32 %v7143, %v7217
        %v7219 = vpop.f32.mrf.mxu0
        %7220 = vdwg.mxu0
        %v7221 = vadd.f32 %v6728, %v7218
        %7222 = vst [vmem:[%s391] sm:$0x3] %v7221
        %s7223 = sand.u32 %s185, 1
        %s7224 = scalar_lea.sflag [#allocation4], %s7223
        %s7225 = sand.u32 %s185, 1
        %s7226 = smul.addr %s7225, 4
        %s7227 = scalar_lea.vmem [#allocation8], %s7226
        %s7228 = sand.u32 %s30, 1
        %s7229 = scalar_lea.sflag [#allocation10], %s7228
        %s7230 = sand.u32 %s213, 1
        %s7231 = smul.addr %s7230, 8
        %s7232 = scalar_lea.vmem [#allocation9], %s7231
        %s7233 = sand.u32 %s30, 1
        %s7234 = scalar_lea.sflag [#allocation10], %s7233
        %s7235 = sand.u32 %s241, 1
        %s7236 = smul.addr %s7235, 2
        %s7237 = scalar_lea.vmem [#allocation11], %s7236
        // Predicated region
        $region57: #{tpu_custom_call.1} parent=43 // pred_check
          %p7238 = pneg %p195
        $region58: #{tpu_custom_call.1} parent=43 // pred_check_branch
          %7240 = sbr.rel (%p7238) target = $region60
        $region59: #{tpu_custom_call.1} parent=43 // pred_region
          %s7242 = ssub.s32 64, 64
          %7243 = vsyncadd %s7224, %s7242
          %s7244 = sadd.s32 %s35, %s34
          %s7245 = smul.addr %s7244, 32
          %s7246 = scalar_lea.hbm %s6, %s7245
          %s7247 = sshll.u32 %s7227, 4
          %s7248 = int_to_ptr.vmem [resolvable:$true] %s7247
          %7253 = dma.vmem_to_hbm [thread:$0]  %s7248, 64, %s7246, %s7224, 32, 64, 2
        $region60: #{tpu_custom_call.1} parent=43 // pred_fallthru
          _
        // Predicated region
        $region61: #{tpu_custom_call.1} parent=43 // pred_check
          %p7254 = pneg %p223
        $region62: #{tpu_custom_call.1} parent=43 // pred_check_branch
          %7256 = sbr.rel (%p7254) target = $region64
        $region63: #{tpu_custom_call.1} parent=43 // pred_region
          %s7257 = smul.u32 4, %s34
          %s7259 = ssub.s32 128, 128
          %7260 = vsyncadd %s7229, %s7259
          %s7261 = sadd.s32 %s35, %s7257
          %s7262 = smul.addr %s7261, 32
          %s7263 = scalar_lea.hbm %s7, %s7262
          %s7264 = sshll.u32 %s7232, 4
          %s7265 = int_to_ptr.vmem [resolvable:$true] %s7264
          %7270 = dma.vmem_to_hbm [thread:$0]  %s7265, 128, %s7263, %s7229, 32, 32, 2
        $region64: #{tpu_custom_call.1} parent=43 // pred_fallthru
          _
        // Predicated region
        $region65: #{tpu_custom_call.1} parent=43 // pred_check
          %p7271 = pneg %p251
        $region66: #{tpu_custom_call.1} parent=43 // pred_check_branch
          %7273 = sbr.rel (%p7271) target = $region68
        $region67: #{tpu_custom_call.1} parent=43 // pred_region
          %s7275 = ssub.s32 32, 32
          %7276 = vsyncadd %s7234, %s7275
          %s7277 = sadd.s32 %s35, %s34
          %s7278 = smul.addr %s7277, 32
          %s7279 = scalar_lea.hbm %s8, %s7278
          %s7281 = sshll.u32 %s7237, 4
          %s7282 = int_to_ptr.vmem [resolvable:$true] %s7281
          %7284 = dma.vmem_to_hbm [thread:$0]  %s7282, 32, %s7279, %s7234
        $region68: #{tpu_custom_call.1} parent=43 // pred_fallthru
          _
      $region44: #{tpu_custom_call.1} parent=5 // pred_fallthru
        _
      %p7285 = scmp.le.s32.totalorder 2, %s25
      // Predicated region
      $region69: #{tpu_custom_call.1} parent=5 // pred_check
        %p7286 = pneg %p7285
      $region70: #{tpu_custom_call.1} parent=5 // pred_check_branch
        %7288 = sbr.rel (%p7286) target = $region72
      $region71: #{tpu_custom_call.1} parent=5 // pred_region
        %s7289 = ssub.s32 %s25, 2
        // Predicated region
        $region73: #{tpu_custom_call.1} parent=71 // pred_check
          %p7290 = pneg %p201
        $region74: #{tpu_custom_call.1} parent=71 // pred_check_branch
          %7292 = sbr.rel (%p7290) target = $region76
        $region75: #{tpu_custom_call.1} parent=71 // pred_region
          %s7293 = sand.u32 %s186, 1
          %s7294 = scalar_lea.sflag [#allocation4], %s7293
          %s7295 = sand.u32 %s186, 1
          %s7296 = smul.addr %s7295, 4
          %s7297 = scalar_lea.vmem [#allocation8], %s7296
          %7298 = dma.done %s7294, 64
        $region76: #{tpu_custom_call.1} parent=71 // pred_fallthru
          _
        // Predicated region
        $region77: #{tpu_custom_call.1} parent=71 // pred_check
          %p7299 = pneg %p229
        $region78: #{tpu_custom_call.1} parent=71 // pred_check_branch
          %7301 = sbr.rel (%p7299) target = $region80
        $region79: #{tpu_custom_call.1} parent=71 // pred_region
          %s7302 = sand.u32 %s31, 1
          %s7303 = scalar_lea.sflag [#allocation10], %s7302
          %s7304 = sand.u32 %s214, 1
          %s7305 = smul.addr %s7304, 8
          %s7306 = scalar_lea.vmem [#allocation9], %s7305
          %7307 = dma.done %s7303, 128
        $region80: #{tpu_custom_call.1} parent=71 // pred_fallthru
          _
        // Predicated region
        $region81: #{tpu_custom_call.1} parent=71 // pred_check
          %p7308 = pneg %p257
        $region82: #{tpu_custom_call.1} parent=71 // pred_check_branch
          %7310 = sbr.rel (%p7308) target = $region84
        $region83: #{tpu_custom_call.1} parent=71 // pred_region
          %s7311 = sand.u32 %s31, 1
          %s7312 = scalar_lea.sflag [#allocation10], %s7311
          %s7313 = sand.u32 %s242, 1
          %s7314 = smul.addr %s7313, 2
          %s7315 = scalar_lea.vmem [#allocation11], %s7314
          %7316 = dma.done %s7312, 32
        $region84: #{tpu_custom_call.1} parent=71 // pred_fallthru
          _
      $region72: #{tpu_custom_call.1} parent=5 // pred_fallthru
        _
    $region6: #{tpu_custom_call.1} parent=1 // loop_footer
      %s29 = sadd.s32 1, %s25
    $region7: #{tpu_custom_call.1} parent=1 // loop_footer_branch
      %24 = sbr.rel target = $region3
    $region8: #{tpu_custom_call.1} parent=1 // loop_exit
      _
    %7317 = vsyncpa [#allocation3], 1
    %s7318 = scalar_lea.sflag [#allocation3], 1
    %7319 = vsyncpa %s7318, 1
    %7320 = vsyncpa [#allocation6], 1
    %7321 = vsyncpa [#allocation4], 1
    %s7322 = scalar_lea.sflag [#allocation4], 1
    %7323 = vsyncpa %s7322, 1
    %7324 = vsyncpa [#allocation10], 1
    %s7325 = scalar_lea.sflag [#allocation10], 1
    %7326 = vsyncpa %s7325, 1

</llo_original>
